<compile_context>
chip_gen: v7x
topology: tpu7x:2x2x1
jax: 0.10.0
libtpu: 0.0.40
codegen_flags: <defaults>
</compile_context>

<pallas_src>
import functools

import jax
import jax.numpy as jnp
from jax import lax
from jax.experimental import pallas as pl
from jax.experimental.pallas import tpu as pltpu

BN_EPS = 1e-5
# Above the 32 MiB scoped default, below v7x's 64 MiB physical VMEM.
VMEM_LIMIT_BYTES = 48 * 1024 * 1024


def _row_tile(m):
    """Largest row tile (<=1024) that still leaves >= 2 grid steps (megacore)."""
    for tm in (1024, 512, 256, 128):
        if m >= 2 * tm:
            return tm
    return m  # tiny problem: single full-extent block


def _compiler_params():
    return pltpu.CompilerParams(
        dimension_semantics=("parallel",),
        vmem_limit_bytes=VMEM_LIMIT_BYTES)


# ---------------------------------------------------------------------------
# Pallas kernels
# ---------------------------------------------------------------------------
def _conv1x1_bn_kernel(x_ref, w_ref, s_ref, b_ref, o_ref, *, relu):
    acc = jnp.dot(x_ref[...], w_ref[...], preferred_element_type=jnp.float32)
    y = acc * s_ref[...] + b_ref[...]
    if relu:
        y = jnp.maximum(y, 0.0)
    o_ref[...] = y.astype(o_ref.dtype)


def _conv1x1_bn_add_relu_kernel(x_ref, w_ref, s_ref, b_ref, r_ref, o_ref):
    """relu((x @ w) * s + b + residual)  -- identity-shortcut block tail."""
    acc = jnp.dot(x_ref[...], w_ref[...], preferred_element_type=jnp.float32)
    y = acc * s_ref[...] + b_ref[...] + r_ref[...].astype(jnp.float32)
    o_ref[...] = jnp.maximum(y, 0.0).astype(o_ref.dtype)


def _conv1x1_dual_bn_add_relu_kernel(h_ref, w3_ref, s3_ref, b3_ref,
                                     x_ref, wsc_ref, ssc_ref, bsc_ref, o_ref):
    """relu((h @ W3)*s3+b3 + (x @ Wsc)*ssc+bsc)  -- conv3 + shortcut fused."""
    main = jnp.dot(h_ref[...], w3_ref[...], preferred_element_type=jnp.float32)
    main = main * s3_ref[...] + b3_ref[...]
    sc = jnp.dot(x_ref[...], wsc_ref[...], preferred_element_type=jnp.float32)
    sc = sc * ssc_ref[...] + bsc_ref[...]
    o_ref[...] = jnp.maximum(main + sc, 0.0).astype(o_ref.dtype)


def _conv3x3_bn_relu_kernel(xp_ref, w_ref, s_ref, b_ref, o_ref, *, H, W):
    """3x3 / pad-1 / stride-1 conv as 9 shifted matmuls over the flattened
    zero-padded image (rows = padded pixels, cols = channels)."""
    Wp = W + 2
    rows = H * Wp
    cout = o_ref.shape[-1]
    acc = jnp.zeros((rows, cout), jnp.float32)
    for a in range(3):
        for b in range(3):
            off = a * Wp + b
            tap = xp_ref[0, pl.ds(off, rows), :]          # (H*Wp, C) bf16
            acc = acc + jnp.dot(tap, w_ref[a, b],
                                preferred_element_type=jnp.float32)
    y = jnp.maximum(acc * s_ref[...] + b_ref[...], 0.0).astype(o_ref.dtype)
    # Compact padded-width rows -> clean (H, W, cout) output block.
    for i in range(H):
        o_ref[0, i, :, :] = y[i * Wp:i * Wp + W, :]


# ---------------------------------------------------------------------------
# pallas_call wrappers
# ---------------------------------------------------------------------------
def conv1x1_bn(x2d, w2d, scale, bias, *, relu, residual=None):
    """bf16 out = act((x2d @ w2d) * scale + bias [+ residual])."""
    m, k = x2d.shape
    cout = w2d.shape[1]
    tm = _row_tile(m)
    s2 = scale.reshape(1, cout).astype(jnp.float32)
    b2 = bias.reshape(1, cout).astype(jnp.float32)

    in_specs = [
        pl.BlockSpec((tm, k), lambda i: (i, 0)),       # activations (row tile)
        pl.BlockSpec((k, cout), lambda i: (0, 0)),     # resident weight
        pl.BlockSpec((1, cout), lambda i: (0, 0)),     # bn scale
        pl.BlockSpec((1, cout), lambda i: (0, 0)),     # bn bias
    ]
    args = [x2d, w2d, s2, b2]
    bytes_acc = (m * k + k * cout + m * cout) * 2 + 2 * cout * 4
    if residual is not None:
        in_specs.append(pl.BlockSpec((tm, cout), lambda i: (i, 0)))
        args.append(residual)
        kernel = _conv1x1_bn_add_relu_kernel
        bytes_acc += m * cout * 2
    else:
        kernel = functools.partial(_conv1x1_bn_kernel, relu=relu)

    return pl.pallas_call(
        kernel,
        out_shape=jax.ShapeDtypeStruct((m, cout), jnp.bfloat16),
        grid=(pl.cdiv(m, tm),),
        in_specs=in_specs,
        out_specs=pl.BlockSpec((tm, cout), lambda i: (i, 0)),
        compiler_params=_compiler_params(),
        cost_estimate=pl.CostEstimate(flops=2 * m * k * cout,
                                      transcendentals=0,
                                      bytes_accessed=bytes_acc),
    )(*args)


def conv1x1_dual_bn_add_relu(h2d, w3, s3, b3, x2d, wsc, ssc, bsc):
    """Fused conv3 + bn3 + shortcut conv + bn_sc + add + relu."""
    m, kmid = h2d.shape
    cout = w3.shape[1]
    kin = x2d.shape[1]
    tm = _row_tile(m)
    s3v, b3v = s3.reshape(1, cout).astype(jnp.float32), b3.reshape(1, cout).astype(jnp.float32)
    sscv, bscv = ssc.reshape(1, cout).astype(jnp.float32), bsc.reshape(1, cout).astype(jnp.float32)
    flops = 2 * m * (kmid + kin) * cout
    bytes_acc = (m * kmid + m * kin + kmid * cout + kin * cout + m * cout) * 2

    return pl.pallas_call(
        _conv1x1_dual_bn_add_relu_kernel,
        out_shape=jax.ShapeDtypeStruct((m, cout), jnp.bfloat16),
        grid=(pl.cdiv(m, tm),),
        in_specs=[
            pl.BlockSpec((tm, kmid), lambda i: (i, 0)),
            pl.BlockSpec((kmid, cout), lambda i: (0, 0)),
            pl.BlockSpec((1, cout), lambda i: (0, 0)),
            pl.BlockSpec((1, cout), lambda i: (0, 0)),
            pl.BlockSpec((tm, kin), lambda i: (i, 0)),
            pl.BlockSpec((kin, cout), lambda i: (0, 0)),
            pl.BlockSpec((1, cout), lambda i: (0, 0)),
            pl.BlockSpec((1, cout), lambda i: (0, 0)),
        ],
        out_specs=pl.BlockSpec((tm, cout), lambda i: (i, 0)),
        compiler_params=_compiler_params(),
        cost_estimate=pl.CostEstimate(flops=flops, transcendentals=0,
                                      bytes_accessed=bytes_acc),
    )(h2d, w3, s3v, b3v, x2d, wsc, sscv, bscv)


def conv3x3_bn_relu(x_nhwc, w3x3, scale, bias):
    """3x3 conv (pad 1, stride 1) + BN + ReLU, one image per grid step."""
    n, h, w, c = x_nhwc.shape
    cout = w3x3.shape[-1]
    wp = w + 2
    lp = (h + 3) * wp  # one extra pad row at the bottom so every tap slice is in-bounds
    xpad = jnp.pad(x_nhwc, ((0, 0), (1, 2), (1, 1), (0, 0)))
    xpad_flat = xpad.reshape(n, lp, c)
    s2 = scale.reshape(1, cout).astype(jnp.float32)
    b2 = bias.reshape(1, cout).astype(jnp.float32)
    kernel = functools.partial(_conv3x3_bn_relu_kernel, H=h, W=w)
    flops = 2 * n * h * w * 9 * c * cout
    bytes_acc = (n * lp * c + 9 * c * cout + n * h * w * cout) * 2

    return pl.pallas_call(
        kernel,
        out_shape=jax.ShapeDtypeStruct((n, h, w, cout), jnp.bfloat16),
        grid=(n,),
        in_specs=[
            pl.BlockSpec((1, lp, c), lambda i: (i, 0, 0)),       # padded image
            pl.BlockSpec((3, 3, c, cout), lambda i: (0, 0, 0, 0)),  # resident weight
            pl.BlockSpec((1, cout), lambda i: (0, 0)),
            pl.BlockSpec((1, cout), lambda i: (0, 0)),
        ],
        out_specs=pl.BlockSpec((1, h, w, cout), lambda i: (i, 0, 0, 0)),
        compiler_params=_compiler_params(),
        cost_estimate=pl.CostEstimate(flops=flops, transcendentals=0,
                                      bytes_accessed=bytes_acc),
    )(xpad_flat, w3x3, s2, b2)


# ---------------------------------------------------------------------------
# Plain-JAX glue: BN folding, weight packing, parameter init
# ---------------------------------------------------------------------------
def bn_affine(gamma, beta, mean, var, eps=BN_EPS):
    scale = gamma / jnp.sqrt(var + eps)
    return scale, beta - mean * scale


def pack_w_1x1(w_oihw):            # (O, I, 1, 1) -> (I, O) bf16
    return jnp.transpose(w_oihw[:, :, 0, 0], (1, 0)).astype(jnp.bfloat16)


def pack_w_3x3(w_oihw):            # (O, I, 3, 3) -> (3, 3, I, O) bf16
    return jnp.transpose(w_oihw, (2, 3, 1, 0)).astype(jnp.bfloat16)


def init_bn(key, c):
    k1, k2, k3, k4 = jax.random.split(key, 4)
    gamma = jax.random.uniform(k1, (c,), jnp.float32, 0.5, 1.5)
    beta = 0.1 * jax.random.normal(k2, (c,), jnp.float32)
    mean = 0.1 * jax.random.normal(k3, (c,), jnp.float32)
    var = jax.random.uniform(k4, (c,), jnp.float32, 0.5, 1.5)
    return gamma, beta, mean, var


def init_basic_block(key, cin, mid, cout, shortcut):
    ks = jax.random.split(key, 8)
    p = {
        "w1": 0.1 * jax.random.normal(ks[0], (mid, cin, 1, 1), jnp.float32),
        "bn1": init_bn(ks[1], mid),
        "w2": 0.1 * jax.random.normal(ks[2], (mid, mid, 3, 3), jnp.float32),
        "bn2": init_bn(ks[3], mid),
        "w3": 0.1 * jax.random.normal(ks[4], (cout, mid, 1, 1), jnp.float32),
        "bn3": init_bn(ks[5], cout),
    }
    if shortcut:
        p["w_sc"] = 0.1 * jax.random.normal(ks[6], (cout, cin, 1, 1), jnp.float32)
        p["bn_sc"] = init_bn(ks[7], cout)
    return p


def init_group(key, cin, mid, cout, num_blocks):
    keys = jax.random.split(key, num_blocks)
    blocks = [init_basic_block(keys[0], cin, mid, cout, shortcut=True)]
    for i in range(1, num_blocks):
        blocks.append(init_basic_block(keys[i], cout, mid, cout, shortcut=False))
    return blocks


# ---------------------------------------------------------------------------
# Forward pass (Pallas hot path)
# ---------------------------------------------------------------------------
def basic_block_forward(x_nhwc, p):
    n, h, w, cin = x_nhwc.shape
    m = n * h * w
    x_flat = x_nhwc.reshape(m, cin)

    # conv1 (1x1) + bn1 + relu  -> bf16
    s1, b1 = bn_affine(*p["bn1"])
    h1 = conv1x1_bn(x_flat, pack_w_1x1(p["w1"]), s1, b1, relu=True)
    mid = h1.shape[1]

    # conv2 (3x3, pad 1) + bn2 + relu  (9 shifted in-VMEM matmuls, no HBM im2col)
    s2, b2 = bn_affine(*p["bn2"])
    h2_nhwc = conv3x3_bn_relu(h1.reshape(n, h, w, mid), pack_w_3x3(p["w2"]), s2, b2)
    h2 = h2_nhwc.reshape(m, mid)

    # conv3 (1x1) + bn3 + shortcut + residual add + relu, fully fused
    s3, b3 = bn_affine(*p["bn3"])
    if "w_sc" in p:
        ssc, bsc = bn_affine(*p["bn_sc"])
        out = conv1x1_dual_bn_add_relu(h2, pack_w_1x1(p["w3"]), s3, b3,
                                       x_flat, pack_w_1x1(p["w_sc"]), ssc, bsc)
    else:
        out = conv1x1_bn(h2, pack_w_1x1(p["w3"]), s3, b3, relu=True,
                         residual=x_flat)
    return out.reshape(n, h, w, out.shape[1])


def group_forward(x_nhwc, blocks):
    for p in blocks:
        x_nhwc = basic_block_forward(x_nhwc, p)
    return x_nhwc


@jax.jit
def group_forward_jit(x_nhwc, blocks):
    return group_forward(x_nhwc, blocks)


# ---------------------------------------------------------------------------
# Pure-JAX reference (for correctness check only; uses bf16-rounded weights
# so the comparison only measures intermediate-rounding error)
# ---------------------------------------------------------------------------
def _bf16_round(t):
    return t.astype(jnp.bfloat16).astype(jnp.float32)


def _conv_ref(x_nhwc, w_oihw, pad):
    w_hwio = jnp.transpose(_bf16_round(w_oihw), (2, 3, 1, 0))
    return lax.conv_general_dilated(
        x_nhwc, w_hwio, (1, 1), [(pad, pad), (pad, pad)],
        dimension_numbers=("NHWC", "HWIO", "NHWC"))


def _bn_ref(x, bn):
    gamma, beta, mean, var = bn
    return (x - mean) / jnp.sqrt(var + BN_EPS) * gamma + beta


def _block_ref(x, p):
    h = jax.nn.relu(_bn_ref(_conv_ref(x, p["w1"], 0), p["bn1"]))
    h = jax.nn.relu(_bn_ref(_conv_ref(h, p["w2"], 1), p["bn2"]))
    h = _bn_ref(_conv_ref(h, p["w3"], 0), p["bn3"])
    sc = _bn_ref(_conv_ref(x, p["w_sc"], 0), p["bn_sc"]) if "w_sc" in p else x
    return jax.nn.relu(h + sc)


def group_ref(x, blocks):
    for p in blocks:
        x = _block_ref(x, p)
    return x


# ---------------------------------------------------------------------------
if __name__ == "__main__":
    key = jax.random.PRNGKey(0)
    kx, kp = jax.random.split(key)

    # PyTorch-style NCHW input, small shapes.
    N, C_IN, H, W = 2, 4, 16, 16
    MID, C_OUT, NUM_BLOCKS = 4, 8, 2
    x_nchw = jax.random.normal(kx, (N, C_IN, H, W), jnp.float32)

    blocks = init_group(kp, C_IN, MID, C_OUT, NUM_BLOCKS)

    # NCHW -> NHWC for the kernels, bf16 activations on the hot path.
    x_nhwc = jnp.transpose(x_nchw, (0, 2, 3, 1))
    x_bf16 = x_nhwc.astype(jnp.bfloat16)

    out_nhwc = jax.block_until_ready(group_forward_jit(x_bf16, blocks))
    out_nchw = jnp.transpose(out_nhwc.astype(jnp.float32), (0, 3, 1, 2))

    ref_nchw = jnp.transpose(group_ref(x_bf16.astype(jnp.float32), blocks),
                             (0, 3, 1, 2))
    assert out_nchw.shape == (N, C_OUT, H, W)
    # bf16 intermediates -> looser tolerance than the previous all-f32 version.
    assert jnp.allclose(out_nchw, ref_nchw, atol=2e-2, rtol=2e-2)

    print("KERNEL_OK")
</pallas_src>

<mosaic_0001>
module attributes {stable_mosaic.version = 11 : i64} {
  func.func @_conv1x1_bn_kernel(%arg0: i32, %arg1: memref<256x4xbf16, #tpu.memory_space<vmem>>, %arg2: memref<4x4xbf16, #tpu.memory_space<vmem>>, %arg3: memref<1x4xf32, #tpu.memory_space<vmem>>, %arg4: memref<1x4xf32, #tpu.memory_space<vmem>>, %arg5: memref<256x4xbf16, #tpu.memory_space<vmem>>) attributes {dimension_semantics = [#tpu.dimension_semantics<parallel>], iteration_bounds = array<i64: 2>, scalar_prefetch = 0 : i64, scratch_operands = 0 : i64, tpu.core_type = #tpu.core_type<tc>, window_params = [{transform_indices = @transform_0, window_bounds = array<i64: 256, 4>}, {pipeline_mode = #tpu.pipeline_mode<synchronous>, transform_indices = @transform_1, window_bounds = array<i64: 4, 4>}, {pipeline_mode = #tpu.pipeline_mode<synchronous>, transform_indices = @transform_2, window_bounds = array<i64: 1, 4>}, {pipeline_mode = #tpu.pipeline_mode<synchronous>, transform_indices = @transform_3, window_bounds = array<i64: 1, 4>}, {transform_indices = @transform_4, window_bounds = array<i64: 256, 4>}]} {
    %c0 = arith.constant 0 : index
    %c0_0 = arith.constant 0 : index
    %0 = vector.load %arg1[%c0, %c0_0] : memref<256x4xbf16, #tpu.memory_space<vmem>>, vector<256x4xbf16>
    %c0_1 = arith.constant 0 : index
    %c0_2 = arith.constant 0 : index
    %1 = vector.load %arg2[%c0_1, %c0_2] : memref<4x4xbf16, #tpu.memory_space<vmem>>, vector<4x4xbf16>
    %cst = arith.constant dense<0.000000e+00> : vector<256x4xf32>
    %2 = tpu.matmul %0, %1, %cst {dimension_numbers = #tpu.dot_dimension_numbers<[1], [0], [0], [1], [0, 0, 1, 1], [], []>} : vector<256x4xbf16>, vector<4x4xbf16>, vector<256x4xf32> -> vector<256x4xf32>
    %c0_3 = arith.constant 0 : index
    %c0_4 = arith.constant 0 : index
    %3 = vector.load %arg3[%c0_3, %c0_4] : memref<1x4xf32, #tpu.memory_space<vmem>>, vector<1x4xf32>
    %4 = vector.broadcast %3 : vector<1x4xf32> to vector<256x4xf32>
    %5 = arith.mulf %2, %4 : vector<256x4xf32>
    %c0_5 = arith.constant 0 : index
    %c0_6 = arith.constant 0 : index
    %6 = vector.load %arg4[%c0_5, %c0_6] : memref<1x4xf32, #tpu.memory_space<vmem>>, vector<1x4xf32>
    %7 = vector.broadcast %6 : vector<1x4xf32> to vector<256x4xf32>
    %8 = arith.addf %5, %7 : vector<256x4xf32>
    %cst_7 = arith.constant 0.000000e+00 : f32
    %9 = vector.broadcast %cst_7 : f32 to vector<256x4xf32>
    %10 = arith.maximumf %8, %9 : vector<256x4xf32>
    %11 = arith.truncf %10 : vector<256x4xf32> to vector<256x4xbf16>
    %c0_8 = arith.constant 0 : index
    %c0_9 = arith.constant 0 : index
    %12 = vector.load %arg5[%c0_8, %c0_9] : memref<256x4xbf16, #tpu.memory_space<vmem>>, vector<256x4xbf16>
    tpu.vector_store %arg5[%c0_8, %c0_9], %11 {strides = array<i32>} : memref<256x4xbf16, #tpu.memory_space<vmem>>, vector<256x4xbf16>,
    return
  }
  func.func @transform_0(%arg0: i32) -> (i32, i32) {
    %c0_i32 = arith.constant 0 : i32
    %c0_i32_0 = arith.constant 0 : i32
    return %arg0, %c0_i32 : i32, i32
  }
  func.func @transform_1(%arg0: i32) -> (i32, i32) {
    %c0_i32 = arith.constant 0 : i32
    %c0_i32_0 = arith.constant 0 : i32
    %c0_i32_1 = arith.constant 0 : i32
    return %c0_i32, %c0_i32_0 : i32, i32
  }
  func.func @transform_2(%arg0: i32) -> (i32, i32) {
    %c0_i32 = arith.constant 0 : i32
    %c0_i32_0 = arith.constant 0 : i32
    %c0_i32_1 = arith.constant 0 : i32
    return %c0_i32, %c0_i32_0 : i32, i32
  }
  func.func @transform_3(%arg0: i32) -> (i32, i32) {
    %c0_i32 = arith.constant 0 : i32
    %c0_i32_0 = arith.constant 0 : i32
    %c0_i32_1 = arith.constant 0 : i32
    return %c0_i32, %c0_i32_0 : i32, i32
  }
  func.func @transform_4(%arg0: i32) -> (i32, i32) {
    %c0_i32 = arith.constant 0 : i32
    %c0_i32_0 = arith.constant 0 : i32
    return %arg0, %c0_i32 : i32, i32
  }
}

module attributes {stable_mosaic.version = 11 : i64} {
  func.func @_conv3x3_bn_relu_kernel(%arg0: i32, %arg1: memref<1x342x4xbf16, #tpu.memory_space<vmem>>, %arg2: memref<3x3x4x4xbf16, #tpu.memory_space<vmem>>, %arg3: memref<1x4xf32, #tpu.memory_space<vmem>>, %arg4: memref<1x4xf32, #tpu.memory_space<vmem>>, %arg5: memref<1x16x16x4xbf16, #tpu.memory_space<vmem>>) attributes {dimension_semantics = [#tpu.dimension_semantics<parallel>], iteration_bounds = array<i64: 2>, scalar_prefetch = 0 : i64, scratch_operands = 0 : i64, tpu.core_type = #tpu.core_type<tc>, window_params = [{transform_indices = @transform_0, window_bounds = array<i64: 1, 342, 4>}, {pipeline_mode = #tpu.pipeline_mode<synchronous>, transform_indices = @transform_1, window_bounds = array<i64: 3, 3, 4, 4>}, {pipeline_mode = #tpu.pipeline_mode<synchronous>, transform_indices = @transform_2, window_bounds = array<i64: 1, 4>}, {pipeline_mode = #tpu.pipeline_mode<synchronous>, transform_indices = @transform_3, window_bounds = array<i64: 1, 4>}, {transform_indices = @transform_4, window_bounds = array<i64: 1, 16, 16, 4>}]} {
    %cst = arith.constant 0.000000e+00 : f32
    %0 = vector.broadcast %cst : f32 to vector<288x4xf32>
    %c0 = arith.constant 0 : index
    %c0_0 = arith.constant 0 : index
    %c0_1 = arith.constant 0 : index
    %1 = vector.load %arg1[%c0, %c0_0, %c0_1] : memref<1x342x4xbf16, #tpu.memory_space<vmem>>, vector<1x288x4xbf16>
    %2 = vector.shape_cast %1 : vector<1x288x4xbf16> to vector<288x4xbf16>
    %c0_2 = arith.constant 0 : index
    %c0_3 = arith.constant 0 : index
    %c0_4 = arith.constant 0 : index
    %c0_5 = arith.constant 0 : index
    %3 = vector.load %arg2[%c0_2, %c0_3, %c0_4, %c0_5] : memref<3x3x4x4xbf16, #tpu.memory_space<vmem>>, vector<1x1x4x4xbf16>
    %4 = vector.shape_cast %3 : vector<1x1x4x4xbf16> to vector<4x4xbf16>
    %cst_6 = arith.constant dense<0.000000e+00> : vector<288x4xf32>
    %5 = tpu.matmul %2, %4, %cst_6 {dimension_numbers = #tpu.dot_dimension_numbers<[1], [0], [0], [1], [0, 0, 1, 1], [], []>} : vector<288x4xbf16>, vector<4x4xbf16>, vector<288x4xf32> -> vector<288x4xf32>
    %6 = arith.addf %0, %5 : vector<288x4xf32>
    %c0_7 = arith.constant 0 : index
    %c1 = arith.constant 1 : index
    %c0_8 = arith.constant 0 : index
    %7 = vector.load %arg1[%c0_7, %c1, %c0_8] : memref<1x342x4xbf16, #tpu.memory_space<vmem>>, vector<1x288x4xbf16>
    %8 = vector.shape_cast %7 : vector<1x288x4xbf16> to vector<288x4xbf16>
    %c0_9 = arith.constant 0 : index
    %c1_10 = arith.constant 1 : index
    %c0_11 = arith.constant 0 : index
    %c0_12 = arith.constant 0 : index
    %9 = vector.load %arg2[%c0_9, %c1_10, %c0_11, %c0_12] : memref<3x3x4x4xbf16, #tpu.memory_space<vmem>>, vector<1x1x4x4xbf16>
    %10 = vector.shape_cast %9 : vector<1x1x4x4xbf16> to vector<4x4xbf16>
    %cst_13 = arith.constant dense<0.000000e+00> : vector<288x4xf32>
    %11 = tpu.matmul %8, %10, %cst_13 {dimension_numbers = #tpu.dot_dimension_numbers<[1], [0], [0], [1], [0, 0, 1, 1], [], []>} : vector<288x4xbf16>, vector<4x4xbf16>, vector<288x4xf32> -> vector<288x4xf32>
    %12 = arith.addf %6, %11 : vector<288x4xf32>
    %c0_14 = arith.constant 0 : index
    %c2 = arith.constant 2 : index
    %c0_15 = arith.constant 0 : index
    %13 = vector.load %arg1[%c0_14, %c2, %c0_15] : memref<1x342x4xbf16, #tpu.memory_space<vmem>>, vector<1x288x4xbf16>
    %14 = vector.shape_cast %13 : vector<1x288x4xbf16> to vector<288x4xbf16>
    %c0_16 = arith.constant 0 : index
    %c2_17 = arith.constant 2 : index
    %c0_18 = arith.constant 0 : index
    %c0_19 = arith.constant 0 : index
    %15 = vector.load %arg2[%c0_16, %c2_17, %c0_18, %c0_19] : memref<3x3x4x4xbf16, #tpu.memory_space<vmem>>, vector<1x1x4x4xbf16>
    %16 = vector.shape_cast %15 : vector<1x1x4x4xbf16> to vector<4x4xbf16>
    %cst_20 = arith.constant dense<0.000000e+00> : vector<288x4xf32>
    %17 = tpu.matmul %14, %16, %cst_20 {dimension_numbers = #tpu.dot_dimension_numbers<[1], [0], [0], [1], [0, 0, 1, 1], [], []>} : vector<288x4xbf16>, vector<4x4xbf16>, vector<288x4xf32> -> vector<288x4xf32>
    %18 = arith.addf %12, %17 : vector<288x4xf32>
    %c0_21 = arith.constant 0 : index
    %c18 = arith.constant 18 : index
    %c0_22 = arith.constant 0 : index
    %19 = vector.load %arg1[%c0_21, %c18, %c0_22] : memref<1x342x4xbf16, #tpu.memory_space<vmem>>, vector<1x288x4xbf16>
    %20 = vector.shape_cast %19 : vector<1x288x4xbf16> to vector<288x4xbf16>
    %c1_23 = arith.constant 1 : index
    %c0_24 = arith.constant 0 : index
    %c0_25 = arith.constant 0 : index
    %c0_26 = arith.constant 0 : index
    %21 = vector.load %arg2[%c1_23, %c0_24, %c0_25, %c0_26] : memref<3x3x4x4xbf16, #tpu.memory_space<vmem>>, vector<1x1x4x4xbf16>
    %22 = vector.shape_cast %21 : vector<1x1x4x4xbf16> to vector<4x4xbf16>
    %cst_27 = arith.constant dense<0.000000e+00> : vector<288x4xf32>
    %23 = tpu.matmul %20, %22, %cst_27 {dimension_numbers = #tpu.dot_dimension_numbers<[1], [0], [0], [1], [0, 0, 1, 1], [], []>} : vector<288x4xbf16>, vector<4x4xbf16>, vector<288x4xf32> -> vector<288x4xf32>
    %24 = arith.addf %18, %23 : vector<288x4xf32>
    %c0_28 = arith.constant 0 : index
    %c19 = arith.constant 19 : index
    %c0_29 = arith.constant 0 : index
    %25 = vector.load %arg1[%c0_28, %c19, %c0_29] : memref<1x342x4xbf16, #tpu.memory_space<vmem>>, vector<1x288x4xbf16>
    %26 = vector.shape_cast %25 : vector<1x288x4xbf16> to vector<288x4xbf16>
    %c1_30 = arith.constant 1 : index
    %c1_31 = arith.constant 1 : index
    %c0_32 = arith.constant 0 : index
    %c0_33 = arith.constant 0 : index
    %27 = vector.load %arg2[%c1_30, %c1_31, %c0_32, %c0_33] : memref<3x3x4x4xbf16, #tpu.memory_space<vmem>>, vector<1x1x4x4xbf16>
    %28 = vector.shape_cast %27 : vector<1x1x4x4xbf16> to vector<4x4xbf16>
    %cst_34 = arith.constant dense<0.000000e+00> : vector<288x4xf32>
    %29 = tpu.matmul %26, %28, %cst_34 {dimension_numbers = #tpu.dot_dimension_numbers<[1], [0], [0], [1], [0, 0, 1, 1], [], []>} : vector<288x4xbf16>, vector<4x4xbf16>, vector<288x4xf32> -> vector<288x4xf32>
    %30 = arith.addf %24, %29 : vector<288x4xf32>
    %c0_35 = arith.constant 0 : index
    %c20 = arith.constant 20 : index
    %c0_36 = arith.constant 0 : index
    %31 = vector.load %arg1[%c0_35, %c20, %c0_36] : memref<1x342x4xbf16, #tpu.memory_space<vmem>>, vector<1x288x4xbf16>
    %32 = vector.shape_cast %31 : vector<1x288x4xbf16> to vector<288x4xbf16>
    %c1_37 = arith.constant 1 : index
    %c2_38 = arith.constant 2 : index
    %c0_39 = arith.constant 0 : index
    %c0_40 = arith.constant 0 : index
    %33 = vector.load %arg2[%c1_37, %c2_38, %c0_39, %c0_40] : memref<3x3x4x4xbf16, #tpu.memory_space<vmem>>, vector<1x1x4x4xbf16>
    %34 = vector.shape_cast %33 : vector<1x1x4x4xbf16> to vector<4x4xbf16>
    %cst_41 = arith.constant dense<0.000000e+00> : vector<288x4xf32>
    %35 = tpu.matmul %32, %34, %cst_41 {dimension_numbers = #tpu.dot_dimension_numbers<[1], [0], [0], [1], [0, 0, 1, 1], [], []>} : vector<288x4xbf16>, vector<4x4xbf16>, vector<288x4xf32> -> vector<288x4xf32>
    %36 = arith.addf %30, %35 : vector<288x4xf32>
    %c0_42 = arith.constant 0 : index
    %c36 = arith.constant 36 : index
    %c0_43 = arith.constant 0 : index
    %37 = vector.load %arg1[%c0_42, %c36, %c0_43] : memref<1x342x4xbf16, #tpu.memory_space<vmem>>, vector<1x288x4xbf16>
    %38 = vector.shape_cast %37 : vector<1x288x4xbf16> to vector<288x4xbf16>
    %c2_44 = arith.constant 2 : index
    %c0_45 = arith.constant 0 : index
    %c0_46 = arith.constant 0 : index
    %c0_47 = arith.constant 0 : index
    %39 = vector.load %arg2[%c2_44, %c0_45, %c0_46, %c0_47] : memref<3x3x4x4xbf16, #tpu.memory_space<vmem>>, vector<1x1x4x4xbf16>
    %40 = vector.shape_cast %39 : vector<1x1x4x4xbf16> to vector<4x4xbf16>
    %cst_48 = arith.constant dense<0.000000e+00> : vector<288x4xf32>
    %41 = tpu.matmul %38, %40, %cst_48 {dimension_numbers = #tpu.dot_dimension_numbers<[1], [0], [0], [1], [0, 0, 1, 1], [], []>} : vector<288x4xbf16>, vector<4x4xbf16>, vector<288x4xf32> -> vector<288x4xf32>
    %42 = arith.addf %36, %41 : vector<288x4xf32>
    %c0_49 = arith.constant 0 : index
    %c37 = arith.constant 37 : index
    %c0_50 = arith.constant 0 : index
    %43 = vector.load %arg1[%c0_49, %c37, %c0_50] : memref<1x342x4xbf16, #tpu.memory_space<vmem>>, vector<1x288x4xbf16>
    %44 = vector.shape_cast %43 : vector<1x288x4xbf16> to vector<288x4xbf16>
    %c2_51 = arith.constant 2 : index
    %c1_52 = arith.constant 1 : index
    %c0_53 = arith.constant 0 : index
    %c0_54 = arith.constant 0 : index
    %45 = vector.load %arg2[%c2_51, %c1_52, %c0_53, %c0_54] : memref<3x3x4x4xbf16, #tpu.memory_space<vmem>>, vector<1x1x4x4xbf16>
    %46 = vector.shape_cast %45 : vector<1x1x4x4xbf16> to vector<4x4xbf16>
    %cst_55 = arith.constant dense<0.000000e+00> : vector<288x4xf32>
    %47 = tpu.matmul %44, %46, %cst_55 {dimension_numbers = #tpu.dot_dimension_numbers<[1], [0], [0], [1], [0, 0, 1, 1], [], []>} : vector<288x4xbf16>, vector<4x4xbf16>, vector<288x4xf32> -> vector<288x4xf32>
    %48 = arith.addf %42, %47 : vector<288x4xf32>
    %c0_56 = arith.constant 0 : index
    %c38 = arith.constant 38 : index
    %c0_57 = arith.constant 0 : index
    %49 = vector.load %arg1[%c0_56, %c38, %c0_57] : memref<1x342x4xbf16, #tpu.memory_space<vmem>>, vector<1x288x4xbf16>
    %50 = vector.shape_cast %49 : vector<1x288x4xbf16> to vector<288x4xbf16>
    %c2_58 = arith.constant 2 : index
    %c2_59 = arith.constant 2 : index
    %c0_60 = arith.constant 0 : index
    %c0_61 = arith.constant 0 : index
    %51 = vector.load %arg2[%c2_58, %c2_59, %c0_60, %c0_61] : memref<3x3x4x4xbf16, #tpu.memory_space<vmem>>, vector<1x1x4x4xbf16>
    %52 = vector.shape_cast %51 : vector<1x1x4x4xbf16> to vector<4x4xbf16>
    %cst_62 = arith.constant dense<0.000000e+00> : vector<288x4xf32>
    %53 = tpu.matmul %50, %52, %cst_62 {dimension_numbers = #tpu.dot_dimension_numbers<[1], [0], [0], [1], [0, 0, 1, 1], [], []>} : vector<288x4xbf16>, vector<4x4xbf16>, vector<288x4xf32> -> vector<288x4xf32>
    %54 = arith.addf %48, %53 : vector<288x4xf32>
    %c0_63 = arith.constant 0 : index
    %c0_64 = arith.constant 0 : index
    %55 = vector.load %arg3[%c0_63, %c0_64] : memref<1x4xf32, #tpu.memory_space<vmem>>, vector<1x4xf32>
    %56 = vector.broadcast %55 : vector<1x4xf32> to vector<288x4xf32>
    %57 = arith.mulf %54, %56 : vector<288x4xf32>
    %c0_65 = arith.constant 0 : index
    %c0_66 = arith.constant 0 : index
    %58 = vector.load %arg4[%c0_65, %c0_66] : memref<1x4xf32, #tpu.memory_space<vmem>>, vector<1x4xf32>
    %59 = vector.broadcast %58 : vector<1x4xf32> to vector<288x4xf32>
    %60 = arith.addf %57, %59 : vector<288x4xf32>
    %cst_67 = arith.constant 0.000000e+00 : f32
    %61 = vector.broadcast %cst_67 : f32 to vector<288x4xf32>
    %62 = arith.maximumf %60, %61 : vector<288x4xf32>
    %63 = arith.truncf %62 : vector<288x4xf32> to vector<288x4xbf16>
    %64 = vector.extract_strided_slice %63 {offsets = [0, 0], sizes = [16, 4], strides = [1, 1]} : vector<288x4xbf16> to vector<16x4xbf16>
    %c0_68 = arith.constant 0 : index
    %c0_69 = arith.constant 0 : index
    %c0_70 = arith.constant 0 : index
    %c0_71 = arith.constant 0 : index
    %65 = vector.load %arg5[%c0_68, %c0_69, %c0_70, %c0_71] : memref<1x16x16x4xbf16, #tpu.memory_space<vmem>>, vector<1x1x16x4xbf16>
    %66 = vector.shape_cast %65 : vector<1x1x16x4xbf16> to vector<16x4xbf16>
    %67 = vector.shape_cast %64 : vector<16x4xbf16> to vector<1x1x16x4xbf16>
    tpu.vector_store %arg5[%c0_68, %c0_69, %c0_70, %c0_71], %67 {strides = array<i32>} : memref<1x16x16x4xbf16, #tpu.memory_space<vmem>>, vector<1x1x16x4xbf16>,
    %68 = vector.extract_strided_slice %63 {offsets = [18, 0], sizes = [16, 4], strides = [1, 1]} : vector<288x4xbf16> to vector<16x4xbf16>
    %c0_72 = arith.constant 0 : index
    %c1_73 = arith.constant 1 : index
    %c0_74 = arith.constant 0 : index
    %c0_75 = arith.constant 0 : index
    %69 = vector.load %arg5[%c0_72, %c1_73, %c0_74, %c0_75] : memref<1x16x16x4xbf16, #tpu.memory_space<vmem>>, vector<1x1x16x4xbf16>
    %70 = vector.shape_cast %69 : vector<1x1x16x4xbf16> to vector<16x4xbf16>
    %71 = vector.shape_cast %68 : vector<16x4xbf16> to vector<1x1x16x4xbf16>
    tpu.vector_store %arg5[%c0_72, %c1_73, %c0_74, %c0_75], %71 {strides = array<i32>} : memref<1x16x16x4xbf16, #tpu.memory_space<vmem>>, vector<1x1x16x4xbf16>,
    %72 = vector.extract_strided_slice %63 {offsets = [36, 0], sizes = [16, 4], strides = [1, 1]} : vector<288x4xbf16> to vector<16x4xbf16>
    %c0_76 = arith.constant 0 : index
    %c2_77 = arith.constant 2 : index
    %c0_78 = arith.constant 0 : index
    %c0_79 = arith.constant 0 : index
    %73 = vector.load %arg5[%c0_76, %c2_77, %c0_78, %c0_79] : memref<1x16x16x4xbf16, #tpu.memory_space<vmem>>, vector<1x1x16x4xbf16>
    %74 = vector.shape_cast %73 : vector<1x1x16x4xbf16> to vector<16x4xbf16>
    %75 = vector.shape_cast %72 : vector<16x4xbf16> to vector<1x1x16x4xbf16>
    tpu.vector_store %arg5[%c0_76, %c2_77, %c0_78, %c0_79], %75 {strides = array<i32>} : memref<1x16x16x4xbf16, #tpu.memory_space<vmem>>, vector<1x1x16x4xbf16>,
    %76 = vector.extract_strided_slice %63 {offsets = [54, 0], sizes = [16, 4], strides = [1, 1]} : vector<288x4xbf16> to vector<16x4xbf16>
    %c0_80 = arith.constant 0 : index
    %c3 = arith.constant 3 : index
    %c0_81 = arith.constant 0 : index
    %c0_82 = arith.constant 0 : index
    %77 = vector.load %arg5[%c0_80, %c3, %c0_81, %c0_82] : memref<1x16x16x4xbf16, #tpu.memory_space<vmem>>, vector<1x1x16x4xbf16>
    %78 = vector.shape_cast %77 : vector<1x1x16x4xbf16> to vector<16x4xbf16>
    %79 = vector.shape_cast %76 : vector<16x4xbf16> to vector<1x1x16x4xbf16>
    tpu.vector_store %arg5[%c0_80, %c3, %c0_81, %c0_82], %79 {strides = array<i32>} : memref<1x16x16x4xbf16, #tpu.memory_space<vmem>>, vector<1x1x16x4xbf16>,
    %80 = vector.extract_strided_slice %63 {offsets = [72, 0], sizes = [16, 4], strides = [1, 1]} : vector<288x4xbf16> to vector<16x4xbf16>
    %c0_83 = arith.constant 0 : index
    %c4 = arith.constant 4 : index
    %c0_84 = arith.constant 0 : index
    %c0_85 = arith.constant 0 : index
    %81 = vector.load %arg5[%c0_83, %c4, %c0_84, %c0_85] : memref<1x16x16x4xbf16, #tpu.memory_space<vmem>>, vector<1x1x16x4xbf16>
    %82 = vector.shape_cast %81 : vector<1x1x16x4xbf16> to vector<16x4xbf16>
    %83 = vector.shape_cast %80 : vector<16x4xbf16> to vector<1x1x16x4xbf16>
    tpu.vector_store %arg5[%c0_83, %c4, %c0_84, %c0_85], %83 {strides = array<i32>} : memref<1x16x16x4xbf16, #tpu.memory_space<vmem>>, vector<1x1x16x4xbf16>,
    %84 = vector.extract_strided_slice %63 {offsets = [90, 0], sizes = [16, 4], strides = [1, 1]} : vector<288x4xbf16> to vector<16x4xbf16>
    %c0_86 = arith.constant 0 : index
    %c5 = arith.constant 5 : index
    %c0_87 = arith.constant 0 : index
    %c0_88 = arith.constant 0 : index
    %85 = vector.load %arg5[%c0_86, %c5, %c0_87, %c0_88] : memref<1x16x16x4xbf16, #tpu.memory_space<vmem>>, vector<1x1x16x4xbf16>
    %86 = vector.shape_cast %85 : vector<1x1x16x4xbf16> to vector<16x4xbf16>
    %87 = vector.shape_cast %84 : vector<16x4xbf16> to vector<1x1x16x4xbf16>
    tpu.vector_store %arg5[%c0_86, %c5, %c0_87, %c0_88], %87 {strides = array<i32>} : memref<1x16x16x4xbf16, #tpu.memory_space<vmem>>, vector<1x1x16x4xbf16>,
    %88 = vector.extract_strided_slice %63 {offsets = [108, 0], sizes = [16, 4], strides = [1, 1]} : vector<288x4xbf16> to vector<16x4xbf16>
    %c0_89 = arith.constant 0 : index
    %c6 = arith.constant 6 : index
    %c0_90 = arith.constant 0 : index
    %c0_91 = arith.constant 0 : index
    %89 = vector.load %arg5[%c0_89, %c6, %c0_90, %c0_91] : memref<1x16x16x4xbf16, #tpu.memory_space<vmem>>, vector<1x1x16x4xbf16>
    %90 = vector.shape_cast %89 : vector<1x1x16x4xbf16> to vector<16x4xbf16>
    %91 = vector.shape_cast %88 : vector<16x4xbf16> to vector<1x1x16x4xbf16>
    tpu.vector_store %arg5[%c0_89, %c6, %c0_90, %c0_91], %91 {strides = array<i32>} : memref<1x16x16x4xbf16, #tpu.memory_space<vmem>>, vector<1x1x16x4xbf16>,
    %92 = vector.extract_strided_slice %63 {offsets = [126, 0], sizes = [16, 4], strides = [1, 1]} : vector<288x4xbf16> to vector<16x4xbf16>
    %c0_92 = arith.constant 0 : index
    %c7 = arith.constant 7 : index
    %c0_93 = arith.constant 0 : index
    %c0_94 = arith.constant 0 : index
    %93 = vector.load %arg5[%c0_92, %c7, %c0_93, %c0_94] : memref<1x16x16x4xbf16, #tpu.memory_space<vmem>>, vector<1x1x16x4xbf16>
    %94 = vector.shape_cast %93 : vector<1x1x16x4xbf16> to vector<16x4xbf16>
    %95 = vector.shape_cast %92 : vector<16x4xbf16> to vector<1x1x16x4xbf16>
    tpu.vector_store %arg5[%c0_92, %c7, %c0_93, %c0_94], %95 {strides = array<i32>} : memref<1x16x16x4xbf16, #tpu.memory_space<vmem>>, vector<1x1x16x4xbf16>,
    %96 = vector.extract_strided_slice %63 {offsets = [144, 0], sizes = [16, 4], strides = [1, 1]} : vector<288x4xbf16> to vector<16x4xbf16>
    %c0_95 = arith.constant 0 : index
    %c8 = arith.constant 8 : index
    %c0_96 = arith.constant 0 : index
    %c0_97 = arith.constant 0 : index
    %97 = vector.load %arg5[%c0_95, %c8, %c0_96, %c0_97] : memref<1x16x16x4xbf16, #tpu.memory_space<vmem>>, vector<1x1x16x4xbf16>
    %98 = vector.shape_cast %97 : vector<1x1x16x4xbf16> to vector<16x4xbf16>
    %99 = vector.shape_cast %96 : vector<16x4xbf16> to vector<1x1x16x4xbf16>
    tpu.vector_store %arg5[%c0_95, %c8, %c0_96, %c0_97], %99 {strides = array<i32>} : memref<1x16x16x4xbf16, #tpu.memory_space<vmem>>, vector<1x1x16x4xbf16>,
    %100 = vector.extract_strided_slice %63 {offsets = [162, 0], sizes = [16, 4], strides = [1, 1]} : vector<288x4xbf16> to vector<16x4xbf16>
    %c0_98 = arith.constant 0 : index
    %c9 = arith.constant 9 : index
    %c0_99 = arith.constant 0 : index
    %c0_100 = arith.constant 0 : index
    %101 = vector.load %arg5[%c0_98, %c9, %c0_99, %c0_100] : memref<1x16x16x4xbf16, #tpu.memory_space<vmem>>, vector<1x1x16x4xbf16>
    %102 = vector.shape_cast %101 : vector<1x1x16x4xbf16> to vector<16x4xbf16>
    %103 = vector.shape_cast %100 : vector<16x4xbf16> to vector<1x1x16x4xbf16>
    tpu.vector_store %arg5[%c0_98, %c9, %c0_99, %c0_100], %103 {strides = array<i32>} : memref<1x16x16x4xbf16, #tpu.memory_space<vmem>>, vector<1x1x16x4xbf16>,
    %104 = vector.extract_strided_slice %63 {offsets = [180, 0], sizes = [16, 4], strides = [1, 1]} : vector<288x4xbf16> to vector<16x4xbf16>
    %c0_101 = arith.constant 0 : index
    %c10 = arith.constant 10 : index
    %c0_102 = arith.constant 0 : index
    %c0_103 = arith.constant 0 : index
    %105 = vector.load %arg5[%c0_101, %c10, %c0_102, %c0_103] : memref<1x16x16x4xbf16, #tpu.memory_space<vmem>>, vector<1x1x16x4xbf16>
    %106 = vector.shape_cast %105 : vector<1x1x16x4xbf16> to vector<16x4xbf16>
    %107 = vector.shape_cast %104 : vector<16x4xbf16> to vector<1x1x16x4xbf16>
    tpu.vector_store %arg5[%c0_101, %c10, %c0_102, %c0_103], %107 {strides = array<i32>} : memref<1x16x16x4xbf16, #tpu.memory_space<vmem>>, vector<1x1x16x4xbf16>,
    %108 = vector.extract_strided_slice %63 {offsets = [198, 0], sizes = [16, 4], strides = [1, 1]} : vector<288x4xbf16> to vector<16x4xbf16>
    %c0_104 = arith.constant 0 : index
    %c11 = arith.constant 11 : index
    %c0_105 = arith.constant 0 : index
    %c0_106 = arith.constant 0 : index
    %109 = vector.load %arg5[%c0_104, %c11, %c0_105, %c0_106] : memref<1x16x16x4xbf16, #tpu.memory_space<vmem>>, vector<1x1x16x4xbf16>
    %110 = vector.shape_cast %109 : vector<1x1x16x4xbf16> to vector<16x4xbf16>
    %111 = vector.shape_cast %108 : vector<16x4xbf16> to vector<1x1x16x4xbf16>
    tpu.vector_store %arg5[%c0_104, %c11, %c0_105, %c0_106], %111 {strides = array<i32>} : memref<1x16x16x4xbf16, #tpu.memory_space<vmem>>, vector<1x1x16x4xbf16>,
    %112 = vector.extract_strided_slice %63 {offsets = [216, 0], sizes = [16, 4], strides = [1, 1]} : vector<288x4xbf16> to vector<16x4xbf16>
    %c0_107 = arith.constant 0 : index
    %c12 = arith.constant 12 : index
    %c0_108 = arith.constant 0 : index
    %c0_109 = arith.constant 0 : index
    %113 = vector.load %arg5[%c0_107, %c12, %c0_108, %c0_109] : memref<1x16x16x4xbf16, #tpu.memory_space<vmem>>, vector<1x1x16x4xbf16>
    %114 = vector.shape_cast %113 : vector<1x1x16x4xbf16> to vector<16x4xbf16>
    %115 = vector.shape_cast %112 : vector<16x4xbf16> to vector<1x1x16x4xbf16>
    tpu.vector_store %arg5[%c0_107, %c12, %c0_108, %c0_109], %115 {strides = array<i32>} : memref<1x16x16x4xbf16, #tpu.memory_space<vmem>>, vector<1x1x16x4xbf16>,
    %116 = vector.extract_strided_slice %63 {offsets = [234, 0], sizes = [16, 4], strides = [1, 1]} : vector<288x4xbf16> to vector<16x4xbf16>
    %c0_110 = arith.constant 0 : index
    %c13 = arith.constant 13 : index
    %c0_111 = arith.constant 0 : index
    %c0_112 = arith.constant 0 : index
    %117 = vector.load %arg5[%c0_110, %c13, %c0_111, %c0_112] : memref<1x16x16x4xbf16, #tpu.memory_space<vmem>>, vector<1x1x16x4xbf16>
    %118 = vector.shape_cast %117 : vector<1x1x16x4xbf16> to vector<16x4xbf16>
    %119 = vector.shape_cast %116 : vector<16x4xbf16> to vector<1x1x16x4xbf16>
    tpu.vector_store %arg5[%c0_110, %c13, %c0_111, %c0_112], %119 {strides = array<i32>} : memref<1x16x16x4xbf16, #tpu.memory_space<vmem>>, vector<1x1x16x4xbf16>,
    %120 = vector.extract_strided_slice %63 {offsets = [252, 0], sizes = [16, 4], strides = [1, 1]} : vector<288x4xbf16> to vector<16x4xbf16>
    %c0_113 = arith.constant 0 : index
    %c14 = arith.constant 14 : index
    %c0_114 = arith.constant 0 : index
    %c0_115 = arith.constant 0 : index
    %121 = vector.load %arg5[%c0_113, %c14, %c0_114, %c0_115] : memref<1x16x16x4xbf16, #tpu.memory_space<vmem>>, vector<1x1x16x4xbf16>
    %122 = vector.shape_cast %121 : vector<1x1x16x4xbf16> to vector<16x4xbf16>
    %123 = vector.shape_cast %120 : vector<16x4xbf16> to vector<1x1x16x4xbf16>
    tpu.vector_store %arg5[%c0_113, %c14, %c0_114, %c0_115], %123 {strides = array<i32>} : memref<1x16x16x4xbf16, #tpu.memory_space<vmem>>, vector<1x1x16x4xbf16>,
    %124 = vector.extract_strided_slice %63 {offsets = [270, 0], sizes = [16, 4], strides = [1, 1]} : vector<288x4xbf16> to vector<16x4xbf16>
    %c0_116 = arith.constant 0 : index
    %c15 = arith.constant 15 : index
    %c0_117 = arith.constant 0 : index
    %c0_118 = arith.constant 0 : index
    %125 = vector.load %arg5[%c0_116, %c15, %c0_117, %c0_118] : memref<1x16x16x4xbf16, #tpu.memory_space<vmem>>, vector<1x1x16x4xbf16>
    %126 = vector.shape_cast %125 : vector<1x1x16x4xbf16> to vector<16x4xbf16>
    %127 = vector.shape_cast %124 : vector<16x4xbf16> to vector<1x1x16x4xbf16>
    tpu.vector_store %arg5[%c0_116, %c15, %c0_117, %c0_118], %127 {strides = array<i32>} : memref<1x16x16x4xbf16, #tpu.memory_space<vmem>>, vector<1x1x16x4xbf16>,
    return
  }
  func.func @transform_0(%arg0: i32) -> (i32, i32, i32) {
    %c0_i32 = arith.constant 0 : i32
    %c0_i32_0 = arith.constant 0 : i32
    %c0_i32_1 = arith.constant 0 : i32
    return %arg0, %c0_i32, %c0_i32_0 : i32, i32, i32
  }
  func.func @transform_1(%arg0: i32) -> (i32, i32, i32, i32) {
    %c0_i32 = arith.constant 0 : i32
    %c0_i32_0 = arith.constant 0 : i32
    %c0_i32_1 = arith.constant 0 : i32
    %c0_i32_2 = arith.constant 0 : i32
    %c0_i32_3 = arith.constant 0 : i32
    return %c0_i32, %c0_i32_0, %c0_i32_1, %c0_i32_2 : i32, i32, i32, i32
  }
  func.func @transform_2(%arg0: i32) -> (i32, i32) {
    %c0_i32 = arith.constant 0 : i32
    %c0_i32_0 = arith.constant 0 : i32
    %c0_i32_1 = arith.constant 0 : i32
    return %c0_i32, %c0_i32_0 : i32, i32
  }
  func.func @transform_3(%arg0: i32) -> (i32, i32) {
    %c0_i32 = arith.constant 0 : i32
    %c0_i32_0 = arith.constant 0 : i32
    %c0_i32_1 = arith.constant 0 : i32
    return %c0_i32, %c0_i32_0 : i32, i32
  }
  func.func @transform_4(%arg0: i32) -> (i32, i32, i32, i32) {
    %c0_i32 = arith.constant 0 : i32
    %c0_i32_0 = arith.constant 0 : i32
    %c0_i32_1 = arith.constant 0 : i32
    %c0_i32_2 = arith.constant 0 : i32
    return %arg0, %c0_i32, %c0_i32_0, %c0_i32_1 : i32, i32, i32, i32
  }
}

module attributes {stable_mosaic.version = 11 : i64} {
  func.func @_conv1x1_dual_bn_add_relu_kernel(%arg0: i32, %arg1: memref<256x4xbf16, #tpu.memory_space<vmem>>, %arg2: memref<4x8xbf16, #tpu.memory_space<vmem>>, %arg3: memref<1x8xf32, #tpu.memory_space<vmem>>, %arg4: memref<1x8xf32, #tpu.memory_space<vmem>>, %arg5: memref<256x4xbf16, #tpu.memory_space<vmem>>, %arg6: memref<4x8xbf16, #tpu.memory_space<vmem>>, %arg7: memref<1x8xf32, #tpu.memory_space<vmem>>, %arg8: memref<1x8xf32, #tpu.memory_space<vmem>>, %arg9: memref<256x8xbf16, #tpu.memory_space<vmem>>) attributes {dimension_semantics = [#tpu.dimension_semantics<parallel>], iteration_bounds = array<i64: 2>, scalar_prefetch = 0 : i64, scratch_operands = 0 : i64, tpu.core_type = #tpu.core_type<tc>, window_params = [{transform_indices = @transform_0, window_bounds = array<i64: 256, 4>}, {pipeline_mode = #tpu.pipeline_mode<synchronous>, transform_indices = @transform_1, window_bounds = array<i64: 4, 8>}, {pipeline_mode = #tpu.pipeline_mode<synchronous>, transform_indices = @transform_2, window_bounds = array<i64: 1, 8>}, {pipeline_mode = #tpu.pipeline_mode<synchronous>, transform_indices = @transform_3, window_bounds = array<i64: 1, 8>}, {transform_indices = @transform_4, window_bounds = array<i64: 256, 4>}, {pipeline_mode = #tpu.pipeline_mode<synchronous>, transform_indices = @transform_5, window_bounds = array<i64: 4, 8>}, {pipeline_mode = #tpu.pipeline_mode<synchronous>, transform_indices = @transform_6, window_bounds = array<i64: 1, 8>}, {pipeline_mode = #tpu.pipeline_mode<synchronous>, transform_indices = @transform_7, window_bounds = array<i64: 1, 8>}, {transform_indices = @transform_8, window_bounds = array<i64: 256, 8>}]} {
    %c0 = arith.constant 0 : index
    %c0_0 = arith.constant 0 : index
    %0 = vector.load %arg1[%c0, %c0_0] : memref<256x4xbf16, #tpu.memory_space<vmem>>, vector<256x4xbf16>
    %c0_1 = arith.constant 0 : index
    %c0_2 = arith.constant 0 : index
    %1 = vector.load %arg2[%c0_1, %c0_2] : memref<4x8xbf16, #tpu.memory_space<vmem>>, vector<4x8xbf16>
    %cst = arith.constant dense<0.000000e+00> : vector<256x8xf32>
    %2 = tpu.matmul %0, %1, %cst {dimension_numbers = #tpu.dot_dimension_numbers<[1], [0], [0], [1], [0, 0, 1, 1], [], []>} : vector<256x4xbf16>, vector<4x8xbf16>, vector<256x8xf32> -> vector<256x8xf32>
    %c0_3 = arith.constant 0 : index
    %c0_4 = arith.constant 0 : index
    %3 = vector.load %arg3[%c0_3, %c0_4] : memref<1x8xf32, #tpu.memory_space<vmem>>, vector<1x8xf32>
    %4 = vector.broadcast %3 : vector<1x8xf32> to vector<256x8xf32>
    %5 = arith.mulf %2, %4 : vector<256x8xf32>
    %c0_5 = arith.constant 0 : index
    %c0_6 = arith.constant 0 : index
    %6 = vector.load %arg4[%c0_5, %c0_6] : memref<1x8xf32, #tpu.memory_space<vmem>>, vector<1x8xf32>
    %7 = vector.broadcast %6 : vector<1x8xf32> to vector<256x8xf32>
    %8 = arith.addf %5, %7 : vector<256x8xf32>
    %c0_7 = arith.constant 0 : index
    %c0_8 = arith.constant 0 : index
    %9 = vector.load %arg5[%c0_7, %c0_8] : memref<256x4xbf16, #tpu.memory_space<vmem>>, vector<256x4xbf16>
    %c0_9 = arith.constant 0 : index
    %c0_10 = arith.constant 0 : index
    %10 = vector.load %arg6[%c0_9, %c0_10] : memref<4x8xbf16, #tpu.memory_space<vmem>>, vector<4x8xbf16>
    %cst_11 = arith.constant dense<0.000000e+00> : vector<256x8xf32>
    %11 = tpu.matmul %9, %10, %cst_11 {dimension_numbers = #tpu.dot_dimension_numbers<[1], [0], [0], [1], [0, 0, 1, 1], [], []>} : vector<256x4xbf16>, vector<4x8xbf16>, vector<256x8xf32> -> vector<256x8xf32>
    %c0_12 = arith.constant 0 : index
    %c0_13 = arith.constant 0 : index
    %12 = vector.load %arg7[%c0_12, %c0_13] : memref<1x8xf32, #tpu.memory_space<vmem>>, vector<1x8xf32>
    %13 = vector.broadcast %12 : vector<1x8xf32> to vector<256x8xf32>
    %14 = arith.mulf %11, %13 : vector<256x8xf32>
    %c0_14 = arith.constant 0 : index
    %c0_15 = arith.constant 0 : index
    %15 = vector.load %arg8[%c0_14, %c0_15] : memref<1x8xf32, #tpu.memory_space<vmem>>, vector<1x8xf32>
    %16 = vector.broadcast %15 : vector<1x8xf32> to vector<256x8xf32>
    %17 = arith.addf %14, %16 : vector<256x8xf32>
    %18 = arith.addf %8, %17 : vector<256x8xf32>
    %cst_16 = arith.constant 0.000000e+00 : f32
    %19 = vector.broadcast %cst_16 : f32 to vector<256x8xf32>
    %20 = arith.maximumf %18, %19 : vector<256x8xf32>
    %21 = arith.truncf %20 : vector<256x8xf32> to vector<256x8xbf16>
    %c0_17 = arith.constant 0 : index
    %c0_18 = arith.constant 0 : index
    %22 = vector.load %arg9[%c0_17, %c0_18] : memref<256x8xbf16, #tpu.memory_space<vmem>>, vector<256x8xbf16>
    tpu.vector_store %arg9[%c0_17, %c0_18], %21 {strides = array<i32>} : memref<256x8xbf16, #tpu.memory_space<vmem>>, vector<256x8xbf16>,
    return
  }
  func.func @transform_0(%arg0: i32) -> (i32, i32) {
    %c0_i32 = arith.constant 0 : i32
    %c0_i32_0 = arith.constant 0 : i32
    return %arg0, %c0_i32 : i32, i32
  }
  func.func @transform_1(%arg0: i32) -> (i32, i32) {
    %c0_i32 = arith.constant 0 : i32
    %c0_i32_0 = arith.constant 0 : i32
    %c0_i32_1 = arith.constant 0 : i32
    return %c0_i32, %c0_i32_0 : i32, i32
  }
  func.func @transform_2(%arg0: i32) -> (i32, i32) {
    %c0_i32 = arith.constant 0 : i32
    %c0_i32_0 = arith.constant 0 : i32
    %c0_i32_1 = arith.constant 0 : i32
    return %c0_i32, %c0_i32_0 : i32, i32
  }
  func.func @transform_3(%arg0: i32) -> (i32, i32) {
    %c0_i32 = arith.constant 0 : i32
    %c0_i32_0 = arith.constant 0 : i32
    %c0_i32_1 = arith.constant 0 : i32
    return %c0_i32, %c0_i32_0 : i32, i32
  }
  func.func @transform_4(%arg0: i32) -> (i32, i32) {
    %c0_i32 = arith.constant 0 : i32
    %c0_i32_0 = arith.constant 0 : i32
    return %arg0, %c0_i32 : i32, i32
  }
  func.func @transform_5(%arg0: i32) -> (i32, i32) {
    %c0_i32 = arith.constant 0 : i32
    %c0_i32_0 = arith.constant 0 : i32
    %c0_i32_1 = arith.constant 0 : i32
    return %c0_i32, %c0_i32_0 : i32, i32
  }
  func.func @transform_6(%arg0: i32) -> (i32, i32) {
    %c0_i32 = arith.constant 0 : i32
    %c0_i32_0 = arith.constant 0 : i32
    %c0_i32_1 = arith.constant 0 : i32
    return %c0_i32, %c0_i32_0 : i32, i32
  }
  func.func @transform_7(%arg0: i32) -> (i32, i32) {
    %c0_i32 = arith.constant 0 : i32
    %c0_i32_0 = arith.constant 0 : i32
    %c0_i32_1 = arith.constant 0 : i32
    return %c0_i32, %c0_i32_0 : i32, i32
  }
  func.func @transform_8(%arg0: i32) -> (i32, i32) {
    %c0_i32 = arith.constant 0 : i32
    %c0_i32_0 = arith.constant 0 : i32
    return %arg0, %c0_i32 : i32, i32
  }
}

module attributes {stable_mosaic.version = 11 : i64} {
  func.func @_conv1x1_bn_kernel(%arg0: i32, %arg1: memref<256x8xbf16, #tpu.memory_space<vmem>>, %arg2: memref<8x4xbf16, #tpu.memory_space<vmem>>, %arg3: memref<1x4xf32, #tpu.memory_space<vmem>>, %arg4: memref<1x4xf32, #tpu.memory_space<vmem>>, %arg5: memref<256x4xbf16, #tpu.memory_space<vmem>>) attributes {dimension_semantics = [#tpu.dimension_semantics<parallel>], iteration_bounds = array<i64: 2>, scalar_prefetch = 0 : i64, scratch_operands = 0 : i64, tpu.core_type = #tpu.core_type<tc>, window_params = [{transform_indices = @transform_0, window_bounds = array<i64: 256, 8>}, {pipeline_mode = #tpu.pipeline_mode<synchronous>, transform_indices = @transform_1, window_bounds = array<i64: 8, 4>}, {pipeline_mode = #tpu.pipeline_mode<synchronous>, transform_indices = @transform_2, window_bounds = array<i64: 1, 4>}, {pipeline_mode = #tpu.pipeline_mode<synchronous>, transform_indices = @transform_3, window_bounds = array<i64: 1, 4>}, {transform_indices = @transform_4, window_bounds = array<i64: 256, 4>}]} {
    %c0 = arith.constant 0 : index
    %c0_0 = arith.constant 0 : index
    %0 = vector.load %arg1[%c0, %c0_0] : memref<256x8xbf16, #tpu.memory_space<vmem>>, vector<256x8xbf16>
    %c0_1 = arith.constant 0 : index
    %c0_2 = arith.constant 0 : index
    %1 = vector.load %arg2[%c0_1, %c0_2] : memref<8x4xbf16, #tpu.memory_space<vmem>>, vector<8x4xbf16>
    %cst = arith.constant dense<0.000000e+00> : vector<256x4xf32>
    %2 = tpu.matmul %0, %1, %cst {dimension_numbers = #tpu.dot_dimension_numbers<[1], [0], [0], [1], [0, 0, 1, 1], [], []>} : vector<256x8xbf16>, vector<8x4xbf16>, vector<256x4xf32> -> vector<256x4xf32>
    %c0_3 = arith.constant 0 : index
    %c0_4 = arith.constant 0 : index
    %3 = vector.load %arg3[%c0_3, %c0_4] : memref<1x4xf32, #tpu.memory_space<vmem>>, vector<1x4xf32>
    %4 = vector.broadcast %3 : vector<1x4xf32> to vector<256x4xf32>
    %5 = arith.mulf %2, %4 : vector<256x4xf32>
    %c0_5 = arith.constant 0 : index
    %c0_6 = arith.constant 0 : index
    %6 = vector.load %arg4[%c0_5, %c0_6] : memref<1x4xf32, #tpu.memory_space<vmem>>, vector<1x4xf32>
    %7 = vector.broadcast %6 : vector<1x4xf32> to vector<256x4xf32>
    %8 = arith.addf %5, %7 : vector<256x4xf32>
    %cst_7 = arith.constant 0.000000e+00 : f32
    %9 = vector.broadcast %cst_7 : f32 to vector<256x4xf32>
    %10 = arith.maximumf %8, %9 : vector<256x4xf32>
    %11 = arith.truncf %10 : vector<256x4xf32> to vector<256x4xbf16>
    %c0_8 = arith.constant 0 : index
    %c0_9 = arith.constant 0 : index
    %12 = vector.load %arg5[%c0_8, %c0_9] : memref<256x4xbf16, #tpu.memory_space<vmem>>, vector<256x4xbf16>
    tpu.vector_store %arg5[%c0_8, %c0_9], %11 {strides = array<i32>} : memref<256x4xbf16, #tpu.memory_space<vmem>>, vector<256x4xbf16>,
    return
  }
  func.func @transform_0(%arg0: i32) -> (i32, i32) {
    %c0_i32 = arith.constant 0 : i32
    %c0_i32_0 = arith.constant 0 : i32
    return %arg0, %c0_i32 : i32, i32
  }
  func.func @transform_1(%arg0: i32) -> (i32, i32) {
    %c0_i32 = arith.constant 0 : i32
    %c0_i32_0 = arith.constant 0 : i32
    %c0_i32_1 = arith.constant 0 : i32
    return %c0_i32, %c0_i32_0 : i32, i32
  }
  func.func @transform_2(%arg0: i32) -> (i32, i32) {
    %c0_i32 = arith.constant 0 : i32
    %c0_i32_0 = arith.constant 0 : i32
    %c0_i32_1 = arith.constant 0 : i32
    return %c0_i32, %c0_i32_0 : i32, i32
  }
  func.func @transform_3(%arg0: i32) -> (i32, i32) {
    %c0_i32 = arith.constant 0 : i32
    %c0_i32_0 = arith.constant 0 : i32
    %c0_i32_1 = arith.constant 0 : i32
    return %c0_i32, %c0_i32_0 : i32, i32
  }
  func.func @transform_4(%arg0: i32) -> (i32, i32) {
    %c0_i32 = arith.constant 0 : i32
    %c0_i32_0 = arith.constant 0 : i32
    return %arg0, %c0_i32 : i32, i32
  }
}

module attributes {stable_mosaic.version = 11 : i64} {
  func.func @_conv1x1_bn_add_relu_kernel(%arg0: i32, %arg1: memref<256x4xbf16, #tpu.memory_space<vmem>>, %arg2: memref<4x8xbf16, #tpu.memory_space<vmem>>, %arg3: memref<1x8xf32, #tpu.memory_space<vmem>>, %arg4: memref<1x8xf32, #tpu.memory_space<vmem>>, %arg5: memref<256x8xbf16, #tpu.memory_space<vmem>>, %arg6: memref<256x8xbf16, #tpu.memory_space<vmem>>) attributes {dimension_semantics = [#tpu.dimension_semantics<parallel>], iteration_bounds = array<i64: 2>, scalar_prefetch = 0 : i64, scratch_operands = 0 : i64, tpu.core_type = #tpu.core_type<tc>, window_params = [{transform_indices = @transform_0, window_bounds = array<i64: 256, 4>}, {pipeline_mode = #tpu.pipeline_mode<synchronous>, transform_indices = @transform_1, window_bounds = array<i64: 4, 8>}, {pipeline_mode = #tpu.pipeline_mode<synchronous>, transform_indices = @transform_2, window_bounds = array<i64: 1, 8>}, {pipeline_mode = #tpu.pipeline_mode<synchronous>, transform_indices = @transform_3, window_bounds = array<i64: 1, 8>}, {transform_indices = @transform_4, window_bounds = array<i64: 256, 8>}, {transform_indices = @transform_5, window_bounds = array<i64: 256, 8>}]} {
    %c0 = arith.constant 0 : index
    %c0_0 = arith.constant 0 : index
    %0 = vector.load %arg1[%c0, %c0_0] : memref<256x4xbf16, #tpu.memory_space<vmem>>, vector<256x4xbf16>
    %c0_1 = arith.constant 0 : index
    %c0_2 = arith.constant 0 : index
    %1 = vector.load %arg2[%c0_1, %c0_2] : memref<4x8xbf16, #tpu.memory_space<vmem>>, vector<4x8xbf16>
    %cst = arith.constant dense<0.000000e+00> : vector<256x8xf32>
    %2 = tpu.matmul %0, %1, %cst {dimension_numbers = #tpu.dot_dimension_numbers<[1], [0], [0], [1], [0, 0, 1, 1], [], []>} : vector<256x4xbf16>, vector<4x8xbf16>, vector<256x8xf32> -> vector<256x8xf32>
    %c0_3 = arith.constant 0 : index
    %c0_4 = arith.constant 0 : index
    %3 = vector.load %arg3[%c0_3, %c0_4] : memref<1x8xf32, #tpu.memory_space<vmem>>, vector<1x8xf32>
    %4 = vector.broadcast %3 : vector<1x8xf32> to vector<256x8xf32>
    %5 = arith.mulf %2, %4 : vector<256x8xf32>
    %c0_5 = arith.constant 0 : index
    %c0_6 = arith.constant 0 : index
    %6 = vector.load %arg4[%c0_5, %c0_6] : memref<1x8xf32, #tpu.memory_space<vmem>>, vector<1x8xf32>
    %7 = vector.broadcast %6 : vector<1x8xf32> to vector<256x8xf32>
    %8 = arith.addf %5, %7 : vector<256x8xf32>
    %c0_7 = arith.constant 0 : index
    %c0_8 = arith.constant 0 : index
    %9 = vector.load %arg5[%c0_7, %c0_8] : memref<256x8xbf16, #tpu.memory_space<vmem>>, vector<256x8xbf16>
    %10 = arith.extf %9 : vector<256x8xbf16> to vector<256x8xf32>
    %11 = arith.addf %8, %10 : vector<256x8xf32>
    %cst_9 = arith.constant 0.000000e+00 : f32
    %12 = vector.broadcast %cst_9 : f32 to vector<256x8xf32>
    %13 = arith.maximumf %11, %12 : vector<256x8xf32>
    %14 = arith.truncf %13 : vector<256x8xf32> to vector<256x8xbf16>
    %c0_10 = arith.constant 0 : index
    %c0_11 = arith.constant 0 : index
    %15 = vector.load %arg6[%c0_10, %c0_11] : memref<256x8xbf16, #tpu.memory_space<vmem>>, vector<256x8xbf16>
    tpu.vector_store %arg6[%c0_10, %c0_11], %14 {strides = array<i32>} : memref<256x8xbf16, #tpu.memory_space<vmem>>, vector<256x8xbf16>,
    return
  }
  func.func @transform_0(%arg0: i32) -> (i32, i32) {
    %c0_i32 = arith.constant 0 : i32
    %c0_i32_0 = arith.constant 0 : i32
    return %arg0, %c0_i32 : i32, i32
  }
  func.func @transform_1(%arg0: i32) -> (i32, i32) {
    %c0_i32 = arith.constant 0 : i32
    %c0_i32_0 = arith.constant 0 : i32
    %c0_i32_1 = arith.constant 0 : i32
    return %c0_i32, %c0_i32_0 : i32, i32
  }
  func.func @transform_2(%arg0: i32) -> (i32, i32) {
    %c0_i32 = arith.constant 0 : i32
    %c0_i32_0 = arith.constant 0 : i32
    %c0_i32_1 = arith.constant 0 : i32
    return %c0_i32, %c0_i32_0 : i32, i32
  }
  func.func @transform_3(%arg0: i32) -> (i32, i32) {
    %c0_i32 = arith.constant 0 : i32
    %c0_i32_0 = arith.constant 0 : i32
    %c0_i32_1 = arith.constant 0 : i32
    return %c0_i32, %c0_i32_0 : i32, i32
  }
  func.func @transform_4(%arg0: i32) -> (i32, i32) {
    %c0_i32 = arith.constant 0 : i32
    %c0_i32_0 = arith.constant 0 : i32
    return %arg0, %c0_i32 : i32, i32
  }
  func.func @transform_5(%arg0: i32) -> (i32, i32) {
    %c0_i32 = arith.constant 0 : i32
    %c0_i32_0 = arith.constant 0 : i32
    return %arg0, %c0_i32 : i32, i32
  }
}

</mosaic_0001>

<llo_original>
// kernel: group_forward_jit.6
$region0: #{group_forward_jit.6}
  #allocation0 [shape = 'u32[]', space=smem, size = 0x4, offset = 0x4, fixed_abs, tag = 'smem constant byte address 0x4 - core index']
  #allocation1 [shape = 'u32[144,128]{1,0:T(1,128)}', space=vmem, size = 0x12000, scoped, tag = 'internal scratch']
  %s0 = inlined_call_operand.vmem [shape: bf16[512,4], index: 0, kind: input, shape index: {}]
  %s1 = inlined_call_operand.vmem [shape: bf16[4,4], index: 1, kind: input, shape index: {}]
  %s2 = inlined_call_operand.vmem [shape: f32[1,4], index: 2, kind: input, shape index: {}]
  %s3 = inlined_call_operand.vmem [shape: f32[1,4], index: 3, kind: input, shape index: {}]
  %s4 = inlined_call_operand.vmem [shape: bf16[512,4], index: 4, kind: output, shape index: {}]
  %s5 = sld [smem:[#allocation0]]
  $region49: #{group_forward_jit.6} parent=0
    _
  %s7 = ssub.s32 1, %s5
  %s8 = scalar_select 0, %s7, %s5
  loop: start=0, step=1, limit=4
  $region2: #{group_forward_jit.6} parent=0 // loop_pre_header
    _
  $region3: #{group_forward_jit.6} parent=0 // loop_header
    %s10 = sphi 0, %s14
    %p11 = scmp.ge.s32.totalorder %s10, 4
    %s20 = sphi 0, %s22
    %s23 = sphi 0, %s20
    %s24 = sphi 0, %s23
    %s40 = sphi 0, %s24
    %s44 = sphi 0, %s44
    %s46 = sphi 0, %s44
    %s47 = sphi 0, %s46
    %s61 = sphi 0, %s47
    %s65 = sphi 0, %s65
    %s67 = sphi 0, %s65
    %s68 = sphi 0, %s67
    %s82 = sphi 0, %s68
    %s86 = sphi 0, %s86
    %s88 = sphi 0, %s86
    %s89 = sphi 0, %s88
    %s103 = sphi 0, %s89
    %s109 = sphi 0, %s111
    %s112 = sphi 0, %s109
    %s113 = sphi 0, %s112
    %s129 = sphi 0, %s113
  $region4: #{group_forward_jit.6} parent=0 // loop_header_branch
    %13 = sbr.rel (%p11) target = $region8
  $region5: #{group_forward_jit.6} parent=0 // loop_body
    %s15 = ssub.s32 %s10, 1
    %s16 = ssub.s32 %s10, 2
    %s17 = sadd.s32 %s10, 1
    %s18 = ssub.s32 %s10, %s17
    %p19 = scmp.eq.s32.totalorder %s18, 0
    %s21 = sadd.s32 %s20, 1
    %s22 = scalar_select %p19, %s20, %s21
    %p25 = pneg %p19
    %p26 = scmp.eq.s32.totalorder %s10, 1
    %p27 = por %p25, %p26
    %p28 = scmp.ne.s32.totalorder %s20, %s23
    %p29 = scmp.eq.s32.totalorder %s10, 0
    %p30 = por %p28, %p29
    %p31 = scmp.ne.s32.totalorder %s20, %s23
    %p32 = scmp.eq.s32.totalorder %s15, 1
    %p33 = por %p31, %p32
    %p34 = scmp.ne.s32.totalorder %s23, %s24
    %p35 = scmp.eq.s32.totalorder %s15, 0
    %p36 = por %p34, %p35
    %p37 = scmp.ne.s32.totalorder %s23, %s24
    %p38 = scmp.eq.s32.totalorder %s16, 1
    %p39 = por %p37, %p38
    %p41 = scmp.ne.s32.totalorder %s24, %s40
    %p42 = scmp.eq.s32.totalorder %s16, 0
    %p43 = por %p41, %p42
    %s45 = sadd.s32 %s44, 1
    %p48 = scmp.eq.s32.totalorder %s10, 1
    %p49 = scmp.ne.s32.totalorder %s44, %s46
    %p50 = scmp.eq.s32.totalorder %s10, 0
    %p51 = por %p49, %p50
    %p52 = scmp.ne.s32.totalorder %s44, %s46
    %p53 = scmp.eq.s32.totalorder %s15, 1
    %p54 = por %p52, %p53
    %p55 = scmp.ne.s32.totalorder %s46, %s47
    %p56 = scmp.eq.s32.totalorder %s15, 0
    %p57 = por %p55, %p56
    %p58 = scmp.ne.s32.totalorder %s46, %s47
    %p59 = scmp.eq.s32.totalorder %s16, 1
    %p60 = por %p58, %p59
    %p62 = scmp.ne.s32.totalorder %s47, %s61
    %p63 = scmp.eq.s32.totalorder %s16, 0
    %p64 = por %p62, %p63
    %s66 = sadd.s32 %s65, 1
    %p69 = scmp.eq.s32.totalorder %s10, 1
    %p70 = scmp.ne.s32.totalorder %s65, %s67
    %p71 = scmp.eq.s32.totalorder %s10, 0
    %p72 = por %p70, %p71
    %p73 = scmp.ne.s32.totalorder %s65, %s67
    %p74 = scmp.eq.s32.totalorder %s15, 1
    %p75 = por %p73, %p74
    %p76 = scmp.ne.s32.totalorder %s67, %s68
    %p77 = scmp.eq.s32.totalorder %s15, 0
    %p78 = por %p76, %p77
    %p79 = scmp.ne.s32.totalorder %s67, %s68
    %p80 = scmp.eq.s32.totalorder %s16, 1
    %p81 = por %p79, %p80
    %p83 = scmp.ne.s32.totalorder %s68, %s82
    %p84 = scmp.eq.s32.totalorder %s16, 0
    %p85 = por %p83, %p84
    %s87 = sadd.s32 %s86, 1
    %p90 = scmp.eq.s32.totalorder %s10, 1
    %p91 = scmp.ne.s32.totalorder %s86, %s88
    %p92 = scmp.eq.s32.totalorder %s10, 0
    %p93 = por %p91, %p92
    %p94 = scmp.ne.s32.totalorder %s86, %s88
    %p95 = scmp.eq.s32.totalorder %s15, 1
    %p96 = por %p94, %p95
    %p97 = scmp.ne.s32.totalorder %s88, %s89
    %p98 = scmp.eq.s32.totalorder %s15, 0
    %p99 = por %p97, %p98
    %p100 = scmp.ne.s32.totalorder %s88, %s89
    %p101 = scmp.eq.s32.totalorder %s16, 1
    %p102 = por %p100, %p101
    %p104 = scmp.ne.s32.totalorder %s89, %s103
    %p105 = scmp.eq.s32.totalorder %s16, 0
    %p106 = por %p104, %p105
    %s107 = ssub.s32 %s10, %s17
    %p108 = scmp.eq.s32.totalorder %s107, 0
    %s110 = sadd.s32 %s109, 1
    %s111 = scalar_select %p108, %s109, %s110
    %p114 = pneg %p108
    %p115 = scmp.eq.s32.totalorder %s10, 1
    %p116 = por %p114, %p115
    %p117 = scmp.ne.s32.totalorder %s109, %s112
    %p118 = scmp.eq.s32.totalorder %s10, 0
    %p119 = por %p117, %p118
    %p120 = scmp.ne.s32.totalorder %s109, %s112
    %p121 = scmp.eq.s32.totalorder %s15, 1
    %p122 = por %p120, %p121
    %p123 = scmp.ne.s32.totalorder %s112, %s113
    %p124 = scmp.eq.s32.totalorder %s15, 0
    %p125 = por %p123, %p124
    %p126 = scmp.ne.s32.totalorder %s112, %s113
    %p127 = scmp.eq.s32.totalorder %s16, 1
    %p128 = por %p126, %p127
    %p130 = scmp.ne.s32.totalorder %s113, %s129
    %p131 = scmp.eq.s32.totalorder %s16, 0
    %p132 = por %p130, %p131
    %p133 = scmp.le.s32.totalorder 1, %s10
    %p134 = scmp.lt.s32.totalorder %s10, 3
    %p135 = pnand %p133, %p134
    %p136 = pneg %p135
    // Predicated region
    $region9: #{group_forward_jit.6} parent=5 // pred_check
      _
    $region10: #{group_forward_jit.6} parent=5 // pred_check_branch
      %138 = sbr.rel (%p135) target = $region12
    $region11: #{group_forward_jit.6} parent=5 // pred_region
      %s139 = ssub.s32 %s10, 1
      // Predicated region
      $region13: #{group_forward_jit.6} parent=11 // pred_check
        %p140 = pneg %p57
      $region14: #{group_forward_jit.6} parent=11 // pred_check_branch
        %142 = sbr.rel (%p140) target = $region16
      $region15: #{group_forward_jit.6} parent=11 // pred_region
        _
      $region16: #{group_forward_jit.6} parent=11 // pred_fallthru
        _
      // Predicated region
      $region17: #{group_forward_jit.6} parent=11 // pred_check
        %p143 = pneg %p78
      $region18: #{group_forward_jit.6} parent=11 // pred_check_branch
        %145 = sbr.rel (%p143) target = $region20
      $region19: #{group_forward_jit.6} parent=11 // pred_region
        _
      $region20: #{group_forward_jit.6} parent=11 // pred_fallthru
        _
      // Predicated region
      $region21: #{group_forward_jit.6} parent=11 // pred_check
        %p146 = pneg %p99
      $region22: #{group_forward_jit.6} parent=11 // pred_check_branch
        %148 = sbr.rel (%p146) target = $region24
      $region23: #{group_forward_jit.6} parent=11 // pred_region
        _
      $region24: #{group_forward_jit.6} parent=11 // pred_fallthru
        _
    $region12: #{group_forward_jit.6} parent=5 // pred_fallthru
      _
    %p149 = scmp.lt.s32.totalorder %s10, 2
    // Predicated region
    $region25: #{group_forward_jit.6} parent=5 // pred_check
      %p150 = pneg %p149
    $region26: #{group_forward_jit.6} parent=5 // pred_check_branch
      %152 = sbr.rel (%p150) target = $region28
    $region27: #{group_forward_jit.6} parent=5 // pred_region
      // Predicated region
      $region29: #{group_forward_jit.6} parent=27 // pred_check
        %p153 = pneg %p30
      $region30: #{group_forward_jit.6} parent=27 // pred_check_branch
        %155 = sbr.rel (%p153) target = $region32
      $region31: #{group_forward_jit.6} parent=27 // pred_region
        %s156 = smul.u32 32, %s10
        %p157 = scmp.lt.s32.totalorder %s156, 63
        %s158 = scalar_select %p157, %s156, 63
        %s159 = smul.addr %s158, 4
        %s160 = scalar_lea.vmem %s0, %s159
        %s161 = smul.u32 32, %s10
      $region32: #{group_forward_jit.6} parent=27 // pred_fallthru
        _
    $region28: #{group_forward_jit.6} parent=5 // pred_fallthru
      _
    %p162 = scmp.le.s32.totalorder 1, %s10
    %p163 = scmp.lt.s32.totalorder %s10, 3
    %p164 = pnand %p162, %p163
    %p165 = pneg %p164
    // Predicated region
    $region33: #{group_forward_jit.6} parent=5 // pred_check
      _
    $region34: #{group_forward_jit.6} parent=5 // pred_check_branch
      %167 = sbr.rel (%p164) target = $region36
    $region35: #{group_forward_jit.6} parent=5 // pred_region
      %s168 = ssub.s32 %s10, 1
      %s169 = smul.u32 32, %s15
      %p170 = scmp.lt.s32.totalorder %s169, 63
      %s171 = scalar_select %p170, %s169, 63
      %s172 = smul.addr %s171, 4
      %s173 = scalar_lea.vmem %s0, %s172
      %p174 = pneg %p36
      %p175 = pneg %p33
      %p176 = pneg %p57
      %p177 = pneg %p54
      %p178 = pneg %p78
      %p179 = pneg %p75
      %p180 = pneg %p99
      %p181 = pneg %p96
      %p182 = pneg %p125
      %p183 = pneg %p122
      %s184 = smul.u32 32, %s15
      %p185 = scmp.lt.s32.totalorder %s184, 63
      %s186 = scalar_select %p185, %s184, 63
      %s187 = smul.addr %s186, 4
      %s188 = scalar_lea.vmem %s4, %s187
      %s189 = smul.u32 32, %s15
      %p190 = scmp.lt.s32.totalorder %s189, 63
      %s191 = scalar_select %p190, %s189, 63
      %s192 = smul.addr %s191, 4
      %s193 = scalar_lea.vmem %s0, %s192
      %s194 = smul.u32 32, %s15
      %s195 = smul.u32 32, %s15
      %p196 = scmp.lt.s32.totalorder %s195, 63
      %s197 = scalar_select %p196, %s195, 63
      %s198 = smul.addr %s197, 4
      %s199 = scalar_lea.vmem %s4, %s198
      %s200 = smul.u32 32, %s15
      %v202 = vld [vmem:[%s193] sm:$0xf]
      %v203 = vld [vmem:[%s193 + $0x4] sm:$0xf]
      %v204 = vld [vmem:[%s193 + $0x8] sm:$0xf]
      %v205 = vld [vmem:[%s193 + $0xc] sm:$0xf]
      %v206 = vld [vmem:[%s193 + $0x10] sm:$0xf]
      %v207 = vld [vmem:[%s193 + $0x14] sm:$0xf]
      %v208 = vld [vmem:[%s193 + $0x18] sm:$0xf]
      %v209 = vld [vmem:[%s193 + $0x1c] sm:$0xf]
      %v210 = vld [vmem:[%s193 + $0x20] sm:$0xf]
      %v211 = vld [vmem:[%s193 + $0x24] sm:$0xf]
      %v212 = vld [vmem:[%s193 + $0x28] sm:$0xf]
      %v213 = vld [vmem:[%s193 + $0x2c] sm:$0xf]
      %v214 = vld [vmem:[%s193 + $0x30] sm:$0xf]
      %v215 = vld [vmem:[%s193 + $0x34] sm:$0xf]
      %v216 = vld [vmem:[%s193 + $0x38] sm:$0xf]
      %v217 = vld [vmem:[%s193 + $0x3c] sm:$0xf]
      %v218 = vld [vmem:[%s193 + $0x40] sm:$0xf]
      %v219 = vld [vmem:[%s193 + $0x44] sm:$0xf]
      %v220 = vld [vmem:[%s193 + $0x48] sm:$0xf]
      %v221 = vld [vmem:[%s193 + $0x4c] sm:$0xf]
      %v222 = vld [vmem:[%s193 + $0x50] sm:$0xf]
      %v223 = vld [vmem:[%s193 + $0x54] sm:$0xf]
      %v224 = vld [vmem:[%s193 + $0x58] sm:$0xf]
      %v225 = vld [vmem:[%s193 + $0x5c] sm:$0xf]
      %v226 = vld [vmem:[%s193 + $0x60] sm:$0xf]
      %v227 = vld [vmem:[%s193 + $0x64] sm:$0xf]
      %v228 = vld [vmem:[%s193 + $0x68] sm:$0xf]
      %v229 = vld [vmem:[%s193 + $0x6c] sm:$0xf]
      %v230 = vld [vmem:[%s193 + $0x70] sm:$0xf]
      %v231 = vld [vmem:[%s193 + $0x74] sm:$0xf]
      %v232 = vld [vmem:[%s193 + $0x78] sm:$0xf]
      %v233 = vld [vmem:[%s193 + $0x7c] sm:$0xf]
      %v234 = vld [vmem:[%s1] sm:$0x3]
      %v267 = vunpack.c.l.b16 %v202
      %v268 = vunpack.c.l.b16 %v203
      %v269 = vunpack.c.l.b16 %v204
      %v270 = vunpack.c.l.b16 %v205
      %v271 = vunpack.c.l.b16 %v206
      %v272 = vunpack.c.l.b16 %v207
      %v273 = vunpack.c.l.b16 %v208
      %v274 = vunpack.c.l.b16 %v209
      %v275 = vunpack.c.l.b16 %v210
      %v276 = vunpack.c.l.b16 %v211
      %v277 = vunpack.c.l.b16 %v212
      %v278 = vunpack.c.l.b16 %v213
      %v279 = vunpack.c.l.b16 %v214
      %v280 = vunpack.c.l.b16 %v215
      %v281 = vunpack.c.l.b16 %v216
      %v282 = vunpack.c.l.b16 %v217
      %v283 = vunpack.c.l.b16 %v218
      %v284 = vunpack.c.l.b16 %v219
      %v285 = vunpack.c.l.b16 %v220
      %v286 = vunpack.c.l.b16 %v221
      %v287 = vunpack.c.l.b16 %v222
      %v288 = vunpack.c.l.b16 %v223
      %v289 = vunpack.c.l.b16 %v224
      %v290 = vunpack.c.l.b16 %v225
      %v291 = vunpack.c.l.b16 %v226
      %v292 = vunpack.c.l.b16 %v227
      %v293 = vunpack.c.l.b16 %v228
      %v294 = vunpack.c.l.b16 %v229
      %v295 = vunpack.c.l.b16 %v230
      %v296 = vunpack.c.l.b16 %v231
      %v297 = vunpack.c.l.b16 %v232
      %v298 = vunpack.c.l.b16 %v233
      %v299 = vpack.c.b16 %v268, %v267
      %v300 = vpack.c.b16 %v270, %v269
      %v301 = vpack.c.b16 %v272, %v271
      %v302 = vpack.c.b16 %v274, %v273
      %v303 = vpack.c.b16 %v276, %v275
      %v304 = vpack.c.b16 %v278, %v277
      %v305 = vpack.c.b16 %v280, %v279
      %v306 = vpack.c.b16 %v282, %v281
      %v307 = vpack.c.b16 %v284, %v283
      %v308 = vpack.c.b16 %v286, %v285
      %v309 = vpack.c.b16 %v288, %v287
      %v310 = vpack.c.b16 %v290, %v289
      %v311 = vpack.c.b16 %v292, %v291
      %v312 = vpack.c.b16 %v294, %v293
      %v313 = vpack.c.b16 %v296, %v295
      %v314 = vpack.c.b16 %v298, %v297
      %vm315 = vcmask 31744
      %v317 = vsel %vm315, %v299, 0
      %v320 = vsel %vm315, %v300, 0
      %v323 = vsel %vm315, %v301, 0
      %v326 = vsel %vm315, %v302, 0
      %v329 = vsel %vm315, %v303, 0
      %v332 = vsel %vm315, %v304, 0
      %v335 = vsel %vm315, %v305, 0
      %v338 = vsel %vm315, %v306, 0
      %v341 = vsel %vm315, %v307, 0
      %v344 = vsel %vm315, %v308, 0
      %v347 = vsel %vm315, %v309, 0
      %v350 = vsel %vm315, %v310, 0
      %v353 = vsel %vm315, %v311, 0
      %v356 = vsel %vm315, %v312, 0
      %v359 = vsel %vm315, %v313, 0
      %v362 = vsel %vm315, %v314, 0
      %vm364 = vcmask 1041408
      %v366 = vsel %vm364, %v234, 0
      %368 = vmatprep.subr.bf16.mxu0 0
      %369 = vmatpush1.bf16.msra.mxu0 %v366
      %370 = vmatprep.subr.bf16.mxu0 0
      %371 = vmatpush1.bf16.msra.mxu0 0
      %372 = vmatprep.subr.bf16.mxu0 0
      %373 = vmatpush1.bf16.msra.mxu0 0
      %374 = vmatprep.subr.bf16.mxu0 0
      %375 = vmatpush1.bf16.msra.mxu0 0
      %376 = vmatprep.subr.bf16.mxu0 0
      %377 = vmatpush1.bf16.msra.mxu0 0
      %378 = vmatprep.subr.bf16.mxu0 0
      %379 = vmatpush1.bf16.msra.mxu0 0
      %380 = vmatprep.subr.bf16.mxu0 0
      %381 = vmatpush1.bf16.msra.mxu0 0
      %382 = vmatprep.subr.bf16.mxu0 0
      %383 = vmatpush1.bf16.msra.mxu0 0
      %384 = vmatprep.subr.bf16.mxu0 0
      %385 = vmatpush1.bf16.msra.mxu0 0
      %386 = vmatprep.subr.bf16.mxu0 0
      %387 = vmatpush1.bf16.msra.mxu0 0
      %388 = vmatprep.subr.bf16.mxu0 0
      %389 = vmatpush1.bf16.msra.mxu0 0
      %390 = vmatprep.subr.bf16.mxu0 0
      %391 = vmatpush1.bf16.msra.mxu0 0
      %392 = vmatprep.subr.bf16.mxu0 0
      %393 = vmatpush1.bf16.msra.mxu0 0
      %394 = vmatprep.subr.bf16.mxu0 0
      %395 = vmatpush1.bf16.msra.mxu0 0
      %396 = vmatprep.subr.bf16.mxu0 0
      %397 = vmatpush1.bf16.msra.mxu0 0
      %398 = vmatprep.subr.bf16.mxu0 0
      %399 = vmatpush1.bf16.msra.mxu0 0
      %400 = vmatprep.mubr.bf16.mxu0 0
      %401 = vmatmul.mubr.bf16.gmra.mrb[0].mxu0 %v317
      %v402 = vpop.f32.mrb[0].mxu0
      %v403 = vadd.f32 0.0, %v402
      %v404 = vpop.f32.mrb[0].mxu0
      %v405 = vpop.f32.mrb[0].mxu0
      %v406 = vadd.f32 0.0, %v405
      %v407 = vpop.f32.mrb[0].mxu0
      %408 = vmatprep.mubr.bf16.mxu0 0
      %409 = vmatmul.mubr.bf16.gmra.mrb[0].mxu0 %v320
      %v410 = vpop.f32.mrb[0].mxu0
      %v411 = vadd.f32 0.0, %v410
      %v412 = vpop.f32.mrb[0].mxu0
      %v413 = vpop.f32.mrb[0].mxu0
      %v414 = vadd.f32 0.0, %v413
      %v415 = vpop.f32.mrb[0].mxu0
      %416 = vmatprep.mubr.bf16.mxu0 0
      %417 = vmatmul.mubr.bf16.gmra.mrb[0].mxu0 %v323
      %v418 = vpop.f32.mrb[0].mxu0
      %v419 = vadd.f32 0.0, %v418
      %v420 = vpop.f32.mrb[0].mxu0
      %v421 = vpop.f32.mrb[0].mxu0
      %v422 = vadd.f32 0.0, %v421
      %v423 = vpop.f32.mrb[0].mxu0
      %424 = vmatprep.mubr.bf16.mxu0 0
      %425 = vmatmul.mubr.bf16.gmra.mrb[0].mxu0 %v326
      %v426 = vpop.f32.mrb[0].mxu0
      %v427 = vadd.f32 0.0, %v426
      %v428 = vpop.f32.mrb[0].mxu0
      %v429 = vpop.f32.mrb[0].mxu0
      %v430 = vadd.f32 0.0, %v429
      %v431 = vpop.f32.mrb[0].mxu0
      %432 = vmatprep.mubr.bf16.mxu0 0
      %433 = vmatmul.mubr.bf16.gmra.mrb[0].mxu0 %v329
      %v434 = vpop.f32.mrb[0].mxu0
      %v435 = vadd.f32 0.0, %v434
      %v436 = vpop.f32.mrb[0].mxu0
      %v437 = vpop.f32.mrb[0].mxu0
      %v438 = vadd.f32 0.0, %v437
      %v439 = vpop.f32.mrb[0].mxu0
      %440 = vmatprep.mubr.bf16.mxu0 0
      %441 = vmatmul.mubr.bf16.gmra.mrb[0].mxu0 %v332
      %v442 = vpop.f32.mrb[0].mxu0
      %v443 = vadd.f32 0.0, %v442
      %v444 = vpop.f32.mrb[0].mxu0
      %v445 = vpop.f32.mrb[0].mxu0
      %v446 = vadd.f32 0.0, %v445
      %v447 = vpop.f32.mrb[0].mxu0
      %448 = vmatprep.mubr.bf16.mxu0 0
      %449 = vmatmul.mubr.bf16.gmra.mrb[0].mxu0 %v335
      %v450 = vpop.f32.mrb[0].mxu0
      %v451 = vadd.f32 0.0, %v450
      %v452 = vpop.f32.mrb[0].mxu0
      %v453 = vpop.f32.mrb[0].mxu0
      %v454 = vadd.f32 0.0, %v453
      %v455 = vpop.f32.mrb[0].mxu0
      %456 = vmatprep.mubr.bf16.mxu0 0
      %457 = vmatmul.mubr.bf16.gmra.mrb[0].mxu0 %v338
      %v458 = vpop.f32.mrb[0].mxu0
      %v459 = vadd.f32 0.0, %v458
      %v460 = vpop.f32.mrb[0].mxu0
      %v461 = vpop.f32.mrb[0].mxu0
      %v462 = vadd.f32 0.0, %v461
      %v463 = vpop.f32.mrb[0].mxu0
      %464 = vmatprep.mubr.bf16.mxu0 0
      %465 = vmatmul.mubr.bf16.gmra.mrb[0].mxu0 %v341
      %v466 = vpop.f32.mrb[0].mxu0
      %v467 = vadd.f32 0.0, %v466
      %v468 = vpop.f32.mrb[0].mxu0
      %v469 = vpop.f32.mrb[0].mxu0
      %v470 = vadd.f32 0.0, %v469
      %v471 = vpop.f32.mrb[0].mxu0
      %472 = vmatprep.mubr.bf16.mxu0 0
      %473 = vmatmul.mubr.bf16.gmra.mrb[0].mxu0 %v344
      %v474 = vpop.f32.mrb[0].mxu0
      %v475 = vadd.f32 0.0, %v474
      %v476 = vpop.f32.mrb[0].mxu0
      %v477 = vpop.f32.mrb[0].mxu0
      %v478 = vadd.f32 0.0, %v477
      %v479 = vpop.f32.mrb[0].mxu0
      %480 = vmatprep.mubr.bf16.mxu0 0
      %481 = vmatmul.mubr.bf16.gmra.mrb[0].mxu0 %v347
      %v482 = vpop.f32.mrb[0].mxu0
      %v483 = vadd.f32 0.0, %v482
      %v484 = vpop.f32.mrb[0].mxu0
      %v485 = vpop.f32.mrb[0].mxu0
      %v486 = vadd.f32 0.0, %v485
      %v487 = vpop.f32.mrb[0].mxu0
      %488 = vmatprep.mubr.bf16.mxu0 0
      %489 = vmatmul.mubr.bf16.gmra.mrb[0].mxu0 %v350
      %v490 = vpop.f32.mrb[0].mxu0
      %v491 = vadd.f32 0.0, %v490
      %v492 = vpop.f32.mrb[0].mxu0
      %v493 = vpop.f32.mrb[0].mxu0
      %v494 = vadd.f32 0.0, %v493
      %v495 = vpop.f32.mrb[0].mxu0
      %496 = vmatprep.mubr.bf16.mxu0 0
      %497 = vmatmul.mubr.bf16.gmra.mrb[0].mxu0 %v353
      %v498 = vpop.f32.mrb[0].mxu0
      %v499 = vadd.f32 0.0, %v498
      %v500 = vpop.f32.mrb[0].mxu0
      %v501 = vpop.f32.mrb[0].mxu0
      %v502 = vadd.f32 0.0, %v501
      %v503 = vpop.f32.mrb[0].mxu0
      %504 = vmatprep.mubr.bf16.mxu0 0
      %505 = vmatmul.mubr.bf16.gmra.mrb[0].mxu0 %v356
      %v506 = vpop.f32.mrb[0].mxu0
      %v507 = vadd.f32 0.0, %v506
      %v508 = vpop.f32.mrb[0].mxu0
      %v509 = vpop.f32.mrb[0].mxu0
      %v510 = vadd.f32 0.0, %v509
      %v511 = vpop.f32.mrb[0].mxu0
      %512 = vmatprep.mubr.bf16.mxu0 0
      %513 = vmatmul.mubr.bf16.gmra.mrb[0].mxu0 %v359
      %v514 = vpop.f32.mrb[0].mxu0
      %v515 = vadd.f32 0.0, %v514
      %v516 = vpop.f32.mrb[0].mxu0
      %v517 = vpop.f32.mrb[0].mxu0
      %v518 = vadd.f32 0.0, %v517
      %v519 = vpop.f32.mrb[0].mxu0
      %520 = vmatprep.mubr.bf16.mxu0 0
      %521 = vmatmul.mubr.bf16.gmra.mrb[0].mxu0 %v362
      %v522 = vpop.f32.mrb[0].mxu0
      %v523 = vadd.f32 0.0, %v522
      %v524 = vpop.f32.mrb[0].mxu0
      %v525 = vpop.f32.mrb[0].mxu0
      %v526 = vadd.f32 0.0, %v525
      %v527 = vpop.f32.mrb[0].mxu0
      %528 = vdwg.mxu0
      %v529 = vld [vmem:[%s2] sm:$0x1]
      %v531 = vlaneseq
      %v532 = vshrl.u32 %v531, 7
      %v533 = vsub.s32 0, %v532
      %v534 = vrot.slane %v529, %v533
      %v536 = vmul.f32 %v403, %v534
      %v537 = vmul.f32 %v406, %v534
      %v538 = vmul.f32 %v411, %v534
      %v539 = vmul.f32 %v414, %v534
      %v540 = vmul.f32 %v419, %v534
      %v541 = vmul.f32 %v422, %v534
      %v542 = vmul.f32 %v427, %v534
      %v543 = vmul.f32 %v430, %v534
      %v544 = vmul.f32 %v435, %v534
      %v545 = vmul.f32 %v438, %v534
      %v546 = vmul.f32 %v443, %v534
      %v547 = vmul.f32 %v446, %v534
      %v548 = vmul.f32 %v451, %v534
      %v549 = vmul.f32 %v454, %v534
      %v550 = vmul.f32 %v459, %v534
      %v551 = vmul.f32 %v462, %v534
      %v552 = vmul.f32 %v467, %v534
      %v553 = vmul.f32 %v470, %v534
      %v554 = vmul.f32 %v475, %v534
      %v555 = vmul.f32 %v478, %v534
      %v556 = vmul.f32 %v483, %v534
      %v557 = vmul.f32 %v486, %v534
      %v558 = vmul.f32 %v491, %v534
      %v559 = vmul.f32 %v494, %v534
      %v560 = vmul.f32 %v499, %v534
      %v561 = vmul.f32 %v502, %v534
      %v562 = vmul.f32 %v507, %v534
      %v563 = vmul.f32 %v510, %v534
      %v564 = vmul.f32 %v515, %v534
      %v565 = vmul.f32 %v518, %v534
      %v566 = vmul.f32 %v523, %v534
      %v567 = vmul.f32 %v526, %v534
      %v568 = vld [vmem:[%s3] sm:$0x1]
      %v570 = vlaneseq
      %v571 = vshrl.u32 %v570, 7
      %v572 = vsub.s32 0, %v571
      %v573 = vrot.slane %v568, %v572
      %v575 = vadd.f32 %v536, %v573
      %v576 = vadd.f32 %v537, %v573
      %v577 = vadd.f32 %v538, %v573
      %v578 = vadd.f32 %v539, %v573
      %v579 = vadd.f32 %v540, %v573
      %v580 = vadd.f32 %v541, %v573
      %v581 = vadd.f32 %v542, %v573
      %v582 = vadd.f32 %v543, %v573
      %v583 = vadd.f32 %v544, %v573
      %v584 = vadd.f32 %v545, %v573
      %v585 = vadd.f32 %v546, %v573
      %v586 = vadd.f32 %v547, %v573
      %v587 = vadd.f32 %v548, %v573
      %v588 = vadd.f32 %v549, %v573
      %v589 = vadd.f32 %v550, %v573
      %v590 = vadd.f32 %v551, %v573
      %v591 = vadd.f32 %v552, %v573
      %v592 = vadd.f32 %v553, %v573
      %v593 = vadd.f32 %v554, %v573
      %v594 = vadd.f32 %v555, %v573
      %v595 = vadd.f32 %v556, %v573
      %v596 = vadd.f32 %v557, %v573
      %v597 = vadd.f32 %v558, %v573
      %v598 = vadd.f32 %v559, %v573
      %v599 = vadd.f32 %v560, %v573
      %v600 = vadd.f32 %v561, %v573
      %v601 = vadd.f32 %v562, %v573
      %v602 = vadd.f32 %v563, %v573
      %v603 = vadd.f32 %v564, %v573
      %v604 = vadd.f32 %v565, %v573
      %v605 = vadd.f32 %v566, %v573
      %v606 = vadd.f32 %v567, %v573
      %v607 = vmax.f32 %v575, 0.0
      %v608 = vmax.f32 %v576, 0.0
      %v609 = vmax.f32 %v577, 0.0
      %v610 = vmax.f32 %v578, 0.0
      %v611 = vmax.f32 %v579, 0.0
      %v612 = vmax.f32 %v580, 0.0
      %v613 = vmax.f32 %v581, 0.0
      %v614 = vmax.f32 %v582, 0.0
      %v615 = vmax.f32 %v583, 0.0
      %v616 = vmax.f32 %v584, 0.0
      %v617 = vmax.f32 %v585, 0.0
      %v618 = vmax.f32 %v586, 0.0
      %v619 = vmax.f32 %v587, 0.0
      %v620 = vmax.f32 %v588, 0.0
      %v621 = vmax.f32 %v589, 0.0
      %v622 = vmax.f32 %v590, 0.0
      %v623 = vmax.f32 %v591, 0.0
      %v624 = vmax.f32 %v592, 0.0
      %v625 = vmax.f32 %v593, 0.0
      %v626 = vmax.f32 %v594, 0.0
      %v627 = vmax.f32 %v595, 0.0
      %v628 = vmax.f32 %v596, 0.0
      %v629 = vmax.f32 %v597, 0.0
      %v630 = vmax.f32 %v598, 0.0
      %v631 = vmax.f32 %v599, 0.0
      %v632 = vmax.f32 %v600, 0.0
      %v633 = vmax.f32 %v601, 0.0
      %v634 = vmax.f32 %v602, 0.0
      %v635 = vmax.f32 %v603, 0.0
      %v636 = vmax.f32 %v604, 0.0
      %v637 = vmax.f32 %v605, 0.0
      %v638 = vmax.f32 %v606, 0.0
      %v639 = vpack.c.bf16 %v608, %v607
      %v640 = vpack.c.bf16 %v610, %v609
      %v641 = vpack.c.bf16 %v612, %v611
      %v642 = vpack.c.bf16 %v614, %v613
      %v643 = vpack.c.bf16 %v616, %v615
      %v644 = vpack.c.bf16 %v618, %v617
      %v645 = vpack.c.bf16 %v620, %v619
      %v646 = vpack.c.bf16 %v622, %v621
      %v647 = vpack.c.bf16 %v624, %v623
      %v648 = vpack.c.bf16 %v626, %v625
      %v649 = vpack.c.bf16 %v628, %v627
      %v650 = vpack.c.bf16 %v630, %v629
      %v651 = vpack.c.bf16 %v632, %v631
      %v652 = vpack.c.bf16 %v634, %v633
      %v653 = vpack.c.bf16 %v636, %v635
      %v654 = vpack.c.bf16 %v638, %v637
      %v671 = vunpack.c.l.b16 %v639
      %v672 = vunpack.c.h.b16 %v639
      %v673 = vunpack.c.l.b16 %v640
      %v674 = vunpack.c.h.b16 %v640
      %v675 = vunpack.c.l.b16 %v641
      %v676 = vunpack.c.h.b16 %v641
      %v677 = vunpack.c.l.b16 %v642
      %v678 = vunpack.c.h.b16 %v642
      %v679 = vunpack.c.l.b16 %v643
      %v680 = vunpack.c.h.b16 %v643
      %v681 = vunpack.c.l.b16 %v644
      %v682 = vunpack.c.h.b16 %v644
      %v683 = vunpack.c.l.b16 %v645
      %v684 = vunpack.c.h.b16 %v645
      %v685 = vunpack.c.l.b16 %v646
      %v686 = vunpack.c.h.b16 %v646
      %v687 = vunpack.c.l.b16 %v647
      %v688 = vunpack.c.h.b16 %v647
      %v689 = vunpack.c.l.b16 %v648
      %v690 = vunpack.c.h.b16 %v648
      %v691 = vunpack.c.l.b16 %v649
      %v692 = vunpack.c.h.b16 %v649
      %v693 = vunpack.c.l.b16 %v650
      %v694 = vunpack.c.h.b16 %v650
      %v695 = vunpack.c.l.b16 %v651
      %v696 = vunpack.c.h.b16 %v651
      %v697 = vunpack.c.l.b16 %v652
      %v698 = vunpack.c.h.b16 %v652
      %v699 = vunpack.c.l.b16 %v653
      %v700 = vunpack.c.h.b16 %v653
      %v701 = vunpack.c.l.b16 %v654
      %v702 = vunpack.c.h.b16 %v654
      %v703 = vpack.c.b16 %v671, %v671
      %v704 = vpack.c.b16 %v672, %v672
      %v705 = vpack.c.b16 %v673, %v673
      %v706 = vpack.c.b16 %v674, %v674
      %v707 = vpack.c.b16 %v675, %v675
      %v708 = vpack.c.b16 %v676, %v676
      %v709 = vpack.c.b16 %v677, %v677
      %v710 = vpack.c.b16 %v678, %v678
      %v711 = vpack.c.b16 %v679, %v679
      %v712 = vpack.c.b16 %v680, %v680
      %v713 = vpack.c.b16 %v681, %v681
      %v714 = vpack.c.b16 %v682, %v682
      %v715 = vpack.c.b16 %v683, %v683
      %v716 = vpack.c.b16 %v684, %v684
      %v717 = vpack.c.b16 %v685, %v685
      %v718 = vpack.c.b16 %v686, %v686
      %v719 = vpack.c.b16 %v687, %v687
      %v720 = vpack.c.b16 %v688, %v688
      %v721 = vpack.c.b16 %v689, %v689
      %v722 = vpack.c.b16 %v690, %v690
      %v723 = vpack.c.b16 %v691, %v691
      %v724 = vpack.c.b16 %v692, %v692
      %v725 = vpack.c.b16 %v693, %v693
      %v726 = vpack.c.b16 %v694, %v694
      %v727 = vpack.c.b16 %v695, %v695
      %v728 = vpack.c.b16 %v696, %v696
      %v729 = vpack.c.b16 %v697, %v697
      %v730 = vpack.c.b16 %v698, %v698
      %v731 = vpack.c.b16 %v699, %v699
      %v732 = vpack.c.b16 %v700, %v700
      %v733 = vpack.c.b16 %v701, %v701
      %v734 = vpack.c.b16 %v702, %v702
      %vm767 = vcmask 27648
      %768 = vst.msk [vmem:[%s199] sm:$0xf] %vm767, %v703
      %769 = vst.msk [vmem:[%s199 + $0x4] sm:$0xf] %vm767, %v704
      %770 = vst.msk [vmem:[%s199 + $0x8] sm:$0xf] %vm767, %v705
      %771 = vst.msk [vmem:[%s199 + $0xc] sm:$0xf] %vm767, %v706
      %772 = vst.msk [vmem:[%s199 + $0x10] sm:$0xf] %vm767, %v707
      %773 = vst.msk [vmem:[%s199 + $0x14] sm:$0xf] %vm767, %v708
      %774 = vst.msk [vmem:[%s199 + $0x18] sm:$0xf] %vm767, %v709
      %775 = vst.msk [vmem:[%s199 + $0x1c] sm:$0xf] %vm767, %v710
      %776 = vst.msk [vmem:[%s199 + $0x20] sm:$0xf] %vm767, %v711
      %777 = vst.msk [vmem:[%s199 + $0x24] sm:$0xf] %vm767, %v712
      %778 = vst.msk [vmem:[%s199 + $0x28] sm:$0xf] %vm767, %v713
      %779 = vst.msk [vmem:[%s199 + $0x2c] sm:$0xf] %vm767, %v714
      %780 = vst.msk [vmem:[%s199 + $0x30] sm:$0xf] %vm767, %v715
      %781 = vst.msk [vmem:[%s199 + $0x34] sm:$0xf] %vm767, %v716
      %782 = vst.msk [vmem:[%s199 + $0x38] sm:$0xf] %vm767, %v717
      %783 = vst.msk [vmem:[%s199 + $0x3c] sm:$0xf] %vm767, %v718
      %784 = vst.msk [vmem:[%s199 + $0x40] sm:$0xf] %vm767, %v719
      %785 = vst.msk [vmem:[%s199 + $0x44] sm:$0xf] %vm767, %v720
      %786 = vst.msk [vmem:[%s199 + $0x48] sm:$0xf] %vm767, %v721
      %787 = vst.msk [vmem:[%s199 + $0x4c] sm:$0xf] %vm767, %v722
      %788 = vst.msk [vmem:[%s199 + $0x50] sm:$0xf] %vm767, %v723
      %789 = vst.msk [vmem:[%s199 + $0x54] sm:$0xf] %vm767, %v724
      %790 = vst.msk [vmem:[%s199 + $0x58] sm:$0xf] %vm767, %v725
      %791 = vst.msk [vmem:[%s199 + $0x5c] sm:$0xf] %vm767, %v726
      %792 = vst.msk [vmem:[%s199 + $0x60] sm:$0xf] %vm767, %v727
      %793 = vst.msk [vmem:[%s199 + $0x64] sm:$0xf] %vm767, %v728
      %794 = vst.msk [vmem:[%s199 + $0x68] sm:$0xf] %vm767, %v729
      %795 = vst.msk [vmem:[%s199 + $0x6c] sm:$0xf] %vm767, %v730
      %796 = vst.msk [vmem:[%s199 + $0x70] sm:$0xf] %vm767, %v731
      %797 = vst.msk [vmem:[%s199 + $0x74] sm:$0xf] %vm767, %v732
      %798 = vst.msk [vmem:[%s199 + $0x78] sm:$0xf] %vm767, %v733
      %799 = vst.msk [vmem:[%s199 + $0x7c] sm:$0xf] %vm767, %v734
      %s800 = smul.u32 32, %s15
      %p801 = scmp.lt.s32.totalorder %s800, 63
      %s802 = scalar_select %p801, %s800, 63
      %s803 = smul.addr %s802, 4
      %s804 = scalar_lea.vmem %s4, %s803
      // Predicated region
      $region37: #{group_forward_jit.6} parent=35 // pred_check
        %p805 = pneg %p122
      $region38: #{group_forward_jit.6} parent=35 // pred_check_branch
        %807 = sbr.rel (%p805) target = $region40
      $region39: #{group_forward_jit.6} parent=35 // pred_region
        %s808 = smul.u32 32, %s15
      $region40: #{group_forward_jit.6} parent=35 // pred_fallthru
        _
    $region36: #{group_forward_jit.6} parent=5 // pred_fallthru
      _
    %p809 = scmp.le.s32.totalorder 2, %s10
    // Predicated region
    $region41: #{group_forward_jit.6} parent=5 // pred_check
      %p810 = pneg %p809
    $region42: #{group_forward_jit.6} parent=5 // pred_check_branch
      %812 = sbr.rel (%p810) target = $region44
    $region43: #{group_forward_jit.6} parent=5 // pred_region
      %s813 = ssub.s32 %s10, 2
      // Predicated region
      $region45: #{group_forward_jit.6} parent=43 // pred_check
        %p814 = pneg %p128
      $region46: #{group_forward_jit.6} parent=43 // pred_check_branch
        %816 = sbr.rel (%p814) target = $region48
      $region47: #{group_forward_jit.6} parent=43 // pred_region
        %s817 = smul.u32 32, %s16
        %p818 = scmp.lt.s32.totalorder %s817, 63
        %s819 = scalar_select %p818, %s817, 63
        %s820 = smul.addr %s819, 4
        %s821 = scalar_lea.vmem %s4, %s820
      $region48: #{group_forward_jit.6} parent=43 // pred_fallthru
        _
    $region44: #{group_forward_jit.6} parent=5 // pred_fallthru
      _
  $region6: #{group_forward_jit.6} parent=0 // loop_footer
    %s14 = sadd.s32 1, %s10
  $region7: #{group_forward_jit.6} parent=0 // loop_footer_branch
    %9 = sbr.rel target = $region3
  $region8: #{group_forward_jit.6} parent=0 // loop_exit
    _

// kernel: group_forward_jit.9
$region0: #{group_forward_jit.9}
  #allocation0 [shape = 'u32[]', space=smem, size = 0x4, offset = 0x4, fixed_abs, tag = 'smem constant byte address 0x4 - core index']
  #allocation1 [shape = 'u32[144,128]{1,0:T(1,128)}', space=vmem, size = 0x12000, scoped, tag = 'internal scratch']
  %s0 = inlined_call_operand.vmem [shape: bf16[512,8], index: 0, kind: input, shape index: {}]
  %s1 = inlined_call_operand.vmem [shape: bf16[8,4], index: 1, kind: input, shape index: {}]
  %s2 = inlined_call_operand.vmem [shape: f32[1,4], index: 2, kind: input, shape index: {}]
  %s3 = inlined_call_operand.vmem [shape: f32[1,4], index: 3, kind: input, shape index: {}]
  %s4 = inlined_call_operand.vmem [shape: bf16[512,4], index: 4, kind: output, shape index: {}]
  %s5 = sld [smem:[#allocation0]]
  $region49: #{group_forward_jit.9} parent=0
    _
  %s7 = ssub.s32 1, %s5
  %s8 = scalar_select 0, %s7, %s5
  loop: start=0, step=1, limit=4
  $region2: #{group_forward_jit.9} parent=0 // loop_pre_header
    _
  $region3: #{group_forward_jit.9} parent=0 // loop_header
    %s10 = sphi 0, %s14
    %p11 = scmp.ge.s32.totalorder %s10, 4
    %s20 = sphi 0, %s22
    %s23 = sphi 0, %s20
    %s24 = sphi 0, %s23
    %s40 = sphi 0, %s24
    %s44 = sphi 0, %s44
    %s46 = sphi 0, %s44
    %s47 = sphi 0, %s46
    %s61 = sphi 0, %s47
    %s65 = sphi 0, %s65
    %s67 = sphi 0, %s65
    %s68 = sphi 0, %s67
    %s82 = sphi 0, %s68
    %s86 = sphi 0, %s86
    %s88 = sphi 0, %s86
    %s89 = sphi 0, %s88
    %s103 = sphi 0, %s89
    %s109 = sphi 0, %s111
    %s112 = sphi 0, %s109
    %s113 = sphi 0, %s112
    %s129 = sphi 0, %s113
  $region4: #{group_forward_jit.9} parent=0 // loop_header_branch
    %13 = sbr.rel (%p11) target = $region8
  $region5: #{group_forward_jit.9} parent=0 // loop_body
    %s15 = ssub.s32 %s10, 1
    %s16 = ssub.s32 %s10, 2
    %s17 = sadd.s32 %s10, 1
    %s18 = ssub.s32 %s10, %s17
    %p19 = scmp.eq.s32.totalorder %s18, 0
    %s21 = sadd.s32 %s20, 1
    %s22 = scalar_select %p19, %s20, %s21
    %p25 = pneg %p19
    %p26 = scmp.eq.s32.totalorder %s10, 1
    %p27 = por %p25, %p26
    %p28 = scmp.ne.s32.totalorder %s20, %s23
    %p29 = scmp.eq.s32.totalorder %s10, 0
    %p30 = por %p28, %p29
    %p31 = scmp.ne.s32.totalorder %s20, %s23
    %p32 = scmp.eq.s32.totalorder %s15, 1
    %p33 = por %p31, %p32
    %p34 = scmp.ne.s32.totalorder %s23, %s24
    %p35 = scmp.eq.s32.totalorder %s15, 0
    %p36 = por %p34, %p35
    %p37 = scmp.ne.s32.totalorder %s23, %s24
    %p38 = scmp.eq.s32.totalorder %s16, 1
    %p39 = por %p37, %p38
    %p41 = scmp.ne.s32.totalorder %s24, %s40
    %p42 = scmp.eq.s32.totalorder %s16, 0
    %p43 = por %p41, %p42
    %s45 = sadd.s32 %s44, 1
    %p48 = scmp.eq.s32.totalorder %s10, 1
    %p49 = scmp.ne.s32.totalorder %s44, %s46
    %p50 = scmp.eq.s32.totalorder %s10, 0
    %p51 = por %p49, %p50
    %p52 = scmp.ne.s32.totalorder %s44, %s46
    %p53 = scmp.eq.s32.totalorder %s15, 1
    %p54 = por %p52, %p53
    %p55 = scmp.ne.s32.totalorder %s46, %s47
    %p56 = scmp.eq.s32.totalorder %s15, 0
    %p57 = por %p55, %p56
    %p58 = scmp.ne.s32.totalorder %s46, %s47
    %p59 = scmp.eq.s32.totalorder %s16, 1
    %p60 = por %p58, %p59
    %p62 = scmp.ne.s32.totalorder %s47, %s61
    %p63 = scmp.eq.s32.totalorder %s16, 0
    %p64 = por %p62, %p63
    %s66 = sadd.s32 %s65, 1
    %p69 = scmp.eq.s32.totalorder %s10, 1
    %p70 = scmp.ne.s32.totalorder %s65, %s67
    %p71 = scmp.eq.s32.totalorder %s10, 0
    %p72 = por %p70, %p71
    %p73 = scmp.ne.s32.totalorder %s65, %s67
    %p74 = scmp.eq.s32.totalorder %s15, 1
    %p75 = por %p73, %p74
    %p76 = scmp.ne.s32.totalorder %s67, %s68
    %p77 = scmp.eq.s32.totalorder %s15, 0
    %p78 = por %p76, %p77
    %p79 = scmp.ne.s32.totalorder %s67, %s68
    %p80 = scmp.eq.s32.totalorder %s16, 1
    %p81 = por %p79, %p80
    %p83 = scmp.ne.s32.totalorder %s68, %s82
    %p84 = scmp.eq.s32.totalorder %s16, 0
    %p85 = por %p83, %p84
    %s87 = sadd.s32 %s86, 1
    %p90 = scmp.eq.s32.totalorder %s10, 1
    %p91 = scmp.ne.s32.totalorder %s86, %s88
    %p92 = scmp.eq.s32.totalorder %s10, 0
    %p93 = por %p91, %p92
    %p94 = scmp.ne.s32.totalorder %s86, %s88
    %p95 = scmp.eq.s32.totalorder %s15, 1
    %p96 = por %p94, %p95
    %p97 = scmp.ne.s32.totalorder %s88, %s89
    %p98 = scmp.eq.s32.totalorder %s15, 0
    %p99 = por %p97, %p98
    %p100 = scmp.ne.s32.totalorder %s88, %s89
    %p101 = scmp.eq.s32.totalorder %s16, 1
    %p102 = por %p100, %p101
    %p104 = scmp.ne.s32.totalorder %s89, %s103
    %p105 = scmp.eq.s32.totalorder %s16, 0
    %p106 = por %p104, %p105
    %s107 = ssub.s32 %s10, %s17
    %p108 = scmp.eq.s32.totalorder %s107, 0
    %s110 = sadd.s32 %s109, 1
    %s111 = scalar_select %p108, %s109, %s110
    %p114 = pneg %p108
    %p115 = scmp.eq.s32.totalorder %s10, 1
    %p116 = por %p114, %p115
    %p117 = scmp.ne.s32.totalorder %s109, %s112
    %p118 = scmp.eq.s32.totalorder %s10, 0
    %p119 = por %p117, %p118
    %p120 = scmp.ne.s32.totalorder %s109, %s112
    %p121 = scmp.eq.s32.totalorder %s15, 1
    %p122 = por %p120, %p121
    %p123 = scmp.ne.s32.totalorder %s112, %s113
    %p124 = scmp.eq.s32.totalorder %s15, 0
    %p125 = por %p123, %p124
    %p126 = scmp.ne.s32.totalorder %s112, %s113
    %p127 = scmp.eq.s32.totalorder %s16, 1
    %p128 = por %p126, %p127
    %p130 = scmp.ne.s32.totalorder %s113, %s129
    %p131 = scmp.eq.s32.totalorder %s16, 0
    %p132 = por %p130, %p131
    %p133 = scmp.le.s32.totalorder 1, %s10
    %p134 = scmp.lt.s32.totalorder %s10, 3
    %p135 = pnand %p133, %p134
    %p136 = pneg %p135
    // Predicated region
    $region9: #{group_forward_jit.9} parent=5 // pred_check
      _
    $region10: #{group_forward_jit.9} parent=5 // pred_check_branch
      %138 = sbr.rel (%p135) target = $region12
    $region11: #{group_forward_jit.9} parent=5 // pred_region
      %s139 = ssub.s32 %s10, 1
      // Predicated region
      $region13: #{group_forward_jit.9} parent=11 // pred_check
        %p140 = pneg %p57
      $region14: #{group_forward_jit.9} parent=11 // pred_check_branch
        %142 = sbr.rel (%p140) target = $region16
      $region15: #{group_forward_jit.9} parent=11 // pred_region
        _
      $region16: #{group_forward_jit.9} parent=11 // pred_fallthru
        _
      // Predicated region
      $region17: #{group_forward_jit.9} parent=11 // pred_check
        %p143 = pneg %p78
      $region18: #{group_forward_jit.9} parent=11 // pred_check_branch
        %145 = sbr.rel (%p143) target = $region20
      $region19: #{group_forward_jit.9} parent=11 // pred_region
        _
      $region20: #{group_forward_jit.9} parent=11 // pred_fallthru
        _
      // Predicated region
      $region21: #{group_forward_jit.9} parent=11 // pred_check
        %p146 = pneg %p99
      $region22: #{group_forward_jit.9} parent=11 // pred_check_branch
        %148 = sbr.rel (%p146) target = $region24
      $region23: #{group_forward_jit.9} parent=11 // pred_region
        _
      $region24: #{group_forward_jit.9} parent=11 // pred_fallthru
        _
    $region12: #{group_forward_jit.9} parent=5 // pred_fallthru
      _
    %p149 = scmp.lt.s32.totalorder %s10, 2
    // Predicated region
    $region25: #{group_forward_jit.9} parent=5 // pred_check
      %p150 = pneg %p149
    $region26: #{group_forward_jit.9} parent=5 // pred_check_branch
      %152 = sbr.rel (%p150) target = $region28
    $region27: #{group_forward_jit.9} parent=5 // pred_region
      // Predicated region
      $region29: #{group_forward_jit.9} parent=27 // pred_check
        %p153 = pneg %p30
      $region30: #{group_forward_jit.9} parent=27 // pred_check_branch
        %155 = sbr.rel (%p153) target = $region32
      $region31: #{group_forward_jit.9} parent=27 // pred_region
        %s156 = smul.u32 32, %s10
        %p157 = scmp.lt.s32.totalorder %s156, 63
        %s158 = scalar_select %p157, %s156, 63
        %s159 = smul.addr %s158, 4
        %s160 = scalar_lea.vmem %s0, %s159
        %s161 = smul.u32 32, %s10
      $region32: #{group_forward_jit.9} parent=27 // pred_fallthru
        _
    $region28: #{group_forward_jit.9} parent=5 // pred_fallthru
      _
    %p162 = scmp.le.s32.totalorder 1, %s10
    %p163 = scmp.lt.s32.totalorder %s10, 3
    %p164 = pnand %p162, %p163
    %p165 = pneg %p164
    // Predicated region
    $region33: #{group_forward_jit.9} parent=5 // pred_check
      _
    $region34: #{group_forward_jit.9} parent=5 // pred_check_branch
      %167 = sbr.rel (%p164) target = $region36
    $region35: #{group_forward_jit.9} parent=5 // pred_region
      %s168 = ssub.s32 %s10, 1
      %s169 = smul.u32 32, %s15
      %p170 = scmp.lt.s32.totalorder %s169, 63
      %s171 = scalar_select %p170, %s169, 63
      %s172 = smul.addr %s171, 4
      %s173 = scalar_lea.vmem %s0, %s172
      %p174 = pneg %p36
      %p175 = pneg %p33
      %p176 = pneg %p57
      %p177 = pneg %p54
      %p178 = pneg %p78
      %p179 = pneg %p75
      %p180 = pneg %p99
      %p181 = pneg %p96
      %p182 = pneg %p125
      %p183 = pneg %p122
      %s184 = smul.u32 32, %s15
      %p185 = scmp.lt.s32.totalorder %s184, 63
      %s186 = scalar_select %p185, %s184, 63
      %s187 = smul.addr %s186, 4
      %s188 = scalar_lea.vmem %s4, %s187
      %s189 = smul.u32 32, %s15
      %p190 = scmp.lt.s32.totalorder %s189, 63
      %s191 = scalar_select %p190, %s189, 63
      %s192 = smul.addr %s191, 4
      %s193 = scalar_lea.vmem %s0, %s192
      %s194 = smul.u32 32, %s15
      %s195 = smul.u32 32, %s15
      %p196 = scmp.lt.s32.totalorder %s195, 63
      %s197 = scalar_select %p196, %s195, 63
      %s198 = smul.addr %s197, 4
      %s199 = scalar_lea.vmem %s4, %s198
      %s200 = smul.u32 32, %s15
      %v202 = vld [vmem:[%s193] sm:$0xf]
      %v203 = vld [vmem:[%s193 + $0x4] sm:$0xf]
      %v204 = vld [vmem:[%s193 + $0x8] sm:$0xf]
      %v205 = vld [vmem:[%s193 + $0xc] sm:$0xf]
      %v206 = vld [vmem:[%s193 + $0x10] sm:$0xf]
      %v207 = vld [vmem:[%s193 + $0x14] sm:$0xf]
      %v208 = vld [vmem:[%s193 + $0x18] sm:$0xf]
      %v209 = vld [vmem:[%s193 + $0x1c] sm:$0xf]
      %v210 = vld [vmem:[%s193 + $0x20] sm:$0xf]
      %v211 = vld [vmem:[%s193 + $0x24] sm:$0xf]
      %v212 = vld [vmem:[%s193 + $0x28] sm:$0xf]
      %v213 = vld [vmem:[%s193 + $0x2c] sm:$0xf]
      %v214 = vld [vmem:[%s193 + $0x30] sm:$0xf]
      %v215 = vld [vmem:[%s193 + $0x34] sm:$0xf]
      %v216 = vld [vmem:[%s193 + $0x38] sm:$0xf]
      %v217 = vld [vmem:[%s193 + $0x3c] sm:$0xf]
      %v218 = vld [vmem:[%s193 + $0x40] sm:$0xf]
      %v219 = vld [vmem:[%s193 + $0x44] sm:$0xf]
      %v220 = vld [vmem:[%s193 + $0x48] sm:$0xf]
      %v221 = vld [vmem:[%s193 + $0x4c] sm:$0xf]
      %v222 = vld [vmem:[%s193 + $0x50] sm:$0xf]
      %v223 = vld [vmem:[%s193 + $0x54] sm:$0xf]
      %v224 = vld [vmem:[%s193 + $0x58] sm:$0xf]
      %v225 = vld [vmem:[%s193 + $0x5c] sm:$0xf]
      %v226 = vld [vmem:[%s193 + $0x60] sm:$0xf]
      %v227 = vld [vmem:[%s193 + $0x64] sm:$0xf]
      %v228 = vld [vmem:[%s193 + $0x68] sm:$0xf]
      %v229 = vld [vmem:[%s193 + $0x6c] sm:$0xf]
      %v230 = vld [vmem:[%s193 + $0x70] sm:$0xf]
      %v231 = vld [vmem:[%s193 + $0x74] sm:$0xf]
      %v232 = vld [vmem:[%s193 + $0x78] sm:$0xf]
      %v233 = vld [vmem:[%s193 + $0x7c] sm:$0xf]
      %v234 = vld [vmem:[%s1] sm:$0xf]
      %v267 = vunpack.c.l.b16 %v202
      %v268 = vunpack.c.l.b16 %v203
      %v269 = vunpack.c.l.b16 %v204
      %v270 = vunpack.c.l.b16 %v205
      %v271 = vunpack.c.l.b16 %v206
      %v272 = vunpack.c.l.b16 %v207
      %v273 = vunpack.c.l.b16 %v208
      %v274 = vunpack.c.l.b16 %v209
      %v275 = vunpack.c.l.b16 %v210
      %v276 = vunpack.c.l.b16 %v211
      %v277 = vunpack.c.l.b16 %v212
      %v278 = vunpack.c.l.b16 %v213
      %v279 = vunpack.c.l.b16 %v214
      %v280 = vunpack.c.l.b16 %v215
      %v281 = vunpack.c.l.b16 %v216
      %v282 = vunpack.c.l.b16 %v217
      %v283 = vunpack.c.l.b16 %v218
      %v284 = vunpack.c.l.b16 %v219
      %v285 = vunpack.c.l.b16 %v220
      %v286 = vunpack.c.l.b16 %v221
      %v287 = vunpack.c.l.b16 %v222
      %v288 = vunpack.c.l.b16 %v223
      %v289 = vunpack.c.l.b16 %v224
      %v290 = vunpack.c.l.b16 %v225
      %v291 = vunpack.c.l.b16 %v226
      %v292 = vunpack.c.l.b16 %v227
      %v293 = vunpack.c.l.b16 %v228
      %v294 = vunpack.c.l.b16 %v229
      %v295 = vunpack.c.l.b16 %v230
      %v296 = vunpack.c.l.b16 %v231
      %v297 = vunpack.c.l.b16 %v232
      %v298 = vunpack.c.l.b16 %v233
      %v299 = vpack.c.b16 %v268, %v267
      %v300 = vpack.c.b16 %v270, %v269
      %v301 = vpack.c.b16 %v272, %v271
      %v302 = vpack.c.b16 %v274, %v273
      %v303 = vpack.c.b16 %v276, %v275
      %v304 = vpack.c.b16 %v278, %v277
      %v305 = vpack.c.b16 %v280, %v279
      %v306 = vpack.c.b16 %v282, %v281
      %v307 = vpack.c.b16 %v284, %v283
      %v308 = vpack.c.b16 %v286, %v285
      %v309 = vpack.c.b16 %v288, %v287
      %v310 = vpack.c.b16 %v290, %v289
      %v311 = vpack.c.b16 %v292, %v291
      %v312 = vpack.c.b16 %v294, %v293
      %v313 = vpack.c.b16 %v296, %v295
      %v314 = vpack.c.b16 %v298, %v297
      %vm315 = vcmask 64512
      %v317 = vsel %vm315, %v299, 0
      %v320 = vsel %vm315, %v300, 0
      %v323 = vsel %vm315, %v301, 0
      %v326 = vsel %vm315, %v302, 0
      %v329 = vsel %vm315, %v303, 0
      %v332 = vsel %vm315, %v304, 0
      %v335 = vsel %vm315, %v305, 0
      %v338 = vsel %vm315, %v306, 0
      %v341 = vsel %vm315, %v307, 0
      %v344 = vsel %vm315, %v308, 0
      %v347 = vsel %vm315, %v309, 0
      %v350 = vsel %vm315, %v310, 0
      %v353 = vsel %vm315, %v311, 0
      %v356 = vsel %vm315, %v312, 0
      %v359 = vsel %vm315, %v313, 0
      %v362 = vsel %vm315, %v314, 0
      %vm364 = vcmask 1043456
      %v366 = vsel %vm364, %v234, 0
      %368 = vmatprep.subr.bf16.mxu0 0
      %369 = vmatpush1.bf16.msra.mxu0 %v366
      %370 = vmatprep.subr.bf16.mxu0 0
      %371 = vmatpush1.bf16.msra.mxu0 0
      %372 = vmatprep.subr.bf16.mxu0 0
      %373 = vmatpush1.bf16.msra.mxu0 0
      %374 = vmatprep.subr.bf16.mxu0 0
      %375 = vmatpush1.bf16.msra.mxu0 0
      %376 = vmatprep.subr.bf16.mxu0 0
      %377 = vmatpush1.bf16.msra.mxu0 0
      %378 = vmatprep.subr.bf16.mxu0 0
      %379 = vmatpush1.bf16.msra.mxu0 0
      %380 = vmatprep.subr.bf16.mxu0 0
      %381 = vmatpush1.bf16.msra.mxu0 0
      %382 = vmatprep.subr.bf16.mxu0 0
      %383 = vmatpush1.bf16.msra.mxu0 0
      %384 = vmatprep.subr.bf16.mxu0 0
      %385 = vmatpush1.bf16.msra.mxu0 0
      %386 = vmatprep.subr.bf16.mxu0 0
      %387 = vmatpush1.bf16.msra.mxu0 0
      %388 = vmatprep.subr.bf16.mxu0 0
      %389 = vmatpush1.bf16.msra.mxu0 0
      %390 = vmatprep.subr.bf16.mxu0 0
      %391 = vmatpush1.bf16.msra.mxu0 0
      %392 = vmatprep.subr.bf16.mxu0 0
      %393 = vmatpush1.bf16.msra.mxu0 0
      %394 = vmatprep.subr.bf16.mxu0 0
      %395 = vmatpush1.bf16.msra.mxu0 0
      %396 = vmatprep.subr.bf16.mxu0 0
      %397 = vmatpush1.bf16.msra.mxu0 0
      %398 = vmatprep.subr.bf16.mxu0 0
      %399 = vmatpush1.bf16.msra.mxu0 0
      %400 = vmatprep.mubr.bf16.mxu0 0
      %401 = vmatmul.mubr.bf16.gmra.mrb[0].mxu0 %v317
      %v402 = vpop.f32.mrb[0].mxu0
      %v403 = vadd.f32 0.0, %v402
      %v404 = vpop.f32.mrb[0].mxu0
      %v405 = vpop.f32.mrb[0].mxu0
      %v406 = vadd.f32 0.0, %v405
      %v407 = vpop.f32.mrb[0].mxu0
      %408 = vmatprep.mubr.bf16.mxu0 0
      %409 = vmatmul.mubr.bf16.gmra.mrb[0].mxu0 %v320
      %v410 = vpop.f32.mrb[0].mxu0
      %v411 = vadd.f32 0.0, %v410
      %v412 = vpop.f32.mrb[0].mxu0
      %v413 = vpop.f32.mrb[0].mxu0
      %v414 = vadd.f32 0.0, %v413
      %v415 = vpop.f32.mrb[0].mxu0
      %416 = vmatprep.mubr.bf16.mxu0 0
      %417 = vmatmul.mubr.bf16.gmra.mrb[0].mxu0 %v323
      %v418 = vpop.f32.mrb[0].mxu0
      %v419 = vadd.f32 0.0, %v418
      %v420 = vpop.f32.mrb[0].mxu0
      %v421 = vpop.f32.mrb[0].mxu0
      %v422 = vadd.f32 0.0, %v421
      %v423 = vpop.f32.mrb[0].mxu0
      %424 = vmatprep.mubr.bf16.mxu0 0
      %425 = vmatmul.mubr.bf16.gmra.mrb[0].mxu0 %v326
      %v426 = vpop.f32.mrb[0].mxu0
      %v427 = vadd.f32 0.0, %v426
      %v428 = vpop.f32.mrb[0].mxu0
      %v429 = vpop.f32.mrb[0].mxu0
      %v430 = vadd.f32 0.0, %v429
      %v431 = vpop.f32.mrb[0].mxu0
      %432 = vmatprep.mubr.bf16.mxu0 0
      %433 = vmatmul.mubr.bf16.gmra.mrb[0].mxu0 %v329
      %v434 = vpop.f32.mrb[0].mxu0
      %v435 = vadd.f32 0.0, %v434
      %v436 = vpop.f32.mrb[0].mxu0
      %v437 = vpop.f32.mrb[0].mxu0
      %v438 = vadd.f32 0.0, %v437
      %v439 = vpop.f32.mrb[0].mxu0
      %440 = vmatprep.mubr.bf16.mxu0 0
      %441 = vmatmul.mubr.bf16.gmra.mrb[0].mxu0 %v332
      %v442 = vpop.f32.mrb[0].mxu0
      %v443 = vadd.f32 0.0, %v442
      %v444 = vpop.f32.mrb[0].mxu0
      %v445 = vpop.f32.mrb[0].mxu0
      %v446 = vadd.f32 0.0, %v445
      %v447 = vpop.f32.mrb[0].mxu0
      %448 = vmatprep.mubr.bf16.mxu0 0
      %449 = vmatmul.mubr.bf16.gmra.mrb[0].mxu0 %v335
      %v450 = vpop.f32.mrb[0].mxu0
      %v451 = vadd.f32 0.0, %v450
      %v452 = vpop.f32.mrb[0].mxu0
      %v453 = vpop.f32.mrb[0].mxu0
      %v454 = vadd.f32 0.0, %v453
      %v455 = vpop.f32.mrb[0].mxu0
      %456 = vmatprep.mubr.bf16.mxu0 0
      %457 = vmatmul.mubr.bf16.gmra.mrb[0].mxu0 %v338
      %v458 = vpop.f32.mrb[0].mxu0
      %v459 = vadd.f32 0.0, %v458
      %v460 = vpop.f32.mrb[0].mxu0
      %v461 = vpop.f32.mrb[0].mxu0
      %v462 = vadd.f32 0.0, %v461
      %v463 = vpop.f32.mrb[0].mxu0
      %464 = vmatprep.mubr.bf16.mxu0 0
      %465 = vmatmul.mubr.bf16.gmra.mrb[0].mxu0 %v341
      %v466 = vpop.f32.mrb[0].mxu0
      %v467 = vadd.f32 0.0, %v466
      %v468 = vpop.f32.mrb[0].mxu0
      %v469 = vpop.f32.mrb[0].mxu0
      %v470 = vadd.f32 0.0, %v469
      %v471 = vpop.f32.mrb[0].mxu0
      %472 = vmatprep.mubr.bf16.mxu0 0
      %473 = vmatmul.mubr.bf16.gmra.mrb[0].mxu0 %v344
      %v474 = vpop.f32.mrb[0].mxu0
      %v475 = vadd.f32 0.0, %v474
      %v476 = vpop.f32.mrb[0].mxu0
      %v477 = vpop.f32.mrb[0].mxu0
      %v478 = vadd.f32 0.0, %v477
      %v479 = vpop.f32.mrb[0].mxu0
      %480 = vmatprep.mubr.bf16.mxu0 0
      %481 = vmatmul.mubr.bf16.gmra.mrb[0].mxu0 %v347
      %v482 = vpop.f32.mrb[0].mxu0
      %v483 = vadd.f32 0.0, %v482
      %v484 = vpop.f32.mrb[0].mxu0
      %v485 = vpop.f32.mrb[0].mxu0
      %v486 = vadd.f32 0.0, %v485
      %v487 = vpop.f32.mrb[0].mxu0
      %488 = vmatprep.mubr.bf16.mxu0 0
      %489 = vmatmul.mubr.bf16.gmra.mrb[0].mxu0 %v350
      %v490 = vpop.f32.mrb[0].mxu0
      %v491 = vadd.f32 0.0, %v490
      %v492 = vpop.f32.mrb[0].mxu0
      %v493 = vpop.f32.mrb[0].mxu0
      %v494 = vadd.f32 0.0, %v493
      %v495 = vpop.f32.mrb[0].mxu0
      %496 = vmatprep.mubr.bf16.mxu0 0
      %497 = vmatmul.mubr.bf16.gmra.mrb[0].mxu0 %v353
      %v498 = vpop.f32.mrb[0].mxu0
      %v499 = vadd.f32 0.0, %v498
      %v500 = vpop.f32.mrb[0].mxu0
      %v501 = vpop.f32.mrb[0].mxu0
      %v502 = vadd.f32 0.0, %v501
      %v503 = vpop.f32.mrb[0].mxu0
      %504 = vmatprep.mubr.bf16.mxu0 0
      %505 = vmatmul.mubr.bf16.gmra.mrb[0].mxu0 %v356
      %v506 = vpop.f32.mrb[0].mxu0
      %v507 = vadd.f32 0.0, %v506
      %v508 = vpop.f32.mrb[0].mxu0
      %v509 = vpop.f32.mrb[0].mxu0
      %v510 = vadd.f32 0.0, %v509
      %v511 = vpop.f32.mrb[0].mxu0
      %512 = vmatprep.mubr.bf16.mxu0 0
      %513 = vmatmul.mubr.bf16.gmra.mrb[0].mxu0 %v359
      %v514 = vpop.f32.mrb[0].mxu0
      %v515 = vadd.f32 0.0, %v514
      %v516 = vpop.f32.mrb[0].mxu0
      %v517 = vpop.f32.mrb[0].mxu0
      %v518 = vadd.f32 0.0, %v517
      %v519 = vpop.f32.mrb[0].mxu0
      %520 = vmatprep.mubr.bf16.mxu0 0
      %521 = vmatmul.mubr.bf16.gmra.mrb[0].mxu0 %v362
      %v522 = vpop.f32.mrb[0].mxu0
      %v523 = vadd.f32 0.0, %v522
      %v524 = vpop.f32.mrb[0].mxu0
      %v525 = vpop.f32.mrb[0].mxu0
      %v526 = vadd.f32 0.0, %v525
      %v527 = vpop.f32.mrb[0].mxu0
      %528 = vdwg.mxu0
      %v529 = vld [vmem:[%s2] sm:$0x1]
      %v531 = vlaneseq
      %v532 = vshrl.u32 %v531, 7
      %v533 = vsub.s32 0, %v532
      %v534 = vrot.slane %v529, %v533
      %v536 = vmul.f32 %v403, %v534
      %v537 = vmul.f32 %v406, %v534
      %v538 = vmul.f32 %v411, %v534
      %v539 = vmul.f32 %v414, %v534
      %v540 = vmul.f32 %v419, %v534
      %v541 = vmul.f32 %v422, %v534
      %v542 = vmul.f32 %v427, %v534
      %v543 = vmul.f32 %v430, %v534
      %v544 = vmul.f32 %v435, %v534
      %v545 = vmul.f32 %v438, %v534
      %v546 = vmul.f32 %v443, %v534
      %v547 = vmul.f32 %v446, %v534
      %v548 = vmul.f32 %v451, %v534
      %v549 = vmul.f32 %v454, %v534
      %v550 = vmul.f32 %v459, %v534
      %v551 = vmul.f32 %v462, %v534
      %v552 = vmul.f32 %v467, %v534
      %v553 = vmul.f32 %v470, %v534
      %v554 = vmul.f32 %v475, %v534
      %v555 = vmul.f32 %v478, %v534
      %v556 = vmul.f32 %v483, %v534
      %v557 = vmul.f32 %v486, %v534
      %v558 = vmul.f32 %v491, %v534
      %v559 = vmul.f32 %v494, %v534
      %v560 = vmul.f32 %v499, %v534
      %v561 = vmul.f32 %v502, %v534
      %v562 = vmul.f32 %v507, %v534
      %v563 = vmul.f32 %v510, %v534
      %v564 = vmul.f32 %v515, %v534
      %v565 = vmul.f32 %v518, %v534
      %v566 = vmul.f32 %v523, %v534
      %v567 = vmul.f32 %v526, %v534
      %v568 = vld [vmem:[%s3] sm:$0x1]
      %v570 = vlaneseq
      %v571 = vshrl.u32 %v570, 7
      %v572 = vsub.s32 0, %v571
      %v573 = vrot.slane %v568, %v572
      %v575 = vadd.f32 %v536, %v573
      %v576 = vadd.f32 %v537, %v573
      %v577 = vadd.f32 %v538, %v573
      %v578 = vadd.f32 %v539, %v573
      %v579 = vadd.f32 %v540, %v573
      %v580 = vadd.f32 %v541, %v573
      %v581 = vadd.f32 %v542, %v573
      %v582 = vadd.f32 %v543, %v573
      %v583 = vadd.f32 %v544, %v573
      %v584 = vadd.f32 %v545, %v573
      %v585 = vadd.f32 %v546, %v573
      %v586 = vadd.f32 %v547, %v573
      %v587 = vadd.f32 %v548, %v573
      %v588 = vadd.f32 %v549, %v573
      %v589 = vadd.f32 %v550, %v573
      %v590 = vadd.f32 %v551, %v573
      %v591 = vadd.f32 %v552, %v573
      %v592 = vadd.f32 %v553, %v573
      %v593 = vadd.f32 %v554, %v573
      %v594 = vadd.f32 %v555, %v573
      %v595 = vadd.f32 %v556, %v573
      %v596 = vadd.f32 %v557, %v573
      %v597 = vadd.f32 %v558, %v573
      %v598 = vadd.f32 %v559, %v573
      %v599 = vadd.f32 %v560, %v573
      %v600 = vadd.f32 %v561, %v573
      %v601 = vadd.f32 %v562, %v573
      %v602 = vadd.f32 %v563, %v573
      %v603 = vadd.f32 %v564, %v573
      %v604 = vadd.f32 %v565, %v573
      %v605 = vadd.f32 %v566, %v573
      %v606 = vadd.f32 %v567, %v573
      %v607 = vmax.f32 %v575, 0.0
      %v608 = vmax.f32 %v576, 0.0
      %v609 = vmax.f32 %v577, 0.0
      %v610 = vmax.f32 %v578, 0.0
      %v611 = vmax.f32 %v579, 0.0
      %v612 = vmax.f32 %v580, 0.0
      %v613 = vmax.f32 %v581, 0.0
      %v614 = vmax.f32 %v582, 0.0
      %v615 = vmax.f32 %v583, 0.0
      %v616 = vmax.f32 %v584, 0.0
      %v617 = vmax.f32 %v585, 0.0
      %v618 = vmax.f32 %v586, 0.0
      %v619 = vmax.f32 %v587, 0.0
      %v620 = vmax.f32 %v588, 0.0
      %v621 = vmax.f32 %v589, 0.0
      %v622 = vmax.f32 %v590, 0.0
      %v623 = vmax.f32 %v591, 0.0
      %v624 = vmax.f32 %v592, 0.0
      %v625 = vmax.f32 %v593, 0.0
      %v626 = vmax.f32 %v594, 0.0
      %v627 = vmax.f32 %v595, 0.0
      %v628 = vmax.f32 %v596, 0.0
      %v629 = vmax.f32 %v597, 0.0
      %v630 = vmax.f32 %v598, 0.0
      %v631 = vmax.f32 %v599, 0.0
      %v632 = vmax.f32 %v600, 0.0
      %v633 = vmax.f32 %v601, 0.0
      %v634 = vmax.f32 %v602, 0.0
      %v635 = vmax.f32 %v603, 0.0
      %v636 = vmax.f32 %v604, 0.0
      %v637 = vmax.f32 %v605, 0.0
      %v638 = vmax.f32 %v606, 0.0
      %v639 = vpack.c.bf16 %v608, %v607
      %v640 = vpack.c.bf16 %v610, %v609
      %v641 = vpack.c.bf16 %v612, %v611
      %v642 = vpack.c.bf16 %v614, %v613
      %v643 = vpack.c.bf16 %v616, %v615
      %v644 = vpack.c.bf16 %v618, %v617
      %v645 = vpack.c.bf16 %v620, %v619
      %v646 = vpack.c.bf16 %v622, %v621
      %v647 = vpack.c.bf16 %v624, %v623
      %v648 = vpack.c.bf16 %v626, %v625
      %v649 = vpack.c.bf16 %v628, %v627
      %v650 = vpack.c.bf16 %v630, %v629
      %v651 = vpack.c.bf16 %v632, %v631
      %v652 = vpack.c.bf16 %v634, %v633
      %v653 = vpack.c.bf16 %v636, %v635
      %v654 = vpack.c.bf16 %v638, %v637
      %v671 = vunpack.c.l.b16 %v639
      %v672 = vunpack.c.h.b16 %v639
      %v673 = vunpack.c.l.b16 %v640
      %v674 = vunpack.c.h.b16 %v640
      %v675 = vunpack.c.l.b16 %v641
      %v676 = vunpack.c.h.b16 %v641
      %v677 = vunpack.c.l.b16 %v642
      %v678 = vunpack.c.h.b16 %v642
      %v679 = vunpack.c.l.b16 %v643
      %v680 = vunpack.c.h.b16 %v643
      %v681 = vunpack.c.l.b16 %v644
      %v682 = vunpack.c.h.b16 %v644
      %v683 = vunpack.c.l.b16 %v645
      %v684 = vunpack.c.h.b16 %v645
      %v685 = vunpack.c.l.b16 %v646
      %v686 = vunpack.c.h.b16 %v646
      %v687 = vunpack.c.l.b16 %v647
      %v688 = vunpack.c.h.b16 %v647
      %v689 = vunpack.c.l.b16 %v648
      %v690 = vunpack.c.h.b16 %v648
      %v691 = vunpack.c.l.b16 %v649
      %v692 = vunpack.c.h.b16 %v649
      %v693 = vunpack.c.l.b16 %v650
      %v694 = vunpack.c.h.b16 %v650
      %v695 = vunpack.c.l.b16 %v651
      %v696 = vunpack.c.h.b16 %v651
      %v697 = vunpack.c.l.b16 %v652
      %v698 = vunpack.c.h.b16 %v652
      %v699 = vunpack.c.l.b16 %v653
      %v700 = vunpack.c.h.b16 %v653
      %v701 = vunpack.c.l.b16 %v654
      %v702 = vunpack.c.h.b16 %v654
      %v703 = vpack.c.b16 %v671, %v671
      %v704 = vpack.c.b16 %v672, %v672
      %v705 = vpack.c.b16 %v673, %v673
      %v706 = vpack.c.b16 %v674, %v674
      %v707 = vpack.c.b16 %v675, %v675
      %v708 = vpack.c.b16 %v676, %v676
      %v709 = vpack.c.b16 %v677, %v677
      %v710 = vpack.c.b16 %v678, %v678
      %v711 = vpack.c.b16 %v679, %v679
      %v712 = vpack.c.b16 %v680, %v680
      %v713 = vpack.c.b16 %v681, %v681
      %v714 = vpack.c.b16 %v682, %v682
      %v715 = vpack.c.b16 %v683, %v683
      %v716 = vpack.c.b16 %v684, %v684
      %v717 = vpack.c.b16 %v685, %v685
      %v718 = vpack.c.b16 %v686, %v686
      %v719 = vpack.c.b16 %v687, %v687
      %v720 = vpack.c.b16 %v688, %v688
      %v721 = vpack.c.b16 %v689, %v689
      %v722 = vpack.c.b16 %v690, %v690
      %v723 = vpack.c.b16 %v691, %v691
      %v724 = vpack.c.b16 %v692, %v692
      %v725 = vpack.c.b16 %v693, %v693
      %v726 = vpack.c.b16 %v694, %v694
      %v727 = vpack.c.b16 %v695, %v695
      %v728 = vpack.c.b16 %v696, %v696
      %v729 = vpack.c.b16 %v697, %v697
      %v730 = vpack.c.b16 %v698, %v698
      %v731 = vpack.c.b16 %v699, %v699
      %v732 = vpack.c.b16 %v700, %v700
      %v733 = vpack.c.b16 %v701, %v701
      %v734 = vpack.c.b16 %v702, %v702
      %vm767 = vcmask 27648
      %768 = vst.msk [vmem:[%s199] sm:$0xf] %vm767, %v703
      %769 = vst.msk [vmem:[%s199 + $0x4] sm:$0xf] %vm767, %v704
      %770 = vst.msk [vmem:[%s199 + $0x8] sm:$0xf] %vm767, %v705
      %771 = vst.msk [vmem:[%s199 + $0xc] sm:$0xf] %vm767, %v706
      %772 = vst.msk [vmem:[%s199 + $0x10] sm:$0xf] %vm767, %v707
      %773 = vst.msk [vmem:[%s199 + $0x14] sm:$0xf] %vm767, %v708
      %774 = vst.msk [vmem:[%s199 + $0x18] sm:$0xf] %vm767, %v709
      %775 = vst.msk [vmem:[%s199 + $0x1c] sm:$0xf] %vm767, %v710
      %776 = vst.msk [vmem:[%s199 + $0x20] sm:$0xf] %vm767, %v711
      %777 = vst.msk [vmem:[%s199 + $0x24] sm:$0xf] %vm767, %v712
      %778 = vst.msk [vmem:[%s199 + $0x28] sm:$0xf] %vm767, %v713
      %779 = vst.msk [vmem:[%s199 + $0x2c] sm:$0xf] %vm767, %v714
      %780 = vst.msk [vmem:[%s199 + $0x30] sm:$0xf] %vm767, %v715
      %781 = vst.msk [vmem:[%s199 + $0x34] sm:$0xf] %vm767, %v716
      %782 = vst.msk [vmem:[%s199 + $0x38] sm:$0xf] %vm767, %v717
      %783 = vst.msk [vmem:[%s199 + $0x3c] sm:$0xf] %vm767, %v718
      %784 = vst.msk [vmem:[%s199 + $0x40] sm:$0xf] %vm767, %v719
      %785 = vst.msk [vmem:[%s199 + $0x44] sm:$0xf] %vm767, %v720
      %786 = vst.msk [vmem:[%s199 + $0x48] sm:$0xf] %vm767, %v721
      %787 = vst.msk [vmem:[%s199 + $0x4c] sm:$0xf] %vm767, %v722
      %788 = vst.msk [vmem:[%s199 + $0x50] sm:$0xf] %vm767, %v723
      %789 = vst.msk [vmem:[%s199 + $0x54] sm:$0xf] %vm767, %v724
      %790 = vst.msk [vmem:[%s199 + $0x58] sm:$0xf] %vm767, %v725
      %791 = vst.msk [vmem:[%s199 + $0x5c] sm:$0xf] %vm767, %v726
      %792 = vst.msk [vmem:[%s199 + $0x60] sm:$0xf] %vm767, %v727
      %793 = vst.msk [vmem:[%s199 + $0x64] sm:$0xf] %vm767, %v728
      %794 = vst.msk [vmem:[%s199 + $0x68] sm:$0xf] %vm767, %v729
      %795 = vst.msk [vmem:[%s199 + $0x6c] sm:$0xf] %vm767, %v730
      %796 = vst.msk [vmem:[%s199 + $0x70] sm:$0xf] %vm767, %v731
      %797 = vst.msk [vmem:[%s199 + $0x74] sm:$0xf] %vm767, %v732
      %798 = vst.msk [vmem:[%s199 + $0x78] sm:$0xf] %vm767, %v733
      %799 = vst.msk [vmem:[%s199 + $0x7c] sm:$0xf] %vm767, %v734
      %s800 = smul.u32 32, %s15
      %p801 = scmp.lt.s32.totalorder %s800, 63
      %s802 = scalar_select %p801, %s800, 63
      %s803 = smul.addr %s802, 4
      %s804 = scalar_lea.vmem %s4, %s803
      // Predicated region
      $region37: #{group_forward_jit.9} parent=35 // pred_check
        %p805 = pneg %p122
      $region38: #{group_forward_jit.9} parent=35 // pred_check_branch
        %807 = sbr.rel (%p805) target = $region40
      $region39: #{group_forward_jit.9} parent=35 // pred_region
        %s808 = smul.u32 32, %s15
      $region40: #{group_forward_jit.9} parent=35 // pred_fallthru
        _
    $region36: #{group_forward_jit.9} parent=5 // pred_fallthru
      _
    %p809 = scmp.le.s32.totalorder 2, %s10
    // Predicated region
    $region41: #{group_forward_jit.9} parent=5 // pred_check
      %p810 = pneg %p809
    $region42: #{group_forward_jit.9} parent=5 // pred_check_branch
      %812 = sbr.rel (%p810) target = $region44
    $region43: #{group_forward_jit.9} parent=5 // pred_region
      %s813 = ssub.s32 %s10, 2
      // Predicated region
      $region45: #{group_forward_jit.9} parent=43 // pred_check
        %p814 = pneg %p128
      $region46: #{group_forward_jit.9} parent=43 // pred_check_branch
        %816 = sbr.rel (%p814) target = $region48
      $region47: #{group_forward_jit.9} parent=43 // pred_region
        %s817 = smul.u32 32, %s16
        %p818 = scmp.lt.s32.totalorder %s817, 63
        %s819 = scalar_select %p818, %s817, 63
        %s820 = smul.addr %s819, 4
        %s821 = scalar_lea.vmem %s4, %s820
      $region48: #{group_forward_jit.9} parent=43 // pred_fallthru
        _
    $region44: #{group_forward_jit.9} parent=5 // pred_fallthru
      _
  $region6: #{group_forward_jit.9} parent=0 // loop_footer
    %s14 = sadd.s32 1, %s10
  $region7: #{group_forward_jit.9} parent=0 // loop_footer_branch
    %9 = sbr.rel target = $region3
  $region8: #{group_forward_jit.9} parent=0 // loop_exit
    _

// kernel: group_forward_jit.8
$region0: #{group_forward_jit.8}
  #allocation0 [shape = 'u32[]', space=smem, size = 0x4, offset = 0x4, fixed_abs, tag = 'smem constant byte address 0x4 - core index']
  #allocation1 [shape = 'u32[144,128]{1,0:T(1,128)}', space=vmem, size = 0x12000, scoped, tag = 'internal scratch']
  %s0 = inlined_call_operand.vmem [shape: bf16[512,4], index: 0, kind: input, shape index: {}]
  %s1 = inlined_call_operand.vmem [shape: bf16[4,8], index: 1, kind: input, shape index: {}]
  %s2 = inlined_call_operand.vmem [shape: f32[1,8], index: 2, kind: input, shape index: {}]
  %s3 = inlined_call_operand.vmem [shape: f32[1,8], index: 3, kind: input, shape index: {}]
  %s4 = inlined_call_operand.vmem [shape: bf16[512,4], index: 4, kind: input, shape index: {}]
  %s5 = inlined_call_operand.vmem [shape: bf16[4,8], index: 5, kind: input, shape index: {}]
  %s6 = inlined_call_operand.vmem [shape: f32[1,8], index: 6, kind: input, shape index: {}]
  %s7 = inlined_call_operand.vmem [shape: f32[1,8], index: 7, kind: input, shape index: {}]
  %s8 = inlined_call_operand.vmem [shape: bf16[512,8], index: 8, kind: output, shape index: {}]
  %s9 = sld [smem:[#allocation0]]
  $region65: #{group_forward_jit.8} parent=0
    _
  %s11 = ssub.s32 1, %s9
  %s12 = scalar_select 0, %s11, %s9
  loop: start=0, step=1, limit=4
  $region2: #{group_forward_jit.8} parent=0 // loop_pre_header
    _
  $region3: #{group_forward_jit.8} parent=0 // loop_header
    %s14 = sphi 0, %s18
    %p15 = scmp.ge.s32.totalorder %s14, 4
    %s24 = sphi 0, %s26
    %s27 = sphi 0, %s24
    %s28 = sphi 0, %s27
    %s44 = sphi 0, %s28
    %s48 = sphi 0, %s48
    %s50 = sphi 0, %s48
    %s51 = sphi 0, %s50
    %s65 = sphi 0, %s51
    %s69 = sphi 0, %s69
    %s71 = sphi 0, %s69
    %s72 = sphi 0, %s71
    %s86 = sphi 0, %s72
    %s90 = sphi 0, %s90
    %s92 = sphi 0, %s90
    %s93 = sphi 0, %s92
    %s107 = sphi 0, %s93
    %s113 = sphi 0, %s115
    %s116 = sphi 0, %s113
    %s117 = sphi 0, %s116
    %s133 = sphi 0, %s117
    %s137 = sphi 0, %s137
    %s139 = sphi 0, %s137
    %s140 = sphi 0, %s139
    %s154 = sphi 0, %s140
    %s158 = sphi 0, %s158
    %s160 = sphi 0, %s158
    %s161 = sphi 0, %s160
    %s175 = sphi 0, %s161
    %s179 = sphi 0, %s179
    %s181 = sphi 0, %s179
    %s182 = sphi 0, %s181
    %s196 = sphi 0, %s182
    %s202 = sphi 0, %s204
    %s205 = sphi 0, %s202
    %s206 = sphi 0, %s205
    %s222 = sphi 0, %s206
  $region4: #{group_forward_jit.8} parent=0 // loop_header_branch
    %17 = sbr.rel (%p15) target = $region8
  $region5: #{group_forward_jit.8} parent=0 // loop_body
    %s19 = ssub.s32 %s14, 1
    %s20 = ssub.s32 %s14, 2
    %s21 = sadd.s32 %s14, 1
    %s22 = ssub.s32 %s14, %s21
    %p23 = scmp.eq.s32.totalorder %s22, 0
    %s25 = sadd.s32 %s24, 1
    %s26 = scalar_select %p23, %s24, %s25
    %p29 = pneg %p23
    %p30 = scmp.eq.s32.totalorder %s14, 1
    %p31 = por %p29, %p30
    %p32 = scmp.ne.s32.totalorder %s24, %s27
    %p33 = scmp.eq.s32.totalorder %s14, 0
    %p34 = por %p32, %p33
    %p35 = scmp.ne.s32.totalorder %s24, %s27
    %p36 = scmp.eq.s32.totalorder %s19, 1
    %p37 = por %p35, %p36
    %p38 = scmp.ne.s32.totalorder %s27, %s28
    %p39 = scmp.eq.s32.totalorder %s19, 0
    %p40 = por %p38, %p39
    %p41 = scmp.ne.s32.totalorder %s27, %s28
    %p42 = scmp.eq.s32.totalorder %s20, 1
    %p43 = por %p41, %p42
    %p45 = scmp.ne.s32.totalorder %s28, %s44
    %p46 = scmp.eq.s32.totalorder %s20, 0
    %p47 = por %p45, %p46
    %s49 = sadd.s32 %s48, 1
    %p52 = scmp.eq.s32.totalorder %s14, 1
    %p53 = scmp.ne.s32.totalorder %s48, %s50
    %p54 = scmp.eq.s32.totalorder %s14, 0
    %p55 = por %p53, %p54
    %p56 = scmp.ne.s32.totalorder %s48, %s50
    %p57 = scmp.eq.s32.totalorder %s19, 1
    %p58 = por %p56, %p57
    %p59 = scmp.ne.s32.totalorder %s50, %s51
    %p60 = scmp.eq.s32.totalorder %s19, 0
    %p61 = por %p59, %p60
    %p62 = scmp.ne.s32.totalorder %s50, %s51
    %p63 = scmp.eq.s32.totalorder %s20, 1
    %p64 = por %p62, %p63
    %p66 = scmp.ne.s32.totalorder %s51, %s65
    %p67 = scmp.eq.s32.totalorder %s20, 0
    %p68 = por %p66, %p67
    %s70 = sadd.s32 %s69, 1
    %p73 = scmp.eq.s32.totalorder %s14, 1
    %p74 = scmp.ne.s32.totalorder %s69, %s71
    %p75 = scmp.eq.s32.totalorder %s14, 0
    %p76 = por %p74, %p75
    %p77 = scmp.ne.s32.totalorder %s69, %s71
    %p78 = scmp.eq.s32.totalorder %s19, 1
    %p79 = por %p77, %p78
    %p80 = scmp.ne.s32.totalorder %s71, %s72
    %p81 = scmp.eq.s32.totalorder %s19, 0
    %p82 = por %p80, %p81
    %p83 = scmp.ne.s32.totalorder %s71, %s72
    %p84 = scmp.eq.s32.totalorder %s20, 1
    %p85 = por %p83, %p84
    %p87 = scmp.ne.s32.totalorder %s72, %s86
    %p88 = scmp.eq.s32.totalorder %s20, 0
    %p89 = por %p87, %p88
    %s91 = sadd.s32 %s90, 1
    %p94 = scmp.eq.s32.totalorder %s14, 1
    %p95 = scmp.ne.s32.totalorder %s90, %s92
    %p96 = scmp.eq.s32.totalorder %s14, 0
    %p97 = por %p95, %p96
    %p98 = scmp.ne.s32.totalorder %s90, %s92
    %p99 = scmp.eq.s32.totalorder %s19, 1
    %p100 = por %p98, %p99
    %p101 = scmp.ne.s32.totalorder %s92, %s93
    %p102 = scmp.eq.s32.totalorder %s19, 0
    %p103 = por %p101, %p102
    %p104 = scmp.ne.s32.totalorder %s92, %s93
    %p105 = scmp.eq.s32.totalorder %s20, 1
    %p106 = por %p104, %p105
    %p108 = scmp.ne.s32.totalorder %s93, %s107
    %p109 = scmp.eq.s32.totalorder %s20, 0
    %p110 = por %p108, %p109
    %s111 = ssub.s32 %s14, %s21
    %p112 = scmp.eq.s32.totalorder %s111, 0
    %s114 = sadd.s32 %s113, 1
    %s115 = scalar_select %p112, %s113, %s114
    %p118 = pneg %p112
    %p119 = scmp.eq.s32.totalorder %s14, 1
    %p120 = por %p118, %p119
    %p121 = scmp.ne.s32.totalorder %s113, %s116
    %p122 = scmp.eq.s32.totalorder %s14, 0
    %p123 = por %p121, %p122
    %p124 = scmp.ne.s32.totalorder %s113, %s116
    %p125 = scmp.eq.s32.totalorder %s19, 1
    %p126 = por %p124, %p125
    %p127 = scmp.ne.s32.totalorder %s116, %s117
    %p128 = scmp.eq.s32.totalorder %s19, 0
    %p129 = por %p127, %p128
    %p130 = scmp.ne.s32.totalorder %s116, %s117
    %p131 = scmp.eq.s32.totalorder %s20, 1
    %p132 = por %p130, %p131
    %p134 = scmp.ne.s32.totalorder %s117, %s133
    %p135 = scmp.eq.s32.totalorder %s20, 0
    %p136 = por %p134, %p135
    %s138 = sadd.s32 %s137, 1
    %p141 = scmp.eq.s32.totalorder %s14, 1
    %p142 = scmp.ne.s32.totalorder %s137, %s139
    %p143 = scmp.eq.s32.totalorder %s14, 0
    %p144 = por %p142, %p143
    %p145 = scmp.ne.s32.totalorder %s137, %s139
    %p146 = scmp.eq.s32.totalorder %s19, 1
    %p147 = por %p145, %p146
    %p148 = scmp.ne.s32.totalorder %s139, %s140
    %p149 = scmp.eq.s32.totalorder %s19, 0
    %p150 = por %p148, %p149
    %p151 = scmp.ne.s32.totalorder %s139, %s140
    %p152 = scmp.eq.s32.totalorder %s20, 1
    %p153 = por %p151, %p152
    %p155 = scmp.ne.s32.totalorder %s140, %s154
    %p156 = scmp.eq.s32.totalorder %s20, 0
    %p157 = por %p155, %p156
    %s159 = sadd.s32 %s158, 1
    %p162 = scmp.eq.s32.totalorder %s14, 1
    %p163 = scmp.ne.s32.totalorder %s158, %s160
    %p164 = scmp.eq.s32.totalorder %s14, 0
    %p165 = por %p163, %p164
    %p166 = scmp.ne.s32.totalorder %s158, %s160
    %p167 = scmp.eq.s32.totalorder %s19, 1
    %p168 = por %p166, %p167
    %p169 = scmp.ne.s32.totalorder %s160, %s161
    %p170 = scmp.eq.s32.totalorder %s19, 0
    %p171 = por %p169, %p170
    %p172 = scmp.ne.s32.totalorder %s160, %s161
    %p173 = scmp.eq.s32.totalorder %s20, 1
    %p174 = por %p172, %p173
    %p176 = scmp.ne.s32.totalorder %s161, %s175
    %p177 = scmp.eq.s32.totalorder %s20, 0
    %p178 = por %p176, %p177
    %s180 = sadd.s32 %s179, 1
    %p183 = scmp.eq.s32.totalorder %s14, 1
    %p184 = scmp.ne.s32.totalorder %s179, %s181
    %p185 = scmp.eq.s32.totalorder %s14, 0
    %p186 = por %p184, %p185
    %p187 = scmp.ne.s32.totalorder %s179, %s181
    %p188 = scmp.eq.s32.totalorder %s19, 1
    %p189 = por %p187, %p188
    %p190 = scmp.ne.s32.totalorder %s181, %s182
    %p191 = scmp.eq.s32.totalorder %s19, 0
    %p192 = por %p190, %p191
    %p193 = scmp.ne.s32.totalorder %s181, %s182
    %p194 = scmp.eq.s32.totalorder %s20, 1
    %p195 = por %p193, %p194
    %p197 = scmp.ne.s32.totalorder %s182, %s196
    %p198 = scmp.eq.s32.totalorder %s20, 0
    %p199 = por %p197, %p198
    %s200 = ssub.s32 %s14, %s21
    %p201 = scmp.eq.s32.totalorder %s200, 0
    %s203 = sadd.s32 %s202, 1
    %s204 = scalar_select %p201, %s202, %s203
    %p207 = pneg %p201
    %p208 = scmp.eq.s32.totalorder %s14, 1
    %p209 = por %p207, %p208
    %p210 = scmp.ne.s32.totalorder %s202, %s205
    %p211 = scmp.eq.s32.totalorder %s14, 0
    %p212 = por %p210, %p211
    %p213 = scmp.ne.s32.totalorder %s202, %s205
    %p214 = scmp.eq.s32.totalorder %s19, 1
    %p215 = por %p213, %p214
    %p216 = scmp.ne.s32.totalorder %s205, %s206
    %p217 = scmp.eq.s32.totalorder %s19, 0
    %p218 = por %p216, %p217
    %p219 = scmp.ne.s32.totalorder %s205, %s206
    %p220 = scmp.eq.s32.totalorder %s20, 1
    %p221 = por %p219, %p220
    %p223 = scmp.ne.s32.totalorder %s206, %s222
    %p224 = scmp.eq.s32.totalorder %s20, 0
    %p225 = por %p223, %p224
    %p226 = scmp.le.s32.totalorder 1, %s14
    %p227 = scmp.lt.s32.totalorder %s14, 3
    %p228 = pnand %p226, %p227
    %p229 = pneg %p228
    // Predicated region
    $region9: #{group_forward_jit.8} parent=5 // pred_check
      _
    $region10: #{group_forward_jit.8} parent=5 // pred_check_branch
      %231 = sbr.rel (%p228) target = $region12
    $region11: #{group_forward_jit.8} parent=5 // pred_region
      %s232 = ssub.s32 %s14, 1
      // Predicated region
      $region13: #{group_forward_jit.8} parent=11 // pred_check
        %p233 = pneg %p61
      $region14: #{group_forward_jit.8} parent=11 // pred_check_branch
        %235 = sbr.rel (%p233) target = $region16
      $region15: #{group_forward_jit.8} parent=11 // pred_region
        _
      $region16: #{group_forward_jit.8} parent=11 // pred_fallthru
        _
      // Predicated region
      $region17: #{group_forward_jit.8} parent=11 // pred_check
        %p236 = pneg %p82
      $region18: #{group_forward_jit.8} parent=11 // pred_check_branch
        %238 = sbr.rel (%p236) target = $region20
      $region19: #{group_forward_jit.8} parent=11 // pred_region
        _
      $region20: #{group_forward_jit.8} parent=11 // pred_fallthru
        _
      // Predicated region
      $region21: #{group_forward_jit.8} parent=11 // pred_check
        %p239 = pneg %p103
      $region22: #{group_forward_jit.8} parent=11 // pred_check_branch
        %241 = sbr.rel (%p239) target = $region24
      $region23: #{group_forward_jit.8} parent=11 // pred_region
        _
      $region24: #{group_forward_jit.8} parent=11 // pred_fallthru
        _
      // Predicated region
      $region25: #{group_forward_jit.8} parent=11 // pred_check
        %p242 = pneg %p150
      $region26: #{group_forward_jit.8} parent=11 // pred_check_branch
        %244 = sbr.rel (%p242) target = $region28
      $region27: #{group_forward_jit.8} parent=11 // pred_region
        _
      $region28: #{group_forward_jit.8} parent=11 // pred_fallthru
        _
      // Predicated region
      $region29: #{group_forward_jit.8} parent=11 // pred_check
        %p245 = pneg %p171
      $region30: #{group_forward_jit.8} parent=11 // pred_check_branch
        %247 = sbr.rel (%p245) target = $region32
      $region31: #{group_forward_jit.8} parent=11 // pred_region
        _
      $region32: #{group_forward_jit.8} parent=11 // pred_fallthru
        _
      // Predicated region
      $region33: #{group_forward_jit.8} parent=11 // pred_check
        %p248 = pneg %p192
      $region34: #{group_forward_jit.8} parent=11 // pred_check_branch
        %250 = sbr.rel (%p248) target = $region36
      $region35: #{group_forward_jit.8} parent=11 // pred_region
        _
      $region36: #{group_forward_jit.8} parent=11 // pred_fallthru
        _
    $region12: #{group_forward_jit.8} parent=5 // pred_fallthru
      _
    %p251 = scmp.lt.s32.totalorder %s14, 2
    // Predicated region
    $region37: #{group_forward_jit.8} parent=5 // pred_check
      %p252 = pneg %p251
    $region38: #{group_forward_jit.8} parent=5 // pred_check_branch
      %254 = sbr.rel (%p252) target = $region40
    $region39: #{group_forward_jit.8} parent=5 // pred_region
      // Predicated region
      $region41: #{group_forward_jit.8} parent=39 // pred_check
        %p255 = pneg %p34
      $region42: #{group_forward_jit.8} parent=39 // pred_check_branch
        %257 = sbr.rel (%p255) target = $region44
      $region43: #{group_forward_jit.8} parent=39 // pred_region
        %s258 = smul.u32 32, %s14
        %p259 = scmp.lt.s32.totalorder %s258, 63
        %s260 = scalar_select %p259, %s258, 63
        %s261 = smul.addr %s260, 4
        %s262 = scalar_lea.vmem %s0, %s261
        %s263 = smul.u32 32, %s14
      $region44: #{group_forward_jit.8} parent=39 // pred_fallthru
        _
      // Predicated region
      $region45: #{group_forward_jit.8} parent=39 // pred_check
        %p264 = pneg %p123
      $region46: #{group_forward_jit.8} parent=39 // pred_check_branch
        %266 = sbr.rel (%p264) target = $region48
      $region47: #{group_forward_jit.8} parent=39 // pred_region
        %s267 = smul.u32 32, %s14
        %p268 = scmp.lt.s32.totalorder %s267, 63
        %s269 = scalar_select %p268, %s267, 63
        %s270 = smul.addr %s269, 4
        %s271 = scalar_lea.vmem %s4, %s270
        %s272 = smul.u32 32, %s14
      $region48: #{group_forward_jit.8} parent=39 // pred_fallthru
        _
    $region40: #{group_forward_jit.8} parent=5 // pred_fallthru
      _
    %p273 = scmp.le.s32.totalorder 1, %s14
    %p274 = scmp.lt.s32.totalorder %s14, 3
    %p275 = pnand %p273, %p274
    %p276 = pneg %p275
    // Predicated region
    $region49: #{group_forward_jit.8} parent=5 // pred_check
      _
    $region50: #{group_forward_jit.8} parent=5 // pred_check_branch
      %278 = sbr.rel (%p275) target = $region52
    $region51: #{group_forward_jit.8} parent=5 // pred_region
      %s279 = ssub.s32 %s14, 1
      %s280 = smul.u32 32, %s19
      %p281 = scmp.lt.s32.totalorder %s280, 63
      %s282 = scalar_select %p281, %s280, 63
      %s283 = smul.addr %s282, 4
      %s284 = scalar_lea.vmem %s0, %s283
      %p285 = pneg %p40
      %p286 = pneg %p37
      %p287 = pneg %p61
      %p288 = pneg %p58
      %p289 = pneg %p82
      %p290 = pneg %p79
      %p291 = pneg %p103
      %p292 = pneg %p100
      %s293 = smul.u32 32, %s19
      %p294 = scmp.lt.s32.totalorder %s293, 63
      %s295 = scalar_select %p294, %s293, 63
      %s296 = smul.addr %s295, 4
      %s297 = scalar_lea.vmem %s4, %s296
      %p298 = pneg %p129
      %p299 = pneg %p126
      %p300 = pneg %p150
      %p301 = pneg %p147
      %p302 = pneg %p171
      %p303 = pneg %p168
      %p304 = pneg %p192
      %p305 = pneg %p189
      %p306 = pneg %p218
      %p307 = pneg %p215
      %s308 = smul.u32 32, %s19
      %p309 = scmp.lt.s32.totalorder %s308, 63
      %s310 = scalar_select %p309, %s308, 63
      %s311 = smul.addr %s310, 4
      %s312 = scalar_lea.vmem %s8, %s311
      %s313 = smul.u32 32, %s19
      %p314 = scmp.lt.s32.totalorder %s313, 63
      %s315 = scalar_select %p314, %s313, 63
      %s316 = smul.addr %s315, 4
      %s317 = scalar_lea.vmem %s0, %s316
      %s318 = smul.u32 32, %s19
      %s319 = smul.u32 32, %s19
      %p320 = scmp.lt.s32.totalorder %s319, 63
      %s321 = scalar_select %p320, %s319, 63
      %s322 = smul.addr %s321, 4
      %s323 = scalar_lea.vmem %s4, %s322
      %s324 = smul.u32 32, %s19
      %s325 = smul.u32 32, %s19
      %p326 = scmp.lt.s32.totalorder %s325, 63
      %s327 = scalar_select %p326, %s325, 63
      %s328 = smul.addr %s327, 4
      %s329 = scalar_lea.vmem %s8, %s328
      %s330 = smul.u32 32, %s19
      %v332 = vld [vmem:[%s317] sm:$0xf]
      %v333 = vld [vmem:[%s317 + $0x4] sm:$0xf]
      %v334 = vld [vmem:[%s317 + $0x8] sm:$0xf]
      %v335 = vld [vmem:[%s317 + $0xc] sm:$0xf]
      %v336 = vld [vmem:[%s317 + $0x10] sm:$0xf]
      %v337 = vld [vmem:[%s317 + $0x14] sm:$0xf]
      %v338 = vld [vmem:[%s317 + $0x18] sm:$0xf]
      %v339 = vld [vmem:[%s317 + $0x1c] sm:$0xf]
      %v340 = vld [vmem:[%s317 + $0x20] sm:$0xf]
      %v341 = vld [vmem:[%s317 + $0x24] sm:$0xf]
      %v342 = vld [vmem:[%s317 + $0x28] sm:$0xf]
      %v343 = vld [vmem:[%s317 + $0x2c] sm:$0xf]
      %v344 = vld [vmem:[%s317 + $0x30] sm:$0xf]
      %v345 = vld [vmem:[%s317 + $0x34] sm:$0xf]
      %v346 = vld [vmem:[%s317 + $0x38] sm:$0xf]
      %v347 = vld [vmem:[%s317 + $0x3c] sm:$0xf]
      %v348 = vld [vmem:[%s317 + $0x40] sm:$0xf]
      %v349 = vld [vmem:[%s317 + $0x44] sm:$0xf]
      %v350 = vld [vmem:[%s317 + $0x48] sm:$0xf]
      %v351 = vld [vmem:[%s317 + $0x4c] sm:$0xf]
      %v352 = vld [vmem:[%s317 + $0x50] sm:$0xf]
      %v353 = vld [vmem:[%s317 + $0x54] sm:$0xf]
      %v354 = vld [vmem:[%s317 + $0x58] sm:$0xf]
      %v355 = vld [vmem:[%s317 + $0x5c] sm:$0xf]
      %v356 = vld [vmem:[%s317 + $0x60] sm:$0xf]
      %v357 = vld [vmem:[%s317 + $0x64] sm:$0xf]
      %v358 = vld [vmem:[%s317 + $0x68] sm:$0xf]
      %v359 = vld [vmem:[%s317 + $0x6c] sm:$0xf]
      %v360 = vld [vmem:[%s317 + $0x70] sm:$0xf]
      %v361 = vld [vmem:[%s317 + $0x74] sm:$0xf]
      %v362 = vld [vmem:[%s317 + $0x78] sm:$0xf]
      %v363 = vld [vmem:[%s317 + $0x7c] sm:$0xf]
      %v364 = vld [vmem:[%s1] sm:$0x3]
      %v397 = vunpack.c.l.b16 %v332
      %v398 = vunpack.c.l.b16 %v333
      %v399 = vunpack.c.l.b16 %v334
      %v400 = vunpack.c.l.b16 %v335
      %v401 = vunpack.c.l.b16 %v336
      %v402 = vunpack.c.l.b16 %v337
      %v403 = vunpack.c.l.b16 %v338
      %v404 = vunpack.c.l.b16 %v339
      %v405 = vunpack.c.l.b16 %v340
      %v406 = vunpack.c.l.b16 %v341
      %v407 = vunpack.c.l.b16 %v342
      %v408 = vunpack.c.l.b16 %v343
      %v409 = vunpack.c.l.b16 %v344
      %v410 = vunpack.c.l.b16 %v345
      %v411 = vunpack.c.l.b16 %v346
      %v412 = vunpack.c.l.b16 %v347
      %v413 = vunpack.c.l.b16 %v348
      %v414 = vunpack.c.l.b16 %v349
      %v415 = vunpack.c.l.b16 %v350
      %v416 = vunpack.c.l.b16 %v351
      %v417 = vunpack.c.l.b16 %v352
      %v418 = vunpack.c.l.b16 %v353
      %v419 = vunpack.c.l.b16 %v354
      %v420 = vunpack.c.l.b16 %v355
      %v421 = vunpack.c.l.b16 %v356
      %v422 = vunpack.c.l.b16 %v357
      %v423 = vunpack.c.l.b16 %v358
      %v424 = vunpack.c.l.b16 %v359
      %v425 = vunpack.c.l.b16 %v360
      %v426 = vunpack.c.l.b16 %v361
      %v427 = vunpack.c.l.b16 %v362
      %v428 = vunpack.c.l.b16 %v363
      %v429 = vpack.c.b16 %v398, %v397
      %v430 = vpack.c.b16 %v400, %v399
      %v431 = vpack.c.b16 %v402, %v401
      %v432 = vpack.c.b16 %v404, %v403
      %v433 = vpack.c.b16 %v406, %v405
      %v434 = vpack.c.b16 %v408, %v407
      %v435 = vpack.c.b16 %v410, %v409
      %v436 = vpack.c.b16 %v412, %v411
      %v437 = vpack.c.b16 %v414, %v413
      %v438 = vpack.c.b16 %v416, %v415
      %v439 = vpack.c.b16 %v418, %v417
      %v440 = vpack.c.b16 %v420, %v419
      %v441 = vpack.c.b16 %v422, %v421
      %v442 = vpack.c.b16 %v424, %v423
      %v443 = vpack.c.b16 %v426, %v425
      %v444 = vpack.c.b16 %v428, %v427
      %vm445 = vcmask 31744
      %v447 = vsel %vm445, %v429, 0
      %v450 = vsel %vm445, %v430, 0
      %v453 = vsel %vm445, %v431, 0
      %v456 = vsel %vm445, %v432, 0
      %v459 = vsel %vm445, %v433, 0
      %v462 = vsel %vm445, %v434, 0
      %v465 = vsel %vm445, %v435, 0
      %v468 = vsel %vm445, %v436, 0
      %v471 = vsel %vm445, %v437, 0
      %v474 = vsel %vm445, %v438, 0
      %v477 = vsel %vm445, %v439, 0
      %v480 = vsel %vm445, %v440, 0
      %v483 = vsel %vm445, %v441, 0
      %v486 = vsel %vm445, %v442, 0
      %v489 = vsel %vm445, %v443, 0
      %v492 = vsel %vm445, %v444, 0
      %vm494 = vcmask 1041408
      %v496 = vsel %vm494, %v364, 0
      %498 = vmatprep.subr.bf16.mxu0 0
      %499 = vmatpush1.bf16.msra.mxu0 %v496
      %500 = vmatprep.subr.bf16.mxu0 0
      %501 = vmatpush1.bf16.msra.mxu0 0
      %502 = vmatprep.subr.bf16.mxu0 0
      %503 = vmatpush1.bf16.msra.mxu0 0
      %504 = vmatprep.subr.bf16.mxu0 0
      %505 = vmatpush1.bf16.msra.mxu0 0
      %506 = vmatprep.subr.bf16.mxu0 0
      %507 = vmatpush1.bf16.msra.mxu0 0
      %508 = vmatprep.subr.bf16.mxu0 0
      %509 = vmatpush1.bf16.msra.mxu0 0
      %510 = vmatprep.subr.bf16.mxu0 0
      %511 = vmatpush1.bf16.msra.mxu0 0
      %512 = vmatprep.subr.bf16.mxu0 0
      %513 = vmatpush1.bf16.msra.mxu0 0
      %514 = vmatprep.subr.bf16.mxu0 0
      %515 = vmatpush1.bf16.msra.mxu0 0
      %516 = vmatprep.subr.bf16.mxu0 0
      %517 = vmatpush1.bf16.msra.mxu0 0
      %518 = vmatprep.subr.bf16.mxu0 0
      %519 = vmatpush1.bf16.msra.mxu0 0
      %520 = vmatprep.subr.bf16.mxu0 0
      %521 = vmatpush1.bf16.msra.mxu0 0
      %522 = vmatprep.subr.bf16.mxu0 0
      %523 = vmatpush1.bf16.msra.mxu0 0
      %524 = vmatprep.subr.bf16.mxu0 0
      %525 = vmatpush1.bf16.msra.mxu0 0
      %526 = vmatprep.subr.bf16.mxu0 0
      %527 = vmatpush1.bf16.msra.mxu0 0
      %528 = vmatprep.subr.bf16.mxu0 0
      %529 = vmatpush1.bf16.msra.mxu0 0
      %530 = vmatprep.mubr.bf16.mxu0 0
      %531 = vmatmul.mubr.bf16.gmra.mrb[0].mxu0 %v447
      %v532 = vpop.f32.mrb[0].mxu0
      %v533 = vadd.f32 0.0, %v532
      %v534 = vpop.f32.mrb[0].mxu0
      %v535 = vpop.f32.mrb[0].mxu0
      %v536 = vadd.f32 0.0, %v535
      %v537 = vpop.f32.mrb[0].mxu0
      %538 = vmatprep.mubr.bf16.mxu0 0
      %539 = vmatmul.mubr.bf16.gmra.mrb[0].mxu0 %v450
      %v540 = vpop.f32.mrb[0].mxu0
      %v541 = vadd.f32 0.0, %v540
      %v542 = vpop.f32.mrb[0].mxu0
      %v543 = vpop.f32.mrb[0].mxu0
      %v544 = vadd.f32 0.0, %v543
      %v545 = vpop.f32.mrb[0].mxu0
      %546 = vmatprep.mubr.bf16.mxu0 0
      %547 = vmatmul.mubr.bf16.gmra.mrb[0].mxu0 %v453
      %v548 = vpop.f32.mrb[0].mxu0
      %v549 = vadd.f32 0.0, %v548
      %v550 = vpop.f32.mrb[0].mxu0
      %v551 = vpop.f32.mrb[0].mxu0
      %v552 = vadd.f32 0.0, %v551
      %v553 = vpop.f32.mrb[0].mxu0
      %554 = vmatprep.mubr.bf16.mxu0 0
      %555 = vmatmul.mubr.bf16.gmra.mrb[0].mxu0 %v456
      %v556 = vpop.f32.mrb[0].mxu0
      %v557 = vadd.f32 0.0, %v556
      %v558 = vpop.f32.mrb[0].mxu0
      %v559 = vpop.f32.mrb[0].mxu0
      %v560 = vadd.f32 0.0, %v559
      %v561 = vpop.f32.mrb[0].mxu0
      %562 = vmatprep.mubr.bf16.mxu0 0
      %563 = vmatmul.mubr.bf16.gmra.mrb[0].mxu0 %v459
      %v564 = vpop.f32.mrb[0].mxu0
      %v565 = vadd.f32 0.0, %v564
      %v566 = vpop.f32.mrb[0].mxu0
      %v567 = vpop.f32.mrb[0].mxu0
      %v568 = vadd.f32 0.0, %v567
      %v569 = vpop.f32.mrb[0].mxu0
      %570 = vmatprep.mubr.bf16.mxu0 0
      %571 = vmatmul.mubr.bf16.gmra.mrb[0].mxu0 %v462
      %v572 = vpop.f32.mrb[0].mxu0
      %v573 = vadd.f32 0.0, %v572
      %v574 = vpop.f32.mrb[0].mxu0
      %v575 = vpop.f32.mrb[0].mxu0
      %v576 = vadd.f32 0.0, %v575
      %v577 = vpop.f32.mrb[0].mxu0
      %578 = vmatprep.mubr.bf16.mxu0 0
      %579 = vmatmul.mubr.bf16.gmra.mrb[0].mxu0 %v465
      %v580 = vpop.f32.mrb[0].mxu0
      %v581 = vadd.f32 0.0, %v580
      %v582 = vpop.f32.mrb[0].mxu0
      %v583 = vpop.f32.mrb[0].mxu0
      %v584 = vadd.f32 0.0, %v583
      %v585 = vpop.f32.mrb[0].mxu0
      %586 = vmatprep.mubr.bf16.mxu0 0
      %587 = vmatmul.mubr.bf16.gmra.mrb[0].mxu0 %v468
      %v588 = vpop.f32.mrb[0].mxu0
      %v589 = vadd.f32 0.0, %v588
      %v590 = vpop.f32.mrb[0].mxu0
      %v591 = vpop.f32.mrb[0].mxu0
      %v592 = vadd.f32 0.0, %v591
      %v593 = vpop.f32.mrb[0].mxu0
      %594 = vmatprep.mubr.bf16.mxu0 0
      %595 = vmatmul.mubr.bf16.gmra.mrb[0].mxu0 %v471
      %v596 = vpop.f32.mrb[0].mxu0
      %v597 = vadd.f32 0.0, %v596
      %v598 = vpop.f32.mrb[0].mxu0
      %v599 = vpop.f32.mrb[0].mxu0
      %v600 = vadd.f32 0.0, %v599
      %v601 = vpop.f32.mrb[0].mxu0
      %602 = vmatprep.mubr.bf16.mxu0 0
      %603 = vmatmul.mubr.bf16.gmra.mrb[0].mxu0 %v474
      %v604 = vpop.f32.mrb[0].mxu0
      %v605 = vadd.f32 0.0, %v604
      %v606 = vpop.f32.mrb[0].mxu0
      %v607 = vpop.f32.mrb[0].mxu0
      %v608 = vadd.f32 0.0, %v607
      %v609 = vpop.f32.mrb[0].mxu0
      %610 = vmatprep.mubr.bf16.mxu0 0
      %611 = vmatmul.mubr.bf16.gmra.mrb[0].mxu0 %v477
      %v612 = vpop.f32.mrb[0].mxu0
      %v613 = vadd.f32 0.0, %v612
      %v614 = vpop.f32.mrb[0].mxu0
      %v615 = vpop.f32.mrb[0].mxu0
      %v616 = vadd.f32 0.0, %v615
      %v617 = vpop.f32.mrb[0].mxu0
      %618 = vmatprep.mubr.bf16.mxu0 0
      %619 = vmatmul.mubr.bf16.gmra.mrb[0].mxu0 %v480
      %v620 = vpop.f32.mrb[0].mxu0
      %v621 = vadd.f32 0.0, %v620
      %v622 = vpop.f32.mrb[0].mxu0
      %v623 = vpop.f32.mrb[0].mxu0
      %v624 = vadd.f32 0.0, %v623
      %v625 = vpop.f32.mrb[0].mxu0
      %626 = vmatprep.mubr.bf16.mxu0 0
      %627 = vmatmul.mubr.bf16.gmra.mrb[0].mxu0 %v483
      %v628 = vpop.f32.mrb[0].mxu0
      %v629 = vadd.f32 0.0, %v628
      %v630 = vpop.f32.mrb[0].mxu0
      %v631 = vpop.f32.mrb[0].mxu0
      %v632 = vadd.f32 0.0, %v631
      %v633 = vpop.f32.mrb[0].mxu0
      %634 = vmatprep.mubr.bf16.mxu0 0
      %635 = vmatmul.mubr.bf16.gmra.mrb[0].mxu0 %v486
      %v636 = vpop.f32.mrb[0].mxu0
      %v637 = vadd.f32 0.0, %v636
      %v638 = vpop.f32.mrb[0].mxu0
      %v639 = vpop.f32.mrb[0].mxu0
      %v640 = vadd.f32 0.0, %v639
      %v641 = vpop.f32.mrb[0].mxu0
      %642 = vmatprep.mubr.bf16.mxu0 0
      %643 = vmatmul.mubr.bf16.gmra.mrb[0].mxu0 %v489
      %v644 = vpop.f32.mrb[0].mxu0
      %v645 = vadd.f32 0.0, %v644
      %v646 = vpop.f32.mrb[0].mxu0
      %v647 = vpop.f32.mrb[0].mxu0
      %v648 = vadd.f32 0.0, %v647
      %v649 = vpop.f32.mrb[0].mxu0
      %650 = vmatprep.mubr.bf16.mxu0 0
      %651 = vmatmul.mubr.bf16.gmra.mrb[0].mxu0 %v492
      %v652 = vpop.f32.mrb[0].mxu0
      %v653 = vadd.f32 0.0, %v652
      %v654 = vpop.f32.mrb[0].mxu0
      %v655 = vpop.f32.mrb[0].mxu0
      %v656 = vadd.f32 0.0, %v655
      %v657 = vpop.f32.mrb[0].mxu0
      %658 = vdwg.mxu0
      %v659 = vld [vmem:[%s2] sm:$0x1]
      %v661 = vlaneseq
      %v662 = vshrl.u32 %v661, 7
      %v663 = vsub.s32 0, %v662
      %v664 = vrot.slane %v659, %v663
      %v666 = vmul.f32 %v533, %v664
      %v667 = vmul.f32 %v536, %v664
      %v668 = vmul.f32 %v541, %v664
      %v669 = vmul.f32 %v544, %v664
      %v670 = vmul.f32 %v549, %v664
      %v671 = vmul.f32 %v552, %v664
      %v672 = vmul.f32 %v557, %v664
      %v673 = vmul.f32 %v560, %v664
      %v674 = vmul.f32 %v565, %v664
      %v675 = vmul.f32 %v568, %v664
      %v676 = vmul.f32 %v573, %v664
      %v677 = vmul.f32 %v576, %v664
      %v678 = vmul.f32 %v581, %v664
      %v679 = vmul.f32 %v584, %v664
      %v680 = vmul.f32 %v589, %v664
      %v681 = vmul.f32 %v592, %v664
      %v682 = vmul.f32 %v597, %v664
      %v683 = vmul.f32 %v600, %v664
      %v684 = vmul.f32 %v605, %v664
      %v685 = vmul.f32 %v608, %v664
      %v686 = vmul.f32 %v613, %v664
      %v687 = vmul.f32 %v616, %v664
      %v688 = vmul.f32 %v621, %v664
      %v689 = vmul.f32 %v624, %v664
      %v690 = vmul.f32 %v629, %v664
      %v691 = vmul.f32 %v632, %v664
      %v692 = vmul.f32 %v637, %v664
      %v693 = vmul.f32 %v640, %v664
      %v694 = vmul.f32 %v645, %v664
      %v695 = vmul.f32 %v648, %v664
      %v696 = vmul.f32 %v653, %v664
      %v697 = vmul.f32 %v656, %v664
      %v698 = vld [vmem:[%s3] sm:$0x1]
      %v700 = vlaneseq
      %v701 = vshrl.u32 %v700, 7
      %v702 = vsub.s32 0, %v701
      %v703 = vrot.slane %v698, %v702
      %v705 = vadd.f32 %v666, %v703
      %v706 = vadd.f32 %v667, %v703
      %v707 = vadd.f32 %v668, %v703
      %v708 = vadd.f32 %v669, %v703
      %v709 = vadd.f32 %v670, %v703
      %v710 = vadd.f32 %v671, %v703
      %v711 = vadd.f32 %v672, %v703
      %v712 = vadd.f32 %v673, %v703
      %v713 = vadd.f32 %v674, %v703
      %v714 = vadd.f32 %v675, %v703
      %v715 = vadd.f32 %v676, %v703
      %v716 = vadd.f32 %v677, %v703
      %v717 = vadd.f32 %v678, %v703
      %v718 = vadd.f32 %v679, %v703
      %v719 = vadd.f32 %v680, %v703
      %v720 = vadd.f32 %v681, %v703
      %v721 = vadd.f32 %v682, %v703
      %v722 = vadd.f32 %v683, %v703
      %v723 = vadd.f32 %v684, %v703
      %v724 = vadd.f32 %v685, %v703
      %v725 = vadd.f32 %v686, %v703
      %v726 = vadd.f32 %v687, %v703
      %v727 = vadd.f32 %v688, %v703
      %v728 = vadd.f32 %v689, %v703
      %v729 = vadd.f32 %v690, %v703
      %v730 = vadd.f32 %v691, %v703
      %v731 = vadd.f32 %v692, %v703
      %v732 = vadd.f32 %v693, %v703
      %v733 = vadd.f32 %v694, %v703
      %v734 = vadd.f32 %v695, %v703
      %v735 = vadd.f32 %v696, %v703
      %v736 = vadd.f32 %v697, %v703
      %v737 = vld [vmem:[%s323] sm:$0xf]
      %v738 = vld [vmem:[%s323 + $0x4] sm:$0xf]
      %v739 = vld [vmem:[%s323 + $0x8] sm:$0xf]
      %v740 = vld [vmem:[%s323 + $0xc] sm:$0xf]
      %v741 = vld [vmem:[%s323 + $0x10] sm:$0xf]
      %v742 = vld [vmem:[%s323 + $0x14] sm:$0xf]
      %v743 = vld [vmem:[%s323 + $0x18] sm:$0xf]
      %v744 = vld [vmem:[%s323 + $0x1c] sm:$0xf]
      %v745 = vld [vmem:[%s323 + $0x20] sm:$0xf]
      %v746 = vld [vmem:[%s323 + $0x24] sm:$0xf]
      %v747 = vld [vmem:[%s323 + $0x28] sm:$0xf]
      %v748 = vld [vmem:[%s323 + $0x2c] sm:$0xf]
      %v749 = vld [vmem:[%s323 + $0x30] sm:$0xf]
      %v750 = vld [vmem:[%s323 + $0x34] sm:$0xf]
      %v751 = vld [vmem:[%s323 + $0x38] sm:$0xf]
      %v752 = vld [vmem:[%s323 + $0x3c] sm:$0xf]
      %v753 = vld [vmem:[%s323 + $0x40] sm:$0xf]
      %v754 = vld [vmem:[%s323 + $0x44] sm:$0xf]
      %v755 = vld [vmem:[%s323 + $0x48] sm:$0xf]
      %v756 = vld [vmem:[%s323 + $0x4c] sm:$0xf]
      %v757 = vld [vmem:[%s323 + $0x50] sm:$0xf]
      %v758 = vld [vmem:[%s323 + $0x54] sm:$0xf]
      %v759 = vld [vmem:[%s323 + $0x58] sm:$0xf]
      %v760 = vld [vmem:[%s323 + $0x5c] sm:$0xf]
      %v761 = vld [vmem:[%s323 + $0x60] sm:$0xf]
      %v762 = vld [vmem:[%s323 + $0x64] sm:$0xf]
      %v763 = vld [vmem:[%s323 + $0x68] sm:$0xf]
      %v764 = vld [vmem:[%s323 + $0x6c] sm:$0xf]
      %v765 = vld [vmem:[%s323 + $0x70] sm:$0xf]
      %v766 = vld [vmem:[%s323 + $0x74] sm:$0xf]
      %v767 = vld [vmem:[%s323 + $0x78] sm:$0xf]
      %v768 = vld [vmem:[%s323 + $0x7c] sm:$0xf]
      %v769 = vld [vmem:[%s5] sm:$0x3]
      %v802 = vunpack.c.l.b16 %v737
      %v803 = vunpack.c.l.b16 %v738
      %v804 = vunpack.c.l.b16 %v739
      %v805 = vunpack.c.l.b16 %v740
      %v806 = vunpack.c.l.b16 %v741
      %v807 = vunpack.c.l.b16 %v742
      %v808 = vunpack.c.l.b16 %v743
      %v809 = vunpack.c.l.b16 %v744
      %v810 = vunpack.c.l.b16 %v745
      %v811 = vunpack.c.l.b16 %v746
      %v812 = vunpack.c.l.b16 %v747
      %v813 = vunpack.c.l.b16 %v748
      %v814 = vunpack.c.l.b16 %v749
      %v815 = vunpack.c.l.b16 %v750
      %v816 = vunpack.c.l.b16 %v751
      %v817 = vunpack.c.l.b16 %v752
      %v818 = vunpack.c.l.b16 %v753
      %v819 = vunpack.c.l.b16 %v754
      %v820 = vunpack.c.l.b16 %v755
      %v821 = vunpack.c.l.b16 %v756
      %v822 = vunpack.c.l.b16 %v757
      %v823 = vunpack.c.l.b16 %v758
      %v824 = vunpack.c.l.b16 %v759
      %v825 = vunpack.c.l.b16 %v760
      %v826 = vunpack.c.l.b16 %v761
      %v827 = vunpack.c.l.b16 %v762
      %v828 = vunpack.c.l.b16 %v763
      %v829 = vunpack.c.l.b16 %v764
      %v830 = vunpack.c.l.b16 %v765
      %v831 = vunpack.c.l.b16 %v766
      %v832 = vunpack.c.l.b16 %v767
      %v833 = vunpack.c.l.b16 %v768
      %v834 = vpack.c.b16 %v803, %v802
      %v835 = vpack.c.b16 %v805, %v804
      %v836 = vpack.c.b16 %v807, %v806
      %v837 = vpack.c.b16 %v809, %v808
      %v838 = vpack.c.b16 %v811, %v810
      %v839 = vpack.c.b16 %v813, %v812
      %v840 = vpack.c.b16 %v815, %v814
      %v841 = vpack.c.b16 %v817, %v816
      %v842 = vpack.c.b16 %v819, %v818
      %v843 = vpack.c.b16 %v821, %v820
      %v844 = vpack.c.b16 %v823, %v822
      %v845 = vpack.c.b16 %v825, %v824
      %v846 = vpack.c.b16 %v827, %v826
      %v847 = vpack.c.b16 %v829, %v828
      %v848 = vpack.c.b16 %v831, %v830
      %v849 = vpack.c.b16 %v833, %v832
      %v851 = vsel %vm445, %v834, 0
      %v854 = vsel %vm445, %v835, 0
      %v857 = vsel %vm445, %v836, 0
      %v860 = vsel %vm445, %v837, 0
      %v863 = vsel %vm445, %v838, 0
      %v866 = vsel %vm445, %v839, 0
      %v869 = vsel %vm445, %v840, 0
      %v872 = vsel %vm445, %v841, 0
      %v875 = vsel %vm445, %v842, 0
      %v878 = vsel %vm445, %v843, 0
      %v881 = vsel %vm445, %v844, 0
      %v884 = vsel %vm445, %v845, 0
      %v887 = vsel %vm445, %v846, 0
      %v890 = vsel %vm445, %v847, 0
      %v893 = vsel %vm445, %v848, 0
      %v896 = vsel %vm445, %v849, 0
      %v899 = vsel %vm494, %v769, 0
      %901 = vmatprep.subr.bf16.mxu0 0
      %902 = vmatpush1.bf16.msra.mxu0 %v899
      %903 = vmatprep.subr.bf16.mxu0 0
      %904 = vmatpush1.bf16.msra.mxu0 0
      %905 = vmatprep.subr.bf16.mxu0 0
      %906 = vmatpush1.bf16.msra.mxu0 0
      %907 = vmatprep.subr.bf16.mxu0 0
      %908 = vmatpush1.bf16.msra.mxu0 0
      %909 = vmatprep.subr.bf16.mxu0 0
      %910 = vmatpush1.bf16.msra.mxu0 0
      %911 = vmatprep.subr.bf16.mxu0 0
      %912 = vmatpush1.bf16.msra.mxu0 0
      %913 = vmatprep.subr.bf16.mxu0 0
      %914 = vmatpush1.bf16.msra.mxu0 0
      %915 = vmatprep.subr.bf16.mxu0 0
      %916 = vmatpush1.bf16.msra.mxu0 0
      %917 = vmatprep.subr.bf16.mxu0 0
      %918 = vmatpush1.bf16.msra.mxu0 0
      %919 = vmatprep.subr.bf16.mxu0 0
      %920 = vmatpush1.bf16.msra.mxu0 0
      %921 = vmatprep.subr.bf16.mxu0 0
      %922 = vmatpush1.bf16.msra.mxu0 0
      %923 = vmatprep.subr.bf16.mxu0 0
      %924 = vmatpush1.bf16.msra.mxu0 0
      %925 = vmatprep.subr.bf16.mxu0 0
      %926 = vmatpush1.bf16.msra.mxu0 0
      %927 = vmatprep.subr.bf16.mxu0 0
      %928 = vmatpush1.bf16.msra.mxu0 0
      %929 = vmatprep.subr.bf16.mxu0 0
      %930 = vmatpush1.bf16.msra.mxu0 0
      %931 = vmatprep.subr.bf16.mxu0 0
      %932 = vmatpush1.bf16.msra.mxu0 0
      %933 = vmatprep.mubr.bf16.mxu0 0
      %934 = vmatmul.mubr.bf16.gmra.mrb[0].mxu0 %v851
      %v935 = vpop.f32.mrb[0].mxu0
      %v936 = vadd.f32 0.0, %v935
      %v937 = vpop.f32.mrb[0].mxu0
      %v938 = vpop.f32.mrb[0].mxu0
      %v939 = vadd.f32 0.0, %v938
      %v940 = vpop.f32.mrb[0].mxu0
      %941 = vmatprep.mubr.bf16.mxu0 0
      %942 = vmatmul.mubr.bf16.gmra.mrb[0].mxu0 %v854
      %v943 = vpop.f32.mrb[0].mxu0
      %v944 = vadd.f32 0.0, %v943
      %v945 = vpop.f32.mrb[0].mxu0
      %v946 = vpop.f32.mrb[0].mxu0
      %v947 = vadd.f32 0.0, %v946
      %v948 = vpop.f32.mrb[0].mxu0
      %949 = vmatprep.mubr.bf16.mxu0 0
      %950 = vmatmul.mubr.bf16.gmra.mrb[0].mxu0 %v857
      %v951 = vpop.f32.mrb[0].mxu0
      %v952 = vadd.f32 0.0, %v951
      %v953 = vpop.f32.mrb[0].mxu0
      %v954 = vpop.f32.mrb[0].mxu0
      %v955 = vadd.f32 0.0, %v954
      %v956 = vpop.f32.mrb[0].mxu0
      %957 = vmatprep.mubr.bf16.mxu0 0
      %958 = vmatmul.mubr.bf16.gmra.mrb[0].mxu0 %v860
      %v959 = vpop.f32.mrb[0].mxu0
      %v960 = vadd.f32 0.0, %v959
      %v961 = vpop.f32.mrb[0].mxu0
      %v962 = vpop.f32.mrb[0].mxu0
      %v963 = vadd.f32 0.0, %v962
      %v964 = vpop.f32.mrb[0].mxu0
      %965 = vmatprep.mubr.bf16.mxu0 0
      %966 = vmatmul.mubr.bf16.gmra.mrb[0].mxu0 %v863
      %v967 = vpop.f32.mrb[0].mxu0
      %v968 = vadd.f32 0.0, %v967
      %v969 = vpop.f32.mrb[0].mxu0
      %v970 = vpop.f32.mrb[0].mxu0
      %v971 = vadd.f32 0.0, %v970
      %v972 = vpop.f32.mrb[0].mxu0
      %973 = vmatprep.mubr.bf16.mxu0 0
      %974 = vmatmul.mubr.bf16.gmra.mrb[0].mxu0 %v866
      %v975 = vpop.f32.mrb[0].mxu0
      %v976 = vadd.f32 0.0, %v975
      %v977 = vpop.f32.mrb[0].mxu0
      %v978 = vpop.f32.mrb[0].mxu0
      %v979 = vadd.f32 0.0, %v978
      %v980 = vpop.f32.mrb[0].mxu0
      %981 = vmatprep.mubr.bf16.mxu0 0
      %982 = vmatmul.mubr.bf16.gmra.mrb[0].mxu0 %v869
      %v983 = vpop.f32.mrb[0].mxu0
      %v984 = vadd.f32 0.0, %v983
      %v985 = vpop.f32.mrb[0].mxu0
      %v986 = vpop.f32.mrb[0].mxu0
      %v987 = vadd.f32 0.0, %v986
      %v988 = vpop.f32.mrb[0].mxu0
      %989 = vmatprep.mubr.bf16.mxu0 0
      %990 = vmatmul.mubr.bf16.gmra.mrb[0].mxu0 %v872
      %v991 = vpop.f32.mrb[0].mxu0
      %v992 = vadd.f32 0.0, %v991
      %v993 = vpop.f32.mrb[0].mxu0
      %v994 = vpop.f32.mrb[0].mxu0
      %v995 = vadd.f32 0.0, %v994
      %v996 = vpop.f32.mrb[0].mxu0
      %997 = vmatprep.mubr.bf16.mxu0 0
      %998 = vmatmul.mubr.bf16.gmra.mrb[0].mxu0 %v875
      %v999 = vpop.f32.mrb[0].mxu0
      %v1000 = vadd.f32 0.0, %v999
      %v1001 = vpop.f32.mrb[0].mxu0
      %v1002 = vpop.f32.mrb[0].mxu0
      %v1003 = vadd.f32 0.0, %v1002
      %v1004 = vpop.f32.mrb[0].mxu0
      %1005 = vmatprep.mubr.bf16.mxu0 0
      %1006 = vmatmul.mubr.bf16.gmra.mrb[0].mxu0 %v878
      %v1007 = vpop.f32.mrb[0].mxu0
      %v1008 = vadd.f32 0.0, %v1007
      %v1009 = vpop.f32.mrb[0].mxu0
      %v1010 = vpop.f32.mrb[0].mxu0
      %v1011 = vadd.f32 0.0, %v1010
      %v1012 = vpop.f32.mrb[0].mxu0
      %1013 = vmatprep.mubr.bf16.mxu0 0
      %1014 = vmatmul.mubr.bf16.gmra.mrb[0].mxu0 %v881
      %v1015 = vpop.f32.mrb[0].mxu0
      %v1016 = vadd.f32 0.0, %v1015
      %v1017 = vpop.f32.mrb[0].mxu0
      %v1018 = vpop.f32.mrb[0].mxu0
      %v1019 = vadd.f32 0.0, %v1018
      %v1020 = vpop.f32.mrb[0].mxu0
      %1021 = vmatprep.mubr.bf16.mxu0 0
      %1022 = vmatmul.mubr.bf16.gmra.mrb[0].mxu0 %v884
      %v1023 = vpop.f32.mrb[0].mxu0
      %v1024 = vadd.f32 0.0, %v1023
      %v1025 = vpop.f32.mrb[0].mxu0
      %v1026 = vpop.f32.mrb[0].mxu0
      %v1027 = vadd.f32 0.0, %v1026
      %v1028 = vpop.f32.mrb[0].mxu0
      %1029 = vmatprep.mubr.bf16.mxu0 0
      %1030 = vmatmul.mubr.bf16.gmra.mrb[0].mxu0 %v887
      %v1031 = vpop.f32.mrb[0].mxu0
      %v1032 = vadd.f32 0.0, %v1031
      %v1033 = vpop.f32.mrb[0].mxu0
      %v1034 = vpop.f32.mrb[0].mxu0
      %v1035 = vadd.f32 0.0, %v1034
      %v1036 = vpop.f32.mrb[0].mxu0
      %1037 = vmatprep.mubr.bf16.mxu0 0
      %1038 = vmatmul.mubr.bf16.gmra.mrb[0].mxu0 %v890
      %v1039 = vpop.f32.mrb[0].mxu0
      %v1040 = vadd.f32 0.0, %v1039
      %v1041 = vpop.f32.mrb[0].mxu0
      %v1042 = vpop.f32.mrb[0].mxu0
      %v1043 = vadd.f32 0.0, %v1042
      %v1044 = vpop.f32.mrb[0].mxu0
      %1045 = vmatprep.mubr.bf16.mxu0 0
      %1046 = vmatmul.mubr.bf16.gmra.mrb[0].mxu0 %v893
      %v1047 = vpop.f32.mrb[0].mxu0
      %v1048 = vadd.f32 0.0, %v1047
      %v1049 = vpop.f32.mrb[0].mxu0
      %v1050 = vpop.f32.mrb[0].mxu0
      %v1051 = vadd.f32 0.0, %v1050
      %v1052 = vpop.f32.mrb[0].mxu0
      %1053 = vmatprep.mubr.bf16.mxu0 0
      %1054 = vmatmul.mubr.bf16.gmra.mrb[0].mxu0 %v896
      %v1055 = vpop.f32.mrb[0].mxu0
      %v1056 = vadd.f32 0.0, %v1055
      %v1057 = vpop.f32.mrb[0].mxu0
      %v1058 = vpop.f32.mrb[0].mxu0
      %v1059 = vadd.f32 0.0, %v1058
      %v1060 = vpop.f32.mrb[0].mxu0
      %1061 = vdwg.mxu0
      %v1062 = vld [vmem:[%s6] sm:$0x1]
      %v1064 = vlaneseq
      %v1065 = vshrl.u32 %v1064, 7
      %v1066 = vsub.s32 0, %v1065
      %v1067 = vrot.slane %v1062, %v1066
      %v1069 = vmul.f32 %v936, %v1067
      %v1070 = vmul.f32 %v939, %v1067
      %v1071 = vmul.f32 %v944, %v1067
      %v1072 = vmul.f32 %v947, %v1067
      %v1073 = vmul.f32 %v952, %v1067
      %v1074 = vmul.f32 %v955, %v1067
      %v1075 = vmul.f32 %v960, %v1067
      %v1076 = vmul.f32 %v963, %v1067
      %v1077 = vmul.f32 %v968, %v1067
      %v1078 = vmul.f32 %v971, %v1067
      %v1079 = vmul.f32 %v976, %v1067
      %v1080 = vmul.f32 %v979, %v1067
      %v1081 = vmul.f32 %v984, %v1067
      %v1082 = vmul.f32 %v987, %v1067
      %v1083 = vmul.f32 %v992, %v1067
      %v1084 = vmul.f32 %v995, %v1067
      %v1085 = vmul.f32 %v1000, %v1067
      %v1086 = vmul.f32 %v1003, %v1067
      %v1087 = vmul.f32 %v1008, %v1067
      %v1088 = vmul.f32 %v1011, %v1067
      %v1089 = vmul.f32 %v1016, %v1067
      %v1090 = vmul.f32 %v1019, %v1067
      %v1091 = vmul.f32 %v1024, %v1067
      %v1092 = vmul.f32 %v1027, %v1067
      %v1093 = vmul.f32 %v1032, %v1067
      %v1094 = vmul.f32 %v1035, %v1067
      %v1095 = vmul.f32 %v1040, %v1067
      %v1096 = vmul.f32 %v1043, %v1067
      %v1097 = vmul.f32 %v1048, %v1067
      %v1098 = vmul.f32 %v1051, %v1067
      %v1099 = vmul.f32 %v1056, %v1067
      %v1100 = vmul.f32 %v1059, %v1067
      %v1101 = vld [vmem:[%s7] sm:$0x1]
      %v1103 = vlaneseq
      %v1104 = vshrl.u32 %v1103, 7
      %v1105 = vsub.s32 0, %v1104
      %v1106 = vrot.slane %v1101, %v1105
      %v1108 = vadd.f32 %v1069, %v1106
      %v1109 = vadd.f32 %v1070, %v1106
      %v1110 = vadd.f32 %v1071, %v1106
      %v1111 = vadd.f32 %v1072, %v1106
      %v1112 = vadd.f32 %v1073, %v1106
      %v1113 = vadd.f32 %v1074, %v1106
      %v1114 = vadd.f32 %v1075, %v1106
      %v1115 = vadd.f32 %v1076, %v1106
      %v1116 = vadd.f32 %v1077, %v1106
      %v1117 = vadd.f32 %v1078, %v1106
      %v1118 = vadd.f32 %v1079, %v1106
      %v1119 = vadd.f32 %v1080, %v1106
      %v1120 = vadd.f32 %v1081, %v1106
      %v1121 = vadd.f32 %v1082, %v1106
      %v1122 = vadd.f32 %v1083, %v1106
      %v1123 = vadd.f32 %v1084, %v1106
      %v1124 = vadd.f32 %v1085, %v1106
      %v1125 = vadd.f32 %v1086, %v1106
      %v1126 = vadd.f32 %v1087, %v1106
      %v1127 = vadd.f32 %v1088, %v1106
      %v1128 = vadd.f32 %v1089, %v1106
      %v1129 = vadd.f32 %v1090, %v1106
      %v1130 = vadd.f32 %v1091, %v1106
      %v1131 = vadd.f32 %v1092, %v1106
      %v1132 = vadd.f32 %v1093, %v1106
      %v1133 = vadd.f32 %v1094, %v1106
      %v1134 = vadd.f32 %v1095, %v1106
      %v1135 = vadd.f32 %v1096, %v1106
      %v1136 = vadd.f32 %v1097, %v1106
      %v1137 = vadd.f32 %v1098, %v1106
      %v1138 = vadd.f32 %v1099, %v1106
      %v1139 = vadd.f32 %v1100, %v1106
      %v1140 = vadd.f32 %v705, %v1108
      %v1141 = vadd.f32 %v706, %v1109
      %v1142 = vadd.f32 %v707, %v1110
      %v1143 = vadd.f32 %v708, %v1111
      %v1144 = vadd.f32 %v709, %v1112
      %v1145 = vadd.f32 %v710, %v1113
      %v1146 = vadd.f32 %v711, %v1114
      %v1147 = vadd.f32 %v712, %v1115
      %v1148 = vadd.f32 %v713, %v1116
      %v1149 = vadd.f32 %v714, %v1117
      %v1150 = vadd.f32 %v715, %v1118
      %v1151 = vadd.f32 %v716, %v1119
      %v1152 = vadd.f32 %v717, %v1120
      %v1153 = vadd.f32 %v718, %v1121
      %v1154 = vadd.f32 %v719, %v1122
      %v1155 = vadd.f32 %v720, %v1123
      %v1156 = vadd.f32 %v721, %v1124
      %v1157 = vadd.f32 %v722, %v1125
      %v1158 = vadd.f32 %v723, %v1126
      %v1159 = vadd.f32 %v724, %v1127
      %v1160 = vadd.f32 %v725, %v1128
      %v1161 = vadd.f32 %v726, %v1129
      %v1162 = vadd.f32 %v727, %v1130
      %v1163 = vadd.f32 %v728, %v1131
      %v1164 = vadd.f32 %v729, %v1132
      %v1165 = vadd.f32 %v730, %v1133
      %v1166 = vadd.f32 %v731, %v1134
      %v1167 = vadd.f32 %v732, %v1135
      %v1168 = vadd.f32 %v733, %v1136
      %v1169 = vadd.f32 %v734, %v1137
      %v1170 = vadd.f32 %v735, %v1138
      %v1171 = vadd.f32 %v736, %v1139
      %v1172 = vmax.f32 %v1140, 0.0
      %v1173 = vmax.f32 %v1141, 0.0
      %v1174 = vmax.f32 %v1142, 0.0
      %v1175 = vmax.f32 %v1143, 0.0
      %v1176 = vmax.f32 %v1144, 0.0
      %v1177 = vmax.f32 %v1145, 0.0
      %v1178 = vmax.f32 %v1146, 0.0
      %v1179 = vmax.f32 %v1147, 0.0
      %v1180 = vmax.f32 %v1148, 0.0
      %v1181 = vmax.f32 %v1149, 0.0
      %v1182 = vmax.f32 %v1150, 0.0
      %v1183 = vmax.f32 %v1151, 0.0
      %v1184 = vmax.f32 %v1152, 0.0
      %v1185 = vmax.f32 %v1153, 0.0
      %v1186 = vmax.f32 %v1154, 0.0
      %v1187 = vmax.f32 %v1155, 0.0
      %v1188 = vmax.f32 %v1156, 0.0
      %v1189 = vmax.f32 %v1157, 0.0
      %v1190 = vmax.f32 %v1158, 0.0
      %v1191 = vmax.f32 %v1159, 0.0
      %v1192 = vmax.f32 %v1160, 0.0
      %v1193 = vmax.f32 %v1161, 0.0
      %v1194 = vmax.f32 %v1162, 0.0
      %v1195 = vmax.f32 %v1163, 0.0
      %v1196 = vmax.f32 %v1164, 0.0
      %v1197 = vmax.f32 %v1165, 0.0
      %v1198 = vmax.f32 %v1166, 0.0
      %v1199 = vmax.f32 %v1167, 0.0
      %v1200 = vmax.f32 %v1168, 0.0
      %v1201 = vmax.f32 %v1169, 0.0
      %v1202 = vmax.f32 %v1170, 0.0
      %v1203 = vmax.f32 %v1171, 0.0
      %v1204 = vpack.c.bf16 %v1173, %v1172
      %v1205 = vpack.c.bf16 %v1175, %v1174
      %v1206 = vpack.c.bf16 %v1177, %v1176
      %v1207 = vpack.c.bf16 %v1179, %v1178
      %v1208 = vpack.c.bf16 %v1181, %v1180
      %v1209 = vpack.c.bf16 %v1183, %v1182
      %v1210 = vpack.c.bf16 %v1185, %v1184
      %v1211 = vpack.c.bf16 %v1187, %v1186
      %v1212 = vpack.c.bf16 %v1189, %v1188
      %v1213 = vpack.c.bf16 %v1191, %v1190
      %v1214 = vpack.c.bf16 %v1193, %v1192
      %v1215 = vpack.c.bf16 %v1195, %v1194
      %v1216 = vpack.c.bf16 %v1197, %v1196
      %v1217 = vpack.c.bf16 %v1199, %v1198
      %v1218 = vpack.c.bf16 %v1201, %v1200
      %v1219 = vpack.c.bf16 %v1203, %v1202
      %v1236 = vunpack.c.l.b16 %v1204
      %v1237 = vunpack.c.h.b16 %v1204
      %v1238 = vunpack.c.l.b16 %v1205
      %v1239 = vunpack.c.h.b16 %v1205
      %v1240 = vunpack.c.l.b16 %v1206
      %v1241 = vunpack.c.h.b16 %v1206
      %v1242 = vunpack.c.l.b16 %v1207
      %v1243 = vunpack.c.h.b16 %v1207
      %v1244 = vunpack.c.l.b16 %v1208
      %v1245 = vunpack.c.h.b16 %v1208
      %v1246 = vunpack.c.l.b16 %v1209
      %v1247 = vunpack.c.h.b16 %v1209
      %v1248 = vunpack.c.l.b16 %v1210
      %v1249 = vunpack.c.h.b16 %v1210
      %v1250 = vunpack.c.l.b16 %v1211
      %v1251 = vunpack.c.h.b16 %v1211
      %v1252 = vunpack.c.l.b16 %v1212
      %v1253 = vunpack.c.h.b16 %v1212
      %v1254 = vunpack.c.l.b16 %v1213
      %v1255 = vunpack.c.h.b16 %v1213
      %v1256 = vunpack.c.l.b16 %v1214
      %v1257 = vunpack.c.h.b16 %v1214
      %v1258 = vunpack.c.l.b16 %v1215
      %v1259 = vunpack.c.h.b16 %v1215
      %v1260 = vunpack.c.l.b16 %v1216
      %v1261 = vunpack.c.h.b16 %v1216
      %v1262 = vunpack.c.l.b16 %v1217
      %v1263 = vunpack.c.h.b16 %v1217
      %v1264 = vunpack.c.l.b16 %v1218
      %v1265 = vunpack.c.h.b16 %v1218
      %v1266 = vunpack.c.l.b16 %v1219
      %v1267 = vunpack.c.h.b16 %v1219
      %v1268 = vpack.c.b16 %v1236, %v1236
      %v1269 = vpack.c.b16 %v1237, %v1237
      %v1270 = vpack.c.b16 %v1238, %v1238
      %v1271 = vpack.c.b16 %v1239, %v1239
      %v1272 = vpack.c.b16 %v1240, %v1240
      %v1273 = vpack.c.b16 %v1241, %v1241
      %v1274 = vpack.c.b16 %v1242, %v1242
      %v1275 = vpack.c.b16 %v1243, %v1243
      %v1276 = vpack.c.b16 %v1244, %v1244
      %v1277 = vpack.c.b16 %v1245, %v1245
      %v1278 = vpack.c.b16 %v1246, %v1246
      %v1279 = vpack.c.b16 %v1247, %v1247
      %v1280 = vpack.c.b16 %v1248, %v1248
      %v1281 = vpack.c.b16 %v1249, %v1249
      %v1282 = vpack.c.b16 %v1250, %v1250
      %v1283 = vpack.c.b16 %v1251, %v1251
      %v1284 = vpack.c.b16 %v1252, %v1252
      %v1285 = vpack.c.b16 %v1253, %v1253
      %v1286 = vpack.c.b16 %v1254, %v1254
      %v1287 = vpack.c.b16 %v1255, %v1255
      %v1288 = vpack.c.b16 %v1256, %v1256
      %v1289 = vpack.c.b16 %v1257, %v1257
      %v1290 = vpack.c.b16 %v1258, %v1258
      %v1291 = vpack.c.b16 %v1259, %v1259
      %v1292 = vpack.c.b16 %v1260, %v1260
      %v1293 = vpack.c.b16 %v1261, %v1261
      %v1294 = vpack.c.b16 %v1262, %v1262
      %v1295 = vpack.c.b16 %v1263, %v1263
      %v1296 = vpack.c.b16 %v1264, %v1264
      %v1297 = vpack.c.b16 %v1265, %v1265
      %v1298 = vpack.c.b16 %v1266, %v1266
      %v1299 = vpack.c.b16 %v1267, %v1267
      %vm1332 = vcmask 60416
      %1333 = vst.msk [vmem:[%s329] sm:$0xf] %vm1332, %v1268
      %1334 = vst.msk [vmem:[%s329 + $0x4] sm:$0xf] %vm1332, %v1269
      %1335 = vst.msk [vmem:[%s329 + $0x8] sm:$0xf] %vm1332, %v1270
      %1336 = vst.msk [vmem:[%s329 + $0xc] sm:$0xf] %vm1332, %v1271
      %1337 = vst.msk [vmem:[%s329 + $0x10] sm:$0xf] %vm1332, %v1272
      %1338 = vst.msk [vmem:[%s329 + $0x14] sm:$0xf] %vm1332, %v1273
      %1339 = vst.msk [vmem:[%s329 + $0x18] sm:$0xf] %vm1332, %v1274
      %1340 = vst.msk [vmem:[%s329 + $0x1c] sm:$0xf] %vm1332, %v1275
      %1341 = vst.msk [vmem:[%s329 + $0x20] sm:$0xf] %vm1332, %v1276
      %1342 = vst.msk [vmem:[%s329 + $0x24] sm:$0xf] %vm1332, %v1277
      %1343 = vst.msk [vmem:[%s329 + $0x28] sm:$0xf] %vm1332, %v1278
      %1344 = vst.msk [vmem:[%s329 + $0x2c] sm:$0xf] %vm1332, %v1279
      %1345 = vst.msk [vmem:[%s329 + $0x30] sm:$0xf] %vm1332, %v1280
      %1346 = vst.msk [vmem:[%s329 + $0x34] sm:$0xf] %vm1332, %v1281
      %1347 = vst.msk [vmem:[%s329 + $0x38] sm:$0xf] %vm1332, %v1282
      %1348 = vst.msk [vmem:[%s329 + $0x3c] sm:$0xf] %vm1332, %v1283
      %1349 = vst.msk [vmem:[%s329 + $0x40] sm:$0xf] %vm1332, %v1284
      %1350 = vst.msk [vmem:[%s329 + $0x44] sm:$0xf] %vm1332, %v1285
      %1351 = vst.msk [vmem:[%s329 + $0x48] sm:$0xf] %vm1332, %v1286
      %1352 = vst.msk [vmem:[%s329 + $0x4c] sm:$0xf] %vm1332, %v1287
      %1353 = vst.msk [vmem:[%s329 + $0x50] sm:$0xf] %vm1332, %v1288
      %1354 = vst.msk [vmem:[%s329 + $0x54] sm:$0xf] %vm1332, %v1289
      %1355 = vst.msk [vmem:[%s329 + $0x58] sm:$0xf] %vm1332, %v1290
      %1356 = vst.msk [vmem:[%s329 + $0x5c] sm:$0xf] %vm1332, %v1291
      %1357 = vst.msk [vmem:[%s329 + $0x60] sm:$0xf] %vm1332, %v1292
      %1358 = vst.msk [vmem:[%s329 + $0x64] sm:$0xf] %vm1332, %v1293
      %1359 = vst.msk [vmem:[%s329 + $0x68] sm:$0xf] %vm1332, %v1294
      %1360 = vst.msk [vmem:[%s329 + $0x6c] sm:$0xf] %vm1332, %v1295
      %1361 = vst.msk [vmem:[%s329 + $0x70] sm:$0xf] %vm1332, %v1296
      %1362 = vst.msk [vmem:[%s329 + $0x74] sm:$0xf] %vm1332, %v1297
      %1363 = vst.msk [vmem:[%s329 + $0x78] sm:$0xf] %vm1332, %v1298
      %1364 = vst.msk [vmem:[%s329 + $0x7c] sm:$0xf] %vm1332, %v1299
      %s1365 = smul.u32 32, %s19
      %p1366 = scmp.lt.s32.totalorder %s1365, 63
      %s1367 = scalar_select %p1366, %s1365, 63
      %s1368 = smul.addr %s1367, 4
      %s1369 = scalar_lea.vmem %s8, %s1368
      // Predicated region
      $region53: #{group_forward_jit.8} parent=51 // pred_check
        %p1370 = pneg %p215
      $region54: #{group_forward_jit.8} parent=51 // pred_check_branch
        %1372 = sbr.rel (%p1370) target = $region56
      $region55: #{group_forward_jit.8} parent=51 // pred_region
        %s1373 = smul.u32 32, %s19
      $region56: #{group_forward_jit.8} parent=51 // pred_fallthru
        _
    $region52: #{group_forward_jit.8} parent=5 // pred_fallthru
      _
    %p1374 = scmp.le.s32.totalorder 2, %s14
    // Predicated region
    $region57: #{group_forward_jit.8} parent=5 // pred_check
      %p1375 = pneg %p1374
    $region58: #{group_forward_jit.8} parent=5 // pred_check_branch
      %1377 = sbr.rel (%p1375) target = $region60
    $region59: #{group_forward_jit.8} parent=5 // pred_region
      %s1378 = ssub.s32 %s14, 2
      // Predicated region
      $region61: #{group_forward_jit.8} parent=59 // pred_check
        %p1379 = pneg %p221
      $region62: #{group_forward_jit.8} parent=59 // pred_check_branch
        %1381 = sbr.rel (%p1379) target = $region64
      $region63: #{group_forward_jit.8} parent=59 // pred_region
        %s1382 = smul.u32 32, %s20
        %p1383 = scmp.lt.s32.totalorder %s1382, 63
        %s1384 = scalar_select %p1383, %s1382, 63
        %s1385 = smul.addr %s1384, 4
        %s1386 = scalar_lea.vmem %s8, %s1385
      $region64: #{group_forward_jit.8} parent=59 // pred_fallthru
        _
    $region60: #{group_forward_jit.8} parent=5 // pred_fallthru
      _
  $region6: #{group_forward_jit.8} parent=0 // loop_footer
    %s18 = sadd.s32 1, %s14
  $region7: #{group_forward_jit.8} parent=0 // loop_footer_branch
    %13 = sbr.rel target = $region3
  $region8: #{group_forward_jit.8} parent=0 // loop_exit
    _

// kernel: group_forward_jit.11
$region0: #{group_forward_jit.11}
  #allocation0 [shape = 'u32[]', space=smem, size = 0x4, offset = 0x4, fixed_abs, tag = 'smem constant byte address 0x4 - core index']
  #allocation1 [shape = 'u32[144,128]{1,0:T(1,128)}', space=vmem, size = 0x12000, scoped, tag = 'internal scratch']
  %s0 = inlined_call_operand.vmem [shape: bf16[512,4], index: 0, kind: input, shape index: {}]
  %s1 = inlined_call_operand.vmem [shape: bf16[4,8], index: 1, kind: input, shape index: {}]
  %s2 = inlined_call_operand.vmem [shape: f32[1,8], index: 2, kind: input, shape index: {}]
  %s3 = inlined_call_operand.vmem [shape: f32[1,8], index: 3, kind: input, shape index: {}]
  %s4 = inlined_call_operand.vmem [shape: bf16[512,8], index: 4, kind: input, shape index: {}]
  %s5 = inlined_call_operand.vmem [shape: bf16[512,8], index: 5, kind: output, shape index: {}]
  %s6 = sld [smem:[#allocation0]]
  $region53: #{group_forward_jit.11} parent=0
    _
  %s8 = ssub.s32 1, %s6
  %s9 = scalar_select 0, %s8, %s6
  loop: start=0, step=1, limit=4
  $region2: #{group_forward_jit.11} parent=0 // loop_pre_header
    _
  $region3: #{group_forward_jit.11} parent=0 // loop_header
    %s11 = sphi 0, %s15
    %p12 = scmp.ge.s32.totalorder %s11, 4
    %s21 = sphi 0, %s23
    %s24 = sphi 0, %s21
    %s25 = sphi 0, %s24
    %s41 = sphi 0, %s25
    %s45 = sphi 0, %s45
    %s47 = sphi 0, %s45
    %s48 = sphi 0, %s47
    %s62 = sphi 0, %s48
    %s66 = sphi 0, %s66
    %s68 = sphi 0, %s66
    %s69 = sphi 0, %s68
    %s83 = sphi 0, %s69
    %s87 = sphi 0, %s87
    %s89 = sphi 0, %s87
    %s90 = sphi 0, %s89
    %s104 = sphi 0, %s90
    %s110 = sphi 0, %s112
    %s113 = sphi 0, %s110
    %s114 = sphi 0, %s113
    %s130 = sphi 0, %s114
    %s136 = sphi 0, %s138
    %s139 = sphi 0, %s136
    %s140 = sphi 0, %s139
    %s156 = sphi 0, %s140
  $region4: #{group_forward_jit.11} parent=0 // loop_header_branch
    %14 = sbr.rel (%p12) target = $region8
  $region5: #{group_forward_jit.11} parent=0 // loop_body
    %s16 = ssub.s32 %s11, 1
    %s17 = ssub.s32 %s11, 2
    %s18 = sadd.s32 %s11, 1
    %s19 = ssub.s32 %s11, %s18
    %p20 = scmp.eq.s32.totalorder %s19, 0
    %s22 = sadd.s32 %s21, 1
    %s23 = scalar_select %p20, %s21, %s22
    %p26 = pneg %p20
    %p27 = scmp.eq.s32.totalorder %s11, 1
    %p28 = por %p26, %p27
    %p29 = scmp.ne.s32.totalorder %s21, %s24
    %p30 = scmp.eq.s32.totalorder %s11, 0
    %p31 = por %p29, %p30
    %p32 = scmp.ne.s32.totalorder %s21, %s24
    %p33 = scmp.eq.s32.totalorder %s16, 1
    %p34 = por %p32, %p33
    %p35 = scmp.ne.s32.totalorder %s24, %s25
    %p36 = scmp.eq.s32.totalorder %s16, 0
    %p37 = por %p35, %p36
    %p38 = scmp.ne.s32.totalorder %s24, %s25
    %p39 = scmp.eq.s32.totalorder %s17, 1
    %p40 = por %p38, %p39
    %p42 = scmp.ne.s32.totalorder %s25, %s41
    %p43 = scmp.eq.s32.totalorder %s17, 0
    %p44 = por %p42, %p43
    %s46 = sadd.s32 %s45, 1
    %p49 = scmp.eq.s32.totalorder %s11, 1
    %p50 = scmp.ne.s32.totalorder %s45, %s47
    %p51 = scmp.eq.s32.totalorder %s11, 0
    %p52 = por %p50, %p51
    %p53 = scmp.ne.s32.totalorder %s45, %s47
    %p54 = scmp.eq.s32.totalorder %s16, 1
    %p55 = por %p53, %p54
    %p56 = scmp.ne.s32.totalorder %s47, %s48
    %p57 = scmp.eq.s32.totalorder %s16, 0
    %p58 = por %p56, %p57
    %p59 = scmp.ne.s32.totalorder %s47, %s48
    %p60 = scmp.eq.s32.totalorder %s17, 1
    %p61 = por %p59, %p60
    %p63 = scmp.ne.s32.totalorder %s48, %s62
    %p64 = scmp.eq.s32.totalorder %s17, 0
    %p65 = por %p63, %p64
    %s67 = sadd.s32 %s66, 1
    %p70 = scmp.eq.s32.totalorder %s11, 1
    %p71 = scmp.ne.s32.totalorder %s66, %s68
    %p72 = scmp.eq.s32.totalorder %s11, 0
    %p73 = por %p71, %p72
    %p74 = scmp.ne.s32.totalorder %s66, %s68
    %p75 = scmp.eq.s32.totalorder %s16, 1
    %p76 = por %p74, %p75
    %p77 = scmp.ne.s32.totalorder %s68, %s69
    %p78 = scmp.eq.s32.totalorder %s16, 0
    %p79 = por %p77, %p78
    %p80 = scmp.ne.s32.totalorder %s68, %s69
    %p81 = scmp.eq.s32.totalorder %s17, 1
    %p82 = por %p80, %p81
    %p84 = scmp.ne.s32.totalorder %s69, %s83
    %p85 = scmp.eq.s32.totalorder %s17, 0
    %p86 = por %p84, %p85
    %s88 = sadd.s32 %s87, 1
    %p91 = scmp.eq.s32.totalorder %s11, 1
    %p92 = scmp.ne.s32.totalorder %s87, %s89
    %p93 = scmp.eq.s32.totalorder %s11, 0
    %p94 = por %p92, %p93
    %p95 = scmp.ne.s32.totalorder %s87, %s89
    %p96 = scmp.eq.s32.totalorder %s16, 1
    %p97 = por %p95, %p96
    %p98 = scmp.ne.s32.totalorder %s89, %s90
    %p99 = scmp.eq.s32.totalorder %s16, 0
    %p100 = por %p98, %p99
    %p101 = scmp.ne.s32.totalorder %s89, %s90
    %p102 = scmp.eq.s32.totalorder %s17, 1
    %p103 = por %p101, %p102
    %p105 = scmp.ne.s32.totalorder %s90, %s104
    %p106 = scmp.eq.s32.totalorder %s17, 0
    %p107 = por %p105, %p106
    %s108 = ssub.s32 %s11, %s18
    %p109 = scmp.eq.s32.totalorder %s108, 0
    %s111 = sadd.s32 %s110, 1
    %s112 = scalar_select %p109, %s110, %s111
    %p115 = pneg %p109
    %p116 = scmp.eq.s32.totalorder %s11, 1
    %p117 = por %p115, %p116
    %p118 = scmp.ne.s32.totalorder %s110, %s113
    %p119 = scmp.eq.s32.totalorder %s11, 0
    %p120 = por %p118, %p119
    %p121 = scmp.ne.s32.totalorder %s110, %s113
    %p122 = scmp.eq.s32.totalorder %s16, 1
    %p123 = por %p121, %p122
    %p124 = scmp.ne.s32.totalorder %s113, %s114
    %p125 = scmp.eq.s32.totalorder %s16, 0
    %p126 = por %p124, %p125
    %p127 = scmp.ne.s32.totalorder %s113, %s114
    %p128 = scmp.eq.s32.totalorder %s17, 1
    %p129 = por %p127, %p128
    %p131 = scmp.ne.s32.totalorder %s114, %s130
    %p132 = scmp.eq.s32.totalorder %s17, 0
    %p133 = por %p131, %p132
    %s134 = ssub.s32 %s11, %s18
    %p135 = scmp.eq.s32.totalorder %s134, 0
    %s137 = sadd.s32 %s136, 1
    %s138 = scalar_select %p135, %s136, %s137
    %p141 = pneg %p135
    %p142 = scmp.eq.s32.totalorder %s11, 1
    %p143 = por %p141, %p142
    %p144 = scmp.ne.s32.totalorder %s136, %s139
    %p145 = scmp.eq.s32.totalorder %s11, 0
    %p146 = por %p144, %p145
    %p147 = scmp.ne.s32.totalorder %s136, %s139
    %p148 = scmp.eq.s32.totalorder %s16, 1
    %p149 = por %p147, %p148
    %p150 = scmp.ne.s32.totalorder %s139, %s140
    %p151 = scmp.eq.s32.totalorder %s16, 0
    %p152 = por %p150, %p151
    %p153 = scmp.ne.s32.totalorder %s139, %s140
    %p154 = scmp.eq.s32.totalorder %s17, 1
    %p155 = por %p153, %p154
    %p157 = scmp.ne.s32.totalorder %s140, %s156
    %p158 = scmp.eq.s32.totalorder %s17, 0
    %p159 = por %p157, %p158
    %p160 = scmp.le.s32.totalorder 1, %s11
    %p161 = scmp.lt.s32.totalorder %s11, 3
    %p162 = pnand %p160, %p161
    %p163 = pneg %p162
    // Predicated region
    $region9: #{group_forward_jit.11} parent=5 // pred_check
      _
    $region10: #{group_forward_jit.11} parent=5 // pred_check_branch
      %165 = sbr.rel (%p162) target = $region12
    $region11: #{group_forward_jit.11} parent=5 // pred_region
      %s166 = ssub.s32 %s11, 1
      // Predicated region
      $region13: #{group_forward_jit.11} parent=11 // pred_check
        %p167 = pneg %p58
      $region14: #{group_forward_jit.11} parent=11 // pred_check_branch
        %169 = sbr.rel (%p167) target = $region16
      $region15: #{group_forward_jit.11} parent=11 // pred_region
        _
      $region16: #{group_forward_jit.11} parent=11 // pred_fallthru
        _
      // Predicated region
      $region17: #{group_forward_jit.11} parent=11 // pred_check
        %p170 = pneg %p79
      $region18: #{group_forward_jit.11} parent=11 // pred_check_branch
        %172 = sbr.rel (%p170) target = $region20
      $region19: #{group_forward_jit.11} parent=11 // pred_region
        _
      $region20: #{group_forward_jit.11} parent=11 // pred_fallthru
        _
      // Predicated region
      $region21: #{group_forward_jit.11} parent=11 // pred_check
        %p173 = pneg %p100
      $region22: #{group_forward_jit.11} parent=11 // pred_check_branch
        %175 = sbr.rel (%p173) target = $region24
      $region23: #{group_forward_jit.11} parent=11 // pred_region
        _
      $region24: #{group_forward_jit.11} parent=11 // pred_fallthru
        _
    $region12: #{group_forward_jit.11} parent=5 // pred_fallthru
      _
    %p176 = scmp.lt.s32.totalorder %s11, 2
    // Predicated region
    $region25: #{group_forward_jit.11} parent=5 // pred_check
      %p177 = pneg %p176
    $region26: #{group_forward_jit.11} parent=5 // pred_check_branch
      %179 = sbr.rel (%p177) target = $region28
    $region27: #{group_forward_jit.11} parent=5 // pred_region
      // Predicated region
      $region29: #{group_forward_jit.11} parent=27 // pred_check
        %p180 = pneg %p31
      $region30: #{group_forward_jit.11} parent=27 // pred_check_branch
        %182 = sbr.rel (%p180) target = $region32
      $region31: #{group_forward_jit.11} parent=27 // pred_region
        %s183 = smul.u32 32, %s11
        %p184 = scmp.lt.s32.totalorder %s183, 63
        %s185 = scalar_select %p184, %s183, 63
        %s186 = smul.addr %s185, 4
        %s187 = scalar_lea.vmem %s0, %s186
        %s188 = smul.u32 32, %s11
      $region32: #{group_forward_jit.11} parent=27 // pred_fallthru
        _
      // Predicated region
      $region33: #{group_forward_jit.11} parent=27 // pred_check
        %p189 = pneg %p120
      $region34: #{group_forward_jit.11} parent=27 // pred_check_branch
        %191 = sbr.rel (%p189) target = $region36
      $region35: #{group_forward_jit.11} parent=27 // pred_region
        %s192 = smul.u32 32, %s11
        %p193 = scmp.lt.s32.totalorder %s192, 63
        %s194 = scalar_select %p193, %s192, 63
        %s195 = smul.addr %s194, 4
        %s196 = scalar_lea.vmem %s4, %s195
        %s197 = smul.u32 32, %s11
      $region36: #{group_forward_jit.11} parent=27 // pred_fallthru
        _
    $region28: #{group_forward_jit.11} parent=5 // pred_fallthru
      _
    %p198 = scmp.le.s32.totalorder 1, %s11
    %p199 = scmp.lt.s32.totalorder %s11, 3
    %p200 = pnand %p198, %p199
    %p201 = pneg %p200
    // Predicated region
    $region37: #{group_forward_jit.11} parent=5 // pred_check
      _
    $region38: #{group_forward_jit.11} parent=5 // pred_check_branch
      %203 = sbr.rel (%p200) target = $region40
    $region39: #{group_forward_jit.11} parent=5 // pred_region
      %s204 = ssub.s32 %s11, 1
      %s205 = smul.u32 32, %s16
      %p206 = scmp.lt.s32.totalorder %s205, 63
      %s207 = scalar_select %p206, %s205, 63
      %s208 = smul.addr %s207, 4
      %s209 = scalar_lea.vmem %s0, %s208
      %p210 = pneg %p37
      %p211 = pneg %p34
      %p212 = pneg %p58
      %p213 = pneg %p55
      %p214 = pneg %p79
      %p215 = pneg %p76
      %p216 = pneg %p100
      %p217 = pneg %p97
      %s218 = smul.u32 32, %s16
      %p219 = scmp.lt.s32.totalorder %s218, 63
      %s220 = scalar_select %p219, %s218, 63
      %s221 = smul.addr %s220, 4
      %s222 = scalar_lea.vmem %s4, %s221
      %p223 = pneg %p126
      %p224 = pneg %p123
      %p225 = pneg %p152
      %p226 = pneg %p149
      %s227 = smul.u32 32, %s16
      %p228 = scmp.lt.s32.totalorder %s227, 63
      %s229 = scalar_select %p228, %s227, 63
      %s230 = smul.addr %s229, 4
      %s231 = scalar_lea.vmem %s5, %s230
      %s232 = smul.u32 32, %s16
      %p233 = scmp.lt.s32.totalorder %s232, 63
      %s234 = scalar_select %p233, %s232, 63
      %s235 = smul.addr %s234, 4
      %s236 = scalar_lea.vmem %s0, %s235
      %s237 = smul.u32 32, %s16
      %s238 = smul.u32 32, %s16
      %p239 = scmp.lt.s32.totalorder %s238, 63
      %s240 = scalar_select %p239, %s238, 63
      %s241 = smul.addr %s240, 4
      %s242 = scalar_lea.vmem %s4, %s241
      %s243 = smul.u32 32, %s16
      %s244 = smul.u32 32, %s16
      %p245 = scmp.lt.s32.totalorder %s244, 63
      %s246 = scalar_select %p245, %s244, 63
      %s247 = smul.addr %s246, 4
      %s248 = scalar_lea.vmem %s5, %s247
      %s249 = smul.u32 32, %s16
      %v251 = vld [vmem:[%s236] sm:$0xf]
      %v252 = vld [vmem:[%s236 + $0x4] sm:$0xf]
      %v253 = vld [vmem:[%s236 + $0x8] sm:$0xf]
      %v254 = vld [vmem:[%s236 + $0xc] sm:$0xf]
      %v255 = vld [vmem:[%s236 + $0x10] sm:$0xf]
      %v256 = vld [vmem:[%s236 + $0x14] sm:$0xf]
      %v257 = vld [vmem:[%s236 + $0x18] sm:$0xf]
      %v258 = vld [vmem:[%s236 + $0x1c] sm:$0xf]
      %v259 = vld [vmem:[%s236 + $0x20] sm:$0xf]
      %v260 = vld [vmem:[%s236 + $0x24] sm:$0xf]
      %v261 = vld [vmem:[%s236 + $0x28] sm:$0xf]
      %v262 = vld [vmem:[%s236 + $0x2c] sm:$0xf]
      %v263 = vld [vmem:[%s236 + $0x30] sm:$0xf]
      %v264 = vld [vmem:[%s236 + $0x34] sm:$0xf]
      %v265 = vld [vmem:[%s236 + $0x38] sm:$0xf]
      %v266 = vld [vmem:[%s236 + $0x3c] sm:$0xf]
      %v267 = vld [vmem:[%s236 + $0x40] sm:$0xf]
      %v268 = vld [vmem:[%s236 + $0x44] sm:$0xf]
      %v269 = vld [vmem:[%s236 + $0x48] sm:$0xf]
      %v270 = vld [vmem:[%s236 + $0x4c] sm:$0xf]
      %v271 = vld [vmem:[%s236 + $0x50] sm:$0xf]
      %v272 = vld [vmem:[%s236 + $0x54] sm:$0xf]
      %v273 = vld [vmem:[%s236 + $0x58] sm:$0xf]
      %v274 = vld [vmem:[%s236 + $0x5c] sm:$0xf]
      %v275 = vld [vmem:[%s236 + $0x60] sm:$0xf]
      %v276 = vld [vmem:[%s236 + $0x64] sm:$0xf]
      %v277 = vld [vmem:[%s236 + $0x68] sm:$0xf]
      %v278 = vld [vmem:[%s236 + $0x6c] sm:$0xf]
      %v279 = vld [vmem:[%s236 + $0x70] sm:$0xf]
      %v280 = vld [vmem:[%s236 + $0x74] sm:$0xf]
      %v281 = vld [vmem:[%s236 + $0x78] sm:$0xf]
      %v282 = vld [vmem:[%s236 + $0x7c] sm:$0xf]
      %v283 = vld [vmem:[%s1] sm:$0x3]
      %v316 = vunpack.c.l.b16 %v251
      %v317 = vunpack.c.l.b16 %v252
      %v318 = vunpack.c.l.b16 %v253
      %v319 = vunpack.c.l.b16 %v254
      %v320 = vunpack.c.l.b16 %v255
      %v321 = vunpack.c.l.b16 %v256
      %v322 = vunpack.c.l.b16 %v257
      %v323 = vunpack.c.l.b16 %v258
      %v324 = vunpack.c.l.b16 %v259
      %v325 = vunpack.c.l.b16 %v260
      %v326 = vunpack.c.l.b16 %v261
      %v327 = vunpack.c.l.b16 %v262
      %v328 = vunpack.c.l.b16 %v263
      %v329 = vunpack.c.l.b16 %v264
      %v330 = vunpack.c.l.b16 %v265
      %v331 = vunpack.c.l.b16 %v266
      %v332 = vunpack.c.l.b16 %v267
      %v333 = vunpack.c.l.b16 %v268
      %v334 = vunpack.c.l.b16 %v269
      %v335 = vunpack.c.l.b16 %v270
      %v336 = vunpack.c.l.b16 %v271
      %v337 = vunpack.c.l.b16 %v272
      %v338 = vunpack.c.l.b16 %v273
      %v339 = vunpack.c.l.b16 %v274
      %v340 = vunpack.c.l.b16 %v275
      %v341 = vunpack.c.l.b16 %v276
      %v342 = vunpack.c.l.b16 %v277
      %v343 = vunpack.c.l.b16 %v278
      %v344 = vunpack.c.l.b16 %v279
      %v345 = vunpack.c.l.b16 %v280
      %v346 = vunpack.c.l.b16 %v281
      %v347 = vunpack.c.l.b16 %v282
      %v348 = vpack.c.b16 %v317, %v316
      %v349 = vpack.c.b16 %v319, %v318
      %v350 = vpack.c.b16 %v321, %v320
      %v351 = vpack.c.b16 %v323, %v322
      %v352 = vpack.c.b16 %v325, %v324
      %v353 = vpack.c.b16 %v327, %v326
      %v354 = vpack.c.b16 %v329, %v328
      %v355 = vpack.c.b16 %v331, %v330
      %v356 = vpack.c.b16 %v333, %v332
      %v357 = vpack.c.b16 %v335, %v334
      %v358 = vpack.c.b16 %v337, %v336
      %v359 = vpack.c.b16 %v339, %v338
      %v360 = vpack.c.b16 %v341, %v340
      %v361 = vpack.c.b16 %v343, %v342
      %v362 = vpack.c.b16 %v345, %v344
      %v363 = vpack.c.b16 %v347, %v346
      %vm364 = vcmask 31744
      %v366 = vsel %vm364, %v348, 0
      %v369 = vsel %vm364, %v349, 0
      %v372 = vsel %vm364, %v350, 0
      %v375 = vsel %vm364, %v351, 0
      %v378 = vsel %vm364, %v352, 0
      %v381 = vsel %vm364, %v353, 0
      %v384 = vsel %vm364, %v354, 0
      %v387 = vsel %vm364, %v355, 0
      %v390 = vsel %vm364, %v356, 0
      %v393 = vsel %vm364, %v357, 0
      %v396 = vsel %vm364, %v358, 0
      %v399 = vsel %vm364, %v359, 0
      %v402 = vsel %vm364, %v360, 0
      %v405 = vsel %vm364, %v361, 0
      %v408 = vsel %vm364, %v362, 0
      %v411 = vsel %vm364, %v363, 0
      %vm413 = vcmask 1041408
      %v415 = vsel %vm413, %v283, 0
      %417 = vmatprep.subr.bf16.mxu0 0
      %418 = vmatpush1.bf16.msra.mxu0 %v415
      %419 = vmatprep.subr.bf16.mxu0 0
      %420 = vmatpush1.bf16.msra.mxu0 0
      %421 = vmatprep.subr.bf16.mxu0 0
      %422 = vmatpush1.bf16.msra.mxu0 0
      %423 = vmatprep.subr.bf16.mxu0 0
      %424 = vmatpush1.bf16.msra.mxu0 0
      %425 = vmatprep.subr.bf16.mxu0 0
      %426 = vmatpush1.bf16.msra.mxu0 0
      %427 = vmatprep.subr.bf16.mxu0 0
      %428 = vmatpush1.bf16.msra.mxu0 0
      %429 = vmatprep.subr.bf16.mxu0 0
      %430 = vmatpush1.bf16.msra.mxu0 0
      %431 = vmatprep.subr.bf16.mxu0 0
      %432 = vmatpush1.bf16.msra.mxu0 0
      %433 = vmatprep.subr.bf16.mxu0 0
      %434 = vmatpush1.bf16.msra.mxu0 0
      %435 = vmatprep.subr.bf16.mxu0 0
      %436 = vmatpush1.bf16.msra.mxu0 0
      %437 = vmatprep.subr.bf16.mxu0 0
      %438 = vmatpush1.bf16.msra.mxu0 0
      %439 = vmatprep.subr.bf16.mxu0 0
      %440 = vmatpush1.bf16.msra.mxu0 0
      %441 = vmatprep.subr.bf16.mxu0 0
      %442 = vmatpush1.bf16.msra.mxu0 0
      %443 = vmatprep.subr.bf16.mxu0 0
      %444 = vmatpush1.bf16.msra.mxu0 0
      %445 = vmatprep.subr.bf16.mxu0 0
      %446 = vmatpush1.bf16.msra.mxu0 0
      %447 = vmatprep.subr.bf16.mxu0 0
      %448 = vmatpush1.bf16.msra.mxu0 0
      %449 = vmatprep.mubr.bf16.mxu0 0
      %450 = vmatmul.mubr.bf16.gmra.mrb[0].mxu0 %v366
      %v451 = vpop.f32.mrb[0].mxu0
      %v452 = vadd.f32 0.0, %v451
      %v453 = vpop.f32.mrb[0].mxu0
      %v454 = vpop.f32.mrb[0].mxu0
      %v455 = vadd.f32 0.0, %v454
      %v456 = vpop.f32.mrb[0].mxu0
      %457 = vmatprep.mubr.bf16.mxu0 0
      %458 = vmatmul.mubr.bf16.gmra.mrb[0].mxu0 %v369
      %v459 = vpop.f32.mrb[0].mxu0
      %v460 = vadd.f32 0.0, %v459
      %v461 = vpop.f32.mrb[0].mxu0
      %v462 = vpop.f32.mrb[0].mxu0
      %v463 = vadd.f32 0.0, %v462
      %v464 = vpop.f32.mrb[0].mxu0
      %465 = vmatprep.mubr.bf16.mxu0 0
      %466 = vmatmul.mubr.bf16.gmra.mrb[0].mxu0 %v372
      %v467 = vpop.f32.mrb[0].mxu0
      %v468 = vadd.f32 0.0, %v467
      %v469 = vpop.f32.mrb[0].mxu0
      %v470 = vpop.f32.mrb[0].mxu0
      %v471 = vadd.f32 0.0, %v470
      %v472 = vpop.f32.mrb[0].mxu0
      %473 = vmatprep.mubr.bf16.mxu0 0
      %474 = vmatmul.mubr.bf16.gmra.mrb[0].mxu0 %v375
      %v475 = vpop.f32.mrb[0].mxu0
      %v476 = vadd.f32 0.0, %v475
      %v477 = vpop.f32.mrb[0].mxu0
      %v478 = vpop.f32.mrb[0].mxu0
      %v479 = vadd.f32 0.0, %v478
      %v480 = vpop.f32.mrb[0].mxu0
      %481 = vmatprep.mubr.bf16.mxu0 0
      %482 = vmatmul.mubr.bf16.gmra.mrb[0].mxu0 %v378
      %v483 = vpop.f32.mrb[0].mxu0
      %v484 = vadd.f32 0.0, %v483
      %v485 = vpop.f32.mrb[0].mxu0
      %v486 = vpop.f32.mrb[0].mxu0
      %v487 = vadd.f32 0.0, %v486
      %v488 = vpop.f32.mrb[0].mxu0
      %489 = vmatprep.mubr.bf16.mxu0 0
      %490 = vmatmul.mubr.bf16.gmra.mrb[0].mxu0 %v381
      %v491 = vpop.f32.mrb[0].mxu0
      %v492 = vadd.f32 0.0, %v491
      %v493 = vpop.f32.mrb[0].mxu0
      %v494 = vpop.f32.mrb[0].mxu0
      %v495 = vadd.f32 0.0, %v494
      %v496 = vpop.f32.mrb[0].mxu0
      %497 = vmatprep.mubr.bf16.mxu0 0
      %498 = vmatmul.mubr.bf16.gmra.mrb[0].mxu0 %v384
      %v499 = vpop.f32.mrb[0].mxu0
      %v500 = vadd.f32 0.0, %v499
      %v501 = vpop.f32.mrb[0].mxu0
      %v502 = vpop.f32.mrb[0].mxu0
      %v503 = vadd.f32 0.0, %v502
      %v504 = vpop.f32.mrb[0].mxu0
      %505 = vmatprep.mubr.bf16.mxu0 0
      %506 = vmatmul.mubr.bf16.gmra.mrb[0].mxu0 %v387
      %v507 = vpop.f32.mrb[0].mxu0
      %v508 = vadd.f32 0.0, %v507
      %v509 = vpop.f32.mrb[0].mxu0
      %v510 = vpop.f32.mrb[0].mxu0
      %v511 = vadd.f32 0.0, %v510
      %v512 = vpop.f32.mrb[0].mxu0
      %513 = vmatprep.mubr.bf16.mxu0 0
      %514 = vmatmul.mubr.bf16.gmra.mrb[0].mxu0 %v390
      %v515 = vpop.f32.mrb[0].mxu0
      %v516 = vadd.f32 0.0, %v515
      %v517 = vpop.f32.mrb[0].mxu0
      %v518 = vpop.f32.mrb[0].mxu0
      %v519 = vadd.f32 0.0, %v518
      %v520 = vpop.f32.mrb[0].mxu0
      %521 = vmatprep.mubr.bf16.mxu0 0
      %522 = vmatmul.mubr.bf16.gmra.mrb[0].mxu0 %v393
      %v523 = vpop.f32.mrb[0].mxu0
      %v524 = vadd.f32 0.0, %v523
      %v525 = vpop.f32.mrb[0].mxu0
      %v526 = vpop.f32.mrb[0].mxu0
      %v527 = vadd.f32 0.0, %v526
      %v528 = vpop.f32.mrb[0].mxu0
      %529 = vmatprep.mubr.bf16.mxu0 0
      %530 = vmatmul.mubr.bf16.gmra.mrb[0].mxu0 %v396
      %v531 = vpop.f32.mrb[0].mxu0
      %v532 = vadd.f32 0.0, %v531
      %v533 = vpop.f32.mrb[0].mxu0
      %v534 = vpop.f32.mrb[0].mxu0
      %v535 = vadd.f32 0.0, %v534
      %v536 = vpop.f32.mrb[0].mxu0
      %537 = vmatprep.mubr.bf16.mxu0 0
      %538 = vmatmul.mubr.bf16.gmra.mrb[0].mxu0 %v399
      %v539 = vpop.f32.mrb[0].mxu0
      %v540 = vadd.f32 0.0, %v539
      %v541 = vpop.f32.mrb[0].mxu0
      %v542 = vpop.f32.mrb[0].mxu0
      %v543 = vadd.f32 0.0, %v542
      %v544 = vpop.f32.mrb[0].mxu0
      %545 = vmatprep.mubr.bf16.mxu0 0
      %546 = vmatmul.mubr.bf16.gmra.mrb[0].mxu0 %v402
      %v547 = vpop.f32.mrb[0].mxu0
      %v548 = vadd.f32 0.0, %v547
      %v549 = vpop.f32.mrb[0].mxu0
      %v550 = vpop.f32.mrb[0].mxu0
      %v551 = vadd.f32 0.0, %v550
      %v552 = vpop.f32.mrb[0].mxu0
      %553 = vmatprep.mubr.bf16.mxu0 0
      %554 = vmatmul.mubr.bf16.gmra.mrb[0].mxu0 %v405
      %v555 = vpop.f32.mrb[0].mxu0
      %v556 = vadd.f32 0.0, %v555
      %v557 = vpop.f32.mrb[0].mxu0
      %v558 = vpop.f32.mrb[0].mxu0
      %v559 = vadd.f32 0.0, %v558
      %v560 = vpop.f32.mrb[0].mxu0
      %561 = vmatprep.mubr.bf16.mxu0 0
      %562 = vmatmul.mubr.bf16.gmra.mrb[0].mxu0 %v408
      %v563 = vpop.f32.mrb[0].mxu0
      %v564 = vadd.f32 0.0, %v563
      %v565 = vpop.f32.mrb[0].mxu0
      %v566 = vpop.f32.mrb[0].mxu0
      %v567 = vadd.f32 0.0, %v566
      %v568 = vpop.f32.mrb[0].mxu0
      %569 = vmatprep.mubr.bf16.mxu0 0
      %570 = vmatmul.mubr.bf16.gmra.mrb[0].mxu0 %v411
      %v571 = vpop.f32.mrb[0].mxu0
      %v572 = vadd.f32 0.0, %v571
      %v573 = vpop.f32.mrb[0].mxu0
      %v574 = vpop.f32.mrb[0].mxu0
      %v575 = vadd.f32 0.0, %v574
      %v576 = vpop.f32.mrb[0].mxu0
      %577 = vdwg.mxu0
      %v578 = vld [vmem:[%s2] sm:$0x1]
      %v580 = vlaneseq
      %v581 = vshrl.u32 %v580, 7
      %v582 = vsub.s32 0, %v581
      %v583 = vrot.slane %v578, %v582
      %v585 = vmul.f32 %v452, %v583
      %v586 = vmul.f32 %v455, %v583
      %v587 = vmul.f32 %v460, %v583
      %v588 = vmul.f32 %v463, %v583
      %v589 = vmul.f32 %v468, %v583
      %v590 = vmul.f32 %v471, %v583
      %v591 = vmul.f32 %v476, %v583
      %v592 = vmul.f32 %v479, %v583
      %v593 = vmul.f32 %v484, %v583
      %v594 = vmul.f32 %v487, %v583
      %v595 = vmul.f32 %v492, %v583
      %v596 = vmul.f32 %v495, %v583
      %v597 = vmul.f32 %v500, %v583
      %v598 = vmul.f32 %v503, %v583
      %v599 = vmul.f32 %v508, %v583
      %v600 = vmul.f32 %v511, %v583
      %v601 = vmul.f32 %v516, %v583
      %v602 = vmul.f32 %v519, %v583
      %v603 = vmul.f32 %v524, %v583
      %v604 = vmul.f32 %v527, %v583
      %v605 = vmul.f32 %v532, %v583
      %v606 = vmul.f32 %v535, %v583
      %v607 = vmul.f32 %v540, %v583
      %v608 = vmul.f32 %v543, %v583
      %v609 = vmul.f32 %v548, %v583
      %v610 = vmul.f32 %v551, %v583
      %v611 = vmul.f32 %v556, %v583
      %v612 = vmul.f32 %v559, %v583
      %v613 = vmul.f32 %v564, %v583
      %v614 = vmul.f32 %v567, %v583
      %v615 = vmul.f32 %v572, %v583
      %v616 = vmul.f32 %v575, %v583
      %v617 = vld [vmem:[%s3] sm:$0x1]
      %v619 = vlaneseq
      %v620 = vshrl.u32 %v619, 7
      %v621 = vsub.s32 0, %v620
      %v622 = vrot.slane %v617, %v621
      %v624 = vadd.f32 %v585, %v622
      %v625 = vadd.f32 %v586, %v622
      %v626 = vadd.f32 %v587, %v622
      %v627 = vadd.f32 %v588, %v622
      %v628 = vadd.f32 %v589, %v622
      %v629 = vadd.f32 %v590, %v622
      %v630 = vadd.f32 %v591, %v622
      %v631 = vadd.f32 %v592, %v622
      %v632 = vadd.f32 %v593, %v622
      %v633 = vadd.f32 %v594, %v622
      %v634 = vadd.f32 %v595, %v622
      %v635 = vadd.f32 %v596, %v622
      %v636 = vadd.f32 %v597, %v622
      %v637 = vadd.f32 %v598, %v622
      %v638 = vadd.f32 %v599, %v622
      %v639 = vadd.f32 %v600, %v622
      %v640 = vadd.f32 %v601, %v622
      %v641 = vadd.f32 %v602, %v622
      %v642 = vadd.f32 %v603, %v622
      %v643 = vadd.f32 %v604, %v622
      %v644 = vadd.f32 %v605, %v622
      %v645 = vadd.f32 %v606, %v622
      %v646 = vadd.f32 %v607, %v622
      %v647 = vadd.f32 %v608, %v622
      %v648 = vadd.f32 %v609, %v622
      %v649 = vadd.f32 %v610, %v622
      %v650 = vadd.f32 %v611, %v622
      %v651 = vadd.f32 %v612, %v622
      %v652 = vadd.f32 %v613, %v622
      %v653 = vadd.f32 %v614, %v622
      %v654 = vadd.f32 %v615, %v622
      %v655 = vadd.f32 %v616, %v622
      %v656 = vld [vmem:[%s242] sm:$0xf]
      %v657 = vld [vmem:[%s242 + $0x4] sm:$0xf]
      %v658 = vld [vmem:[%s242 + $0x8] sm:$0xf]
      %v659 = vld [vmem:[%s242 + $0xc] sm:$0xf]
      %v660 = vld [vmem:[%s242 + $0x10] sm:$0xf]
      %v661 = vld [vmem:[%s242 + $0x14] sm:$0xf]
      %v662 = vld [vmem:[%s242 + $0x18] sm:$0xf]
      %v663 = vld [vmem:[%s242 + $0x1c] sm:$0xf]
      %v664 = vld [vmem:[%s242 + $0x20] sm:$0xf]
      %v665 = vld [vmem:[%s242 + $0x24] sm:$0xf]
      %v666 = vld [vmem:[%s242 + $0x28] sm:$0xf]
      %v667 = vld [vmem:[%s242 + $0x2c] sm:$0xf]
      %v668 = vld [vmem:[%s242 + $0x30] sm:$0xf]
      %v669 = vld [vmem:[%s242 + $0x34] sm:$0xf]
      %v670 = vld [vmem:[%s242 + $0x38] sm:$0xf]
      %v671 = vld [vmem:[%s242 + $0x3c] sm:$0xf]
      %v672 = vld [vmem:[%s242 + $0x40] sm:$0xf]
      %v673 = vld [vmem:[%s242 + $0x44] sm:$0xf]
      %v674 = vld [vmem:[%s242 + $0x48] sm:$0xf]
      %v675 = vld [vmem:[%s242 + $0x4c] sm:$0xf]
      %v676 = vld [vmem:[%s242 + $0x50] sm:$0xf]
      %v677 = vld [vmem:[%s242 + $0x54] sm:$0xf]
      %v678 = vld [vmem:[%s242 + $0x58] sm:$0xf]
      %v679 = vld [vmem:[%s242 + $0x5c] sm:$0xf]
      %v680 = vld [vmem:[%s242 + $0x60] sm:$0xf]
      %v681 = vld [vmem:[%s242 + $0x64] sm:$0xf]
      %v682 = vld [vmem:[%s242 + $0x68] sm:$0xf]
      %v683 = vld [vmem:[%s242 + $0x6c] sm:$0xf]
      %v684 = vld [vmem:[%s242 + $0x70] sm:$0xf]
      %v685 = vld [vmem:[%s242 + $0x74] sm:$0xf]
      %v686 = vld [vmem:[%s242 + $0x78] sm:$0xf]
      %v687 = vld [vmem:[%s242 + $0x7c] sm:$0xf]
      %v688 = vunpack.c.l.bf16 %v656
      %v689 = vunpack.c.l.bf16 %v657
      %v690 = vunpack.c.l.bf16 %v658
      %v691 = vunpack.c.l.bf16 %v659
      %v692 = vunpack.c.l.bf16 %v660
      %v693 = vunpack.c.l.bf16 %v661
      %v694 = vunpack.c.l.bf16 %v662
      %v695 = vunpack.c.l.bf16 %v663
      %v696 = vunpack.c.l.bf16 %v664
      %v697 = vunpack.c.l.bf16 %v665
      %v698 = vunpack.c.l.bf16 %v666
      %v699 = vunpack.c.l.bf16 %v667
      %v700 = vunpack.c.l.bf16 %v668
      %v701 = vunpack.c.l.bf16 %v669
      %v702 = vunpack.c.l.bf16 %v670
      %v703 = vunpack.c.l.bf16 %v671
      %v704 = vunpack.c.l.bf16 %v672
      %v705 = vunpack.c.l.bf16 %v673
      %v706 = vunpack.c.l.bf16 %v674
      %v707 = vunpack.c.l.bf16 %v675
      %v708 = vunpack.c.l.bf16 %v676
      %v709 = vunpack.c.l.bf16 %v677
      %v710 = vunpack.c.l.bf16 %v678
      %v711 = vunpack.c.l.bf16 %v679
      %v712 = vunpack.c.l.bf16 %v680
      %v713 = vunpack.c.l.bf16 %v681
      %v714 = vunpack.c.l.bf16 %v682
      %v715 = vunpack.c.l.bf16 %v683
      %v716 = vunpack.c.l.bf16 %v684
      %v717 = vunpack.c.l.bf16 %v685
      %v718 = vunpack.c.l.bf16 %v686
      %v719 = vunpack.c.l.bf16 %v687
      %v720 = vadd.f32 %v624, %v688
      %v721 = vadd.f32 %v625, %v689
      %v722 = vadd.f32 %v626, %v690
      %v723 = vadd.f32 %v627, %v691
      %v724 = vadd.f32 %v628, %v692
      %v725 = vadd.f32 %v629, %v693
      %v726 = vadd.f32 %v630, %v694
      %v727 = vadd.f32 %v631, %v695
      %v728 = vadd.f32 %v632, %v696
      %v729 = vadd.f32 %v633, %v697
      %v730 = vadd.f32 %v634, %v698
      %v731 = vadd.f32 %v635, %v699
      %v732 = vadd.f32 %v636, %v700
      %v733 = vadd.f32 %v637, %v701
      %v734 = vadd.f32 %v638, %v702
      %v735 = vadd.f32 %v639, %v703
      %v736 = vadd.f32 %v640, %v704
      %v737 = vadd.f32 %v641, %v705
      %v738 = vadd.f32 %v642, %v706
      %v739 = vadd.f32 %v643, %v707
      %v740 = vadd.f32 %v644, %v708
      %v741 = vadd.f32 %v645, %v709
      %v742 = vadd.f32 %v646, %v710
      %v743 = vadd.f32 %v647, %v711
      %v744 = vadd.f32 %v648, %v712
      %v745 = vadd.f32 %v649, %v713
      %v746 = vadd.f32 %v650, %v714
      %v747 = vadd.f32 %v651, %v715
      %v748 = vadd.f32 %v652, %v716
      %v749 = vadd.f32 %v653, %v717
      %v750 = vadd.f32 %v654, %v718
      %v751 = vadd.f32 %v655, %v719
      %v752 = vmax.f32 %v720, 0.0
      %v753 = vmax.f32 %v721, 0.0
      %v754 = vmax.f32 %v722, 0.0
      %v755 = vmax.f32 %v723, 0.0
      %v756 = vmax.f32 %v724, 0.0
      %v757 = vmax.f32 %v725, 0.0
      %v758 = vmax.f32 %v726, 0.0
      %v759 = vmax.f32 %v727, 0.0
      %v760 = vmax.f32 %v728, 0.0
      %v761 = vmax.f32 %v729, 0.0
      %v762 = vmax.f32 %v730, 0.0
      %v763 = vmax.f32 %v731, 0.0
      %v764 = vmax.f32 %v732, 0.0
      %v765 = vmax.f32 %v733, 0.0
      %v766 = vmax.f32 %v734, 0.0
      %v767 = vmax.f32 %v735, 0.0
      %v768 = vmax.f32 %v736, 0.0
      %v769 = vmax.f32 %v737, 0.0
      %v770 = vmax.f32 %v738, 0.0
      %v771 = vmax.f32 %v739, 0.0
      %v772 = vmax.f32 %v740, 0.0
      %v773 = vmax.f32 %v741, 0.0
      %v774 = vmax.f32 %v742, 0.0
      %v775 = vmax.f32 %v743, 0.0
      %v776 = vmax.f32 %v744, 0.0
      %v777 = vmax.f32 %v745, 0.0
      %v778 = vmax.f32 %v746, 0.0
      %v779 = vmax.f32 %v747, 0.0
      %v780 = vmax.f32 %v748, 0.0
      %v781 = vmax.f32 %v749, 0.0
      %v782 = vmax.f32 %v750, 0.0
      %v783 = vmax.f32 %v751, 0.0
      %v784 = vpack.c.bf16 %v753, %v752
      %v785 = vpack.c.bf16 %v755, %v754
      %v786 = vpack.c.bf16 %v757, %v756
      %v787 = vpack.c.bf16 %v759, %v758
      %v788 = vpack.c.bf16 %v761, %v760
      %v789 = vpack.c.bf16 %v763, %v762
      %v790 = vpack.c.bf16 %v765, %v764
      %v791 = vpack.c.bf16 %v767, %v766
      %v792 = vpack.c.bf16 %v769, %v768
      %v793 = vpack.c.bf16 %v771, %v770
      %v794 = vpack.c.bf16 %v773, %v772
      %v795 = vpack.c.bf16 %v775, %v774
      %v796 = vpack.c.bf16 %v777, %v776
      %v797 = vpack.c.bf16 %v779, %v778
      %v798 = vpack.c.bf16 %v781, %v780
      %v799 = vpack.c.bf16 %v783, %v782
      %v816 = vunpack.c.l.b16 %v784
      %v817 = vunpack.c.h.b16 %v784
      %v818 = vunpack.c.l.b16 %v785
      %v819 = vunpack.c.h.b16 %v785
      %v820 = vunpack.c.l.b16 %v786
      %v821 = vunpack.c.h.b16 %v786
      %v822 = vunpack.c.l.b16 %v787
      %v823 = vunpack.c.h.b16 %v787
      %v824 = vunpack.c.l.b16 %v788
      %v825 = vunpack.c.h.b16 %v788
      %v826 = vunpack.c.l.b16 %v789
      %v827 = vunpack.c.h.b16 %v789
      %v828 = vunpack.c.l.b16 %v790
      %v829 = vunpack.c.h.b16 %v790
      %v830 = vunpack.c.l.b16 %v791
      %v831 = vunpack.c.h.b16 %v791
      %v832 = vunpack.c.l.b16 %v792
      %v833 = vunpack.c.h.b16 %v792
      %v834 = vunpack.c.l.b16 %v793
      %v835 = vunpack.c.h.b16 %v793
      %v836 = vunpack.c.l.b16 %v794
      %v837 = vunpack.c.h.b16 %v794
      %v838 = vunpack.c.l.b16 %v795
      %v839 = vunpack.c.h.b16 %v795
      %v840 = vunpack.c.l.b16 %v796
      %v841 = vunpack.c.h.b16 %v796
      %v842 = vunpack.c.l.b16 %v797
      %v843 = vunpack.c.h.b16 %v797
      %v844 = vunpack.c.l.b16 %v798
      %v845 = vunpack.c.h.b16 %v798
      %v846 = vunpack.c.l.b16 %v799
      %v847 = vunpack.c.h.b16 %v799
      %v848 = vpack.c.b16 %v816, %v816
      %v849 = vpack.c.b16 %v817, %v817
      %v850 = vpack.c.b16 %v818, %v818
      %v851 = vpack.c.b16 %v819, %v819
      %v852 = vpack.c.b16 %v820, %v820
      %v853 = vpack.c.b16 %v821, %v821
      %v854 = vpack.c.b16 %v822, %v822
      %v855 = vpack.c.b16 %v823, %v823
      %v856 = vpack.c.b16 %v824, %v824
      %v857 = vpack.c.b16 %v825, %v825
      %v858 = vpack.c.b16 %v826, %v826
      %v859 = vpack.c.b16 %v827, %v827
      %v860 = vpack.c.b16 %v828, %v828
      %v861 = vpack.c.b16 %v829, %v829
      %v862 = vpack.c.b16 %v830, %v830
      %v863 = vpack.c.b16 %v831, %v831
      %v864 = vpack.c.b16 %v832, %v832
      %v865 = vpack.c.b16 %v833, %v833
      %v866 = vpack.c.b16 %v834, %v834
      %v867 = vpack.c.b16 %v835, %v835
      %v868 = vpack.c.b16 %v836, %v836
      %v869 = vpack.c.b16 %v837, %v837
      %v870 = vpack.c.b16 %v838, %v838
      %v871 = vpack.c.b16 %v839, %v839
      %v872 = vpack.c.b16 %v840, %v840
      %v873 = vpack.c.b16 %v841, %v841
      %v874 = vpack.c.b16 %v842, %v842
      %v875 = vpack.c.b16 %v843, %v843
      %v876 = vpack.c.b16 %v844, %v844
      %v877 = vpack.c.b16 %v845, %v845
      %v878 = vpack.c.b16 %v846, %v846
      %v879 = vpack.c.b16 %v847, %v847
      %vm912 = vcmask 60416
      %913 = vst.msk [vmem:[%s248] sm:$0xf] %vm912, %v848
      %914 = vst.msk [vmem:[%s248 + $0x4] sm:$0xf] %vm912, %v849
      %915 = vst.msk [vmem:[%s248 + $0x8] sm:$0xf] %vm912, %v850
      %916 = vst.msk [vmem:[%s248 + $0xc] sm:$0xf] %vm912, %v851
      %917 = vst.msk [vmem:[%s248 + $0x10] sm:$0xf] %vm912, %v852
      %918 = vst.msk [vmem:[%s248 + $0x14] sm:$0xf] %vm912, %v853
      %919 = vst.msk [vmem:[%s248 + $0x18] sm:$0xf] %vm912, %v854
      %920 = vst.msk [vmem:[%s248 + $0x1c] sm:$0xf] %vm912, %v855
      %921 = vst.msk [vmem:[%s248 + $0x20] sm:$0xf] %vm912, %v856
      %922 = vst.msk [vmem:[%s248 + $0x24] sm:$0xf] %vm912, %v857
      %923 = vst.msk [vmem:[%s248 + $0x28] sm:$0xf] %vm912, %v858
      %924 = vst.msk [vmem:[%s248 + $0x2c] sm:$0xf] %vm912, %v859
      %925 = vst.msk [vmem:[%s248 + $0x30] sm:$0xf] %vm912, %v860
      %926 = vst.msk [vmem:[%s248 + $0x34] sm:$0xf] %vm912, %v861
      %927 = vst.msk [vmem:[%s248 + $0x38] sm:$0xf] %vm912, %v862
      %928 = vst.msk [vmem:[%s248 + $0x3c] sm:$0xf] %vm912, %v863
      %929 = vst.msk [vmem:[%s248 + $0x40] sm:$0xf] %vm912, %v864
      %930 = vst.msk [vmem:[%s248 + $0x44] sm:$0xf] %vm912, %v865
      %931 = vst.msk [vmem:[%s248 + $0x48] sm:$0xf] %vm912, %v866
      %932 = vst.msk [vmem:[%s248 + $0x4c] sm:$0xf] %vm912, %v867
      %933 = vst.msk [vmem:[%s248 + $0x50] sm:$0xf] %vm912, %v868
      %934 = vst.msk [vmem:[%s248 + $0x54] sm:$0xf] %vm912, %v869
      %935 = vst.msk [vmem:[%s248 + $0x58] sm:$0xf] %vm912, %v870
      %936 = vst.msk [vmem:[%s248 + $0x5c] sm:$0xf] %vm912, %v871
      %937 = vst.msk [vmem:[%s248 + $0x60] sm:$0xf] %vm912, %v872
      %938 = vst.msk [vmem:[%s248 + $0x64] sm:$0xf] %vm912, %v873
      %939 = vst.msk [vmem:[%s248 + $0x68] sm:$0xf] %vm912, %v874
      %940 = vst.msk [vmem:[%s248 + $0x6c] sm:$0xf] %vm912, %v875
      %941 = vst.msk [vmem:[%s248 + $0x70] sm:$0xf] %vm912, %v876
      %942 = vst.msk [vmem:[%s248 + $0x74] sm:$0xf] %vm912, %v877
      %943 = vst.msk [vmem:[%s248 + $0x78] sm:$0xf] %vm912, %v878
      %944 = vst.msk [vmem:[%s248 + $0x7c] sm:$0xf] %vm912, %v879
      %s945 = smul.u32 32, %s16
      %p946 = scmp.lt.s32.totalorder %s945, 63
      %s947 = scalar_select %p946, %s945, 63
      %s948 = smul.addr %s947, 4
      %s949 = scalar_lea.vmem %s5, %s948
      // Predicated region
      $region41: #{group_forward_jit.11} parent=39 // pred_check
        %p950 = pneg %p149
      $region42: #{group_forward_jit.11} parent=39 // pred_check_branch
        %952 = sbr.rel (%p950) target = $region44
      $region43: #{group_forward_jit.11} parent=39 // pred_region
        %s953 = smul.u32 32, %s16
      $region44: #{group_forward_jit.11} parent=39 // pred_fallthru
        _
    $region40: #{group_forward_jit.11} parent=5 // pred_fallthru
      _
    %p954 = scmp.le.s32.totalorder 2, %s11
    // Predicated region
    $region45: #{group_forward_jit.11} parent=5 // pred_check
      %p955 = pneg %p954
    $region46: #{group_forward_jit.11} parent=5 // pred_check_branch
      %957 = sbr.rel (%p955) target = $region48
    $region47: #{group_forward_jit.11} parent=5 // pred_region
      %s958 = ssub.s32 %s11, 2
      // Predicated region
      $region49: #{group_forward_jit.11} parent=47 // pred_check
        %p959 = pneg %p155
      $region50: #{group_forward_jit.11} parent=47 // pred_check_branch
        %961 = sbr.rel (%p959) target = $region52
      $region51: #{group_forward_jit.11} parent=47 // pred_region
        %s962 = smul.u32 32, %s17
        %p963 = scmp.lt.s32.totalorder %s962, 63
        %s964 = scalar_select %p963, %s962, 63
        %s965 = smul.addr %s964, 4
        %s966 = scalar_lea.vmem %s5, %s965
      $region52: #{group_forward_jit.11} parent=47 // pred_fallthru
        _
    $region48: #{group_forward_jit.11} parent=5 // pred_fallthru
      _
  $region6: #{group_forward_jit.11} parent=0 // loop_footer
    %s15 = sadd.s32 1, %s11
  $region7: #{group_forward_jit.11} parent=0 // loop_footer_branch
    %10 = sbr.rel target = $region3
  $region8: #{group_forward_jit.11} parent=0 // loop_exit
    _

// kernel: group_forward_jit.7
$region0: #{group_forward_jit.7}
  #allocation0 [shape = 'u32[]', space=smem, size = 0x4, offset = 0x4, fixed_abs, tag = 'smem constant byte address 0x4 - core index']
  #allocation1 [shape = 'u32[144,128]{1,0:T(1,128)}', space=vmem, size = 0x12000, scoped, tag = 'internal scratch']
  %s0 = inlined_call_operand.vmem [shape: bf16[2,342,4], index: 0, kind: input, shape index: {}]
  %s1 = inlined_call_operand.vmem [shape: bf16[3,3,4,4], index: 1, kind: input, shape index: {}]
  %s2 = inlined_call_operand.vmem [shape: f32[1,4], index: 2, kind: input, shape index: {}]
  %s3 = inlined_call_operand.vmem [shape: f32[1,4], index: 3, kind: input, shape index: {}]
  %s4 = inlined_call_operand.vmem [shape: bf16[2,16,16,4], index: 4, kind: output, shape index: {}]
  %s5 = sld [smem:[#allocation0]]
  $region49: #{group_forward_jit.7} parent=0
    _
  %s7 = ssub.s32 1, %s5
  %s8 = scalar_select 0, %s7, %s5
  loop: start=0, step=1, limit=4
  $region2: #{group_forward_jit.7} parent=0 // loop_pre_header
    _
  $region3: #{group_forward_jit.7} parent=0 // loop_header
    %s10 = sphi 0, %s14
    %p11 = scmp.ge.s32.totalorder %s10, 4
    %s20 = sphi 0, %s22
    %s23 = sphi 0, %s20
    %s24 = sphi 0, %s23
    %s40 = sphi 0, %s24
    %s44 = sphi 0, %s44
    %s46 = sphi 0, %s44
    %s47 = sphi 0, %s46
    %s61 = sphi 0, %s47
    %s65 = sphi 0, %s65
    %s67 = sphi 0, %s65
    %s68 = sphi 0, %s67
    %s82 = sphi 0, %s68
    %s86 = sphi 0, %s86
    %s88 = sphi 0, %s86
    %s89 = sphi 0, %s88
    %s103 = sphi 0, %s89
    %s109 = sphi 0, %s111
    %s112 = sphi 0, %s109
    %s113 = sphi 0, %s112
    %s129 = sphi 0, %s113
  $region4: #{group_forward_jit.7} parent=0 // loop_header_branch
    %13 = sbr.rel (%p11) target = $region8
  $region5: #{group_forward_jit.7} parent=0 // loop_body
    %s15 = ssub.s32 %s10, 1
    %s16 = ssub.s32 %s10, 2
    %s17 = sadd.s32 %s10, 1
    %s18 = ssub.s32 %s10, %s17
    %p19 = scmp.eq.s32.totalorder %s18, 0
    %s21 = sadd.s32 %s20, 1
    %s22 = scalar_select %p19, %s20, %s21
    %p25 = pneg %p19
    %p26 = scmp.eq.s32.totalorder %s10, 1
    %p27 = por %p25, %p26
    %p28 = scmp.ne.s32.totalorder %s20, %s23
    %p29 = scmp.eq.s32.totalorder %s10, 0
    %p30 = por %p28, %p29
    %p31 = scmp.ne.s32.totalorder %s20, %s23
    %p32 = scmp.eq.s32.totalorder %s15, 1
    %p33 = por %p31, %p32
    %p34 = scmp.ne.s32.totalorder %s23, %s24
    %p35 = scmp.eq.s32.totalorder %s15, 0
    %p36 = por %p34, %p35
    %p37 = scmp.ne.s32.totalorder %s23, %s24
    %p38 = scmp.eq.s32.totalorder %s16, 1
    %p39 = por %p37, %p38
    %p41 = scmp.ne.s32.totalorder %s24, %s40
    %p42 = scmp.eq.s32.totalorder %s16, 0
    %p43 = por %p41, %p42
    %s45 = sadd.s32 %s44, 1
    %p48 = scmp.eq.s32.totalorder %s10, 1
    %p49 = scmp.ne.s32.totalorder %s44, %s46
    %p50 = scmp.eq.s32.totalorder %s10, 0
    %p51 = por %p49, %p50
    %p52 = scmp.ne.s32.totalorder %s44, %s46
    %p53 = scmp.eq.s32.totalorder %s15, 1
    %p54 = por %p52, %p53
    %p55 = scmp.ne.s32.totalorder %s46, %s47
    %p56 = scmp.eq.s32.totalorder %s15, 0
    %p57 = por %p55, %p56
    %p58 = scmp.ne.s32.totalorder %s46, %s47
    %p59 = scmp.eq.s32.totalorder %s16, 1
    %p60 = por %p58, %p59
    %p62 = scmp.ne.s32.totalorder %s47, %s61
    %p63 = scmp.eq.s32.totalorder %s16, 0
    %p64 = por %p62, %p63
    %s66 = sadd.s32 %s65, 1
    %p69 = scmp.eq.s32.totalorder %s10, 1
    %p70 = scmp.ne.s32.totalorder %s65, %s67
    %p71 = scmp.eq.s32.totalorder %s10, 0
    %p72 = por %p70, %p71
    %p73 = scmp.ne.s32.totalorder %s65, %s67
    %p74 = scmp.eq.s32.totalorder %s15, 1
    %p75 = por %p73, %p74
    %p76 = scmp.ne.s32.totalorder %s67, %s68
    %p77 = scmp.eq.s32.totalorder %s15, 0
    %p78 = por %p76, %p77
    %p79 = scmp.ne.s32.totalorder %s67, %s68
    %p80 = scmp.eq.s32.totalorder %s16, 1
    %p81 = por %p79, %p80
    %p83 = scmp.ne.s32.totalorder %s68, %s82
    %p84 = scmp.eq.s32.totalorder %s16, 0
    %p85 = por %p83, %p84
    %s87 = sadd.s32 %s86, 1
    %p90 = scmp.eq.s32.totalorder %s10, 1
    %p91 = scmp.ne.s32.totalorder %s86, %s88
    %p92 = scmp.eq.s32.totalorder %s10, 0
    %p93 = por %p91, %p92
    %p94 = scmp.ne.s32.totalorder %s86, %s88
    %p95 = scmp.eq.s32.totalorder %s15, 1
    %p96 = por %p94, %p95
    %p97 = scmp.ne.s32.totalorder %s88, %s89
    %p98 = scmp.eq.s32.totalorder %s15, 0
    %p99 = por %p97, %p98
    %p100 = scmp.ne.s32.totalorder %s88, %s89
    %p101 = scmp.eq.s32.totalorder %s16, 1
    %p102 = por %p100, %p101
    %p104 = scmp.ne.s32.totalorder %s89, %s103
    %p105 = scmp.eq.s32.totalorder %s16, 0
    %p106 = por %p104, %p105
    %s107 = ssub.s32 %s10, %s17
    %p108 = scmp.eq.s32.totalorder %s107, 0
    %s110 = sadd.s32 %s109, 1
    %s111 = scalar_select %p108, %s109, %s110
    %p114 = pneg %p108
    %p115 = scmp.eq.s32.totalorder %s10, 1
    %p116 = por %p114, %p115
    %p117 = scmp.ne.s32.totalorder %s109, %s112
    %p118 = scmp.eq.s32.totalorder %s10, 0
    %p119 = por %p117, %p118
    %p120 = scmp.ne.s32.totalorder %s109, %s112
    %p121 = scmp.eq.s32.totalorder %s15, 1
    %p122 = por %p120, %p121
    %p123 = scmp.ne.s32.totalorder %s112, %s113
    %p124 = scmp.eq.s32.totalorder %s15, 0
    %p125 = por %p123, %p124
    %p126 = scmp.ne.s32.totalorder %s112, %s113
    %p127 = scmp.eq.s32.totalorder %s16, 1
    %p128 = por %p126, %p127
    %p130 = scmp.ne.s32.totalorder %s113, %s129
    %p131 = scmp.eq.s32.totalorder %s16, 0
    %p132 = por %p130, %p131
    %p133 = scmp.le.s32.totalorder 1, %s10
    %p134 = scmp.lt.s32.totalorder %s10, 3
    %p135 = pnand %p133, %p134
    %p136 = pneg %p135
    // Predicated region
    $region9: #{group_forward_jit.7} parent=5 // pred_check
      _
    $region10: #{group_forward_jit.7} parent=5 // pred_check_branch
      %138 = sbr.rel (%p135) target = $region12
    $region11: #{group_forward_jit.7} parent=5 // pred_region
      %s139 = ssub.s32 %s10, 1
      // Predicated region
      $region13: #{group_forward_jit.7} parent=11 // pred_check
        %p140 = pneg %p57
      $region14: #{group_forward_jit.7} parent=11 // pred_check_branch
        %142 = sbr.rel (%p140) target = $region16
      $region15: #{group_forward_jit.7} parent=11 // pred_region
        _
      $region16: #{group_forward_jit.7} parent=11 // pred_fallthru
        _
      // Predicated region
      $region17: #{group_forward_jit.7} parent=11 // pred_check
        %p143 = pneg %p78
      $region18: #{group_forward_jit.7} parent=11 // pred_check_branch
        %145 = sbr.rel (%p143) target = $region20
      $region19: #{group_forward_jit.7} parent=11 // pred_region
        _
      $region20: #{group_forward_jit.7} parent=11 // pred_fallthru
        _
      // Predicated region
      $region21: #{group_forward_jit.7} parent=11 // pred_check
        %p146 = pneg %p99
      $region22: #{group_forward_jit.7} parent=11 // pred_check_branch
        %148 = sbr.rel (%p146) target = $region24
      $region23: #{group_forward_jit.7} parent=11 // pred_region
        _
      $region24: #{group_forward_jit.7} parent=11 // pred_fallthru
        _
    $region12: #{group_forward_jit.7} parent=5 // pred_fallthru
      _
    %p149 = scmp.lt.s32.totalorder %s10, 2
    // Predicated region
    $region25: #{group_forward_jit.7} parent=5 // pred_check
      %p150 = pneg %p149
    $region26: #{group_forward_jit.7} parent=5 // pred_check_branch
      %152 = sbr.rel (%p150) target = $region28
    $region27: #{group_forward_jit.7} parent=5 // pred_region
      // Predicated region
      $region29: #{group_forward_jit.7} parent=27 // pred_check
        %p153 = pneg %p30
      $region30: #{group_forward_jit.7} parent=27 // pred_check_branch
        %155 = sbr.rel (%p153) target = $region32
      $region31: #{group_forward_jit.7} parent=27 // pred_region
        %p156 = scmp.lt.s32.totalorder %s10, 1
        %s157 = scalar_select %p156, %s10, 1
        %s158 = smul.addr %s157, 43
        %s159 = smul.addr %s158, 4
        %s160 = scalar_lea.vmem %s0, %s159
      $region32: #{group_forward_jit.7} parent=27 // pred_fallthru
        _
    $region28: #{group_forward_jit.7} parent=5 // pred_fallthru
      _
    %p161 = scmp.le.s32.totalorder 1, %s10
    %p162 = scmp.lt.s32.totalorder %s10, 3
    %p163 = pnand %p161, %p162
    %p164 = pneg %p163
    // Predicated region
    $region33: #{group_forward_jit.7} parent=5 // pred_check
      _
    $region34: #{group_forward_jit.7} parent=5 // pred_check_branch
      %166 = sbr.rel (%p163) target = $region36
    $region35: #{group_forward_jit.7} parent=5 // pred_region
      %s167 = ssub.s32 %s10, 1
      %p168 = scmp.lt.s32.totalorder %s15, 1
      %s169 = scalar_select %p168, %s15, 1
      %s170 = smul.addr %s169, 43
      %s171 = smul.addr %s170, 4
      %s172 = scalar_lea.vmem %s0, %s171
      %p173 = pneg %p36
      %p174 = pneg %p33
      %p175 = pneg %p57
      %p176 = pneg %p54
      %p177 = pneg %p78
      %p178 = pneg %p75
      %p179 = pneg %p99
      %p180 = pneg %p96
      %p181 = pneg %p125
      %p182 = pneg %p122
      %p183 = scmp.lt.s32.totalorder %s15, 1
      %s184 = scalar_select %p183, %s15, 1
      %s185 = smul.addr %s184, 32
      %s186 = smul.addr %s185, 4
      %s187 = scalar_lea.vmem %s4, %s186
      %p188 = scmp.lt.s32.totalorder %s15, 1
      %s189 = scalar_select %p188, %s15, 1
      %s190 = smul.addr %s189, 43
      %s191 = smul.addr %s190, 4
      %s192 = scalar_lea.vmem %s0, %s191
      %p193 = scmp.lt.s32.totalorder %s15, 1
      %s194 = scalar_select %p193, %s15, 1
      %s195 = smul.addr %s194, 32
      %s196 = smul.addr %s195, 4
      %s197 = scalar_lea.vmem %s4, %s196
      %v199 = vld [vmem:[%s192] sm:$0xf]
      %v200 = vld [vmem:[%s192 + $0x4] sm:$0xf]
      %v201 = vld [vmem:[%s192 + $0x8] sm:$0xf]
      %v202 = vld [vmem:[%s192 + $0xc] sm:$0xf]
      %v203 = vld [vmem:[%s192 + $0x10] sm:$0xf]
      %v204 = vld [vmem:[%s192 + $0x14] sm:$0xf]
      %v205 = vld [vmem:[%s192 + $0x18] sm:$0xf]
      %v206 = vld [vmem:[%s192 + $0x1c] sm:$0xf]
      %v207 = vld [vmem:[%s192 + $0x20] sm:$0xf]
      %v208 = vld [vmem:[%s192 + $0x24] sm:$0xf]
      %v209 = vld [vmem:[%s192 + $0x28] sm:$0xf]
      %v210 = vld [vmem:[%s192 + $0x2c] sm:$0xf]
      %v211 = vld [vmem:[%s192 + $0x30] sm:$0xf]
      %v212 = vld [vmem:[%s192 + $0x34] sm:$0xf]
      %v213 = vld [vmem:[%s192 + $0x38] sm:$0xf]
      %v214 = vld [vmem:[%s192 + $0x3c] sm:$0xf]
      %v215 = vld [vmem:[%s192 + $0x40] sm:$0xf]
      %v216 = vld [vmem:[%s192 + $0x44] sm:$0xf]
      %v217 = vld [vmem:[%s192 + $0x48] sm:$0xf]
      %v218 = vld [vmem:[%s192 + $0x4c] sm:$0xf]
      %v219 = vld [vmem:[%s192 + $0x50] sm:$0xf]
      %v220 = vld [vmem:[%s192 + $0x54] sm:$0xf]
      %v221 = vld [vmem:[%s192 + $0x58] sm:$0xf]
      %v222 = vld [vmem:[%s192 + $0x5c] sm:$0xf]
      %v223 = vld [vmem:[%s192 + $0x60] sm:$0xf]
      %v224 = vld [vmem:[%s192 + $0x64] sm:$0xf]
      %v225 = vld [vmem:[%s192 + $0x68] sm:$0xf]
      %v226 = vld [vmem:[%s192 + $0x6c] sm:$0xf]
      %v227 = vld [vmem:[%s192 + $0x70] sm:$0xf]
      %v228 = vld [vmem:[%s192 + $0x74] sm:$0xf]
      %v229 = vld [vmem:[%s192 + $0x78] sm:$0xf]
      %v230 = vld [vmem:[%s192 + $0x7c] sm:$0xf]
      %v231 = vld [vmem:[%s192 + $0x80] sm:$0xf]
      %v232 = vld [vmem:[%s192 + $0x84] sm:$0xf]
      %v233 = vld [vmem:[%s192 + $0x88] sm:$0xf]
      %v234 = vld [vmem:[%s192 + $0x8c] sm:$0xf]
      %v235 = vld [vmem:[%s1] sm:$0x3]
      %v236 = vld [vmem:[%s192 + $0x90] sm:$0x1]
      %s237 = scalar_lea.vmem %s1, 2
      %v238 = vld [vmem:[%s237] sm:$0x3]
      %v276 = vunpack.c.l.b16 %v199
      %v277 = vunpack.c.l.b16 %v200
      %v278 = vunpack.c.l.b16 %v201
      %v279 = vunpack.c.l.b16 %v202
      %v280 = vunpack.c.l.b16 %v203
      %v281 = vunpack.c.l.b16 %v204
      %v282 = vunpack.c.l.b16 %v205
      %v283 = vunpack.c.l.b16 %v206
      %v284 = vunpack.c.l.b16 %v207
      %v285 = vunpack.c.l.b16 %v208
      %v286 = vunpack.c.l.b16 %v209
      %v287 = vunpack.c.l.b16 %v210
      %v288 = vunpack.c.l.b16 %v211
      %v289 = vunpack.c.l.b16 %v212
      %v290 = vunpack.c.l.b16 %v213
      %v291 = vunpack.c.l.b16 %v214
      %v292 = vunpack.c.l.b16 %v215
      %v293 = vunpack.c.l.b16 %v216
      %v294 = vunpack.c.l.b16 %v217
      %v295 = vunpack.c.l.b16 %v218
      %v296 = vunpack.c.l.b16 %v219
      %v297 = vunpack.c.l.b16 %v220
      %v298 = vunpack.c.l.b16 %v221
      %v299 = vunpack.c.l.b16 %v222
      %v300 = vunpack.c.l.b16 %v223
      %v301 = vunpack.c.l.b16 %v224
      %v302 = vunpack.c.l.b16 %v225
      %v303 = vunpack.c.l.b16 %v226
      %v304 = vunpack.c.l.b16 %v227
      %v305 = vunpack.c.l.b16 %v228
      %v306 = vunpack.c.l.b16 %v229
      %v307 = vunpack.c.l.b16 %v230
      %v308 = vunpack.c.l.b16 %v231
      %v309 = vunpack.c.l.b16 %v232
      %v310 = vunpack.c.l.b16 %v233
      %v311 = vunpack.c.l.b16 %v234
      %v312 = vunpack.c.l.b16 %v236
      %v313 = vpack.c.b16 %v277, %v276
      %v314 = vpack.c.b16 %v279, %v278
      %v315 = vpack.c.b16 %v281, %v280
      %v316 = vpack.c.b16 %v283, %v282
      %v317 = vpack.c.b16 %v285, %v284
      %v318 = vpack.c.b16 %v287, %v286
      %v319 = vpack.c.b16 %v289, %v288
      %v320 = vpack.c.b16 %v291, %v290
      %v321 = vpack.c.b16 %v293, %v292
      %v322 = vpack.c.b16 %v295, %v294
      %v323 = vpack.c.b16 %v297, %v296
      %v324 = vpack.c.b16 %v299, %v298
      %v325 = vpack.c.b16 %v301, %v300
      %v326 = vpack.c.b16 %v303, %v302
      %v327 = vpack.c.b16 %v305, %v304
      %v328 = vpack.c.b16 %v307, %v306
      %v329 = vpack.c.b16 %v309, %v308
      %v330 = vpack.c.b16 %v311, %v310
      %v331 = vpack.c.b16 %v312, %v312
      %vm332 = vsmask.f32 7424
      %v334 = vshrl.u32 %v313, 16
      %v336 = vshll.u32 %v313, 16
      %v338 = vrot.slane %v336, 1
      %v339 = vor.u32 %v334, %v338
      %v341 = vshll.u32 %v314, 16
      %v343 = vrot.slane %v341, 1
      %v344 = vsel %vm332, %v339, %v343
      %v345 = vshrl.u32 %v314, 16
      %v347 = vor.u32 %v345, %v343
      %v349 = vshll.u32 %v315, 16
      %v351 = vrot.slane %v349, 1
      %v352 = vsel %vm332, %v347, %v351
      %v353 = vshrl.u32 %v315, 16
      %v355 = vor.u32 %v353, %v351
      %v357 = vshll.u32 %v316, 16
      %v359 = vrot.slane %v357, 1
      %v360 = vsel %vm332, %v355, %v359
      %v361 = vshrl.u32 %v316, 16
      %v363 = vor.u32 %v361, %v359
      %v365 = vshll.u32 %v317, 16
      %v367 = vrot.slane %v365, 1
      %v368 = vsel %vm332, %v363, %v367
      %v369 = vshrl.u32 %v317, 16
      %v371 = vor.u32 %v369, %v367
      %v373 = vshll.u32 %v318, 16
      %v375 = vrot.slane %v373, 1
      %v376 = vsel %vm332, %v371, %v375
      %v377 = vshrl.u32 %v318, 16
      %v379 = vor.u32 %v377, %v375
      %v381 = vshll.u32 %v319, 16
      %v383 = vrot.slane %v381, 1
      %v384 = vsel %vm332, %v379, %v383
      %v385 = vshrl.u32 %v319, 16
      %v387 = vor.u32 %v385, %v383
      %v389 = vshll.u32 %v320, 16
      %v391 = vrot.slane %v389, 1
      %v392 = vsel %vm332, %v387, %v391
      %v393 = vshrl.u32 %v320, 16
      %v395 = vor.u32 %v393, %v391
      %v397 = vshll.u32 %v321, 16
      %v399 = vrot.slane %v397, 1
      %v400 = vsel %vm332, %v395, %v399
      %v401 = vshrl.u32 %v321, 16
      %v403 = vor.u32 %v401, %v399
      %v405 = vshll.u32 %v322, 16
      %v407 = vrot.slane %v405, 1
      %v408 = vsel %vm332, %v403, %v407
      %v409 = vshrl.u32 %v322, 16
      %v411 = vor.u32 %v409, %v407
      %v413 = vshll.u32 %v323, 16
      %v415 = vrot.slane %v413, 1
      %v416 = vsel %vm332, %v411, %v415
      %v417 = vshrl.u32 %v323, 16
      %v419 = vor.u32 %v417, %v415
      %v421 = vshll.u32 %v324, 16
      %v423 = vrot.slane %v421, 1
      %v424 = vsel %vm332, %v419, %v423
      %v425 = vshrl.u32 %v324, 16
      %v427 = vor.u32 %v425, %v423
      %v429 = vshll.u32 %v325, 16
      %v431 = vrot.slane %v429, 1
      %v432 = vsel %vm332, %v427, %v431
      %v433 = vshrl.u32 %v325, 16
      %v435 = vor.u32 %v433, %v431
      %v437 = vshll.u32 %v326, 16
      %v439 = vrot.slane %v437, 1
      %v440 = vsel %vm332, %v435, %v439
      %v441 = vshrl.u32 %v326, 16
      %v443 = vor.u32 %v441, %v439
      %v445 = vshll.u32 %v327, 16
      %v447 = vrot.slane %v445, 1
      %v448 = vsel %vm332, %v443, %v447
      %v449 = vshrl.u32 %v327, 16
      %v451 = vor.u32 %v449, %v447
      %v453 = vshll.u32 %v328, 16
      %v455 = vrot.slane %v453, 1
      %v456 = vsel %vm332, %v451, %v455
      %v457 = vshrl.u32 %v328, 16
      %v459 = vor.u32 %v457, %v455
      %v461 = vshll.u32 %v329, 16
      %v463 = vrot.slane %v461, 1
      %v464 = vsel %vm332, %v459, %v463
      %v465 = vshrl.u32 %v329, 16
      %v467 = vor.u32 %v465, %v463
      %v469 = vshll.u32 %v330, 16
      %v471 = vrot.slane %v469, 1
      %v472 = vsel %vm332, %v467, %v471
      %v473 = vshrl.u32 %v330, 16
      %v475 = vor.u32 %v473, %v471
      %v477 = vshll.u32 %v331, 16
      %v479 = vrot.slane %v477, 1
      %v480 = vsel %vm332, %v475, %v479
      %vm481 = vcmask 31744
      %v483 = vsel %vm481, %v344, 0
      %v486 = vsel %vm481, %v352, 0
      %v489 = vsel %vm481, %v360, 0
      %v492 = vsel %vm481, %v368, 0
      %v495 = vsel %vm481, %v376, 0
      %v498 = vsel %vm481, %v384, 0
      %v501 = vsel %vm481, %v392, 0
      %v504 = vsel %vm481, %v400, 0
      %v507 = vsel %vm481, %v408, 0
      %v510 = vsel %vm481, %v416, 0
      %v513 = vsel %vm481, %v424, 0
      %v516 = vsel %vm481, %v432, 0
      %v519 = vsel %vm481, %v440, 0
      %v522 = vsel %vm481, %v448, 0
      %v525 = vsel %vm481, %v456, 0
      %v528 = vsel %vm481, %v464, 0
      %v531 = vsel %vm481, %v472, 0
      %v534 = vsel %vm481, %v480, 0
      %vm536 = vcmask 1041408
      %v538 = vsel %vm536, %v238, 0
      %540 = vmatprep.subr.bf16.mxu0 0
      %541 = vmatpush1.bf16.msra.mxu0 %v538
      %542 = vmatprep.subr.bf16.mxu0 0
      %543 = vmatpush1.bf16.msra.mxu0 0
      %544 = vmatprep.subr.bf16.mxu0 0
      %545 = vmatpush1.bf16.msra.mxu0 0
      %546 = vmatprep.subr.bf16.mxu0 0
      %547 = vmatpush1.bf16.msra.mxu0 0
      %548 = vmatprep.subr.bf16.mxu0 0
      %549 = vmatpush1.bf16.msra.mxu0 0
      %550 = vmatprep.subr.bf16.mxu0 0
      %551 = vmatpush1.bf16.msra.mxu0 0
      %552 = vmatprep.subr.bf16.mxu0 0
      %553 = vmatpush1.bf16.msra.mxu0 0
      %554 = vmatprep.subr.bf16.mxu0 0
      %555 = vmatpush1.bf16.msra.mxu0 0
      %556 = vmatprep.subr.bf16.mxu0 0
      %557 = vmatpush1.bf16.msra.mxu0 0
      %558 = vmatprep.subr.bf16.mxu0 0
      %559 = vmatpush1.bf16.msra.mxu0 0
      %560 = vmatprep.subr.bf16.mxu0 0
      %561 = vmatpush1.bf16.msra.mxu0 0
      %562 = vmatprep.subr.bf16.mxu0 0
      %563 = vmatpush1.bf16.msra.mxu0 0
      %564 = vmatprep.subr.bf16.mxu0 0
      %565 = vmatpush1.bf16.msra.mxu0 0
      %566 = vmatprep.subr.bf16.mxu0 0
      %567 = vmatpush1.bf16.msra.mxu0 0
      %568 = vmatprep.subr.bf16.mxu0 0
      %569 = vmatpush1.bf16.msra.mxu0 0
      %570 = vmatprep.subr.bf16.mxu0 0
      %571 = vmatpush1.bf16.msra.mxu0 0
      %572 = vmatprep.mubr.bf16.mxu0 0
      %573 = vmatmul.mubr.bf16.gmra.mrb[0].mxu0 %v483
      %v574 = vpop.f32.mrb[0].mxu0
      %v575 = vadd.f32 0.0, %v574
      %v576 = vpop.f32.mrb[0].mxu0
      %v577 = vpop.f32.mrb[0].mxu0
      %v578 = vadd.f32 0.0, %v577
      %v579 = vpop.f32.mrb[0].mxu0
      %580 = vmatprep.mubr.bf16.mxu0 0
      %581 = vmatmul.mubr.bf16.gmra.mrb[0].mxu0 %v486
      %v582 = vpop.f32.mrb[0].mxu0
      %v583 = vadd.f32 0.0, %v582
      %v584 = vpop.f32.mrb[0].mxu0
      %v585 = vpop.f32.mrb[0].mxu0
      %v586 = vadd.f32 0.0, %v585
      %v587 = vpop.f32.mrb[0].mxu0
      %588 = vmatprep.mubr.bf16.mxu0 0
      %589 = vmatmul.mubr.bf16.gmra.mrb[0].mxu0 %v489
      %v590 = vpop.f32.mrb[0].mxu0
      %v591 = vadd.f32 0.0, %v590
      %v592 = vpop.f32.mrb[0].mxu0
      %v593 = vpop.f32.mrb[0].mxu0
      %v594 = vadd.f32 0.0, %v593
      %v595 = vpop.f32.mrb[0].mxu0
      %596 = vmatprep.mubr.bf16.mxu0 0
      %597 = vmatmul.mubr.bf16.gmra.mrb[0].mxu0 %v492
      %v598 = vpop.f32.mrb[0].mxu0
      %v599 = vadd.f32 0.0, %v598
      %v600 = vpop.f32.mrb[0].mxu0
      %v601 = vpop.f32.mrb[0].mxu0
      %v602 = vadd.f32 0.0, %v601
      %v603 = vpop.f32.mrb[0].mxu0
      %604 = vmatprep.mubr.bf16.mxu0 0
      %605 = vmatmul.mubr.bf16.gmra.mrb[0].mxu0 %v495
      %v606 = vpop.f32.mrb[0].mxu0
      %v607 = vadd.f32 0.0, %v606
      %v608 = vpop.f32.mrb[0].mxu0
      %v609 = vpop.f32.mrb[0].mxu0
      %v610 = vadd.f32 0.0, %v609
      %v611 = vpop.f32.mrb[0].mxu0
      %612 = vmatprep.mubr.bf16.mxu0 0
      %613 = vmatmul.mubr.bf16.gmra.mrb[0].mxu0 %v498
      %v614 = vpop.f32.mrb[0].mxu0
      %v615 = vadd.f32 0.0, %v614
      %v616 = vpop.f32.mrb[0].mxu0
      %v617 = vpop.f32.mrb[0].mxu0
      %v618 = vadd.f32 0.0, %v617
      %v619 = vpop.f32.mrb[0].mxu0
      %620 = vmatprep.mubr.bf16.mxu0 0
      %621 = vmatmul.mubr.bf16.gmra.mrb[0].mxu0 %v501
      %v622 = vpop.f32.mrb[0].mxu0
      %v623 = vadd.f32 0.0, %v622
      %v624 = vpop.f32.mrb[0].mxu0
      %v625 = vpop.f32.mrb[0].mxu0
      %v626 = vadd.f32 0.0, %v625
      %v627 = vpop.f32.mrb[0].mxu0
      %628 = vmatprep.mubr.bf16.mxu0 0
      %629 = vmatmul.mubr.bf16.gmra.mrb[0].mxu0 %v504
      %v630 = vpop.f32.mrb[0].mxu0
      %v631 = vadd.f32 0.0, %v630
      %v632 = vpop.f32.mrb[0].mxu0
      %v633 = vpop.f32.mrb[0].mxu0
      %v634 = vadd.f32 0.0, %v633
      %v635 = vpop.f32.mrb[0].mxu0
      %636 = vmatprep.mubr.bf16.mxu0 0
      %637 = vmatmul.mubr.bf16.gmra.mrb[0].mxu0 %v507
      %v638 = vpop.f32.mrb[0].mxu0
      %v639 = vadd.f32 0.0, %v638
      %v640 = vpop.f32.mrb[0].mxu0
      %v641 = vpop.f32.mrb[0].mxu0
      %v642 = vadd.f32 0.0, %v641
      %v643 = vpop.f32.mrb[0].mxu0
      %644 = vmatprep.mubr.bf16.mxu0 0
      %645 = vmatmul.mubr.bf16.gmra.mrb[0].mxu0 %v510
      %v646 = vpop.f32.mrb[0].mxu0
      %v647 = vadd.f32 0.0, %v646
      %v648 = vpop.f32.mrb[0].mxu0
      %v649 = vpop.f32.mrb[0].mxu0
      %v650 = vadd.f32 0.0, %v649
      %v651 = vpop.f32.mrb[0].mxu0
      %652 = vmatprep.mubr.bf16.mxu0 0
      %653 = vmatmul.mubr.bf16.gmra.mrb[0].mxu0 %v513
      %v654 = vpop.f32.mrb[0].mxu0
      %v655 = vadd.f32 0.0, %v654
      %v656 = vpop.f32.mrb[0].mxu0
      %v657 = vpop.f32.mrb[0].mxu0
      %v658 = vadd.f32 0.0, %v657
      %v659 = vpop.f32.mrb[0].mxu0
      %660 = vmatprep.mubr.bf16.mxu0 0
      %661 = vmatmul.mubr.bf16.gmra.mrb[0].mxu0 %v516
      %v662 = vpop.f32.mrb[0].mxu0
      %v663 = vadd.f32 0.0, %v662
      %v664 = vpop.f32.mrb[0].mxu0
      %v665 = vpop.f32.mrb[0].mxu0
      %v666 = vadd.f32 0.0, %v665
      %v667 = vpop.f32.mrb[0].mxu0
      %668 = vmatprep.mubr.bf16.mxu0 0
      %669 = vmatmul.mubr.bf16.gmra.mrb[0].mxu0 %v519
      %v670 = vpop.f32.mrb[0].mxu0
      %v671 = vadd.f32 0.0, %v670
      %v672 = vpop.f32.mrb[0].mxu0
      %v673 = vpop.f32.mrb[0].mxu0
      %v674 = vadd.f32 0.0, %v673
      %v675 = vpop.f32.mrb[0].mxu0
      %676 = vmatprep.mubr.bf16.mxu0 0
      %677 = vmatmul.mubr.bf16.gmra.mrb[0].mxu0 %v522
      %v678 = vpop.f32.mrb[0].mxu0
      %v679 = vadd.f32 0.0, %v678
      %v680 = vpop.f32.mrb[0].mxu0
      %v681 = vpop.f32.mrb[0].mxu0
      %v682 = vadd.f32 0.0, %v681
      %v683 = vpop.f32.mrb[0].mxu0
      %684 = vmatprep.mubr.bf16.mxu0 0
      %685 = vmatmul.mubr.bf16.gmra.mrb[0].mxu0 %v525
      %v686 = vpop.f32.mrb[0].mxu0
      %v687 = vadd.f32 0.0, %v686
      %v688 = vpop.f32.mrb[0].mxu0
      %v689 = vpop.f32.mrb[0].mxu0
      %v690 = vadd.f32 0.0, %v689
      %v691 = vpop.f32.mrb[0].mxu0
      %692 = vmatprep.mubr.bf16.mxu0 0
      %693 = vmatmul.mubr.bf16.gmra.mrb[0].mxu0 %v528
      %v694 = vpop.f32.mrb[0].mxu0
      %v695 = vadd.f32 0.0, %v694
      %v696 = vpop.f32.mrb[0].mxu0
      %v697 = vpop.f32.mrb[0].mxu0
      %v698 = vadd.f32 0.0, %v697
      %v699 = vpop.f32.mrb[0].mxu0
      %700 = vmatprep.mubr.bf16.mxu0 0
      %701 = vmatmul.mubr.bf16.gmra.mrb[0].mxu0 %v531
      %v702 = vpop.f32.mrb[0].mxu0
      %v703 = vadd.f32 0.0, %v702
      %v704 = vpop.f32.mrb[0].mxu0
      %v705 = vpop.f32.mrb[0].mxu0
      %v706 = vadd.f32 0.0, %v705
      %v707 = vpop.f32.mrb[0].mxu0
      %708 = vmatprep.mubr.bf16.mxu0 0
      %709 = vmatmul.mubr.bf16.gmra.mrb[0].mxu0 %v534
      %v710 = vpop.f32.mrb[0].mxu0
      %v711 = vadd.f32 0.0, %v710
      %v712 = vpop.f32.mrb[0].mxu0
      %v713 = vpop.f32.mrb[0].mxu0
      %v714 = vadd.f32 0.0, %v713
      %v715 = vpop.f32.mrb[0].mxu0
      %716 = vdwg.mxu0
      %v717 = vsel %vm481, %v313, 0
      %v719 = vsel %vm481, %v314, 0
      %v721 = vsel %vm481, %v315, 0
      %v723 = vsel %vm481, %v316, 0
      %v725 = vsel %vm481, %v317, 0
      %v727 = vsel %vm481, %v318, 0
      %v729 = vsel %vm481, %v319, 0
      %v731 = vsel %vm481, %v320, 0
      %v733 = vsel %vm481, %v321, 0
      %v735 = vsel %vm481, %v322, 0
      %v737 = vsel %vm481, %v323, 0
      %v739 = vsel %vm481, %v324, 0
      %v741 = vsel %vm481, %v325, 0
      %v743 = vsel %vm481, %v326, 0
      %v745 = vsel %vm481, %v327, 0
      %v747 = vsel %vm481, %v328, 0
      %v749 = vsel %vm481, %v329, 0
      %v751 = vsel %vm481, %v330, 0
      %v754 = vsel %vm536, %v235, 0
      %756 = vmatprep.subr.bf16.mxu0 0
      %757 = vmatpush1.bf16.msra.mxu0 %v754
      %758 = vmatprep.subr.bf16.mxu0 0
      %759 = vmatpush1.bf16.msra.mxu0 0
      %760 = vmatprep.subr.bf16.mxu0 0
      %761 = vmatpush1.bf16.msra.mxu0 0
      %762 = vmatprep.subr.bf16.mxu0 0
      %763 = vmatpush1.bf16.msra.mxu0 0
      %764 = vmatprep.subr.bf16.mxu0 0
      %765 = vmatpush1.bf16.msra.mxu0 0
      %766 = vmatprep.subr.bf16.mxu0 0
      %767 = vmatpush1.bf16.msra.mxu0 0
      %768 = vmatprep.subr.bf16.mxu0 0
      %769 = vmatpush1.bf16.msra.mxu0 0
      %770 = vmatprep.subr.bf16.mxu0 0
      %771 = vmatpush1.bf16.msra.mxu0 0
      %772 = vmatprep.subr.bf16.mxu0 0
      %773 = vmatpush1.bf16.msra.mxu0 0
      %774 = vmatprep.subr.bf16.mxu0 0
      %775 = vmatpush1.bf16.msra.mxu0 0
      %776 = vmatprep.subr.bf16.mxu0 0
      %777 = vmatpush1.bf16.msra.mxu0 0
      %778 = vmatprep.subr.bf16.mxu0 0
      %779 = vmatpush1.bf16.msra.mxu0 0
      %780 = vmatprep.subr.bf16.mxu0 0
      %781 = vmatpush1.bf16.msra.mxu0 0
      %782 = vmatprep.subr.bf16.mxu0 0
      %783 = vmatpush1.bf16.msra.mxu0 0
      %784 = vmatprep.subr.bf16.mxu0 0
      %785 = vmatpush1.bf16.msra.mxu0 0
      %786 = vmatprep.subr.bf16.mxu0 0
      %787 = vmatpush1.bf16.msra.mxu0 0
      %788 = vmatprep.mubr.bf16.mxu0 0
      %789 = vmatmul.mubr.bf16.gmra.mrb[0].mxu0 %v717
      %v790 = vpop.f32.mrb[0].mxu0
      %v791 = vadd.f32 %v575, %v790
      %v792 = vpop.f32.mrb[0].mxu0
      %v793 = vpop.f32.mrb[0].mxu0
      %v794 = vadd.f32 %v578, %v793
      %v795 = vpop.f32.mrb[0].mxu0
      %796 = vmatprep.mubr.bf16.mxu0 0
      %797 = vmatmul.mubr.bf16.gmra.mrb[0].mxu0 %v719
      %v798 = vpop.f32.mrb[0].mxu0
      %v799 = vadd.f32 %v583, %v798
      %v800 = vpop.f32.mrb[0].mxu0
      %v801 = vpop.f32.mrb[0].mxu0
      %v802 = vadd.f32 %v586, %v801
      %v803 = vpop.f32.mrb[0].mxu0
      %804 = vmatprep.mubr.bf16.mxu0 0
      %805 = vmatmul.mubr.bf16.gmra.mrb[0].mxu0 %v721
      %v806 = vpop.f32.mrb[0].mxu0
      %v807 = vadd.f32 %v591, %v806
      %v808 = vpop.f32.mrb[0].mxu0
      %v809 = vpop.f32.mrb[0].mxu0
      %v810 = vadd.f32 %v594, %v809
      %v811 = vpop.f32.mrb[0].mxu0
      %812 = vmatprep.mubr.bf16.mxu0 0
      %813 = vmatmul.mubr.bf16.gmra.mrb[0].mxu0 %v723
      %v814 = vpop.f32.mrb[0].mxu0
      %v815 = vadd.f32 %v599, %v814
      %v816 = vpop.f32.mrb[0].mxu0
      %v817 = vpop.f32.mrb[0].mxu0
      %v818 = vadd.f32 %v602, %v817
      %v819 = vpop.f32.mrb[0].mxu0
      %820 = vmatprep.mubr.bf16.mxu0 0
      %821 = vmatmul.mubr.bf16.gmra.mrb[0].mxu0 %v725
      %v822 = vpop.f32.mrb[0].mxu0
      %v823 = vadd.f32 %v607, %v822
      %v824 = vpop.f32.mrb[0].mxu0
      %v825 = vpop.f32.mrb[0].mxu0
      %v826 = vadd.f32 %v610, %v825
      %v827 = vpop.f32.mrb[0].mxu0
      %828 = vmatprep.mubr.bf16.mxu0 0
      %829 = vmatmul.mubr.bf16.gmra.mrb[0].mxu0 %v727
      %v830 = vpop.f32.mrb[0].mxu0
      %v831 = vadd.f32 %v615, %v830
      %v832 = vpop.f32.mrb[0].mxu0
      %v833 = vpop.f32.mrb[0].mxu0
      %v834 = vadd.f32 %v618, %v833
      %v835 = vpop.f32.mrb[0].mxu0
      %836 = vmatprep.mubr.bf16.mxu0 0
      %837 = vmatmul.mubr.bf16.gmra.mrb[0].mxu0 %v729
      %v838 = vpop.f32.mrb[0].mxu0
      %v839 = vadd.f32 %v623, %v838
      %v840 = vpop.f32.mrb[0].mxu0
      %v841 = vpop.f32.mrb[0].mxu0
      %v842 = vadd.f32 %v626, %v841
      %v843 = vpop.f32.mrb[0].mxu0
      %844 = vmatprep.mubr.bf16.mxu0 0
      %845 = vmatmul.mubr.bf16.gmra.mrb[0].mxu0 %v731
      %v846 = vpop.f32.mrb[0].mxu0
      %v847 = vadd.f32 %v631, %v846
      %v848 = vpop.f32.mrb[0].mxu0
      %v849 = vpop.f32.mrb[0].mxu0
      %v850 = vadd.f32 %v634, %v849
      %v851 = vpop.f32.mrb[0].mxu0
      %852 = vmatprep.mubr.bf16.mxu0 0
      %853 = vmatmul.mubr.bf16.gmra.mrb[0].mxu0 %v733
      %v854 = vpop.f32.mrb[0].mxu0
      %v855 = vadd.f32 %v639, %v854
      %v856 = vpop.f32.mrb[0].mxu0
      %v857 = vpop.f32.mrb[0].mxu0
      %v858 = vadd.f32 %v642, %v857
      %v859 = vpop.f32.mrb[0].mxu0
      %860 = vmatprep.mubr.bf16.mxu0 0
      %861 = vmatmul.mubr.bf16.gmra.mrb[0].mxu0 %v735
      %v862 = vpop.f32.mrb[0].mxu0
      %v863 = vadd.f32 %v647, %v862
      %v864 = vpop.f32.mrb[0].mxu0
      %v865 = vpop.f32.mrb[0].mxu0
      %v866 = vadd.f32 %v650, %v865
      %v867 = vpop.f32.mrb[0].mxu0
      %868 = vmatprep.mubr.bf16.mxu0 0
      %869 = vmatmul.mubr.bf16.gmra.mrb[0].mxu0 %v737
      %v870 = vpop.f32.mrb[0].mxu0
      %v871 = vadd.f32 %v655, %v870
      %v872 = vpop.f32.mrb[0].mxu0
      %v873 = vpop.f32.mrb[0].mxu0
      %v874 = vadd.f32 %v658, %v873
      %v875 = vpop.f32.mrb[0].mxu0
      %876 = vmatprep.mubr.bf16.mxu0 0
      %877 = vmatmul.mubr.bf16.gmra.mrb[0].mxu0 %v739
      %v878 = vpop.f32.mrb[0].mxu0
      %v879 = vadd.f32 %v663, %v878
      %v880 = vpop.f32.mrb[0].mxu0
      %v881 = vpop.f32.mrb[0].mxu0
      %v882 = vadd.f32 %v666, %v881
      %v883 = vpop.f32.mrb[0].mxu0
      %884 = vmatprep.mubr.bf16.mxu0 0
      %885 = vmatmul.mubr.bf16.gmra.mrb[0].mxu0 %v741
      %v886 = vpop.f32.mrb[0].mxu0
      %v887 = vadd.f32 %v671, %v886
      %v888 = vpop.f32.mrb[0].mxu0
      %v889 = vpop.f32.mrb[0].mxu0
      %v890 = vadd.f32 %v674, %v889
      %v891 = vpop.f32.mrb[0].mxu0
      %892 = vmatprep.mubr.bf16.mxu0 0
      %893 = vmatmul.mubr.bf16.gmra.mrb[0].mxu0 %v743
      %v894 = vpop.f32.mrb[0].mxu0
      %v895 = vadd.f32 %v679, %v894
      %v896 = vpop.f32.mrb[0].mxu0
      %v897 = vpop.f32.mrb[0].mxu0
      %v898 = vadd.f32 %v682, %v897
      %v899 = vpop.f32.mrb[0].mxu0
      %900 = vmatprep.mubr.bf16.mxu0 0
      %901 = vmatmul.mubr.bf16.gmra.mrb[0].mxu0 %v745
      %v902 = vpop.f32.mrb[0].mxu0
      %v903 = vadd.f32 %v687, %v902
      %v904 = vpop.f32.mrb[0].mxu0
      %v905 = vpop.f32.mrb[0].mxu0
      %v906 = vadd.f32 %v690, %v905
      %v907 = vpop.f32.mrb[0].mxu0
      %908 = vmatprep.mubr.bf16.mxu0 0
      %909 = vmatmul.mubr.bf16.gmra.mrb[0].mxu0 %v747
      %v910 = vpop.f32.mrb[0].mxu0
      %v911 = vadd.f32 %v695, %v910
      %v912 = vpop.f32.mrb[0].mxu0
      %v913 = vpop.f32.mrb[0].mxu0
      %v914 = vadd.f32 %v698, %v913
      %v915 = vpop.f32.mrb[0].mxu0
      %916 = vmatprep.mubr.bf16.mxu0 0
      %917 = vmatmul.mubr.bf16.gmra.mrb[0].mxu0 %v749
      %v918 = vpop.f32.mrb[0].mxu0
      %v919 = vadd.f32 %v703, %v918
      %v920 = vpop.f32.mrb[0].mxu0
      %v921 = vpop.f32.mrb[0].mxu0
      %v922 = vadd.f32 %v706, %v921
      %v923 = vpop.f32.mrb[0].mxu0
      %924 = vmatprep.mubr.bf16.mxu0 0
      %925 = vmatmul.mubr.bf16.gmra.mrb[0].mxu0 %v751
      %v926 = vpop.f32.mrb[0].mxu0
      %v927 = vadd.f32 %v711, %v926
      %v928 = vpop.f32.mrb[0].mxu0
      %v929 = vpop.f32.mrb[0].mxu0
      %v930 = vadd.f32 %v714, %v929
      %v931 = vpop.f32.mrb[0].mxu0
      %932 = vdwg.mxu0
      %v933 = vld [vmem:[%s192] sm:$0xe]
      %s934 = scalar_lea.vmem %s1, 4
      %v935 = vld [vmem:[%s934] sm:$0x3]
      %v937 = vunpack.c.l.b16 %v933
      %v938 = vpack.c.b16 %v277, %v937
      %vm939 = vcmask 1046528
      %v940 = vrot.slane %v938, 1
      %v941 = vrot.slane %v314, 1
      %v942 = vsel %vm939, %v940, %v941
      %v943 = vrot.slane %v315, 1
      %v944 = vsel %vm939, %v941, %v943
      %v945 = vrot.slane %v316, 1
      %v946 = vsel %vm939, %v943, %v945
      %v947 = vrot.slane %v317, 1
      %v948 = vsel %vm939, %v945, %v947
      %v949 = vrot.slane %v318, 1
      %v950 = vsel %vm939, %v947, %v949
      %v951 = vrot.slane %v319, 1
      %v952 = vsel %vm939, %v949, %v951
      %v953 = vrot.slane %v320, 1
      %v954 = vsel %vm939, %v951, %v953
      %v955 = vrot.slane %v321, 1
      %v956 = vsel %vm939, %v953, %v955
      %v957 = vrot.slane %v322, 1
      %v958 = vsel %vm939, %v955, %v957
      %v959 = vrot.slane %v323, 1
      %v960 = vsel %vm939, %v957, %v959
      %v961 = vrot.slane %v324, 1
      %v962 = vsel %vm939, %v959, %v961
      %v963 = vrot.slane %v325, 1
      %v964 = vsel %vm939, %v961, %v963
      %v965 = vrot.slane %v326, 1
      %v966 = vsel %vm939, %v963, %v965
      %v967 = vrot.slane %v327, 1
      %v968 = vsel %vm939, %v965, %v967
      %v969 = vrot.slane %v328, 1
      %v970 = vsel %vm939, %v967, %v969
      %v971 = vrot.slane %v329, 1
      %v972 = vsel %vm939, %v969, %v971
      %v973 = vrot.slane %v330, 1
      %v974 = vsel %vm939, %v971, %v973
      %v975 = vrot.slane %v331, 1
      %v976 = vsel %vm939, %v973, %v975
      %v978 = vsel %vm481, %v942, 0
      %v981 = vsel %vm481, %v944, 0
      %v984 = vsel %vm481, %v946, 0
      %v987 = vsel %vm481, %v948, 0
      %v990 = vsel %vm481, %v950, 0
      %v993 = vsel %vm481, %v952, 0
      %v996 = vsel %vm481, %v954, 0
      %v999 = vsel %vm481, %v956, 0
      %v1002 = vsel %vm481, %v958, 0
      %v1005 = vsel %vm481, %v960, 0
      %v1008 = vsel %vm481, %v962, 0
      %v1011 = vsel %vm481, %v964, 0
      %v1014 = vsel %vm481, %v966, 0
      %v1017 = vsel %vm481, %v968, 0
      %v1020 = vsel %vm481, %v970, 0
      %v1023 = vsel %vm481, %v972, 0
      %v1026 = vsel %vm481, %v974, 0
      %v1029 = vsel %vm481, %v976, 0
      %v1032 = vsel %vm536, %v935, 0
      %1034 = vmatprep.subr.bf16.mxu0 0
      %1035 = vmatpush1.bf16.msra.mxu0 %v1032
      %1036 = vmatprep.subr.bf16.mxu0 0
      %1037 = vmatpush1.bf16.msra.mxu0 0
      %1038 = vmatprep.subr.bf16.mxu0 0
      %1039 = vmatpush1.bf16.msra.mxu0 0
      %1040 = vmatprep.subr.bf16.mxu0 0
      %1041 = vmatpush1.bf16.msra.mxu0 0
      %1042 = vmatprep.subr.bf16.mxu0 0
      %1043 = vmatpush1.bf16.msra.mxu0 0
      %1044 = vmatprep.subr.bf16.mxu0 0
      %1045 = vmatpush1.bf16.msra.mxu0 0
      %1046 = vmatprep.subr.bf16.mxu0 0
      %1047 = vmatpush1.bf16.msra.mxu0 0
      %1048 = vmatprep.subr.bf16.mxu0 0
      %1049 = vmatpush1.bf16.msra.mxu0 0
      %1050 = vmatprep.subr.bf16.mxu0 0
      %1051 = vmatpush1.bf16.msra.mxu0 0
      %1052 = vmatprep.subr.bf16.mxu0 0
      %1053 = vmatpush1.bf16.msra.mxu0 0
      %1054 = vmatprep.subr.bf16.mxu0 0
      %1055 = vmatpush1.bf16.msra.mxu0 0
      %1056 = vmatprep.subr.bf16.mxu0 0
      %1057 = vmatpush1.bf16.msra.mxu0 0
      %1058 = vmatprep.subr.bf16.mxu0 0
      %1059 = vmatpush1.bf16.msra.mxu0 0
      %1060 = vmatprep.subr.bf16.mxu0 0
      %1061 = vmatpush1.bf16.msra.mxu0 0
      %1062 = vmatprep.subr.bf16.mxu0 0
      %1063 = vmatpush1.bf16.msra.mxu0 0
      %1064 = vmatprep.subr.bf16.mxu0 0
      %1065 = vmatpush1.bf16.msra.mxu0 0
      %1066 = vmatprep.mubr.bf16.mxu0 0
      %1067 = vmatmul.mubr.bf16.gmra.mrb[0].mxu0 %v978
      %v1068 = vpop.f32.mrb[0].mxu0
      %v1069 = vadd.f32 0.0, %v1068
      %v1070 = vpop.f32.mrb[0].mxu0
      %v1071 = vpop.f32.mrb[0].mxu0
      %v1072 = vadd.f32 0.0, %v1071
      %v1073 = vpop.f32.mrb[0].mxu0
      %1074 = vmatprep.mubr.bf16.mxu0 0
      %1075 = vmatmul.mubr.bf16.gmra.mrb[0].mxu0 %v981
      %v1076 = vpop.f32.mrb[0].mxu0
      %v1077 = vadd.f32 0.0, %v1076
      %v1078 = vpop.f32.mrb[0].mxu0
      %v1079 = vpop.f32.mrb[0].mxu0
      %v1080 = vadd.f32 0.0, %v1079
      %v1081 = vpop.f32.mrb[0].mxu0
      %1082 = vmatprep.mubr.bf16.mxu0 0
      %1083 = vmatmul.mubr.bf16.gmra.mrb[0].mxu0 %v984
      %v1084 = vpop.f32.mrb[0].mxu0
      %v1085 = vadd.f32 0.0, %v1084
      %v1086 = vpop.f32.mrb[0].mxu0
      %v1087 = vpop.f32.mrb[0].mxu0
      %v1088 = vadd.f32 0.0, %v1087
      %v1089 = vpop.f32.mrb[0].mxu0
      %1090 = vmatprep.mubr.bf16.mxu0 0
      %1091 = vmatmul.mubr.bf16.gmra.mrb[0].mxu0 %v987
      %v1092 = vpop.f32.mrb[0].mxu0
      %v1093 = vadd.f32 0.0, %v1092
      %v1094 = vpop.f32.mrb[0].mxu0
      %v1095 = vpop.f32.mrb[0].mxu0
      %v1096 = vadd.f32 0.0, %v1095
      %v1097 = vpop.f32.mrb[0].mxu0
      %1098 = vmatprep.mubr.bf16.mxu0 0
      %1099 = vmatmul.mubr.bf16.gmra.mrb[0].mxu0 %v990
      %v1100 = vpop.f32.mrb[0].mxu0
      %v1101 = vadd.f32 0.0, %v1100
      %v1102 = vpop.f32.mrb[0].mxu0
      %v1103 = vpop.f32.mrb[0].mxu0
      %v1104 = vadd.f32 0.0, %v1103
      %v1105 = vpop.f32.mrb[0].mxu0
      %1106 = vmatprep.mubr.bf16.mxu0 0
      %1107 = vmatmul.mubr.bf16.gmra.mrb[0].mxu0 %v993
      %v1108 = vpop.f32.mrb[0].mxu0
      %v1109 = vadd.f32 0.0, %v1108
      %v1110 = vpop.f32.mrb[0].mxu0
      %v1111 = vpop.f32.mrb[0].mxu0
      %v1112 = vadd.f32 0.0, %v1111
      %v1113 = vpop.f32.mrb[0].mxu0
      %1114 = vmatprep.mubr.bf16.mxu0 0
      %1115 = vmatmul.mubr.bf16.gmra.mrb[0].mxu0 %v996
      %v1116 = vpop.f32.mrb[0].mxu0
      %v1117 = vadd.f32 0.0, %v1116
      %v1118 = vpop.f32.mrb[0].mxu0
      %v1119 = vpop.f32.mrb[0].mxu0
      %v1120 = vadd.f32 0.0, %v1119
      %v1121 = vpop.f32.mrb[0].mxu0
      %1122 = vmatprep.mubr.bf16.mxu0 0
      %1123 = vmatmul.mubr.bf16.gmra.mrb[0].mxu0 %v999
      %v1124 = vpop.f32.mrb[0].mxu0
      %v1125 = vadd.f32 0.0, %v1124
      %v1126 = vpop.f32.mrb[0].mxu0
      %v1127 = vpop.f32.mrb[0].mxu0
      %v1128 = vadd.f32 0.0, %v1127
      %v1129 = vpop.f32.mrb[0].mxu0
      %1130 = vmatprep.mubr.bf16.mxu0 0
      %1131 = vmatmul.mubr.bf16.gmra.mrb[0].mxu0 %v1002
      %v1132 = vpop.f32.mrb[0].mxu0
      %v1133 = vadd.f32 0.0, %v1132
      %v1134 = vpop.f32.mrb[0].mxu0
      %v1135 = vpop.f32.mrb[0].mxu0
      %v1136 = vadd.f32 0.0, %v1135
      %v1137 = vpop.f32.mrb[0].mxu0
      %1138 = vmatprep.mubr.bf16.mxu0 0
      %1139 = vmatmul.mubr.bf16.gmra.mrb[0].mxu0 %v1005
      %v1140 = vpop.f32.mrb[0].mxu0
      %v1141 = vadd.f32 0.0, %v1140
      %v1142 = vpop.f32.mrb[0].mxu0
      %v1143 = vpop.f32.mrb[0].mxu0
      %v1144 = vadd.f32 0.0, %v1143
      %v1145 = vpop.f32.mrb[0].mxu0
      %1146 = vmatprep.mubr.bf16.mxu0 0
      %1147 = vmatmul.mubr.bf16.gmra.mrb[0].mxu0 %v1008
      %v1148 = vpop.f32.mrb[0].mxu0
      %v1149 = vadd.f32 0.0, %v1148
      %v1150 = vpop.f32.mrb[0].mxu0
      %v1151 = vpop.f32.mrb[0].mxu0
      %v1152 = vadd.f32 0.0, %v1151
      %v1153 = vpop.f32.mrb[0].mxu0
      %1154 = vmatprep.mubr.bf16.mxu0 0
      %1155 = vmatmul.mubr.bf16.gmra.mrb[0].mxu0 %v1011
      %v1156 = vpop.f32.mrb[0].mxu0
      %v1157 = vadd.f32 0.0, %v1156
      %v1158 = vpop.f32.mrb[0].mxu0
      %v1159 = vpop.f32.mrb[0].mxu0
      %v1160 = vadd.f32 0.0, %v1159
      %v1161 = vpop.f32.mrb[0].mxu0
      %1162 = vmatprep.mubr.bf16.mxu0 0
      %1163 = vmatmul.mubr.bf16.gmra.mrb[0].mxu0 %v1014
      %v1164 = vpop.f32.mrb[0].mxu0
      %v1165 = vadd.f32 0.0, %v1164
      %v1166 = vpop.f32.mrb[0].mxu0
      %v1167 = vpop.f32.mrb[0].mxu0
      %v1168 = vadd.f32 0.0, %v1167
      %v1169 = vpop.f32.mrb[0].mxu0
      %1170 = vmatprep.mubr.bf16.mxu0 0
      %1171 = vmatmul.mubr.bf16.gmra.mrb[0].mxu0 %v1017
      %v1172 = vpop.f32.mrb[0].mxu0
      %v1173 = vadd.f32 0.0, %v1172
      %v1174 = vpop.f32.mrb[0].mxu0
      %v1175 = vpop.f32.mrb[0].mxu0
      %v1176 = vadd.f32 0.0, %v1175
      %v1177 = vpop.f32.mrb[0].mxu0
      %1178 = vmatprep.mubr.bf16.mxu0 0
      %1179 = vmatmul.mubr.bf16.gmra.mrb[0].mxu0 %v1020
      %v1180 = vpop.f32.mrb[0].mxu0
      %v1181 = vadd.f32 0.0, %v1180
      %v1182 = vpop.f32.mrb[0].mxu0
      %v1183 = vpop.f32.mrb[0].mxu0
      %v1184 = vadd.f32 0.0, %v1183
      %v1185 = vpop.f32.mrb[0].mxu0
      %1186 = vmatprep.mubr.bf16.mxu0 0
      %1187 = vmatmul.mubr.bf16.gmra.mrb[0].mxu0 %v1023
      %v1188 = vpop.f32.mrb[0].mxu0
      %v1189 = vadd.f32 0.0, %v1188
      %v1190 = vpop.f32.mrb[0].mxu0
      %v1191 = vpop.f32.mrb[0].mxu0
      %v1192 = vadd.f32 0.0, %v1191
      %v1193 = vpop.f32.mrb[0].mxu0
      %1194 = vmatprep.mubr.bf16.mxu0 0
      %1195 = vmatmul.mubr.bf16.gmra.mrb[0].mxu0 %v1026
      %v1196 = vpop.f32.mrb[0].mxu0
      %v1197 = vadd.f32 0.0, %v1196
      %v1198 = vpop.f32.mrb[0].mxu0
      %v1199 = vpop.f32.mrb[0].mxu0
      %v1200 = vadd.f32 0.0, %v1199
      %v1201 = vpop.f32.mrb[0].mxu0
      %1202 = vmatprep.mubr.bf16.mxu0 0
      %1203 = vmatmul.mubr.bf16.gmra.mrb[0].mxu0 %v1029
      %v1204 = vpop.f32.mrb[0].mxu0
      %v1205 = vadd.f32 0.0, %v1204
      %v1206 = vpop.f32.mrb[0].mxu0
      %v1207 = vpop.f32.mrb[0].mxu0
      %v1208 = vadd.f32 0.0, %v1207
      %v1209 = vpop.f32.mrb[0].mxu0
      %1210 = vdwg.mxu0
      %v1211 = vadd.f32 %v791, %v1069
      %v1212 = vadd.f32 %v794, %v1072
      %v1213 = vadd.f32 %v799, %v1077
      %v1214 = vadd.f32 %v802, %v1080
      %v1215 = vadd.f32 %v807, %v1085
      %v1216 = vadd.f32 %v810, %v1088
      %v1217 = vadd.f32 %v815, %v1093
      %v1218 = vadd.f32 %v818, %v1096
      %v1219 = vadd.f32 %v823, %v1101
      %v1220 = vadd.f32 %v826, %v1104
      %v1221 = vadd.f32 %v831, %v1109
      %v1222 = vadd.f32 %v834, %v1112
      %v1223 = vadd.f32 %v839, %v1117
      %v1224 = vadd.f32 %v842, %v1120
      %v1225 = vadd.f32 %v847, %v1125
      %v1226 = vadd.f32 %v850, %v1128
      %v1227 = vadd.f32 %v855, %v1133
      %v1228 = vadd.f32 %v858, %v1136
      %v1229 = vadd.f32 %v863, %v1141
      %v1230 = vadd.f32 %v866, %v1144
      %v1231 = vadd.f32 %v871, %v1149
      %v1232 = vadd.f32 %v874, %v1152
      %v1233 = vadd.f32 %v879, %v1157
      %v1234 = vadd.f32 %v882, %v1160
      %v1235 = vadd.f32 %v887, %v1165
      %v1236 = vadd.f32 %v890, %v1168
      %v1237 = vadd.f32 %v895, %v1173
      %v1238 = vadd.f32 %v898, %v1176
      %v1239 = vadd.f32 %v903, %v1181
      %v1240 = vadd.f32 %v906, %v1184
      %v1241 = vadd.f32 %v911, %v1189
      %v1242 = vadd.f32 %v914, %v1192
      %v1243 = vadd.f32 %v919, %v1197
      %v1244 = vadd.f32 %v922, %v1200
      %v1245 = vadd.f32 %v927, %v1205
      %v1246 = vadd.f32 %v930, %v1208
      %v1247 = vld [vmem:[%s192 + $0x8] sm:$0xe]
      %v1248 = vld [vmem:[%s192 + $0xc] sm:$0xf]
      %v1249 = vld [vmem:[%s192 + $0x10] sm:$0xf]
      %v1250 = vld [vmem:[%s192 + $0x14] sm:$0xf]
      %v1251 = vld [vmem:[%s192 + $0x18] sm:$0xf]
      %v1252 = vld [vmem:[%s192 + $0x1c] sm:$0xf]
      %v1253 = vld [vmem:[%s192 + $0x20] sm:$0xf]
      %v1254 = vld [vmem:[%s192 + $0x24] sm:$0xf]
      %v1255 = vld [vmem:[%s192 + $0x28] sm:$0xf]
      %v1256 = vld [vmem:[%s192 + $0x2c] sm:$0xf]
      %v1257 = vld [vmem:[%s192 + $0x30] sm:$0xf]
      %v1258 = vld [vmem:[%s192 + $0x34] sm:$0xf]
      %v1259 = vld [vmem:[%s192 + $0x38] sm:$0xf]
      %v1260 = vld [vmem:[%s192 + $0x3c] sm:$0xf]
      %v1261 = vld [vmem:[%s192 + $0x40] sm:$0xf]
      %v1262 = vld [vmem:[%s192 + $0x44] sm:$0xf]
      %v1263 = vld [vmem:[%s192 + $0x48] sm:$0xf]
      %v1264 = vld [vmem:[%s192 + $0x4c] sm:$0xf]
      %v1265 = vld [vmem:[%s192 + $0x50] sm:$0xf]
      %v1266 = vld [vmem:[%s192 + $0x54] sm:$0xf]
      %v1267 = vld [vmem:[%s192 + $0x58] sm:$0xf]
      %v1268 = vld [vmem:[%s192 + $0x5c] sm:$0xf]
      %v1269 = vld [vmem:[%s192 + $0x60] sm:$0xf]
      %v1270 = vld [vmem:[%s192 + $0x64] sm:$0xf]
      %v1271 = vld [vmem:[%s192 + $0x68] sm:$0xf]
      %v1272 = vld [vmem:[%s192 + $0x6c] sm:$0xf]
      %v1273 = vld [vmem:[%s192 + $0x70] sm:$0xf]
      %v1274 = vld [vmem:[%s192 + $0x74] sm:$0xf]
      %v1275 = vld [vmem:[%s192 + $0x78] sm:$0xf]
      %v1276 = vld [vmem:[%s192 + $0x7c] sm:$0xf]
      %v1277 = vld [vmem:[%s192 + $0x80] sm:$0xf]
      %v1278 = vld [vmem:[%s192 + $0x84] sm:$0xf]
      %v1279 = vld [vmem:[%s192 + $0x88] sm:$0xf]
      %v1280 = vld [vmem:[%s192 + $0x8c] sm:$0xf]
      %v1281 = vld [vmem:[%s192 + $0x90] sm:$0xf]
      %v1282 = vld [vmem:[%s192 + $0x94] sm:$0xf]
      %v1283 = vld [vmem:[%s192 + $0x98] sm:$0x1]
      %s1284 = scalar_lea.vmem %s1, 6
      %v1285 = vld [vmem:[%s1284] sm:$0x3]
      %v1323 = vunpack.c.l.b16 %v1247
      %v1324 = vunpack.c.l.b16 %v1248
      %v1325 = vunpack.c.l.b16 %v1249
      %v1326 = vunpack.c.l.b16 %v1250
      %v1327 = vunpack.c.l.b16 %v1251
      %v1328 = vunpack.c.l.b16 %v1252
      %v1329 = vunpack.c.l.b16 %v1253
      %v1330 = vunpack.c.l.b16 %v1254
      %v1331 = vunpack.c.l.b16 %v1255
      %v1332 = vunpack.c.l.b16 %v1256
      %v1333 = vunpack.c.l.b16 %v1257
      %v1334 = vunpack.c.l.b16 %v1258
      %v1335 = vunpack.c.l.b16 %v1259
      %v1336 = vunpack.c.l.b16 %v1260
      %v1337 = vunpack.c.l.b16 %v1261
      %v1338 = vunpack.c.l.b16 %v1262
      %v1339 = vunpack.c.l.b16 %v1263
      %v1340 = vunpack.c.l.b16 %v1264
      %v1341 = vunpack.c.l.b16 %v1265
      %v1342 = vunpack.c.l.b16 %v1266
      %v1343 = vunpack.c.l.b16 %v1267
      %v1344 = vunpack.c.l.b16 %v1268
      %v1345 = vunpack.c.l.b16 %v1269
      %v1346 = vunpack.c.l.b16 %v1270
      %v1347 = vunpack.c.l.b16 %v1271
      %v1348 = vunpack.c.l.b16 %v1272
      %v1349 = vunpack.c.l.b16 %v1273
      %v1350 = vunpack.c.l.b16 %v1274
      %v1351 = vunpack.c.l.b16 %v1275
      %v1352 = vunpack.c.l.b16 %v1276
      %v1353 = vunpack.c.l.b16 %v1277
      %v1354 = vunpack.c.l.b16 %v1278
      %v1355 = vunpack.c.l.b16 %v1279
      %v1356 = vunpack.c.l.b16 %v1280
      %v1357 = vunpack.c.l.b16 %v1281
      %v1358 = vunpack.c.l.b16 %v1282
      %v1359 = vunpack.c.l.b16 %v1283
      %v1360 = vpack.c.b16 %v1324, %v1323
      %v1361 = vpack.c.b16 %v1326, %v1325
      %v1362 = vpack.c.b16 %v1328, %v1327
      %v1363 = vpack.c.b16 %v1330, %v1329
      %v1364 = vpack.c.b16 %v1332, %v1331
      %v1365 = vpack.c.b16 %v1334, %v1333
      %v1366 = vpack.c.b16 %v1336, %v1335
      %v1367 = vpack.c.b16 %v1338, %v1337
      %v1368 = vpack.c.b16 %v1340, %v1339
      %v1369 = vpack.c.b16 %v1342, %v1341
      %v1370 = vpack.c.b16 %v1344, %v1343
      %v1371 = vpack.c.b16 %v1346, %v1345
      %v1372 = vpack.c.b16 %v1348, %v1347
      %v1373 = vpack.c.b16 %v1350, %v1349
      %v1374 = vpack.c.b16 %v1352, %v1351
      %v1375 = vpack.c.b16 %v1354, %v1353
      %v1376 = vpack.c.b16 %v1356, %v1355
      %v1377 = vpack.c.b16 %v1358, %v1357
      %v1378 = vpack.c.b16 %v1359, %v1359
      %v1379 = vrot.slane %v1360, 1
      %v1380 = vrot.slane %v1361, 1
      %v1381 = vsel %vm939, %v1379, %v1380
      %v1382 = vrot.slane %v1362, 1
      %v1383 = vsel %vm939, %v1380, %v1382
      %v1384 = vrot.slane %v1363, 1
      %v1385 = vsel %vm939, %v1382, %v1384
      %v1386 = vrot.slane %v1364, 1
      %v1387 = vsel %vm939, %v1384, %v1386
      %v1388 = vrot.slane %v1365, 1
      %v1389 = vsel %vm939, %v1386, %v1388
      %v1390 = vrot.slane %v1366, 1
      %v1391 = vsel %vm939, %v1388, %v1390
      %v1392 = vrot.slane %v1367, 1
      %v1393 = vsel %vm939, %v1390, %v1392
      %v1394 = vrot.slane %v1368, 1
      %v1395 = vsel %vm939, %v1392, %v1394
      %v1396 = vrot.slane %v1369, 1
      %v1397 = vsel %vm939, %v1394, %v1396
      %v1398 = vrot.slane %v1370, 1
      %v1399 = vsel %vm939, %v1396, %v1398
      %v1400 = vrot.slane %v1371, 1
      %v1401 = vsel %vm939, %v1398, %v1400
      %v1402 = vrot.slane %v1372, 1
      %v1403 = vsel %vm939, %v1400, %v1402
      %v1404 = vrot.slane %v1373, 1
      %v1405 = vsel %vm939, %v1402, %v1404
      %v1406 = vrot.slane %v1374, 1
      %v1407 = vsel %vm939, %v1404, %v1406
      %v1408 = vrot.slane %v1375, 1
      %v1409 = vsel %vm939, %v1406, %v1408
      %v1410 = vrot.slane %v1376, 1
      %v1411 = vsel %vm939, %v1408, %v1410
      %v1412 = vrot.slane %v1377, 1
      %v1413 = vsel %vm939, %v1410, %v1412
      %v1414 = vrot.slane %v1378, 1
      %v1415 = vsel %vm939, %v1412, %v1414
      %v1417 = vsel %vm481, %v1381, 0
      %v1420 = vsel %vm481, %v1383, 0
      %v1423 = vsel %vm481, %v1385, 0
      %v1426 = vsel %vm481, %v1387, 0
      %v1429 = vsel %vm481, %v1389, 0
      %v1432 = vsel %vm481, %v1391, 0
      %v1435 = vsel %vm481, %v1393, 0
      %v1438 = vsel %vm481, %v1395, 0
      %v1441 = vsel %vm481, %v1397, 0
      %v1444 = vsel %vm481, %v1399, 0
      %v1447 = vsel %vm481, %v1401, 0
      %v1450 = vsel %vm481, %v1403, 0
      %v1453 = vsel %vm481, %v1405, 0
      %v1456 = vsel %vm481, %v1407, 0
      %v1459 = vsel %vm481, %v1409, 0
      %v1462 = vsel %vm481, %v1411, 0
      %v1465 = vsel %vm481, %v1413, 0
      %v1468 = vsel %vm481, %v1415, 0
      %v1471 = vsel %vm536, %v1285, 0
      %1473 = vmatprep.subr.bf16.mxu0 0
      %1474 = vmatpush1.bf16.msra.mxu0 %v1471
      %1475 = vmatprep.subr.bf16.mxu0 0
      %1476 = vmatpush1.bf16.msra.mxu0 0
      %1477 = vmatprep.subr.bf16.mxu0 0
      %1478 = vmatpush1.bf16.msra.mxu0 0
      %1479 = vmatprep.subr.bf16.mxu0 0
      %1480 = vmatpush1.bf16.msra.mxu0 0
      %1481 = vmatprep.subr.bf16.mxu0 0
      %1482 = vmatpush1.bf16.msra.mxu0 0
      %1483 = vmatprep.subr.bf16.mxu0 0
      %1484 = vmatpush1.bf16.msra.mxu0 0
      %1485 = vmatprep.subr.bf16.mxu0 0
      %1486 = vmatpush1.bf16.msra.mxu0 0
      %1487 = vmatprep.subr.bf16.mxu0 0
      %1488 = vmatpush1.bf16.msra.mxu0 0
      %1489 = vmatprep.subr.bf16.mxu0 0
      %1490 = vmatpush1.bf16.msra.mxu0 0
      %1491 = vmatprep.subr.bf16.mxu0 0
      %1492 = vmatpush1.bf16.msra.mxu0 0
      %1493 = vmatprep.subr.bf16.mxu0 0
      %1494 = vmatpush1.bf16.msra.mxu0 0
      %1495 = vmatprep.subr.bf16.mxu0 0
      %1496 = vmatpush1.bf16.msra.mxu0 0
      %1497 = vmatprep.subr.bf16.mxu0 0
      %1498 = vmatpush1.bf16.msra.mxu0 0
      %1499 = vmatprep.subr.bf16.mxu0 0
      %1500 = vmatpush1.bf16.msra.mxu0 0
      %1501 = vmatprep.subr.bf16.mxu0 0
      %1502 = vmatpush1.bf16.msra.mxu0 0
      %1503 = vmatprep.subr.bf16.mxu0 0
      %1504 = vmatpush1.bf16.msra.mxu0 0
      %1505 = vmatprep.mubr.bf16.mxu0 0
      %1506 = vmatmul.mubr.bf16.gmra.mrb[0].mxu0 %v1417
      %v1507 = vpop.f32.mrb[0].mxu0
      %v1508 = vadd.f32 0.0, %v1507
      %v1509 = vpop.f32.mrb[0].mxu0
      %v1510 = vpop.f32.mrb[0].mxu0
      %v1511 = vadd.f32 0.0, %v1510
      %v1512 = vpop.f32.mrb[0].mxu0
      %1513 = vmatprep.mubr.bf16.mxu0 0
      %1514 = vmatmul.mubr.bf16.gmra.mrb[0].mxu0 %v1420
      %v1515 = vpop.f32.mrb[0].mxu0
      %v1516 = vadd.f32 0.0, %v1515
      %v1517 = vpop.f32.mrb[0].mxu0
      %v1518 = vpop.f32.mrb[0].mxu0
      %v1519 = vadd.f32 0.0, %v1518
      %v1520 = vpop.f32.mrb[0].mxu0
      %1521 = vmatprep.mubr.bf16.mxu0 0
      %1522 = vmatmul.mubr.bf16.gmra.mrb[0].mxu0 %v1423
      %v1523 = vpop.f32.mrb[0].mxu0
      %v1524 = vadd.f32 0.0, %v1523
      %v1525 = vpop.f32.mrb[0].mxu0
      %v1526 = vpop.f32.mrb[0].mxu0
      %v1527 = vadd.f32 0.0, %v1526
      %v1528 = vpop.f32.mrb[0].mxu0
      %1529 = vmatprep.mubr.bf16.mxu0 0
      %1530 = vmatmul.mubr.bf16.gmra.mrb[0].mxu0 %v1426
      %v1531 = vpop.f32.mrb[0].mxu0
      %v1532 = vadd.f32 0.0, %v1531
      %v1533 = vpop.f32.mrb[0].mxu0
      %v1534 = vpop.f32.mrb[0].mxu0
      %v1535 = vadd.f32 0.0, %v1534
      %v1536 = vpop.f32.mrb[0].mxu0
      %1537 = vmatprep.mubr.bf16.mxu0 0
      %1538 = vmatmul.mubr.bf16.gmra.mrb[0].mxu0 %v1429
      %v1539 = vpop.f32.mrb[0].mxu0
      %v1540 = vadd.f32 0.0, %v1539
      %v1541 = vpop.f32.mrb[0].mxu0
      %v1542 = vpop.f32.mrb[0].mxu0
      %v1543 = vadd.f32 0.0, %v1542
      %v1544 = vpop.f32.mrb[0].mxu0
      %1545 = vmatprep.mubr.bf16.mxu0 0
      %1546 = vmatmul.mubr.bf16.gmra.mrb[0].mxu0 %v1432
      %v1547 = vpop.f32.mrb[0].mxu0
      %v1548 = vadd.f32 0.0, %v1547
      %v1549 = vpop.f32.mrb[0].mxu0
      %v1550 = vpop.f32.mrb[0].mxu0
      %v1551 = vadd.f32 0.0, %v1550
      %v1552 = vpop.f32.mrb[0].mxu0
      %1553 = vmatprep.mubr.bf16.mxu0 0
      %1554 = vmatmul.mubr.bf16.gmra.mrb[0].mxu0 %v1435
      %v1555 = vpop.f32.mrb[0].mxu0
      %v1556 = vadd.f32 0.0, %v1555
      %v1557 = vpop.f32.mrb[0].mxu0
      %v1558 = vpop.f32.mrb[0].mxu0
      %v1559 = vadd.f32 0.0, %v1558
      %v1560 = vpop.f32.mrb[0].mxu0
      %1561 = vmatprep.mubr.bf16.mxu0 0
      %1562 = vmatmul.mubr.bf16.gmra.mrb[0].mxu0 %v1438
      %v1563 = vpop.f32.mrb[0].mxu0
      %v1564 = vadd.f32 0.0, %v1563
      %v1565 = vpop.f32.mrb[0].mxu0
      %v1566 = vpop.f32.mrb[0].mxu0
      %v1567 = vadd.f32 0.0, %v1566
      %v1568 = vpop.f32.mrb[0].mxu0
      %1569 = vmatprep.mubr.bf16.mxu0 0
      %1570 = vmatmul.mubr.bf16.gmra.mrb[0].mxu0 %v1441
      %v1571 = vpop.f32.mrb[0].mxu0
      %v1572 = vadd.f32 0.0, %v1571
      %v1573 = vpop.f32.mrb[0].mxu0
      %v1574 = vpop.f32.mrb[0].mxu0
      %v1575 = vadd.f32 0.0, %v1574
      %v1576 = vpop.f32.mrb[0].mxu0
      %1577 = vmatprep.mubr.bf16.mxu0 0
      %1578 = vmatmul.mubr.bf16.gmra.mrb[0].mxu0 %v1444
      %v1579 = vpop.f32.mrb[0].mxu0
      %v1580 = vadd.f32 0.0, %v1579
      %v1581 = vpop.f32.mrb[0].mxu0
      %v1582 = vpop.f32.mrb[0].mxu0
      %v1583 = vadd.f32 0.0, %v1582
      %v1584 = vpop.f32.mrb[0].mxu0
      %1585 = vmatprep.mubr.bf16.mxu0 0
      %1586 = vmatmul.mubr.bf16.gmra.mrb[0].mxu0 %v1447
      %v1587 = vpop.f32.mrb[0].mxu0
      %v1588 = vadd.f32 0.0, %v1587
      %v1589 = vpop.f32.mrb[0].mxu0
      %v1590 = vpop.f32.mrb[0].mxu0
      %v1591 = vadd.f32 0.0, %v1590
      %v1592 = vpop.f32.mrb[0].mxu0
      %1593 = vmatprep.mubr.bf16.mxu0 0
      %1594 = vmatmul.mubr.bf16.gmra.mrb[0].mxu0 %v1450
      %v1595 = vpop.f32.mrb[0].mxu0
      %v1596 = vadd.f32 0.0, %v1595
      %v1597 = vpop.f32.mrb[0].mxu0
      %v1598 = vpop.f32.mrb[0].mxu0
      %v1599 = vadd.f32 0.0, %v1598
      %v1600 = vpop.f32.mrb[0].mxu0
      %1601 = vmatprep.mubr.bf16.mxu0 0
      %1602 = vmatmul.mubr.bf16.gmra.mrb[0].mxu0 %v1453
      %v1603 = vpop.f32.mrb[0].mxu0
      %v1604 = vadd.f32 0.0, %v1603
      %v1605 = vpop.f32.mrb[0].mxu0
      %v1606 = vpop.f32.mrb[0].mxu0
      %v1607 = vadd.f32 0.0, %v1606
      %v1608 = vpop.f32.mrb[0].mxu0
      %1609 = vmatprep.mubr.bf16.mxu0 0
      %1610 = vmatmul.mubr.bf16.gmra.mrb[0].mxu0 %v1456
      %v1611 = vpop.f32.mrb[0].mxu0
      %v1612 = vadd.f32 0.0, %v1611
      %v1613 = vpop.f32.mrb[0].mxu0
      %v1614 = vpop.f32.mrb[0].mxu0
      %v1615 = vadd.f32 0.0, %v1614
      %v1616 = vpop.f32.mrb[0].mxu0
      %1617 = vmatprep.mubr.bf16.mxu0 0
      %1618 = vmatmul.mubr.bf16.gmra.mrb[0].mxu0 %v1459
      %v1619 = vpop.f32.mrb[0].mxu0
      %v1620 = vadd.f32 0.0, %v1619
      %v1621 = vpop.f32.mrb[0].mxu0
      %v1622 = vpop.f32.mrb[0].mxu0
      %v1623 = vadd.f32 0.0, %v1622
      %v1624 = vpop.f32.mrb[0].mxu0
      %1625 = vmatprep.mubr.bf16.mxu0 0
      %1626 = vmatmul.mubr.bf16.gmra.mrb[0].mxu0 %v1462
      %v1627 = vpop.f32.mrb[0].mxu0
      %v1628 = vadd.f32 0.0, %v1627
      %v1629 = vpop.f32.mrb[0].mxu0
      %v1630 = vpop.f32.mrb[0].mxu0
      %v1631 = vadd.f32 0.0, %v1630
      %v1632 = vpop.f32.mrb[0].mxu0
      %1633 = vmatprep.mubr.bf16.mxu0 0
      %1634 = vmatmul.mubr.bf16.gmra.mrb[0].mxu0 %v1465
      %v1635 = vpop.f32.mrb[0].mxu0
      %v1636 = vadd.f32 0.0, %v1635
      %v1637 = vpop.f32.mrb[0].mxu0
      %v1638 = vpop.f32.mrb[0].mxu0
      %v1639 = vadd.f32 0.0, %v1638
      %v1640 = vpop.f32.mrb[0].mxu0
      %1641 = vmatprep.mubr.bf16.mxu0 0
      %1642 = vmatmul.mubr.bf16.gmra.mrb[0].mxu0 %v1468
      %v1643 = vpop.f32.mrb[0].mxu0
      %v1644 = vadd.f32 0.0, %v1643
      %v1645 = vpop.f32.mrb[0].mxu0
      %v1646 = vpop.f32.mrb[0].mxu0
      %v1647 = vadd.f32 0.0, %v1646
      %v1648 = vpop.f32.mrb[0].mxu0
      %1649 = vdwg.mxu0
      %v1650 = vadd.f32 %v1211, %v1508
      %v1651 = vadd.f32 %v1212, %v1511
      %v1652 = vadd.f32 %v1213, %v1516
      %v1653 = vadd.f32 %v1214, %v1519
      %v1654 = vadd.f32 %v1215, %v1524
      %v1655 = vadd.f32 %v1216, %v1527
      %v1656 = vadd.f32 %v1217, %v1532
      %v1657 = vadd.f32 %v1218, %v1535
      %v1658 = vadd.f32 %v1219, %v1540
      %v1659 = vadd.f32 %v1220, %v1543
      %v1660 = vadd.f32 %v1221, %v1548
      %v1661 = vadd.f32 %v1222, %v1551
      %v1662 = vadd.f32 %v1223, %v1556
      %v1663 = vadd.f32 %v1224, %v1559
      %v1664 = vadd.f32 %v1225, %v1564
      %v1665 = vadd.f32 %v1226, %v1567
      %v1666 = vadd.f32 %v1227, %v1572
      %v1667 = vadd.f32 %v1228, %v1575
      %v1668 = vadd.f32 %v1229, %v1580
      %v1669 = vadd.f32 %v1230, %v1583
      %v1670 = vadd.f32 %v1231, %v1588
      %v1671 = vadd.f32 %v1232, %v1591
      %v1672 = vadd.f32 %v1233, %v1596
      %v1673 = vadd.f32 %v1234, %v1599
      %v1674 = vadd.f32 %v1235, %v1604
      %v1675 = vadd.f32 %v1236, %v1607
      %v1676 = vadd.f32 %v1237, %v1612
      %v1677 = vadd.f32 %v1238, %v1615
      %v1678 = vadd.f32 %v1239, %v1620
      %v1679 = vadd.f32 %v1240, %v1623
      %v1680 = vadd.f32 %v1241, %v1628
      %v1681 = vadd.f32 %v1242, %v1631
      %v1682 = vadd.f32 %v1243, %v1636
      %v1683 = vadd.f32 %v1244, %v1639
      %v1684 = vadd.f32 %v1245, %v1644
      %v1685 = vadd.f32 %v1246, %v1647
      %v1686 = vld [vmem:[%s192 + $0x98] sm:$0x3]
      %s1687 = scalar_lea.vmem %s1, 8
      %v1688 = vld [vmem:[%s1687] sm:$0x3]
      %v1690 = vunpack.c.l.b16 %v1686
      %v1691 = vpack.c.b16 %v1690, %v1690
      %vm1692 = vsmask.f32 6400
      %v1694 = vshrl.u32 %v1360, 16
      %v1696 = vrot.slane %v1694, 1
      %v1697 = vshll.u32 %v1360, 16
      %v1699 = vrot.slane %v1697, 2
      %v1700 = vor.u32 %v1696, %v1699
      %v1702 = vshrl.u32 %v1361, 16
      %v1704 = vrot.slane %v1702, 1
      %v1705 = vshll.u32 %v1361, 16
      %v1707 = vrot.slane %v1705, 2
      %v1708 = vor.u32 %v1704, %v1707
      %v1709 = vsel %vm1692, %v1700, %v1708
      %v1711 = vshrl.u32 %v1362, 16
      %v1713 = vrot.slane %v1711, 1
      %v1714 = vshll.u32 %v1362, 16
      %v1716 = vrot.slane %v1714, 2
      %v1717 = vor.u32 %v1713, %v1716
      %v1718 = vsel %vm1692, %v1708, %v1717
      %v1720 = vshrl.u32 %v1363, 16
      %v1722 = vrot.slane %v1720, 1
      %v1723 = vshll.u32 %v1363, 16
      %v1725 = vrot.slane %v1723, 2
      %v1726 = vor.u32 %v1722, %v1725
      %v1727 = vsel %vm1692, %v1717, %v1726
      %v1729 = vshrl.u32 %v1364, 16
      %v1731 = vrot.slane %v1729, 1
      %v1732 = vshll.u32 %v1364, 16
      %v1734 = vrot.slane %v1732, 2
      %v1735 = vor.u32 %v1731, %v1734
      %v1736 = vsel %vm1692, %v1726, %v1735
      %v1738 = vshrl.u32 %v1365, 16
      %v1740 = vrot.slane %v1738, 1
      %v1741 = vshll.u32 %v1365, 16
      %v1743 = vrot.slane %v1741, 2
      %v1744 = vor.u32 %v1740, %v1743
      %v1745 = vsel %vm1692, %v1735, %v1744
      %v1747 = vshrl.u32 %v1366, 16
      %v1749 = vrot.slane %v1747, 1
      %v1750 = vshll.u32 %v1366, 16
      %v1752 = vrot.slane %v1750, 2
      %v1753 = vor.u32 %v1749, %v1752
      %v1754 = vsel %vm1692, %v1744, %v1753
      %v1756 = vshrl.u32 %v1367, 16
      %v1758 = vrot.slane %v1756, 1
      %v1759 = vshll.u32 %v1367, 16
      %v1761 = vrot.slane %v1759, 2
      %v1762 = vor.u32 %v1758, %v1761
      %v1763 = vsel %vm1692, %v1753, %v1762
      %v1765 = vshrl.u32 %v1368, 16
      %v1767 = vrot.slane %v1765, 1
      %v1768 = vshll.u32 %v1368, 16
      %v1770 = vrot.slane %v1768, 2
      %v1771 = vor.u32 %v1767, %v1770
      %v1772 = vsel %vm1692, %v1762, %v1771
      %v1774 = vshrl.u32 %v1369, 16
      %v1776 = vrot.slane %v1774, 1
      %v1777 = vshll.u32 %v1369, 16
      %v1779 = vrot.slane %v1777, 2
      %v1780 = vor.u32 %v1776, %v1779
      %v1781 = vsel %vm1692, %v1771, %v1780
      %v1783 = vshrl.u32 %v1370, 16
      %v1785 = vrot.slane %v1783, 1
      %v1786 = vshll.u32 %v1370, 16
      %v1788 = vrot.slane %v1786, 2
      %v1789 = vor.u32 %v1785, %v1788
      %v1790 = vsel %vm1692, %v1780, %v1789
      %v1792 = vshrl.u32 %v1371, 16
      %v1794 = vrot.slane %v1792, 1
      %v1795 = vshll.u32 %v1371, 16
      %v1797 = vrot.slane %v1795, 2
      %v1798 = vor.u32 %v1794, %v1797
      %v1799 = vsel %vm1692, %v1789, %v1798
      %v1801 = vshrl.u32 %v1372, 16
      %v1803 = vrot.slane %v1801, 1
      %v1804 = vshll.u32 %v1372, 16
      %v1806 = vrot.slane %v1804, 2
      %v1807 = vor.u32 %v1803, %v1806
      %v1808 = vsel %vm1692, %v1798, %v1807
      %v1810 = vshrl.u32 %v1373, 16
      %v1812 = vrot.slane %v1810, 1
      %v1813 = vshll.u32 %v1373, 16
      %v1815 = vrot.slane %v1813, 2
      %v1816 = vor.u32 %v1812, %v1815
      %v1817 = vsel %vm1692, %v1807, %v1816
      %v1819 = vshrl.u32 %v1374, 16
      %v1821 = vrot.slane %v1819, 1
      %v1822 = vshll.u32 %v1374, 16
      %v1824 = vrot.slane %v1822, 2
      %v1825 = vor.u32 %v1821, %v1824
      %v1826 = vsel %vm1692, %v1816, %v1825
      %v1828 = vshrl.u32 %v1375, 16
      %v1830 = vrot.slane %v1828, 1
      %v1831 = vshll.u32 %v1375, 16
      %v1833 = vrot.slane %v1831, 2
      %v1834 = vor.u32 %v1830, %v1833
      %v1835 = vsel %vm1692, %v1825, %v1834
      %v1837 = vshrl.u32 %v1376, 16
      %v1839 = vrot.slane %v1837, 1
      %v1840 = vshll.u32 %v1376, 16
      %v1842 = vrot.slane %v1840, 2
      %v1843 = vor.u32 %v1839, %v1842
      %v1844 = vsel %vm1692, %v1834, %v1843
      %v1846 = vshrl.u32 %v1377, 16
      %v1848 = vrot.slane %v1846, 1
      %v1849 = vshll.u32 %v1377, 16
      %v1851 = vrot.slane %v1849, 2
      %v1852 = vor.u32 %v1848, %v1851
      %v1853 = vsel %vm1692, %v1843, %v1852
      %v1855 = vshrl.u32 %v1691, 16
      %v1857 = vrot.slane %v1855, 1
      %v1858 = vshll.u32 %v1691, 16
      %v1860 = vrot.slane %v1858, 2
      %v1861 = vor.u32 %v1857, %v1860
      %v1862 = vsel %vm1692, %v1852, %v1861
      %v1864 = vsel %vm481, %v1709, 0
      %v1867 = vsel %vm481, %v1718, 0
      %v1870 = vsel %vm481, %v1727, 0
      %v1873 = vsel %vm481, %v1736, 0
      %v1876 = vsel %vm481, %v1745, 0
      %v1879 = vsel %vm481, %v1754, 0
      %v1882 = vsel %vm481, %v1763, 0
      %v1885 = vsel %vm481, %v1772, 0
      %v1888 = vsel %vm481, %v1781, 0
      %v1891 = vsel %vm481, %v1790, 0
      %v1894 = vsel %vm481, %v1799, 0
      %v1897 = vsel %vm481, %v1808, 0
      %v1900 = vsel %vm481, %v1817, 0
      %v1903 = vsel %vm481, %v1826, 0
      %v1906 = vsel %vm481, %v1835, 0
      %v1909 = vsel %vm481, %v1844, 0
      %v1912 = vsel %vm481, %v1853, 0
      %v1915 = vsel %vm481, %v1862, 0
      %v1918 = vsel %vm536, %v1688, 0
      %1920 = vmatprep.subr.bf16.mxu0 0
      %1921 = vmatpush1.bf16.msra.mxu0 %v1918
      %1922 = vmatprep.subr.bf16.mxu0 0
      %1923 = vmatpush1.bf16.msra.mxu0 0
      %1924 = vmatprep.subr.bf16.mxu0 0
      %1925 = vmatpush1.bf16.msra.mxu0 0
      %1926 = vmatprep.subr.bf16.mxu0 0
      %1927 = vmatpush1.bf16.msra.mxu0 0
      %1928 = vmatprep.subr.bf16.mxu0 0
      %1929 = vmatpush1.bf16.msra.mxu0 0
      %1930 = vmatprep.subr.bf16.mxu0 0
      %1931 = vmatpush1.bf16.msra.mxu0 0
      %1932 = vmatprep.subr.bf16.mxu0 0
      %1933 = vmatpush1.bf16.msra.mxu0 0
      %1934 = vmatprep.subr.bf16.mxu0 0
      %1935 = vmatpush1.bf16.msra.mxu0 0
      %1936 = vmatprep.subr.bf16.mxu0 0
      %1937 = vmatpush1.bf16.msra.mxu0 0
      %1938 = vmatprep.subr.bf16.mxu0 0
      %1939 = vmatpush1.bf16.msra.mxu0 0
      %1940 = vmatprep.subr.bf16.mxu0 0
      %1941 = vmatpush1.bf16.msra.mxu0 0
      %1942 = vmatprep.subr.bf16.mxu0 0
      %1943 = vmatpush1.bf16.msra.mxu0 0
      %1944 = vmatprep.subr.bf16.mxu0 0
      %1945 = vmatpush1.bf16.msra.mxu0 0
      %1946 = vmatprep.subr.bf16.mxu0 0
      %1947 = vmatpush1.bf16.msra.mxu0 0
      %1948 = vmatprep.subr.bf16.mxu0 0
      %1949 = vmatpush1.bf16.msra.mxu0 0
      %1950 = vmatprep.subr.bf16.mxu0 0
      %1951 = vmatpush1.bf16.msra.mxu0 0
      %1952 = vmatprep.mubr.bf16.mxu0 0
      %1953 = vmatmul.mubr.bf16.gmra.mrb[0].mxu0 %v1864
      %v1954 = vpop.f32.mrb[0].mxu0
      %v1955 = vadd.f32 0.0, %v1954
      %v1956 = vpop.f32.mrb[0].mxu0
      %v1957 = vpop.f32.mrb[0].mxu0
      %v1958 = vadd.f32 0.0, %v1957
      %v1959 = vpop.f32.mrb[0].mxu0
      %1960 = vmatprep.mubr.bf16.mxu0 0
      %1961 = vmatmul.mubr.bf16.gmra.mrb[0].mxu0 %v1867
      %v1962 = vpop.f32.mrb[0].mxu0
      %v1963 = vadd.f32 0.0, %v1962
      %v1964 = vpop.f32.mrb[0].mxu0
      %v1965 = vpop.f32.mrb[0].mxu0
      %v1966 = vadd.f32 0.0, %v1965
      %v1967 = vpop.f32.mrb[0].mxu0
      %1968 = vmatprep.mubr.bf16.mxu0 0
      %1969 = vmatmul.mubr.bf16.gmra.mrb[0].mxu0 %v1870
      %v1970 = vpop.f32.mrb[0].mxu0
      %v1971 = vadd.f32 0.0, %v1970
      %v1972 = vpop.f32.mrb[0].mxu0
      %v1973 = vpop.f32.mrb[0].mxu0
      %v1974 = vadd.f32 0.0, %v1973
      %v1975 = vpop.f32.mrb[0].mxu0
      %1976 = vmatprep.mubr.bf16.mxu0 0
      %1977 = vmatmul.mubr.bf16.gmra.mrb[0].mxu0 %v1873
      %v1978 = vpop.f32.mrb[0].mxu0
      %v1979 = vadd.f32 0.0, %v1978
      %v1980 = vpop.f32.mrb[0].mxu0
      %v1981 = vpop.f32.mrb[0].mxu0
      %v1982 = vadd.f32 0.0, %v1981
      %v1983 = vpop.f32.mrb[0].mxu0
      %1984 = vmatprep.mubr.bf16.mxu0 0
      %1985 = vmatmul.mubr.bf16.gmra.mrb[0].mxu0 %v1876
      %v1986 = vpop.f32.mrb[0].mxu0
      %v1987 = vadd.f32 0.0, %v1986
      %v1988 = vpop.f32.mrb[0].mxu0
      %v1989 = vpop.f32.mrb[0].mxu0
      %v1990 = vadd.f32 0.0, %v1989
      %v1991 = vpop.f32.mrb[0].mxu0
      %1992 = vmatprep.mubr.bf16.mxu0 0
      %1993 = vmatmul.mubr.bf16.gmra.mrb[0].mxu0 %v1879
      %v1994 = vpop.f32.mrb[0].mxu0
      %v1995 = vadd.f32 0.0, %v1994
      %v1996 = vpop.f32.mrb[0].mxu0
      %v1997 = vpop.f32.mrb[0].mxu0
      %v1998 = vadd.f32 0.0, %v1997
      %v1999 = vpop.f32.mrb[0].mxu0
      %2000 = vmatprep.mubr.bf16.mxu0 0
      %2001 = vmatmul.mubr.bf16.gmra.mrb[0].mxu0 %v1882
      %v2002 = vpop.f32.mrb[0].mxu0
      %v2003 = vadd.f32 0.0, %v2002
      %v2004 = vpop.f32.mrb[0].mxu0
      %v2005 = vpop.f32.mrb[0].mxu0
      %v2006 = vadd.f32 0.0, %v2005
      %v2007 = vpop.f32.mrb[0].mxu0
      %2008 = vmatprep.mubr.bf16.mxu0 0
      %2009 = vmatmul.mubr.bf16.gmra.mrb[0].mxu0 %v1885
      %v2010 = vpop.f32.mrb[0].mxu0
      %v2011 = vadd.f32 0.0, %v2010
      %v2012 = vpop.f32.mrb[0].mxu0
      %v2013 = vpop.f32.mrb[0].mxu0
      %v2014 = vadd.f32 0.0, %v2013
      %v2015 = vpop.f32.mrb[0].mxu0
      %2016 = vmatprep.mubr.bf16.mxu0 0
      %2017 = vmatmul.mubr.bf16.gmra.mrb[0].mxu0 %v1888
      %v2018 = vpop.f32.mrb[0].mxu0
      %v2019 = vadd.f32 0.0, %v2018
      %v2020 = vpop.f32.mrb[0].mxu0
      %v2021 = vpop.f32.mrb[0].mxu0
      %v2022 = vadd.f32 0.0, %v2021
      %v2023 = vpop.f32.mrb[0].mxu0
      %2024 = vmatprep.mubr.bf16.mxu0 0
      %2025 = vmatmul.mubr.bf16.gmra.mrb[0].mxu0 %v1891
      %v2026 = vpop.f32.mrb[0].mxu0
      %v2027 = vadd.f32 0.0, %v2026
      %v2028 = vpop.f32.mrb[0].mxu0
      %v2029 = vpop.f32.mrb[0].mxu0
      %v2030 = vadd.f32 0.0, %v2029
      %v2031 = vpop.f32.mrb[0].mxu0
      %2032 = vmatprep.mubr.bf16.mxu0 0
      %2033 = vmatmul.mubr.bf16.gmra.mrb[0].mxu0 %v1894
      %v2034 = vpop.f32.mrb[0].mxu0
      %v2035 = vadd.f32 0.0, %v2034
      %v2036 = vpop.f32.mrb[0].mxu0
      %v2037 = vpop.f32.mrb[0].mxu0
      %v2038 = vadd.f32 0.0, %v2037
      %v2039 = vpop.f32.mrb[0].mxu0
      %2040 = vmatprep.mubr.bf16.mxu0 0
      %2041 = vmatmul.mubr.bf16.gmra.mrb[0].mxu0 %v1897
      %v2042 = vpop.f32.mrb[0].mxu0
      %v2043 = vadd.f32 0.0, %v2042
      %v2044 = vpop.f32.mrb[0].mxu0
      %v2045 = vpop.f32.mrb[0].mxu0
      %v2046 = vadd.f32 0.0, %v2045
      %v2047 = vpop.f32.mrb[0].mxu0
      %2048 = vmatprep.mubr.bf16.mxu0 0
      %2049 = vmatmul.mubr.bf16.gmra.mrb[0].mxu0 %v1900
      %v2050 = vpop.f32.mrb[0].mxu0
      %v2051 = vadd.f32 0.0, %v2050
      %v2052 = vpop.f32.mrb[0].mxu0
      %v2053 = vpop.f32.mrb[0].mxu0
      %v2054 = vadd.f32 0.0, %v2053
      %v2055 = vpop.f32.mrb[0].mxu0
      %2056 = vmatprep.mubr.bf16.mxu0 0
      %2057 = vmatmul.mubr.bf16.gmra.mrb[0].mxu0 %v1903
      %v2058 = vpop.f32.mrb[0].mxu0
      %v2059 = vadd.f32 0.0, %v2058
      %v2060 = vpop.f32.mrb[0].mxu0
      %v2061 = vpop.f32.mrb[0].mxu0
      %v2062 = vadd.f32 0.0, %v2061
      %v2063 = vpop.f32.mrb[0].mxu0
      %2064 = vmatprep.mubr.bf16.mxu0 0
      %2065 = vmatmul.mubr.bf16.gmra.mrb[0].mxu0 %v1906
      %v2066 = vpop.f32.mrb[0].mxu0
      %v2067 = vadd.f32 0.0, %v2066
      %v2068 = vpop.f32.mrb[0].mxu0
      %v2069 = vpop.f32.mrb[0].mxu0
      %v2070 = vadd.f32 0.0, %v2069
      %v2071 = vpop.f32.mrb[0].mxu0
      %2072 = vmatprep.mubr.bf16.mxu0 0
      %2073 = vmatmul.mubr.bf16.gmra.mrb[0].mxu0 %v1909
      %v2074 = vpop.f32.mrb[0].mxu0
      %v2075 = vadd.f32 0.0, %v2074
      %v2076 = vpop.f32.mrb[0].mxu0
      %v2077 = vpop.f32.mrb[0].mxu0
      %v2078 = vadd.f32 0.0, %v2077
      %v2079 = vpop.f32.mrb[0].mxu0
      %2080 = vmatprep.mubr.bf16.mxu0 0
      %2081 = vmatmul.mubr.bf16.gmra.mrb[0].mxu0 %v1912
      %v2082 = vpop.f32.mrb[0].mxu0
      %v2083 = vadd.f32 0.0, %v2082
      %v2084 = vpop.f32.mrb[0].mxu0
      %v2085 = vpop.f32.mrb[0].mxu0
      %v2086 = vadd.f32 0.0, %v2085
      %v2087 = vpop.f32.mrb[0].mxu0
      %2088 = vmatprep.mubr.bf16.mxu0 0
      %2089 = vmatmul.mubr.bf16.gmra.mrb[0].mxu0 %v1915
      %v2090 = vpop.f32.mrb[0].mxu0
      %v2091 = vadd.f32 0.0, %v2090
      %v2092 = vpop.f32.mrb[0].mxu0
      %v2093 = vpop.f32.mrb[0].mxu0
      %v2094 = vadd.f32 0.0, %v2093
      %v2095 = vpop.f32.mrb[0].mxu0
      %2096 = vdwg.mxu0
      %v2097 = vadd.f32 %v1650, %v1955
      %v2098 = vadd.f32 %v1651, %v1958
      %v2099 = vadd.f32 %v1652, %v1963
      %v2100 = vadd.f32 %v1653, %v1966
      %v2101 = vadd.f32 %v1654, %v1971
      %v2102 = vadd.f32 %v1655, %v1974
      %v2103 = vadd.f32 %v1656, %v1979
      %v2104 = vadd.f32 %v1657, %v1982
      %v2105 = vadd.f32 %v1658, %v1987
      %v2106 = vadd.f32 %v1659, %v1990
      %v2107 = vadd.f32 %v1660, %v1995
      %v2108 = vadd.f32 %v1661, %v1998
      %v2109 = vadd.f32 %v1662, %v2003
      %v2110 = vadd.f32 %v1663, %v2006
      %v2111 = vadd.f32 %v1664, %v2011
      %v2112 = vadd.f32 %v1665, %v2014
      %v2113 = vadd.f32 %v1666, %v2019
      %v2114 = vadd.f32 %v1667, %v2022
      %v2115 = vadd.f32 %v1668, %v2027
      %v2116 = vadd.f32 %v1669, %v2030
      %v2117 = vadd.f32 %v1670, %v2035
      %v2118 = vadd.f32 %v1671, %v2038
      %v2119 = vadd.f32 %v1672, %v2043
      %v2120 = vadd.f32 %v1673, %v2046
      %v2121 = vadd.f32 %v1674, %v2051
      %v2122 = vadd.f32 %v1675, %v2054
      %v2123 = vadd.f32 %v1676, %v2059
      %v2124 = vadd.f32 %v1677, %v2062
      %v2125 = vadd.f32 %v1678, %v2067
      %v2126 = vadd.f32 %v1679, %v2070
      %v2127 = vadd.f32 %v1680, %v2075
      %v2128 = vadd.f32 %v1681, %v2078
      %v2129 = vadd.f32 %v1682, %v2083
      %v2130 = vadd.f32 %v1683, %v2086
      %v2131 = vadd.f32 %v1684, %v2091
      %v2132 = vadd.f32 %v1685, %v2094
      %v2133 = vld [vmem:[%s192 + $0x8] sm:$0xc]
      %s2134 = scalar_lea.vmem %s1, 10
      %v2135 = vld [vmem:[%s2134] sm:$0x3]
      %v2137 = vunpack.c.l.b16 %v2133
      %v2138 = vpack.c.b16 %v1324, %v2137
      %vm2139 = vcmask 1045504
      %v2140 = vrot.slane %v2138, 2
      %v2141 = vrot.slane %v1361, 2
      %v2142 = vsel %vm2139, %v2140, %v2141
      %v2143 = vrot.slane %v1362, 2
      %v2144 = vsel %vm2139, %v2141, %v2143
      %v2145 = vrot.slane %v1363, 2
      %v2146 = vsel %vm2139, %v2143, %v2145
      %v2147 = vrot.slane %v1364, 2
      %v2148 = vsel %vm2139, %v2145, %v2147
      %v2149 = vrot.slane %v1365, 2
      %v2150 = vsel %vm2139, %v2147, %v2149
      %v2151 = vrot.slane %v1366, 2
      %v2152 = vsel %vm2139, %v2149, %v2151
      %v2153 = vrot.slane %v1367, 2
      %v2154 = vsel %vm2139, %v2151, %v2153
      %v2155 = vrot.slane %v1368, 2
      %v2156 = vsel %vm2139, %v2153, %v2155
      %v2157 = vrot.slane %v1369, 2
      %v2158 = vsel %vm2139, %v2155, %v2157
      %v2159 = vrot.slane %v1370, 2
      %v2160 = vsel %vm2139, %v2157, %v2159
      %v2161 = vrot.slane %v1371, 2
      %v2162 = vsel %vm2139, %v2159, %v2161
      %v2163 = vrot.slane %v1372, 2
      %v2164 = vsel %vm2139, %v2161, %v2163
      %v2165 = vrot.slane %v1373, 2
      %v2166 = vsel %vm2139, %v2163, %v2165
      %v2167 = vrot.slane %v1374, 2
      %v2168 = vsel %vm2139, %v2165, %v2167
      %v2169 = vrot.slane %v1375, 2
      %v2170 = vsel %vm2139, %v2167, %v2169
      %v2171 = vrot.slane %v1376, 2
      %v2172 = vsel %vm2139, %v2169, %v2171
      %v2173 = vrot.slane %v1377, 2
      %v2174 = vsel %vm2139, %v2171, %v2173
      %v2175 = vrot.slane %v1691, 2
      %v2176 = vsel %vm2139, %v2173, %v2175
      %v2178 = vsel %vm481, %v2142, 0
      %v2181 = vsel %vm481, %v2144, 0
      %v2184 = vsel %vm481, %v2146, 0
      %v2187 = vsel %vm481, %v2148, 0
      %v2190 = vsel %vm481, %v2150, 0
      %v2193 = vsel %vm481, %v2152, 0
      %v2196 = vsel %vm481, %v2154, 0
      %v2199 = vsel %vm481, %v2156, 0
      %v2202 = vsel %vm481, %v2158, 0
      %v2205 = vsel %vm481, %v2160, 0
      %v2208 = vsel %vm481, %v2162, 0
      %v2211 = vsel %vm481, %v2164, 0
      %v2214 = vsel %vm481, %v2166, 0
      %v2217 = vsel %vm481, %v2168, 0
      %v2220 = vsel %vm481, %v2170, 0
      %v2223 = vsel %vm481, %v2172, 0
      %v2226 = vsel %vm481, %v2174, 0
      %v2229 = vsel %vm481, %v2176, 0
      %v2232 = vsel %vm536, %v2135, 0
      %2234 = vmatprep.subr.bf16.mxu0 0
      %2235 = vmatpush1.bf16.msra.mxu0 %v2232
      %2236 = vmatprep.subr.bf16.mxu0 0
      %2237 = vmatpush1.bf16.msra.mxu0 0
      %2238 = vmatprep.subr.bf16.mxu0 0
      %2239 = vmatpush1.bf16.msra.mxu0 0
      %2240 = vmatprep.subr.bf16.mxu0 0
      %2241 = vmatpush1.bf16.msra.mxu0 0
      %2242 = vmatprep.subr.bf16.mxu0 0
      %2243 = vmatpush1.bf16.msra.mxu0 0
      %2244 = vmatprep.subr.bf16.mxu0 0
      %2245 = vmatpush1.bf16.msra.mxu0 0
      %2246 = vmatprep.subr.bf16.mxu0 0
      %2247 = vmatpush1.bf16.msra.mxu0 0
      %2248 = vmatprep.subr.bf16.mxu0 0
      %2249 = vmatpush1.bf16.msra.mxu0 0
      %2250 = vmatprep.subr.bf16.mxu0 0
      %2251 = vmatpush1.bf16.msra.mxu0 0
      %2252 = vmatprep.subr.bf16.mxu0 0
      %2253 = vmatpush1.bf16.msra.mxu0 0
      %2254 = vmatprep.subr.bf16.mxu0 0
      %2255 = vmatpush1.bf16.msra.mxu0 0
      %2256 = vmatprep.subr.bf16.mxu0 0
      %2257 = vmatpush1.bf16.msra.mxu0 0
      %2258 = vmatprep.subr.bf16.mxu0 0
      %2259 = vmatpush1.bf16.msra.mxu0 0
      %2260 = vmatprep.subr.bf16.mxu0 0
      %2261 = vmatpush1.bf16.msra.mxu0 0
      %2262 = vmatprep.subr.bf16.mxu0 0
      %2263 = vmatpush1.bf16.msra.mxu0 0
      %2264 = vmatprep.subr.bf16.mxu0 0
      %2265 = vmatpush1.bf16.msra.mxu0 0
      %2266 = vmatprep.mubr.bf16.mxu0 0
      %2267 = vmatmul.mubr.bf16.gmra.mrb[0].mxu0 %v2178
      %v2268 = vpop.f32.mrb[0].mxu0
      %v2269 = vadd.f32 0.0, %v2268
      %v2270 = vpop.f32.mrb[0].mxu0
      %v2271 = vpop.f32.mrb[0].mxu0
      %v2272 = vadd.f32 0.0, %v2271
      %v2273 = vpop.f32.mrb[0].mxu0
      %2274 = vmatprep.mubr.bf16.mxu0 0
      %2275 = vmatmul.mubr.bf16.gmra.mrb[0].mxu0 %v2181
      %v2276 = vpop.f32.mrb[0].mxu0
      %v2277 = vadd.f32 0.0, %v2276
      %v2278 = vpop.f32.mrb[0].mxu0
      %v2279 = vpop.f32.mrb[0].mxu0
      %v2280 = vadd.f32 0.0, %v2279
      %v2281 = vpop.f32.mrb[0].mxu0
      %2282 = vmatprep.mubr.bf16.mxu0 0
      %2283 = vmatmul.mubr.bf16.gmra.mrb[0].mxu0 %v2184
      %v2284 = vpop.f32.mrb[0].mxu0
      %v2285 = vadd.f32 0.0, %v2284
      %v2286 = vpop.f32.mrb[0].mxu0
      %v2287 = vpop.f32.mrb[0].mxu0
      %v2288 = vadd.f32 0.0, %v2287
      %v2289 = vpop.f32.mrb[0].mxu0
      %2290 = vmatprep.mubr.bf16.mxu0 0
      %2291 = vmatmul.mubr.bf16.gmra.mrb[0].mxu0 %v2187
      %v2292 = vpop.f32.mrb[0].mxu0
      %v2293 = vadd.f32 0.0, %v2292
      %v2294 = vpop.f32.mrb[0].mxu0
      %v2295 = vpop.f32.mrb[0].mxu0
      %v2296 = vadd.f32 0.0, %v2295
      %v2297 = vpop.f32.mrb[0].mxu0
      %2298 = vmatprep.mubr.bf16.mxu0 0
      %2299 = vmatmul.mubr.bf16.gmra.mrb[0].mxu0 %v2190
      %v2300 = vpop.f32.mrb[0].mxu0
      %v2301 = vadd.f32 0.0, %v2300
      %v2302 = vpop.f32.mrb[0].mxu0
      %v2303 = vpop.f32.mrb[0].mxu0
      %v2304 = vadd.f32 0.0, %v2303
      %v2305 = vpop.f32.mrb[0].mxu0
      %2306 = vmatprep.mubr.bf16.mxu0 0
      %2307 = vmatmul.mubr.bf16.gmra.mrb[0].mxu0 %v2193
      %v2308 = vpop.f32.mrb[0].mxu0
      %v2309 = vadd.f32 0.0, %v2308
      %v2310 = vpop.f32.mrb[0].mxu0
      %v2311 = vpop.f32.mrb[0].mxu0
      %v2312 = vadd.f32 0.0, %v2311
      %v2313 = vpop.f32.mrb[0].mxu0
      %2314 = vmatprep.mubr.bf16.mxu0 0
      %2315 = vmatmul.mubr.bf16.gmra.mrb[0].mxu0 %v2196
      %v2316 = vpop.f32.mrb[0].mxu0
      %v2317 = vadd.f32 0.0, %v2316
      %v2318 = vpop.f32.mrb[0].mxu0
      %v2319 = vpop.f32.mrb[0].mxu0
      %v2320 = vadd.f32 0.0, %v2319
      %v2321 = vpop.f32.mrb[0].mxu0
      %2322 = vmatprep.mubr.bf16.mxu0 0
      %2323 = vmatmul.mubr.bf16.gmra.mrb[0].mxu0 %v2199
      %v2324 = vpop.f32.mrb[0].mxu0
      %v2325 = vadd.f32 0.0, %v2324
      %v2326 = vpop.f32.mrb[0].mxu0
      %v2327 = vpop.f32.mrb[0].mxu0
      %v2328 = vadd.f32 0.0, %v2327
      %v2329 = vpop.f32.mrb[0].mxu0
      %2330 = vmatprep.mubr.bf16.mxu0 0
      %2331 = vmatmul.mubr.bf16.gmra.mrb[0].mxu0 %v2202
      %v2332 = vpop.f32.mrb[0].mxu0
      %v2333 = vadd.f32 0.0, %v2332
      %v2334 = vpop.f32.mrb[0].mxu0
      %v2335 = vpop.f32.mrb[0].mxu0
      %v2336 = vadd.f32 0.0, %v2335
      %v2337 = vpop.f32.mrb[0].mxu0
      %2338 = vmatprep.mubr.bf16.mxu0 0
      %2339 = vmatmul.mubr.bf16.gmra.mrb[0].mxu0 %v2205
      %v2340 = vpop.f32.mrb[0].mxu0
      %v2341 = vadd.f32 0.0, %v2340
      %v2342 = vpop.f32.mrb[0].mxu0
      %v2343 = vpop.f32.mrb[0].mxu0
      %v2344 = vadd.f32 0.0, %v2343
      %v2345 = vpop.f32.mrb[0].mxu0
      %2346 = vmatprep.mubr.bf16.mxu0 0
      %2347 = vmatmul.mubr.bf16.gmra.mrb[0].mxu0 %v2208
      %v2348 = vpop.f32.mrb[0].mxu0
      %v2349 = vadd.f32 0.0, %v2348
      %v2350 = vpop.f32.mrb[0].mxu0
      %v2351 = vpop.f32.mrb[0].mxu0
      %v2352 = vadd.f32 0.0, %v2351
      %v2353 = vpop.f32.mrb[0].mxu0
      %2354 = vmatprep.mubr.bf16.mxu0 0
      %2355 = vmatmul.mubr.bf16.gmra.mrb[0].mxu0 %v2211
      %v2356 = vpop.f32.mrb[0].mxu0
      %v2357 = vadd.f32 0.0, %v2356
      %v2358 = vpop.f32.mrb[0].mxu0
      %v2359 = vpop.f32.mrb[0].mxu0
      %v2360 = vadd.f32 0.0, %v2359
      %v2361 = vpop.f32.mrb[0].mxu0
      %2362 = vmatprep.mubr.bf16.mxu0 0
      %2363 = vmatmul.mubr.bf16.gmra.mrb[0].mxu0 %v2214
      %v2364 = vpop.f32.mrb[0].mxu0
      %v2365 = vadd.f32 0.0, %v2364
      %v2366 = vpop.f32.mrb[0].mxu0
      %v2367 = vpop.f32.mrb[0].mxu0
      %v2368 = vadd.f32 0.0, %v2367
      %v2369 = vpop.f32.mrb[0].mxu0
      %2370 = vmatprep.mubr.bf16.mxu0 0
      %2371 = vmatmul.mubr.bf16.gmra.mrb[0].mxu0 %v2217
      %v2372 = vpop.f32.mrb[0].mxu0
      %v2373 = vadd.f32 0.0, %v2372
      %v2374 = vpop.f32.mrb[0].mxu0
      %v2375 = vpop.f32.mrb[0].mxu0
      %v2376 = vadd.f32 0.0, %v2375
      %v2377 = vpop.f32.mrb[0].mxu0
      %2378 = vmatprep.mubr.bf16.mxu0 0
      %2379 = vmatmul.mubr.bf16.gmra.mrb[0].mxu0 %v2220
      %v2380 = vpop.f32.mrb[0].mxu0
      %v2381 = vadd.f32 0.0, %v2380
      %v2382 = vpop.f32.mrb[0].mxu0
      %v2383 = vpop.f32.mrb[0].mxu0
      %v2384 = vadd.f32 0.0, %v2383
      %v2385 = vpop.f32.mrb[0].mxu0
      %2386 = vmatprep.mubr.bf16.mxu0 0
      %2387 = vmatmul.mubr.bf16.gmra.mrb[0].mxu0 %v2223
      %v2388 = vpop.f32.mrb[0].mxu0
      %v2389 = vadd.f32 0.0, %v2388
      %v2390 = vpop.f32.mrb[0].mxu0
      %v2391 = vpop.f32.mrb[0].mxu0
      %v2392 = vadd.f32 0.0, %v2391
      %v2393 = vpop.f32.mrb[0].mxu0
      %2394 = vmatprep.mubr.bf16.mxu0 0
      %2395 = vmatmul.mubr.bf16.gmra.mrb[0].mxu0 %v2226
      %v2396 = vpop.f32.mrb[0].mxu0
      %v2397 = vadd.f32 0.0, %v2396
      %v2398 = vpop.f32.mrb[0].mxu0
      %v2399 = vpop.f32.mrb[0].mxu0
      %v2400 = vadd.f32 0.0, %v2399
      %v2401 = vpop.f32.mrb[0].mxu0
      %2402 = vmatprep.mubr.bf16.mxu0 0
      %2403 = vmatmul.mubr.bf16.gmra.mrb[0].mxu0 %v2229
      %v2404 = vpop.f32.mrb[0].mxu0
      %v2405 = vadd.f32 0.0, %v2404
      %v2406 = vpop.f32.mrb[0].mxu0
      %v2407 = vpop.f32.mrb[0].mxu0
      %v2408 = vadd.f32 0.0, %v2407
      %v2409 = vpop.f32.mrb[0].mxu0
      %2410 = vdwg.mxu0
      %v2411 = vadd.f32 %v2097, %v2269
      %v2412 = vadd.f32 %v2098, %v2272
      %v2413 = vadd.f32 %v2099, %v2277
      %v2414 = vadd.f32 %v2100, %v2280
      %v2415 = vadd.f32 %v2101, %v2285
      %v2416 = vadd.f32 %v2102, %v2288
      %v2417 = vadd.f32 %v2103, %v2293
      %v2418 = vadd.f32 %v2104, %v2296
      %v2419 = vadd.f32 %v2105, %v2301
      %v2420 = vadd.f32 %v2106, %v2304
      %v2421 = vadd.f32 %v2107, %v2309
      %v2422 = vadd.f32 %v2108, %v2312
      %v2423 = vadd.f32 %v2109, %v2317
      %v2424 = vadd.f32 %v2110, %v2320
      %v2425 = vadd.f32 %v2111, %v2325
      %v2426 = vadd.f32 %v2112, %v2328
      %v2427 = vadd.f32 %v2113, %v2333
      %v2428 = vadd.f32 %v2114, %v2336
      %v2429 = vadd.f32 %v2115, %v2341
      %v2430 = vadd.f32 %v2116, %v2344
      %v2431 = vadd.f32 %v2117, %v2349
      %v2432 = vadd.f32 %v2118, %v2352
      %v2433 = vadd.f32 %v2119, %v2357
      %v2434 = vadd.f32 %v2120, %v2360
      %v2435 = vadd.f32 %v2121, %v2365
      %v2436 = vadd.f32 %v2122, %v2368
      %v2437 = vadd.f32 %v2123, %v2373
      %v2438 = vadd.f32 %v2124, %v2376
      %v2439 = vadd.f32 %v2125, %v2381
      %v2440 = vadd.f32 %v2126, %v2384
      %v2441 = vadd.f32 %v2127, %v2389
      %v2442 = vadd.f32 %v2128, %v2392
      %v2443 = vadd.f32 %v2129, %v2397
      %v2444 = vadd.f32 %v2130, %v2400
      %v2445 = vadd.f32 %v2131, %v2405
      %v2446 = vadd.f32 %v2132, %v2408
      %v2447 = vld [vmem:[%s192 + $0x10] sm:$0xc]
      %v2448 = vld [vmem:[%s192 + $0x14] sm:$0xf]
      %v2449 = vld [vmem:[%s192 + $0x18] sm:$0xf]
      %v2450 = vld [vmem:[%s192 + $0x1c] sm:$0xf]
      %v2451 = vld [vmem:[%s192 + $0x20] sm:$0xf]
      %v2452 = vld [vmem:[%s192 + $0x24] sm:$0xf]
      %v2453 = vld [vmem:[%s192 + $0x28] sm:$0xf]
      %v2454 = vld [vmem:[%s192 + $0x2c] sm:$0xf]
      %v2455 = vld [vmem:[%s192 + $0x30] sm:$0xf]
      %v2456 = vld [vmem:[%s192 + $0x34] sm:$0xf]
      %v2457 = vld [vmem:[%s192 + $0x38] sm:$0xf]
      %v2458 = vld [vmem:[%s192 + $0x3c] sm:$0xf]
      %v2459 = vld [vmem:[%s192 + $0x40] sm:$0xf]
      %v2460 = vld [vmem:[%s192 + $0x44] sm:$0xf]
      %v2461 = vld [vmem:[%s192 + $0x48] sm:$0xf]
      %v2462 = vld [vmem:[%s192 + $0x4c] sm:$0xf]
      %v2463 = vld [vmem:[%s192 + $0x50] sm:$0xf]
      %v2464 = vld [vmem:[%s192 + $0x54] sm:$0xf]
      %v2465 = vld [vmem:[%s192 + $0x58] sm:$0xf]
      %v2466 = vld [vmem:[%s192 + $0x5c] sm:$0xf]
      %v2467 = vld [vmem:[%s192 + $0x60] sm:$0xf]
      %v2468 = vld [vmem:[%s192 + $0x64] sm:$0xf]
      %v2469 = vld [vmem:[%s192 + $0x68] sm:$0xf]
      %v2470 = vld [vmem:[%s192 + $0x6c] sm:$0xf]
      %v2471 = vld [vmem:[%s192 + $0x70] sm:$0xf]
      %v2472 = vld [vmem:[%s192 + $0x74] sm:$0xf]
      %v2473 = vld [vmem:[%s192 + $0x78] sm:$0xf]
      %v2474 = vld [vmem:[%s192 + $0x7c] sm:$0xf]
      %v2475 = vld [vmem:[%s192 + $0x80] sm:$0xf]
      %v2476 = vld [vmem:[%s192 + $0x84] sm:$0xf]
      %v2477 = vld [vmem:[%s192 + $0x88] sm:$0xf]
      %v2478 = vld [vmem:[%s192 + $0x8c] sm:$0xf]
      %v2479 = vld [vmem:[%s192 + $0x90] sm:$0xf]
      %v2480 = vld [vmem:[%s192 + $0x94] sm:$0xf]
      %v2481 = vld [vmem:[%s192 + $0x98] sm:$0xf]
      %v2482 = vld [vmem:[%s192 + $0x9c] sm:$0xf]
      %v2483 = vld [vmem:[%s192 + $0xa0] sm:$0x3]
      %s2484 = scalar_lea.vmem %s1, 12
      %v2485 = vld [vmem:[%s2484] sm:$0x3]
      %v2523 = vunpack.c.l.b16 %v2447
      %v2524 = vunpack.c.l.b16 %v2448
      %v2525 = vunpack.c.l.b16 %v2449
      %v2526 = vunpack.c.l.b16 %v2450
      %v2527 = vunpack.c.l.b16 %v2451
      %v2528 = vunpack.c.l.b16 %v2452
      %v2529 = vunpack.c.l.b16 %v2453
      %v2530 = vunpack.c.l.b16 %v2454
      %v2531 = vunpack.c.l.b16 %v2455
      %v2532 = vunpack.c.l.b16 %v2456
      %v2533 = vunpack.c.l.b16 %v2457
      %v2534 = vunpack.c.l.b16 %v2458
      %v2535 = vunpack.c.l.b16 %v2459
      %v2536 = vunpack.c.l.b16 %v2460
      %v2537 = vunpack.c.l.b16 %v2461
      %v2538 = vunpack.c.l.b16 %v2462
      %v2539 = vunpack.c.l.b16 %v2463
      %v2540 = vunpack.c.l.b16 %v2464
      %v2541 = vunpack.c.l.b16 %v2465
      %v2542 = vunpack.c.l.b16 %v2466
      %v2543 = vunpack.c.l.b16 %v2467
      %v2544 = vunpack.c.l.b16 %v2468
      %v2545 = vunpack.c.l.b16 %v2469
      %v2546 = vunpack.c.l.b16 %v2470
      %v2547 = vunpack.c.l.b16 %v2471
      %v2548 = vunpack.c.l.b16 %v2472
      %v2549 = vunpack.c.l.b16 %v2473
      %v2550 = vunpack.c.l.b16 %v2474
      %v2551 = vunpack.c.l.b16 %v2475
      %v2552 = vunpack.c.l.b16 %v2476
      %v2553 = vunpack.c.l.b16 %v2477
      %v2554 = vunpack.c.l.b16 %v2478
      %v2555 = vunpack.c.l.b16 %v2479
      %v2556 = vunpack.c.l.b16 %v2480
      %v2557 = vunpack.c.l.b16 %v2481
      %v2558 = vunpack.c.l.b16 %v2482
      %v2559 = vunpack.c.l.b16 %v2483
      %v2560 = vpack.c.b16 %v2524, %v2523
      %v2561 = vpack.c.b16 %v2526, %v2525
      %v2562 = vpack.c.b16 %v2528, %v2527
      %v2563 = vpack.c.b16 %v2530, %v2529
      %v2564 = vpack.c.b16 %v2532, %v2531
      %v2565 = vpack.c.b16 %v2534, %v2533
      %v2566 = vpack.c.b16 %v2536, %v2535
      %v2567 = vpack.c.b16 %v2538, %v2537
      %v2568 = vpack.c.b16 %v2540, %v2539
      %v2569 = vpack.c.b16 %v2542, %v2541
      %v2570 = vpack.c.b16 %v2544, %v2543
      %v2571 = vpack.c.b16 %v2546, %v2545
      %v2572 = vpack.c.b16 %v2548, %v2547
      %v2573 = vpack.c.b16 %v2550, %v2549
      %v2574 = vpack.c.b16 %v2552, %v2551
      %v2575 = vpack.c.b16 %v2554, %v2553
      %v2576 = vpack.c.b16 %v2556, %v2555
      %v2577 = vpack.c.b16 %v2558, %v2557
      %v2578 = vpack.c.b16 %v2559, %v2559
      %v2579 = vrot.slane %v2560, 2
      %v2580 = vrot.slane %v2561, 2
      %v2581 = vsel %vm2139, %v2579, %v2580
      %v2582 = vrot.slane %v2562, 2
      %v2583 = vsel %vm2139, %v2580, %v2582
      %v2584 = vrot.slane %v2563, 2
      %v2585 = vsel %vm2139, %v2582, %v2584
      %v2586 = vrot.slane %v2564, 2
      %v2587 = vsel %vm2139, %v2584, %v2586
      %v2588 = vrot.slane %v2565, 2
      %v2589 = vsel %vm2139, %v2586, %v2588
      %v2590 = vrot.slane %v2566, 2
      %v2591 = vsel %vm2139, %v2588, %v2590
      %v2592 = vrot.slane %v2567, 2
      %v2593 = vsel %vm2139, %v2590, %v2592
      %v2594 = vrot.slane %v2568, 2
      %v2595 = vsel %vm2139, %v2592, %v2594
      %v2596 = vrot.slane %v2569, 2
      %v2597 = vsel %vm2139, %v2594, %v2596
      %v2598 = vrot.slane %v2570, 2
      %v2599 = vsel %vm2139, %v2596, %v2598
      %v2600 = vrot.slane %v2571, 2
      %v2601 = vsel %vm2139, %v2598, %v2600
      %v2602 = vrot.slane %v2572, 2
      %v2603 = vsel %vm2139, %v2600, %v2602
      %v2604 = vrot.slane %v2573, 2
      %v2605 = vsel %vm2139, %v2602, %v2604
      %v2606 = vrot.slane %v2574, 2
      %v2607 = vsel %vm2139, %v2604, %v2606
      %v2608 = vrot.slane %v2575, 2
      %v2609 = vsel %vm2139, %v2606, %v2608
      %v2610 = vrot.slane %v2576, 2
      %v2611 = vsel %vm2139, %v2608, %v2610
      %v2612 = vrot.slane %v2577, 2
      %v2613 = vsel %vm2139, %v2610, %v2612
      %v2614 = vrot.slane %v2578, 2
      %v2615 = vsel %vm2139, %v2612, %v2614
      %v2617 = vsel %vm481, %v2581, 0
      %v2620 = vsel %vm481, %v2583, 0
      %v2623 = vsel %vm481, %v2585, 0
      %v2626 = vsel %vm481, %v2587, 0
      %v2629 = vsel %vm481, %v2589, 0
      %v2632 = vsel %vm481, %v2591, 0
      %v2635 = vsel %vm481, %v2593, 0
      %v2638 = vsel %vm481, %v2595, 0
      %v2641 = vsel %vm481, %v2597, 0
      %v2644 = vsel %vm481, %v2599, 0
      %v2647 = vsel %vm481, %v2601, 0
      %v2650 = vsel %vm481, %v2603, 0
      %v2653 = vsel %vm481, %v2605, 0
      %v2656 = vsel %vm481, %v2607, 0
      %v2659 = vsel %vm481, %v2609, 0
      %v2662 = vsel %vm481, %v2611, 0
      %v2665 = vsel %vm481, %v2613, 0
      %v2668 = vsel %vm481, %v2615, 0
      %v2671 = vsel %vm536, %v2485, 0
      %2673 = vmatprep.subr.bf16.mxu0 0
      %2674 = vmatpush1.bf16.msra.mxu0 %v2671
      %2675 = vmatprep.subr.bf16.mxu0 0
      %2676 = vmatpush1.bf16.msra.mxu0 0
      %2677 = vmatprep.subr.bf16.mxu0 0
      %2678 = vmatpush1.bf16.msra.mxu0 0
      %2679 = vmatprep.subr.bf16.mxu0 0
      %2680 = vmatpush1.bf16.msra.mxu0 0
      %2681 = vmatprep.subr.bf16.mxu0 0
      %2682 = vmatpush1.bf16.msra.mxu0 0
      %2683 = vmatprep.subr.bf16.mxu0 0
      %2684 = vmatpush1.bf16.msra.mxu0 0
      %2685 = vmatprep.subr.bf16.mxu0 0
      %2686 = vmatpush1.bf16.msra.mxu0 0
      %2687 = vmatprep.subr.bf16.mxu0 0
      %2688 = vmatpush1.bf16.msra.mxu0 0
      %2689 = vmatprep.subr.bf16.mxu0 0
      %2690 = vmatpush1.bf16.msra.mxu0 0
      %2691 = vmatprep.subr.bf16.mxu0 0
      %2692 = vmatpush1.bf16.msra.mxu0 0
      %2693 = vmatprep.subr.bf16.mxu0 0
      %2694 = vmatpush1.bf16.msra.mxu0 0
      %2695 = vmatprep.subr.bf16.mxu0 0
      %2696 = vmatpush1.bf16.msra.mxu0 0
      %2697 = vmatprep.subr.bf16.mxu0 0
      %2698 = vmatpush1.bf16.msra.mxu0 0
      %2699 = vmatprep.subr.bf16.mxu0 0
      %2700 = vmatpush1.bf16.msra.mxu0 0
      %2701 = vmatprep.subr.bf16.mxu0 0
      %2702 = vmatpush1.bf16.msra.mxu0 0
      %2703 = vmatprep.subr.bf16.mxu0 0
      %2704 = vmatpush1.bf16.msra.mxu0 0
      %2705 = vmatprep.mubr.bf16.mxu0 0
      %2706 = vmatmul.mubr.bf16.gmra.mrb[0].mxu0 %v2617
      %v2707 = vpop.f32.mrb[0].mxu0
      %v2708 = vadd.f32 0.0, %v2707
      %v2709 = vpop.f32.mrb[0].mxu0
      %v2710 = vpop.f32.mrb[0].mxu0
      %v2711 = vadd.f32 0.0, %v2710
      %v2712 = vpop.f32.mrb[0].mxu0
      %2713 = vmatprep.mubr.bf16.mxu0 0
      %2714 = vmatmul.mubr.bf16.gmra.mrb[0].mxu0 %v2620
      %v2715 = vpop.f32.mrb[0].mxu0
      %v2716 = vadd.f32 0.0, %v2715
      %v2717 = vpop.f32.mrb[0].mxu0
      %v2718 = vpop.f32.mrb[0].mxu0
      %v2719 = vadd.f32 0.0, %v2718
      %v2720 = vpop.f32.mrb[0].mxu0
      %2721 = vmatprep.mubr.bf16.mxu0 0
      %2722 = vmatmul.mubr.bf16.gmra.mrb[0].mxu0 %v2623
      %v2723 = vpop.f32.mrb[0].mxu0
      %v2724 = vadd.f32 0.0, %v2723
      %v2725 = vpop.f32.mrb[0].mxu0
      %v2726 = vpop.f32.mrb[0].mxu0
      %v2727 = vadd.f32 0.0, %v2726
      %v2728 = vpop.f32.mrb[0].mxu0
      %2729 = vmatprep.mubr.bf16.mxu0 0
      %2730 = vmatmul.mubr.bf16.gmra.mrb[0].mxu0 %v2626
      %v2731 = vpop.f32.mrb[0].mxu0
      %v2732 = vadd.f32 0.0, %v2731
      %v2733 = vpop.f32.mrb[0].mxu0
      %v2734 = vpop.f32.mrb[0].mxu0
      %v2735 = vadd.f32 0.0, %v2734
      %v2736 = vpop.f32.mrb[0].mxu0
      %2737 = vmatprep.mubr.bf16.mxu0 0
      %2738 = vmatmul.mubr.bf16.gmra.mrb[0].mxu0 %v2629
      %v2739 = vpop.f32.mrb[0].mxu0
      %v2740 = vadd.f32 0.0, %v2739
      %v2741 = vpop.f32.mrb[0].mxu0
      %v2742 = vpop.f32.mrb[0].mxu0
      %v2743 = vadd.f32 0.0, %v2742
      %v2744 = vpop.f32.mrb[0].mxu0
      %2745 = vmatprep.mubr.bf16.mxu0 0
      %2746 = vmatmul.mubr.bf16.gmra.mrb[0].mxu0 %v2632
      %v2747 = vpop.f32.mrb[0].mxu0
      %v2748 = vadd.f32 0.0, %v2747
      %v2749 = vpop.f32.mrb[0].mxu0
      %v2750 = vpop.f32.mrb[0].mxu0
      %v2751 = vadd.f32 0.0, %v2750
      %v2752 = vpop.f32.mrb[0].mxu0
      %2753 = vmatprep.mubr.bf16.mxu0 0
      %2754 = vmatmul.mubr.bf16.gmra.mrb[0].mxu0 %v2635
      %v2755 = vpop.f32.mrb[0].mxu0
      %v2756 = vadd.f32 0.0, %v2755
      %v2757 = vpop.f32.mrb[0].mxu0
      %v2758 = vpop.f32.mrb[0].mxu0
      %v2759 = vadd.f32 0.0, %v2758
      %v2760 = vpop.f32.mrb[0].mxu0
      %2761 = vmatprep.mubr.bf16.mxu0 0
      %2762 = vmatmul.mubr.bf16.gmra.mrb[0].mxu0 %v2638
      %v2763 = vpop.f32.mrb[0].mxu0
      %v2764 = vadd.f32 0.0, %v2763
      %v2765 = vpop.f32.mrb[0].mxu0
      %v2766 = vpop.f32.mrb[0].mxu0
      %v2767 = vadd.f32 0.0, %v2766
      %v2768 = vpop.f32.mrb[0].mxu0
      %2769 = vmatprep.mubr.bf16.mxu0 0
      %2770 = vmatmul.mubr.bf16.gmra.mrb[0].mxu0 %v2641
      %v2771 = vpop.f32.mrb[0].mxu0
      %v2772 = vadd.f32 0.0, %v2771
      %v2773 = vpop.f32.mrb[0].mxu0
      %v2774 = vpop.f32.mrb[0].mxu0
      %v2775 = vadd.f32 0.0, %v2774
      %v2776 = vpop.f32.mrb[0].mxu0
      %2777 = vmatprep.mubr.bf16.mxu0 0
      %2778 = vmatmul.mubr.bf16.gmra.mrb[0].mxu0 %v2644
      %v2779 = vpop.f32.mrb[0].mxu0
      %v2780 = vadd.f32 0.0, %v2779
      %v2781 = vpop.f32.mrb[0].mxu0
      %v2782 = vpop.f32.mrb[0].mxu0
      %v2783 = vadd.f32 0.0, %v2782
      %v2784 = vpop.f32.mrb[0].mxu0
      %2785 = vmatprep.mubr.bf16.mxu0 0
      %2786 = vmatmul.mubr.bf16.gmra.mrb[0].mxu0 %v2647
      %v2787 = vpop.f32.mrb[0].mxu0
      %v2788 = vadd.f32 0.0, %v2787
      %v2789 = vpop.f32.mrb[0].mxu0
      %v2790 = vpop.f32.mrb[0].mxu0
      %v2791 = vadd.f32 0.0, %v2790
      %v2792 = vpop.f32.mrb[0].mxu0
      %2793 = vmatprep.mubr.bf16.mxu0 0
      %2794 = vmatmul.mubr.bf16.gmra.mrb[0].mxu0 %v2650
      %v2795 = vpop.f32.mrb[0].mxu0
      %v2796 = vadd.f32 0.0, %v2795
      %v2797 = vpop.f32.mrb[0].mxu0
      %v2798 = vpop.f32.mrb[0].mxu0
      %v2799 = vadd.f32 0.0, %v2798
      %v2800 = vpop.f32.mrb[0].mxu0
      %2801 = vmatprep.mubr.bf16.mxu0 0
      %2802 = vmatmul.mubr.bf16.gmra.mrb[0].mxu0 %v2653
      %v2803 = vpop.f32.mrb[0].mxu0
      %v2804 = vadd.f32 0.0, %v2803
      %v2805 = vpop.f32.mrb[0].mxu0
      %v2806 = vpop.f32.mrb[0].mxu0
      %v2807 = vadd.f32 0.0, %v2806
      %v2808 = vpop.f32.mrb[0].mxu0
      %2809 = vmatprep.mubr.bf16.mxu0 0
      %2810 = vmatmul.mubr.bf16.gmra.mrb[0].mxu0 %v2656
      %v2811 = vpop.f32.mrb[0].mxu0
      %v2812 = vadd.f32 0.0, %v2811
      %v2813 = vpop.f32.mrb[0].mxu0
      %v2814 = vpop.f32.mrb[0].mxu0
      %v2815 = vadd.f32 0.0, %v2814
      %v2816 = vpop.f32.mrb[0].mxu0
      %2817 = vmatprep.mubr.bf16.mxu0 0
      %2818 = vmatmul.mubr.bf16.gmra.mrb[0].mxu0 %v2659
      %v2819 = vpop.f32.mrb[0].mxu0
      %v2820 = vadd.f32 0.0, %v2819
      %v2821 = vpop.f32.mrb[0].mxu0
      %v2822 = vpop.f32.mrb[0].mxu0
      %v2823 = vadd.f32 0.0, %v2822
      %v2824 = vpop.f32.mrb[0].mxu0
      %2825 = vmatprep.mubr.bf16.mxu0 0
      %2826 = vmatmul.mubr.bf16.gmra.mrb[0].mxu0 %v2662
      %v2827 = vpop.f32.mrb[0].mxu0
      %v2828 = vadd.f32 0.0, %v2827
      %v2829 = vpop.f32.mrb[0].mxu0
      %v2830 = vpop.f32.mrb[0].mxu0
      %v2831 = vadd.f32 0.0, %v2830
      %v2832 = vpop.f32.mrb[0].mxu0
      %2833 = vmatprep.mubr.bf16.mxu0 0
      %2834 = vmatmul.mubr.bf16.gmra.mrb[0].mxu0 %v2665
      %v2835 = vpop.f32.mrb[0].mxu0
      %v2836 = vadd.f32 0.0, %v2835
      %v2837 = vpop.f32.mrb[0].mxu0
      %v2838 = vpop.f32.mrb[0].mxu0
      %v2839 = vadd.f32 0.0, %v2838
      %v2840 = vpop.f32.mrb[0].mxu0
      %2841 = vmatprep.mubr.bf16.mxu0 0
      %2842 = vmatmul.mubr.bf16.gmra.mrb[0].mxu0 %v2668
      %v2843 = vpop.f32.mrb[0].mxu0
      %v2844 = vadd.f32 0.0, %v2843
      %v2845 = vpop.f32.mrb[0].mxu0
      %v2846 = vpop.f32.mrb[0].mxu0
      %v2847 = vadd.f32 0.0, %v2846
      %v2848 = vpop.f32.mrb[0].mxu0
      %2849 = vdwg.mxu0
      %v2850 = vadd.f32 %v2411, %v2708
      %v2851 = vadd.f32 %v2412, %v2711
      %v2852 = vadd.f32 %v2413, %v2716
      %v2853 = vadd.f32 %v2414, %v2719
      %v2854 = vadd.f32 %v2415, %v2724
      %v2855 = vadd.f32 %v2416, %v2727
      %v2856 = vadd.f32 %v2417, %v2732
      %v2857 = vadd.f32 %v2418, %v2735
      %v2858 = vadd.f32 %v2419, %v2740
      %v2859 = vadd.f32 %v2420, %v2743
      %v2860 = vadd.f32 %v2421, %v2748
      %v2861 = vadd.f32 %v2422, %v2751
      %v2862 = vadd.f32 %v2423, %v2756
      %v2863 = vadd.f32 %v2424, %v2759
      %v2864 = vadd.f32 %v2425, %v2764
      %v2865 = vadd.f32 %v2426, %v2767
      %v2866 = vadd.f32 %v2427, %v2772
      %v2867 = vadd.f32 %v2428, %v2775
      %v2868 = vadd.f32 %v2429, %v2780
      %v2869 = vadd.f32 %v2430, %v2783
      %v2870 = vadd.f32 %v2431, %v2788
      %v2871 = vadd.f32 %v2432, %v2791
      %v2872 = vadd.f32 %v2433, %v2796
      %v2873 = vadd.f32 %v2434, %v2799
      %v2874 = vadd.f32 %v2435, %v2804
      %v2875 = vadd.f32 %v2436, %v2807
      %v2876 = vadd.f32 %v2437, %v2812
      %v2877 = vadd.f32 %v2438, %v2815
      %v2878 = vadd.f32 %v2439, %v2820
      %v2879 = vadd.f32 %v2440, %v2823
      %v2880 = vadd.f32 %v2441, %v2828
      %v2881 = vadd.f32 %v2442, %v2831
      %v2882 = vadd.f32 %v2443, %v2836
      %v2883 = vadd.f32 %v2444, %v2839
      %v2884 = vadd.f32 %v2445, %v2844
      %v2885 = vadd.f32 %v2446, %v2847
      %v2886 = vld [vmem:[%s192 + $0xa0] sm:$0x7]
      %s2887 = scalar_lea.vmem %s1, 14
      %v2888 = vld [vmem:[%s2887] sm:$0x3]
      %v2890 = vunpack.c.l.b16 %v2886
      %v2891 = vpack.c.b16 %v2890, %v2890
      %vm2892 = vsmask.f32 5376
      %v2894 = vshrl.u32 %v2560, 16
      %v2896 = vrot.slane %v2894, 2
      %v2897 = vshll.u32 %v2560, 16
      %v2899 = vrot.slane %v2897, 3
      %v2900 = vor.u32 %v2896, %v2899
      %v2902 = vshrl.u32 %v2561, 16
      %v2904 = vrot.slane %v2902, 2
      %v2905 = vshll.u32 %v2561, 16
      %v2907 = vrot.slane %v2905, 3
      %v2908 = vor.u32 %v2904, %v2907
      %v2909 = vsel %vm2892, %v2900, %v2908
      %v2911 = vshrl.u32 %v2562, 16
      %v2913 = vrot.slane %v2911, 2
      %v2914 = vshll.u32 %v2562, 16
      %v2916 = vrot.slane %v2914, 3
      %v2917 = vor.u32 %v2913, %v2916
      %v2918 = vsel %vm2892, %v2908, %v2917
      %v2920 = vshrl.u32 %v2563, 16
      %v2922 = vrot.slane %v2920, 2
      %v2923 = vshll.u32 %v2563, 16
      %v2925 = vrot.slane %v2923, 3
      %v2926 = vor.u32 %v2922, %v2925
      %v2927 = vsel %vm2892, %v2917, %v2926
      %v2929 = vshrl.u32 %v2564, 16
      %v2931 = vrot.slane %v2929, 2
      %v2932 = vshll.u32 %v2564, 16
      %v2934 = vrot.slane %v2932, 3
      %v2935 = vor.u32 %v2931, %v2934
      %v2936 = vsel %vm2892, %v2926, %v2935
      %v2938 = vshrl.u32 %v2565, 16
      %v2940 = vrot.slane %v2938, 2
      %v2941 = vshll.u32 %v2565, 16
      %v2943 = vrot.slane %v2941, 3
      %v2944 = vor.u32 %v2940, %v2943
      %v2945 = vsel %vm2892, %v2935, %v2944
      %v2947 = vshrl.u32 %v2566, 16
      %v2949 = vrot.slane %v2947, 2
      %v2950 = vshll.u32 %v2566, 16
      %v2952 = vrot.slane %v2950, 3
      %v2953 = vor.u32 %v2949, %v2952
      %v2954 = vsel %vm2892, %v2944, %v2953
      %v2956 = vshrl.u32 %v2567, 16
      %v2958 = vrot.slane %v2956, 2
      %v2959 = vshll.u32 %v2567, 16
      %v2961 = vrot.slane %v2959, 3
      %v2962 = vor.u32 %v2958, %v2961
      %v2963 = vsel %vm2892, %v2953, %v2962
      %v2965 = vshrl.u32 %v2568, 16
      %v2967 = vrot.slane %v2965, 2
      %v2968 = vshll.u32 %v2568, 16
      %v2970 = vrot.slane %v2968, 3
      %v2971 = vor.u32 %v2967, %v2970
      %v2972 = vsel %vm2892, %v2962, %v2971
      %v2974 = vshrl.u32 %v2569, 16
      %v2976 = vrot.slane %v2974, 2
      %v2977 = vshll.u32 %v2569, 16
      %v2979 = vrot.slane %v2977, 3
      %v2980 = vor.u32 %v2976, %v2979
      %v2981 = vsel %vm2892, %v2971, %v2980
      %v2983 = vshrl.u32 %v2570, 16
      %v2985 = vrot.slane %v2983, 2
      %v2986 = vshll.u32 %v2570, 16
      %v2988 = vrot.slane %v2986, 3
      %v2989 = vor.u32 %v2985, %v2988
      %v2990 = vsel %vm2892, %v2980, %v2989
      %v2992 = vshrl.u32 %v2571, 16
      %v2994 = vrot.slane %v2992, 2
      %v2995 = vshll.u32 %v2571, 16
      %v2997 = vrot.slane %v2995, 3
      %v2998 = vor.u32 %v2994, %v2997
      %v2999 = vsel %vm2892, %v2989, %v2998
      %v3001 = vshrl.u32 %v2572, 16
      %v3003 = vrot.slane %v3001, 2
      %v3004 = vshll.u32 %v2572, 16
      %v3006 = vrot.slane %v3004, 3
      %v3007 = vor.u32 %v3003, %v3006
      %v3008 = vsel %vm2892, %v2998, %v3007
      %v3010 = vshrl.u32 %v2573, 16
      %v3012 = vrot.slane %v3010, 2
      %v3013 = vshll.u32 %v2573, 16
      %v3015 = vrot.slane %v3013, 3
      %v3016 = vor.u32 %v3012, %v3015
      %v3017 = vsel %vm2892, %v3007, %v3016
      %v3019 = vshrl.u32 %v2574, 16
      %v3021 = vrot.slane %v3019, 2
      %v3022 = vshll.u32 %v2574, 16
      %v3024 = vrot.slane %v3022, 3
      %v3025 = vor.u32 %v3021, %v3024
      %v3026 = vsel %vm2892, %v3016, %v3025
      %v3028 = vshrl.u32 %v2575, 16
      %v3030 = vrot.slane %v3028, 2
      %v3031 = vshll.u32 %v2575, 16
      %v3033 = vrot.slane %v3031, 3
      %v3034 = vor.u32 %v3030, %v3033
      %v3035 = vsel %vm2892, %v3025, %v3034
      %v3037 = vshrl.u32 %v2576, 16
      %v3039 = vrot.slane %v3037, 2
      %v3040 = vshll.u32 %v2576, 16
      %v3042 = vrot.slane %v3040, 3
      %v3043 = vor.u32 %v3039, %v3042
      %v3044 = vsel %vm2892, %v3034, %v3043
      %v3046 = vshrl.u32 %v2577, 16
      %v3048 = vrot.slane %v3046, 2
      %v3049 = vshll.u32 %v2577, 16
      %v3051 = vrot.slane %v3049, 3
      %v3052 = vor.u32 %v3048, %v3051
      %v3053 = vsel %vm2892, %v3043, %v3052
      %v3055 = vshrl.u32 %v2891, 16
      %v3057 = vrot.slane %v3055, 2
      %v3058 = vshll.u32 %v2891, 16
      %v3060 = vrot.slane %v3058, 3
      %v3061 = vor.u32 %v3057, %v3060
      %v3062 = vsel %vm2892, %v3052, %v3061
      %v3064 = vsel %vm481, %v2909, 0
      %v3067 = vsel %vm481, %v2918, 0
      %v3070 = vsel %vm481, %v2927, 0
      %v3073 = vsel %vm481, %v2936, 0
      %v3076 = vsel %vm481, %v2945, 0
      %v3079 = vsel %vm481, %v2954, 0
      %v3082 = vsel %vm481, %v2963, 0
      %v3085 = vsel %vm481, %v2972, 0
      %v3088 = vsel %vm481, %v2981, 0
      %v3091 = vsel %vm481, %v2990, 0
      %v3094 = vsel %vm481, %v2999, 0
      %v3097 = vsel %vm481, %v3008, 0
      %v3100 = vsel %vm481, %v3017, 0
      %v3103 = vsel %vm481, %v3026, 0
      %v3106 = vsel %vm481, %v3035, 0
      %v3109 = vsel %vm481, %v3044, 0
      %v3112 = vsel %vm481, %v3053, 0
      %v3115 = vsel %vm481, %v3062, 0
      %v3118 = vsel %vm536, %v2888, 0
      %3120 = vmatprep.subr.bf16.mxu0 0
      %3121 = vmatpush1.bf16.msra.mxu0 %v3118
      %3122 = vmatprep.subr.bf16.mxu0 0
      %3123 = vmatpush1.bf16.msra.mxu0 0
      %3124 = vmatprep.subr.bf16.mxu0 0
      %3125 = vmatpush1.bf16.msra.mxu0 0
      %3126 = vmatprep.subr.bf16.mxu0 0
      %3127 = vmatpush1.bf16.msra.mxu0 0
      %3128 = vmatprep.subr.bf16.mxu0 0
      %3129 = vmatpush1.bf16.msra.mxu0 0
      %3130 = vmatprep.subr.bf16.mxu0 0
      %3131 = vmatpush1.bf16.msra.mxu0 0
      %3132 = vmatprep.subr.bf16.mxu0 0
      %3133 = vmatpush1.bf16.msra.mxu0 0
      %3134 = vmatprep.subr.bf16.mxu0 0
      %3135 = vmatpush1.bf16.msra.mxu0 0
      %3136 = vmatprep.subr.bf16.mxu0 0
      %3137 = vmatpush1.bf16.msra.mxu0 0
      %3138 = vmatprep.subr.bf16.mxu0 0
      %3139 = vmatpush1.bf16.msra.mxu0 0
      %3140 = vmatprep.subr.bf16.mxu0 0
      %3141 = vmatpush1.bf16.msra.mxu0 0
      %3142 = vmatprep.subr.bf16.mxu0 0
      %3143 = vmatpush1.bf16.msra.mxu0 0
      %3144 = vmatprep.subr.bf16.mxu0 0
      %3145 = vmatpush1.bf16.msra.mxu0 0
      %3146 = vmatprep.subr.bf16.mxu0 0
      %3147 = vmatpush1.bf16.msra.mxu0 0
      %3148 = vmatprep.subr.bf16.mxu0 0
      %3149 = vmatpush1.bf16.msra.mxu0 0
      %3150 = vmatprep.subr.bf16.mxu0 0
      %3151 = vmatpush1.bf16.msra.mxu0 0
      %3152 = vmatprep.mubr.bf16.mxu0 0
      %3153 = vmatmul.mubr.bf16.gmra.mrb[0].mxu0 %v3064
      %v3154 = vpop.f32.mrb[0].mxu0
      %v3155 = vadd.f32 0.0, %v3154
      %v3156 = vpop.f32.mrb[0].mxu0
      %v3157 = vpop.f32.mrb[0].mxu0
      %v3158 = vadd.f32 0.0, %v3157
      %v3159 = vpop.f32.mrb[0].mxu0
      %3160 = vmatprep.mubr.bf16.mxu0 0
      %3161 = vmatmul.mubr.bf16.gmra.mrb[0].mxu0 %v3067
      %v3162 = vpop.f32.mrb[0].mxu0
      %v3163 = vadd.f32 0.0, %v3162
      %v3164 = vpop.f32.mrb[0].mxu0
      %v3165 = vpop.f32.mrb[0].mxu0
      %v3166 = vadd.f32 0.0, %v3165
      %v3167 = vpop.f32.mrb[0].mxu0
      %3168 = vmatprep.mubr.bf16.mxu0 0
      %3169 = vmatmul.mubr.bf16.gmra.mrb[0].mxu0 %v3070
      %v3170 = vpop.f32.mrb[0].mxu0
      %v3171 = vadd.f32 0.0, %v3170
      %v3172 = vpop.f32.mrb[0].mxu0
      %v3173 = vpop.f32.mrb[0].mxu0
      %v3174 = vadd.f32 0.0, %v3173
      %v3175 = vpop.f32.mrb[0].mxu0
      %3176 = vmatprep.mubr.bf16.mxu0 0
      %3177 = vmatmul.mubr.bf16.gmra.mrb[0].mxu0 %v3073
      %v3178 = vpop.f32.mrb[0].mxu0
      %v3179 = vadd.f32 0.0, %v3178
      %v3180 = vpop.f32.mrb[0].mxu0
      %v3181 = vpop.f32.mrb[0].mxu0
      %v3182 = vadd.f32 0.0, %v3181
      %v3183 = vpop.f32.mrb[0].mxu0
      %3184 = vmatprep.mubr.bf16.mxu0 0
      %3185 = vmatmul.mubr.bf16.gmra.mrb[0].mxu0 %v3076
      %v3186 = vpop.f32.mrb[0].mxu0
      %v3187 = vadd.f32 0.0, %v3186
      %v3188 = vpop.f32.mrb[0].mxu0
      %v3189 = vpop.f32.mrb[0].mxu0
      %v3190 = vadd.f32 0.0, %v3189
      %v3191 = vpop.f32.mrb[0].mxu0
      %3192 = vmatprep.mubr.bf16.mxu0 0
      %3193 = vmatmul.mubr.bf16.gmra.mrb[0].mxu0 %v3079
      %v3194 = vpop.f32.mrb[0].mxu0
      %v3195 = vadd.f32 0.0, %v3194
      %v3196 = vpop.f32.mrb[0].mxu0
      %v3197 = vpop.f32.mrb[0].mxu0
      %v3198 = vadd.f32 0.0, %v3197
      %v3199 = vpop.f32.mrb[0].mxu0
      %3200 = vmatprep.mubr.bf16.mxu0 0
      %3201 = vmatmul.mubr.bf16.gmra.mrb[0].mxu0 %v3082
      %v3202 = vpop.f32.mrb[0].mxu0
      %v3203 = vadd.f32 0.0, %v3202
      %v3204 = vpop.f32.mrb[0].mxu0
      %v3205 = vpop.f32.mrb[0].mxu0
      %v3206 = vadd.f32 0.0, %v3205
      %v3207 = vpop.f32.mrb[0].mxu0
      %3208 = vmatprep.mubr.bf16.mxu0 0
      %3209 = vmatmul.mubr.bf16.gmra.mrb[0].mxu0 %v3085
      %v3210 = vpop.f32.mrb[0].mxu0
      %v3211 = vadd.f32 0.0, %v3210
      %v3212 = vpop.f32.mrb[0].mxu0
      %v3213 = vpop.f32.mrb[0].mxu0
      %v3214 = vadd.f32 0.0, %v3213
      %v3215 = vpop.f32.mrb[0].mxu0
      %3216 = vmatprep.mubr.bf16.mxu0 0
      %3217 = vmatmul.mubr.bf16.gmra.mrb[0].mxu0 %v3088
      %v3218 = vpop.f32.mrb[0].mxu0
      %v3219 = vadd.f32 0.0, %v3218
      %v3220 = vpop.f32.mrb[0].mxu0
      %v3221 = vpop.f32.mrb[0].mxu0
      %v3222 = vadd.f32 0.0, %v3221
      %v3223 = vpop.f32.mrb[0].mxu0
      %3224 = vmatprep.mubr.bf16.mxu0 0
      %3225 = vmatmul.mubr.bf16.gmra.mrb[0].mxu0 %v3091
      %v3226 = vpop.f32.mrb[0].mxu0
      %v3227 = vadd.f32 0.0, %v3226
      %v3228 = vpop.f32.mrb[0].mxu0
      %v3229 = vpop.f32.mrb[0].mxu0
      %v3230 = vadd.f32 0.0, %v3229
      %v3231 = vpop.f32.mrb[0].mxu0
      %3232 = vmatprep.mubr.bf16.mxu0 0
      %3233 = vmatmul.mubr.bf16.gmra.mrb[0].mxu0 %v3094
      %v3234 = vpop.f32.mrb[0].mxu0
      %v3235 = vadd.f32 0.0, %v3234
      %v3236 = vpop.f32.mrb[0].mxu0
      %v3237 = vpop.f32.mrb[0].mxu0
      %v3238 = vadd.f32 0.0, %v3237
      %v3239 = vpop.f32.mrb[0].mxu0
      %3240 = vmatprep.mubr.bf16.mxu0 0
      %3241 = vmatmul.mubr.bf16.gmra.mrb[0].mxu0 %v3097
      %v3242 = vpop.f32.mrb[0].mxu0
      %v3243 = vadd.f32 0.0, %v3242
      %v3244 = vpop.f32.mrb[0].mxu0
      %v3245 = vpop.f32.mrb[0].mxu0
      %v3246 = vadd.f32 0.0, %v3245
      %v3247 = vpop.f32.mrb[0].mxu0
      %3248 = vmatprep.mubr.bf16.mxu0 0
      %3249 = vmatmul.mubr.bf16.gmra.mrb[0].mxu0 %v3100
      %v3250 = vpop.f32.mrb[0].mxu0
      %v3251 = vadd.f32 0.0, %v3250
      %v3252 = vpop.f32.mrb[0].mxu0
      %v3253 = vpop.f32.mrb[0].mxu0
      %v3254 = vadd.f32 0.0, %v3253
      %v3255 = vpop.f32.mrb[0].mxu0
      %3256 = vmatprep.mubr.bf16.mxu0 0
      %3257 = vmatmul.mubr.bf16.gmra.mrb[0].mxu0 %v3103
      %v3258 = vpop.f32.mrb[0].mxu0
      %v3259 = vadd.f32 0.0, %v3258
      %v3260 = vpop.f32.mrb[0].mxu0
      %v3261 = vpop.f32.mrb[0].mxu0
      %v3262 = vadd.f32 0.0, %v3261
      %v3263 = vpop.f32.mrb[0].mxu0
      %3264 = vmatprep.mubr.bf16.mxu0 0
      %3265 = vmatmul.mubr.bf16.gmra.mrb[0].mxu0 %v3106
      %v3266 = vpop.f32.mrb[0].mxu0
      %v3267 = vadd.f32 0.0, %v3266
      %v3268 = vpop.f32.mrb[0].mxu0
      %v3269 = vpop.f32.mrb[0].mxu0
      %v3270 = vadd.f32 0.0, %v3269
      %v3271 = vpop.f32.mrb[0].mxu0
      %3272 = vmatprep.mubr.bf16.mxu0 0
      %3273 = vmatmul.mubr.bf16.gmra.mrb[0].mxu0 %v3109
      %v3274 = vpop.f32.mrb[0].mxu0
      %v3275 = vadd.f32 0.0, %v3274
      %v3276 = vpop.f32.mrb[0].mxu0
      %v3277 = vpop.f32.mrb[0].mxu0
      %v3278 = vadd.f32 0.0, %v3277
      %v3279 = vpop.f32.mrb[0].mxu0
      %3280 = vmatprep.mubr.bf16.mxu0 0
      %3281 = vmatmul.mubr.bf16.gmra.mrb[0].mxu0 %v3112
      %v3282 = vpop.f32.mrb[0].mxu0
      %v3283 = vadd.f32 0.0, %v3282
      %v3284 = vpop.f32.mrb[0].mxu0
      %v3285 = vpop.f32.mrb[0].mxu0
      %v3286 = vadd.f32 0.0, %v3285
      %v3287 = vpop.f32.mrb[0].mxu0
      %3288 = vmatprep.mubr.bf16.mxu0 0
      %3289 = vmatmul.mubr.bf16.gmra.mrb[0].mxu0 %v3115
      %v3290 = vpop.f32.mrb[0].mxu0
      %v3291 = vadd.f32 0.0, %v3290
      %v3292 = vpop.f32.mrb[0].mxu0
      %v3293 = vpop.f32.mrb[0].mxu0
      %v3294 = vadd.f32 0.0, %v3293
      %v3295 = vpop.f32.mrb[0].mxu0
      %3296 = vdwg.mxu0
      %v3297 = vadd.f32 %v2850, %v3155
      %v3298 = vadd.f32 %v2851, %v3158
      %v3299 = vadd.f32 %v2852, %v3163
      %v3300 = vadd.f32 %v2853, %v3166
      %v3301 = vadd.f32 %v2854, %v3171
      %v3302 = vadd.f32 %v2855, %v3174
      %v3303 = vadd.f32 %v2856, %v3179
      %v3304 = vadd.f32 %v2857, %v3182
      %v3305 = vadd.f32 %v2858, %v3187
      %v3306 = vadd.f32 %v2859, %v3190
      %v3307 = vadd.f32 %v2860, %v3195
      %v3308 = vadd.f32 %v2861, %v3198
      %v3309 = vadd.f32 %v2862, %v3203
      %v3310 = vadd.f32 %v2863, %v3206
      %v3311 = vadd.f32 %v2864, %v3211
      %v3312 = vadd.f32 %v2865, %v3214
      %v3313 = vadd.f32 %v2866, %v3219
      %v3314 = vadd.f32 %v2867, %v3222
      %v3315 = vadd.f32 %v2868, %v3227
      %v3316 = vadd.f32 %v2869, %v3230
      %v3317 = vadd.f32 %v2870, %v3235
      %v3318 = vadd.f32 %v2871, %v3238
      %v3319 = vadd.f32 %v2872, %v3243
      %v3320 = vadd.f32 %v2873, %v3246
      %v3321 = vadd.f32 %v2874, %v3251
      %v3322 = vadd.f32 %v2875, %v3254
      %v3323 = vadd.f32 %v2876, %v3259
      %v3324 = vadd.f32 %v2877, %v3262
      %v3325 = vadd.f32 %v2878, %v3267
      %v3326 = vadd.f32 %v2879, %v3270
      %v3327 = vadd.f32 %v2880, %v3275
      %v3328 = vadd.f32 %v2881, %v3278
      %v3329 = vadd.f32 %v2882, %v3283
      %v3330 = vadd.f32 %v2883, %v3286
      %v3331 = vadd.f32 %v2884, %v3291
      %v3332 = vadd.f32 %v2885, %v3294
      %v3333 = vld [vmem:[%s192 + $0x10] sm:$0x8]
      %s3334 = scalar_lea.vmem %s1, 16
      %v3335 = vld [vmem:[%s3334] sm:$0x3]
      %v3337 = vunpack.c.l.b16 %v3333
      %v3338 = vpack.c.b16 %v2524, %v3337
      %vm3339 = vcmask 1044480
      %v3340 = vrot.slane %v3338, 3
      %v3341 = vrot.slane %v2561, 3
      %v3342 = vsel %vm3339, %v3340, %v3341
      %v3343 = vrot.slane %v2562, 3
      %v3344 = vsel %vm3339, %v3341, %v3343
      %v3345 = vrot.slane %v2563, 3
      %v3346 = vsel %vm3339, %v3343, %v3345
      %v3347 = vrot.slane %v2564, 3
      %v3348 = vsel %vm3339, %v3345, %v3347
      %v3349 = vrot.slane %v2565, 3
      %v3350 = vsel %vm3339, %v3347, %v3349
      %v3351 = vrot.slane %v2566, 3
      %v3352 = vsel %vm3339, %v3349, %v3351
      %v3353 = vrot.slane %v2567, 3
      %v3354 = vsel %vm3339, %v3351, %v3353
      %v3355 = vrot.slane %v2568, 3
      %v3356 = vsel %vm3339, %v3353, %v3355
      %v3357 = vrot.slane %v2569, 3
      %v3358 = vsel %vm3339, %v3355, %v3357
      %v3359 = vrot.slane %v2570, 3
      %v3360 = vsel %vm3339, %v3357, %v3359
      %v3361 = vrot.slane %v2571, 3
      %v3362 = vsel %vm3339, %v3359, %v3361
      %v3363 = vrot.slane %v2572, 3
      %v3364 = vsel %vm3339, %v3361, %v3363
      %v3365 = vrot.slane %v2573, 3
      %v3366 = vsel %vm3339, %v3363, %v3365
      %v3367 = vrot.slane %v2574, 3
      %v3368 = vsel %vm3339, %v3365, %v3367
      %v3369 = vrot.slane %v2575, 3
      %v3370 = vsel %vm3339, %v3367, %v3369
      %v3371 = vrot.slane %v2576, 3
      %v3372 = vsel %vm3339, %v3369, %v3371
      %v3373 = vrot.slane %v2577, 3
      %v3374 = vsel %vm3339, %v3371, %v3373
      %v3375 = vrot.slane %v2891, 3
      %v3376 = vsel %vm3339, %v3373, %v3375
      %v3378 = vsel %vm481, %v3342, 0
      %v3381 = vsel %vm481, %v3344, 0
      %v3384 = vsel %vm481, %v3346, 0
      %v3387 = vsel %vm481, %v3348, 0
      %v3390 = vsel %vm481, %v3350, 0
      %v3393 = vsel %vm481, %v3352, 0
      %v3396 = vsel %vm481, %v3354, 0
      %v3399 = vsel %vm481, %v3356, 0
      %v3402 = vsel %vm481, %v3358, 0
      %v3405 = vsel %vm481, %v3360, 0
      %v3408 = vsel %vm481, %v3362, 0
      %v3411 = vsel %vm481, %v3364, 0
      %v3414 = vsel %vm481, %v3366, 0
      %v3417 = vsel %vm481, %v3368, 0
      %v3420 = vsel %vm481, %v3370, 0
      %v3423 = vsel %vm481, %v3372, 0
      %v3426 = vsel %vm481, %v3374, 0
      %v3429 = vsel %vm481, %v3376, 0
      %v3432 = vsel %vm536, %v3335, 0
      %3434 = vmatprep.subr.bf16.mxu0 0
      %3435 = vmatpush1.bf16.msra.mxu0 %v3432
      %3436 = vmatprep.subr.bf16.mxu0 0
      %3437 = vmatpush1.bf16.msra.mxu0 0
      %3438 = vmatprep.subr.bf16.mxu0 0
      %3439 = vmatpush1.bf16.msra.mxu0 0
      %3440 = vmatprep.subr.bf16.mxu0 0
      %3441 = vmatpush1.bf16.msra.mxu0 0
      %3442 = vmatprep.subr.bf16.mxu0 0
      %3443 = vmatpush1.bf16.msra.mxu0 0
      %3444 = vmatprep.subr.bf16.mxu0 0
      %3445 = vmatpush1.bf16.msra.mxu0 0
      %3446 = vmatprep.subr.bf16.mxu0 0
      %3447 = vmatpush1.bf16.msra.mxu0 0
      %3448 = vmatprep.subr.bf16.mxu0 0
      %3449 = vmatpush1.bf16.msra.mxu0 0
      %3450 = vmatprep.subr.bf16.mxu0 0
      %3451 = vmatpush1.bf16.msra.mxu0 0
      %3452 = vmatprep.subr.bf16.mxu0 0
      %3453 = vmatpush1.bf16.msra.mxu0 0
      %3454 = vmatprep.subr.bf16.mxu0 0
      %3455 = vmatpush1.bf16.msra.mxu0 0
      %3456 = vmatprep.subr.bf16.mxu0 0
      %3457 = vmatpush1.bf16.msra.mxu0 0
      %3458 = vmatprep.subr.bf16.mxu0 0
      %3459 = vmatpush1.bf16.msra.mxu0 0
      %3460 = vmatprep.subr.bf16.mxu0 0
      %3461 = vmatpush1.bf16.msra.mxu0 0
      %3462 = vmatprep.subr.bf16.mxu0 0
      %3463 = vmatpush1.bf16.msra.mxu0 0
      %3464 = vmatprep.subr.bf16.mxu0 0
      %3465 = vmatpush1.bf16.msra.mxu0 0
      %3466 = vmatprep.mubr.bf16.mxu0 0
      %3467 = vmatmul.mubr.bf16.gmra.mrb[0].mxu0 %v3378
      %v3468 = vpop.f32.mrb[0].mxu0
      %v3469 = vadd.f32 0.0, %v3468
      %v3470 = vpop.f32.mrb[0].mxu0
      %v3471 = vpop.f32.mrb[0].mxu0
      %v3472 = vadd.f32 0.0, %v3471
      %v3473 = vpop.f32.mrb[0].mxu0
      %3474 = vmatprep.mubr.bf16.mxu0 0
      %3475 = vmatmul.mubr.bf16.gmra.mrb[0].mxu0 %v3381
      %v3476 = vpop.f32.mrb[0].mxu0
      %v3477 = vadd.f32 0.0, %v3476
      %v3478 = vpop.f32.mrb[0].mxu0
      %v3479 = vpop.f32.mrb[0].mxu0
      %v3480 = vadd.f32 0.0, %v3479
      %v3481 = vpop.f32.mrb[0].mxu0
      %3482 = vmatprep.mubr.bf16.mxu0 0
      %3483 = vmatmul.mubr.bf16.gmra.mrb[0].mxu0 %v3384
      %v3484 = vpop.f32.mrb[0].mxu0
      %v3485 = vadd.f32 0.0, %v3484
      %v3486 = vpop.f32.mrb[0].mxu0
      %v3487 = vpop.f32.mrb[0].mxu0
      %v3488 = vadd.f32 0.0, %v3487
      %v3489 = vpop.f32.mrb[0].mxu0
      %3490 = vmatprep.mubr.bf16.mxu0 0
      %3491 = vmatmul.mubr.bf16.gmra.mrb[0].mxu0 %v3387
      %v3492 = vpop.f32.mrb[0].mxu0
      %v3493 = vadd.f32 0.0, %v3492
      %v3494 = vpop.f32.mrb[0].mxu0
      %v3495 = vpop.f32.mrb[0].mxu0
      %v3496 = vadd.f32 0.0, %v3495
      %v3497 = vpop.f32.mrb[0].mxu0
      %3498 = vmatprep.mubr.bf16.mxu0 0
      %3499 = vmatmul.mubr.bf16.gmra.mrb[0].mxu0 %v3390
      %v3500 = vpop.f32.mrb[0].mxu0
      %v3501 = vadd.f32 0.0, %v3500
      %v3502 = vpop.f32.mrb[0].mxu0
      %v3503 = vpop.f32.mrb[0].mxu0
      %v3504 = vadd.f32 0.0, %v3503
      %v3505 = vpop.f32.mrb[0].mxu0
      %3506 = vmatprep.mubr.bf16.mxu0 0
      %3507 = vmatmul.mubr.bf16.gmra.mrb[0].mxu0 %v3393
      %v3508 = vpop.f32.mrb[0].mxu0
      %v3509 = vadd.f32 0.0, %v3508
      %v3510 = vpop.f32.mrb[0].mxu0
      %v3511 = vpop.f32.mrb[0].mxu0
      %v3512 = vadd.f32 0.0, %v3511
      %v3513 = vpop.f32.mrb[0].mxu0
      %3514 = vmatprep.mubr.bf16.mxu0 0
      %3515 = vmatmul.mubr.bf16.gmra.mrb[0].mxu0 %v3396
      %v3516 = vpop.f32.mrb[0].mxu0
      %v3517 = vadd.f32 0.0, %v3516
      %v3518 = vpop.f32.mrb[0].mxu0
      %v3519 = vpop.f32.mrb[0].mxu0
      %v3520 = vadd.f32 0.0, %v3519
      %v3521 = vpop.f32.mrb[0].mxu0
      %3522 = vmatprep.mubr.bf16.mxu0 0
      %3523 = vmatmul.mubr.bf16.gmra.mrb[0].mxu0 %v3399
      %v3524 = vpop.f32.mrb[0].mxu0
      %v3525 = vadd.f32 0.0, %v3524
      %v3526 = vpop.f32.mrb[0].mxu0
      %v3527 = vpop.f32.mrb[0].mxu0
      %v3528 = vadd.f32 0.0, %v3527
      %v3529 = vpop.f32.mrb[0].mxu0
      %3530 = vmatprep.mubr.bf16.mxu0 0
      %3531 = vmatmul.mubr.bf16.gmra.mrb[0].mxu0 %v3402
      %v3532 = vpop.f32.mrb[0].mxu0
      %v3533 = vadd.f32 0.0, %v3532
      %v3534 = vpop.f32.mrb[0].mxu0
      %v3535 = vpop.f32.mrb[0].mxu0
      %v3536 = vadd.f32 0.0, %v3535
      %v3537 = vpop.f32.mrb[0].mxu0
      %3538 = vmatprep.mubr.bf16.mxu0 0
      %3539 = vmatmul.mubr.bf16.gmra.mrb[0].mxu0 %v3405
      %v3540 = vpop.f32.mrb[0].mxu0
      %v3541 = vadd.f32 0.0, %v3540
      %v3542 = vpop.f32.mrb[0].mxu0
      %v3543 = vpop.f32.mrb[0].mxu0
      %v3544 = vadd.f32 0.0, %v3543
      %v3545 = vpop.f32.mrb[0].mxu0
      %3546 = vmatprep.mubr.bf16.mxu0 0
      %3547 = vmatmul.mubr.bf16.gmra.mrb[0].mxu0 %v3408
      %v3548 = vpop.f32.mrb[0].mxu0
      %v3549 = vadd.f32 0.0, %v3548
      %v3550 = vpop.f32.mrb[0].mxu0
      %v3551 = vpop.f32.mrb[0].mxu0
      %v3552 = vadd.f32 0.0, %v3551
      %v3553 = vpop.f32.mrb[0].mxu0
      %3554 = vmatprep.mubr.bf16.mxu0 0
      %3555 = vmatmul.mubr.bf16.gmra.mrb[0].mxu0 %v3411
      %v3556 = vpop.f32.mrb[0].mxu0
      %v3557 = vadd.f32 0.0, %v3556
      %v3558 = vpop.f32.mrb[0].mxu0
      %v3559 = vpop.f32.mrb[0].mxu0
      %v3560 = vadd.f32 0.0, %v3559
      %v3561 = vpop.f32.mrb[0].mxu0
      %3562 = vmatprep.mubr.bf16.mxu0 0
      %3563 = vmatmul.mubr.bf16.gmra.mrb[0].mxu0 %v3414
      %v3564 = vpop.f32.mrb[0].mxu0
      %v3565 = vadd.f32 0.0, %v3564
      %v3566 = vpop.f32.mrb[0].mxu0
      %v3567 = vpop.f32.mrb[0].mxu0
      %v3568 = vadd.f32 0.0, %v3567
      %v3569 = vpop.f32.mrb[0].mxu0
      %3570 = vmatprep.mubr.bf16.mxu0 0
      %3571 = vmatmul.mubr.bf16.gmra.mrb[0].mxu0 %v3417
      %v3572 = vpop.f32.mrb[0].mxu0
      %v3573 = vadd.f32 0.0, %v3572
      %v3574 = vpop.f32.mrb[0].mxu0
      %v3575 = vpop.f32.mrb[0].mxu0
      %v3576 = vadd.f32 0.0, %v3575
      %v3577 = vpop.f32.mrb[0].mxu0
      %3578 = vmatprep.mubr.bf16.mxu0 0
      %3579 = vmatmul.mubr.bf16.gmra.mrb[0].mxu0 %v3420
      %v3580 = vpop.f32.mrb[0].mxu0
      %v3581 = vadd.f32 0.0, %v3580
      %v3582 = vpop.f32.mrb[0].mxu0
      %v3583 = vpop.f32.mrb[0].mxu0
      %v3584 = vadd.f32 0.0, %v3583
      %v3585 = vpop.f32.mrb[0].mxu0
      %3586 = vmatprep.mubr.bf16.mxu0 0
      %3587 = vmatmul.mubr.bf16.gmra.mrb[0].mxu0 %v3423
      %v3588 = vpop.f32.mrb[0].mxu0
      %v3589 = vadd.f32 0.0, %v3588
      %v3590 = vpop.f32.mrb[0].mxu0
      %v3591 = vpop.f32.mrb[0].mxu0
      %v3592 = vadd.f32 0.0, %v3591
      %v3593 = vpop.f32.mrb[0].mxu0
      %3594 = vmatprep.mubr.bf16.mxu0 0
      %3595 = vmatmul.mubr.bf16.gmra.mrb[0].mxu0 %v3426
      %v3596 = vpop.f32.mrb[0].mxu0
      %v3597 = vadd.f32 0.0, %v3596
      %v3598 = vpop.f32.mrb[0].mxu0
      %v3599 = vpop.f32.mrb[0].mxu0
      %v3600 = vadd.f32 0.0, %v3599
      %v3601 = vpop.f32.mrb[0].mxu0
      %3602 = vmatprep.mubr.bf16.mxu0 0
      %3603 = vmatmul.mubr.bf16.gmra.mrb[0].mxu0 %v3429
      %v3604 = vpop.f32.mrb[0].mxu0
      %v3605 = vadd.f32 0.0, %v3604
      %v3606 = vpop.f32.mrb[0].mxu0
      %v3607 = vpop.f32.mrb[0].mxu0
      %v3608 = vadd.f32 0.0, %v3607
      %v3609 = vpop.f32.mrb[0].mxu0
      %3610 = vdwg.mxu0
      %v3611 = vadd.f32 %v3297, %v3469
      %v3612 = vadd.f32 %v3298, %v3472
      %v3613 = vadd.f32 %v3299, %v3477
      %v3614 = vadd.f32 %v3300, %v3480
      %v3615 = vadd.f32 %v3301, %v3485
      %v3616 = vadd.f32 %v3302, %v3488
      %v3617 = vadd.f32 %v3303, %v3493
      %v3618 = vadd.f32 %v3304, %v3496
      %v3619 = vadd.f32 %v3305, %v3501
      %v3620 = vadd.f32 %v3306, %v3504
      %v3621 = vadd.f32 %v3307, %v3509
      %v3622 = vadd.f32 %v3308, %v3512
      %v3623 = vadd.f32 %v3309, %v3517
      %v3624 = vadd.f32 %v3310, %v3520
      %v3625 = vadd.f32 %v3311, %v3525
      %v3626 = vadd.f32 %v3312, %v3528
      %v3627 = vadd.f32 %v3313, %v3533
      %v3628 = vadd.f32 %v3314, %v3536
      %v3629 = vadd.f32 %v3315, %v3541
      %v3630 = vadd.f32 %v3316, %v3544
      %v3631 = vadd.f32 %v3317, %v3549
      %v3632 = vadd.f32 %v3318, %v3552
      %v3633 = vadd.f32 %v3319, %v3557
      %v3634 = vadd.f32 %v3320, %v3560
      %v3635 = vadd.f32 %v3321, %v3565
      %v3636 = vadd.f32 %v3322, %v3568
      %v3637 = vadd.f32 %v3323, %v3573
      %v3638 = vadd.f32 %v3324, %v3576
      %v3639 = vadd.f32 %v3325, %v3581
      %v3640 = vadd.f32 %v3326, %v3584
      %v3641 = vadd.f32 %v3327, %v3589
      %v3642 = vadd.f32 %v3328, %v3592
      %v3643 = vadd.f32 %v3329, %v3597
      %v3644 = vadd.f32 %v3330, %v3600
      %v3645 = vadd.f32 %v3331, %v3605
      %v3646 = vadd.f32 %v3332, %v3608
      %v3647 = vld [vmem:[%s2] sm:$0x1]
      %v3649 = vlaneseq
      %v3650 = vshrl.u32 %v3649, 7
      %v3651 = vsub.s32 0, %v3650
      %v3652 = vrot.slane %v3647, %v3651
      %v3654 = vmul.f32 %v3611, %v3652
      %v3655 = vmul.f32 %v3612, %v3652
      %v3656 = vmul.f32 %v3613, %v3652
      %v3657 = vmul.f32 %v3614, %v3652
      %v3658 = vmul.f32 %v3615, %v3652
      %v3659 = vmul.f32 %v3616, %v3652
      %v3660 = vmul.f32 %v3617, %v3652
      %v3661 = vmul.f32 %v3618, %v3652
      %v3662 = vmul.f32 %v3619, %v3652
      %v3663 = vmul.f32 %v3620, %v3652
      %v3664 = vmul.f32 %v3621, %v3652
      %v3665 = vmul.f32 %v3622, %v3652
      %v3666 = vmul.f32 %v3623, %v3652
      %v3667 = vmul.f32 %v3624, %v3652
      %v3668 = vmul.f32 %v3625, %v3652
      %v3669 = vmul.f32 %v3626, %v3652
      %v3670 = vmul.f32 %v3627, %v3652
      %v3671 = vmul.f32 %v3628, %v3652
      %v3672 = vmul.f32 %v3629, %v3652
      %v3673 = vmul.f32 %v3630, %v3652
      %v3674 = vmul.f32 %v3631, %v3652
      %v3675 = vmul.f32 %v3632, %v3652
      %v3676 = vmul.f32 %v3633, %v3652
      %v3677 = vmul.f32 %v3634, %v3652
      %v3678 = vmul.f32 %v3635, %v3652
      %v3679 = vmul.f32 %v3636, %v3652
      %v3680 = vmul.f32 %v3637, %v3652
      %v3681 = vmul.f32 %v3638, %v3652
      %v3682 = vmul.f32 %v3639, %v3652
      %v3683 = vmul.f32 %v3640, %v3652
      %v3684 = vmul.f32 %v3641, %v3652
      %v3685 = vmul.f32 %v3642, %v3652
      %v3686 = vmul.f32 %v3643, %v3652
      %v3687 = vmul.f32 %v3644, %v3652
      %v3688 = vmul.f32 %v3645, %v3652
      %v3689 = vmul.f32 %v3646, %v3652
      %v3690 = vld [vmem:[%s3] sm:$0x1]
      %v3692 = vlaneseq
      %v3693 = vshrl.u32 %v3692, 7
      %v3694 = vsub.s32 0, %v3693
      %v3695 = vrot.slane %v3690, %v3694
      %v3697 = vadd.f32 %v3654, %v3695
      %v3698 = vadd.f32 %v3655, %v3695
      %v3699 = vadd.f32 %v3656, %v3695
      %v3700 = vadd.f32 %v3657, %v3695
      %v3701 = vadd.f32 %v3658, %v3695
      %v3702 = vadd.f32 %v3659, %v3695
      %v3703 = vadd.f32 %v3660, %v3695
      %v3704 = vadd.f32 %v3661, %v3695
      %v3705 = vadd.f32 %v3662, %v3695
      %v3706 = vadd.f32 %v3663, %v3695
      %v3707 = vadd.f32 %v3664, %v3695
      %v3708 = vadd.f32 %v3665, %v3695
      %v3709 = vadd.f32 %v3666, %v3695
      %v3710 = vadd.f32 %v3667, %v3695
      %v3711 = vadd.f32 %v3668, %v3695
      %v3712 = vadd.f32 %v3669, %v3695
      %v3713 = vadd.f32 %v3670, %v3695
      %v3714 = vadd.f32 %v3671, %v3695
      %v3715 = vadd.f32 %v3672, %v3695
      %v3716 = vadd.f32 %v3673, %v3695
      %v3717 = vadd.f32 %v3674, %v3695
      %v3718 = vadd.f32 %v3675, %v3695
      %v3719 = vadd.f32 %v3676, %v3695
      %v3720 = vadd.f32 %v3677, %v3695
      %v3721 = vadd.f32 %v3678, %v3695
      %v3722 = vadd.f32 %v3679, %v3695
      %v3723 = vadd.f32 %v3680, %v3695
      %v3724 = vadd.f32 %v3681, %v3695
      %v3725 = vadd.f32 %v3682, %v3695
      %v3726 = vadd.f32 %v3683, %v3695
      %v3727 = vadd.f32 %v3684, %v3695
      %v3728 = vadd.f32 %v3685, %v3695
      %v3729 = vadd.f32 %v3686, %v3695
      %v3730 = vadd.f32 %v3687, %v3695
      %v3731 = vadd.f32 %v3688, %v3695
      %v3732 = vadd.f32 %v3689, %v3695
      %v3733 = vmax.f32 %v3697, 0.0
      %v3734 = vmax.f32 %v3698, 0.0
      %v3735 = vmax.f32 %v3699, 0.0
      %v3736 = vmax.f32 %v3700, 0.0
      %v3737 = vmax.f32 %v3701, 0.0
      %v3738 = vmax.f32 %v3702, 0.0
      %v3739 = vmax.f32 %v3703, 0.0
      %v3740 = vmax.f32 %v3704, 0.0
      %v3741 = vmax.f32 %v3705, 0.0
      %v3742 = vmax.f32 %v3706, 0.0
      %v3743 = vmax.f32 %v3707, 0.0
      %v3744 = vmax.f32 %v3708, 0.0
      %v3745 = vmax.f32 %v3709, 0.0
      %v3746 = vmax.f32 %v3710, 0.0
      %v3747 = vmax.f32 %v3711, 0.0
      %v3748 = vmax.f32 %v3712, 0.0
      %v3749 = vmax.f32 %v3713, 0.0
      %v3750 = vmax.f32 %v3714, 0.0
      %v3751 = vmax.f32 %v3715, 0.0
      %v3752 = vmax.f32 %v3716, 0.0
      %v3753 = vmax.f32 %v3717, 0.0
      %v3754 = vmax.f32 %v3718, 0.0
      %v3755 = vmax.f32 %v3719, 0.0
      %v3756 = vmax.f32 %v3720, 0.0
      %v3757 = vmax.f32 %v3721, 0.0
      %v3758 = vmax.f32 %v3722, 0.0
      %v3759 = vmax.f32 %v3723, 0.0
      %v3760 = vmax.f32 %v3724, 0.0
      %v3761 = vmax.f32 %v3725, 0.0
      %v3762 = vmax.f32 %v3726, 0.0
      %v3763 = vmax.f32 %v3727, 0.0
      %v3764 = vmax.f32 %v3728, 0.0
      %v3765 = vmax.f32 %v3729, 0.0
      %v3766 = vmax.f32 %v3730, 0.0
      %v3767 = vmax.f32 %v3731, 0.0
      %v3768 = vmax.f32 %v3732, 0.0
      %v3769 = vpack.c.bf16 %v3734, %v3733
      %v3770 = vpack.c.bf16 %v3736, %v3735
      %v3771 = vpack.c.bf16 %v3738, %v3737
      %v3772 = vpack.c.bf16 %v3740, %v3739
      %v3773 = vpack.c.bf16 %v3742, %v3741
      %v3774 = vpack.c.bf16 %v3744, %v3743
      %v3775 = vpack.c.bf16 %v3746, %v3745
      %v3776 = vpack.c.bf16 %v3748, %v3747
      %v3777 = vpack.c.bf16 %v3750, %v3749
      %v3778 = vpack.c.bf16 %v3752, %v3751
      %v3779 = vpack.c.bf16 %v3754, %v3753
      %v3780 = vpack.c.bf16 %v3756, %v3755
      %v3781 = vpack.c.bf16 %v3758, %v3757
      %v3782 = vpack.c.bf16 %v3760, %v3759
      %v3783 = vpack.c.bf16 %v3762, %v3761
      %v3784 = vpack.c.bf16 %v3764, %v3763
      %v3785 = vpack.c.bf16 %v3766, %v3765
      %v3786 = vpack.c.bf16 %v3768, %v3767
      %v3788 = vunpack.c.l.b16 %v3769
      %v3789 = vunpack.c.h.b16 %v3769
      %v3790 = vpack.c.b16 %v3788, %v3788
      %v3791 = vpack.c.b16 %v3789, %v3789
      %vm3794 = vcmask 27648
      %3795 = vst.msk [vmem:[%s197] sm:$0xf] %vm3794, %v3790
      %3796 = vst.msk [vmem:[%s197 + $0x4] sm:$0xf] %vm3794, %v3791
      %v3799 = vunpack.c.l.b16 %v3770
      %v3800 = vunpack.c.h.b16 %v3770
      %v3801 = vunpack.c.l.b16 %v3771
      %v3802 = vpack.c.b16 %v3799, %v3799
      %v3803 = vpack.c.b16 %v3800, %v3800
      %v3804 = vpack.c.b16 %v3801, %v3801
      %vm3805 = vcmask 1042432
      %vm3806 = vcmask 1046532
      %vm3807 = vmor %vm3805, %vm3806
      %v3808 = vrot.slane %v3802, 5
      %v3809 = vrot.slane %v3808, 4
      %v3810 = vrot.slane %v3803, 5
      %v3811 = vsel %vm3807, %v3809, %v3810
      %v3812 = vrot.slane %v3810, 4
      %v3813 = vrot.slane %v3804, 5
      %v3814 = vsel %vm3807, %v3812, %v3813
      %s3817 = scalar_lea.vmem %s197, 8
      %3818 = vst.msk [vmem:[%s3817] sm:$0xf] %vm3794, %v3811
      %3819 = vst.msk [vmem:[%s3817 + $0x4] sm:$0xf] %vm3794, %v3814
      %v3821 = vunpack.c.h.b16 %v3771
      %v3822 = vunpack.c.l.b16 %v3772
      %v3823 = vpack.c.b16 %v3821, %v3821
      %v3824 = vpack.c.b16 %v3822, %v3822
      %vm3825 = vcmask 1041408
      %vm3826 = vcmask 1045508
      %vm3827 = vmor %vm3825, %vm3826
      %v3828 = vrot.slane %v3804, 6
      %v3829 = vrot.slane %v3828, 4
      %v3830 = vrot.slane %v3823, 6
      %v3831 = vsel %vm3827, %v3829, %v3830
      %v3832 = vrot.slane %v3830, 4
      %v3833 = vrot.slane %v3824, 6
      %v3834 = vsel %vm3827, %v3832, %v3833
      %s3837 = scalar_lea.vmem %s197, 16
      %3838 = vst.msk [vmem:[%s3837] sm:$0xf] %vm3794, %v3831
      %3839 = vst.msk [vmem:[%s3837 + $0x4] sm:$0xf] %vm3794, %v3834
      %v3841 = vunpack.c.h.b16 %v3772
      %v3842 = vunpack.c.l.b16 %v3773
      %v3843 = vpack.c.b16 %v3841, %v3841
      %v3844 = vpack.c.b16 %v3842, %v3842
      %vm3845 = vcmask 1040384
      %vm3846 = vcmask 1044484
      %vm3847 = vmor %vm3845, %vm3846
      %v3848 = vrot.slane %v3824, 7
      %v3849 = vrot.slane %v3848, 4
      %v3850 = vrot.slane %v3843, 7
      %v3851 = vsel %vm3847, %v3849, %v3850
      %v3852 = vrot.slane %v3850, 4
      %v3853 = vrot.slane %v3844, 7
      %v3854 = vsel %vm3847, %v3852, %v3853
      %s3857 = scalar_lea.vmem %s197, 24
      %3858 = vst.msk [vmem:[%s3857] sm:$0xf] %vm3794, %v3851
      %3859 = vst.msk [vmem:[%s3857 + $0x4] sm:$0xf] %vm3794, %v3854
      %v3861 = vunpack.c.h.b16 %v3773
      %v3862 = vunpack.c.l.b16 %v3774
      %v3863 = vpack.c.b16 %v3861, %v3861
      %v3864 = vpack.c.b16 %v3862, %v3862
      %s3867 = scalar_lea.vmem %s197, 32
      %3868 = vst.msk [vmem:[%s3867] sm:$0xf] %vm3794, %v3863
      %3869 = vst.msk [vmem:[%s3867 + $0x4] sm:$0xf] %vm3794, %v3864
      %v3871 = vunpack.c.h.b16 %v3774
      %v3872 = vunpack.c.l.b16 %v3775
      %v3873 = vunpack.c.h.b16 %v3775
      %v3874 = vpack.c.b16 %v3871, %v3871
      %v3875 = vpack.c.b16 %v3872, %v3872
      %v3876 = vpack.c.b16 %v3873, %v3873
      %v3877 = vrot.slane %v3874, 5
      %v3878 = vrot.slane %v3877, 4
      %v3879 = vrot.slane %v3875, 5
      %v3880 = vsel %vm3807, %v3878, %v3879
      %v3881 = vrot.slane %v3879, 4
      %v3882 = vrot.slane %v3876, 5
      %v3883 = vsel %vm3807, %v3881, %v3882
      %s3886 = scalar_lea.vmem %s197, 40
      %3887 = vst.msk [vmem:[%s3886] sm:$0xf] %vm3794, %v3880
      %3888 = vst.msk [vmem:[%s3886 + $0x4] sm:$0xf] %vm3794, %v3883
      %v3890 = vunpack.c.l.b16 %v3776
      %v3891 = vunpack.c.h.b16 %v3776
      %v3892 = vpack.c.b16 %v3890, %v3890
      %v3893 = vpack.c.b16 %v3891, %v3891
      %v3894 = vrot.slane %v3876, 6
      %v3895 = vrot.slane %v3894, 4
      %v3896 = vrot.slane %v3892, 6
      %v3897 = vsel %vm3827, %v3895, %v3896
      %v3898 = vrot.slane %v3896, 4
      %v3899 = vrot.slane %v3893, 6
      %v3900 = vsel %vm3827, %v3898, %v3899
      %s3903 = scalar_lea.vmem %s197, 48
      %3904 = vst.msk [vmem:[%s3903] sm:$0xf] %vm3794, %v3897
      %3905 = vst.msk [vmem:[%s3903 + $0x4] sm:$0xf] %vm3794, %v3900
      %v3907 = vunpack.c.l.b16 %v3777
      %v3908 = vunpack.c.h.b16 %v3777
      %v3909 = vpack.c.b16 %v3907, %v3907
      %v3910 = vpack.c.b16 %v3908, %v3908
      %v3911 = vrot.slane %v3893, 7
      %v3912 = vrot.slane %v3911, 4
      %v3913 = vrot.slane %v3909, 7
      %v3914 = vsel %vm3847, %v3912, %v3913
      %v3915 = vrot.slane %v3913, 4
      %v3916 = vrot.slane %v3910, 7
      %v3917 = vsel %vm3847, %v3915, %v3916
      %s3920 = scalar_lea.vmem %s197, 56
      %3921 = vst.msk [vmem:[%s3920] sm:$0xf] %vm3794, %v3914
      %3922 = vst.msk [vmem:[%s3920 + $0x4] sm:$0xf] %vm3794, %v3917
      %v3924 = vunpack.c.l.b16 %v3778
      %v3925 = vunpack.c.h.b16 %v3778
      %v3926 = vpack.c.b16 %v3924, %v3924
      %v3927 = vpack.c.b16 %v3925, %v3925
      %s3930 = scalar_lea.vmem %s197, 64
      %3931 = vst.msk [vmem:[%s3930] sm:$0xf] %vm3794, %v3926
      %3932 = vst.msk [vmem:[%s3930 + $0x4] sm:$0xf] %vm3794, %v3927
      %v3935 = vunpack.c.l.b16 %v3779
      %v3936 = vunpack.c.h.b16 %v3779
      %v3937 = vunpack.c.l.b16 %v3780
      %v3938 = vpack.c.b16 %v3935, %v3935
      %v3939 = vpack.c.b16 %v3936, %v3936
      %v3940 = vpack.c.b16 %v3937, %v3937
      %v3941 = vrot.slane %v3938, 5
      %v3942 = vrot.slane %v3941, 4
      %v3943 = vrot.slane %v3939, 5
      %v3944 = vsel %vm3807, %v3942, %v3943
      %v3945 = vrot.slane %v3943, 4
      %v3946 = vrot.slane %v3940, 5
      %v3947 = vsel %vm3807, %v3945, %v3946
      %s3950 = scalar_lea.vmem %s197, 72
      %3951 = vst.msk [vmem:[%s3950] sm:$0xf] %vm3794, %v3944
      %3952 = vst.msk [vmem:[%s3950 + $0x4] sm:$0xf] %vm3794, %v3947
      %v3954 = vunpack.c.h.b16 %v3780
      %v3955 = vunpack.c.l.b16 %v3781
      %v3956 = vpack.c.b16 %v3954, %v3954
      %v3957 = vpack.c.b16 %v3955, %v3955
      %v3958 = vrot.slane %v3940, 6
      %v3959 = vrot.slane %v3958, 4
      %v3960 = vrot.slane %v3956, 6
      %v3961 = vsel %vm3827, %v3959, %v3960
      %v3962 = vrot.slane %v3960, 4
      %v3963 = vrot.slane %v3957, 6
      %v3964 = vsel %vm3827, %v3962, %v3963
      %s3967 = scalar_lea.vmem %s197, 80
      %3968 = vst.msk [vmem:[%s3967] sm:$0xf] %vm3794, %v3961
      %3969 = vst.msk [vmem:[%s3967 + $0x4] sm:$0xf] %vm3794, %v3964
      %v3971 = vunpack.c.h.b16 %v3781
      %v3972 = vunpack.c.l.b16 %v3782
      %v3973 = vpack.c.b16 %v3971, %v3971
      %v3974 = vpack.c.b16 %v3972, %v3972
      %v3975 = vrot.slane %v3957, 7
      %v3976 = vrot.slane %v3975, 4
      %v3977 = vrot.slane %v3973, 7
      %v3978 = vsel %vm3847, %v3976, %v3977
      %v3979 = vrot.slane %v3977, 4
      %v3980 = vrot.slane %v3974, 7
      %v3981 = vsel %vm3847, %v3979, %v3980
      %s3984 = scalar_lea.vmem %s197, 88
      %3985 = vst.msk [vmem:[%s3984] sm:$0xf] %vm3794, %v3978
      %3986 = vst.msk [vmem:[%s3984 + $0x4] sm:$0xf] %vm3794, %v3981
      %v3988 = vunpack.c.h.b16 %v3782
      %v3989 = vunpack.c.l.b16 %v3783
      %v3990 = vpack.c.b16 %v3988, %v3988
      %v3991 = vpack.c.b16 %v3989, %v3989
      %s3994 = scalar_lea.vmem %s197, 96
      %3995 = vst.msk [vmem:[%s3994] sm:$0xf] %vm3794, %v3990
      %3996 = vst.msk [vmem:[%s3994 + $0x4] sm:$0xf] %vm3794, %v3991
      %v3998 = vunpack.c.h.b16 %v3783
      %v3999 = vunpack.c.l.b16 %v3784
      %v4000 = vunpack.c.h.b16 %v3784
      %v4001 = vpack.c.b16 %v3998, %v3998
      %v4002 = vpack.c.b16 %v3999, %v3999
      %v4003 = vpack.c.b16 %v4000, %v4000
      %v4004 = vrot.slane %v4001, 5
      %v4005 = vrot.slane %v4004, 4
      %v4006 = vrot.slane %v4002, 5
      %v4007 = vsel %vm3807, %v4005, %v4006
      %v4008 = vrot.slane %v4006, 4
      %v4009 = vrot.slane %v4003, 5
      %v4010 = vsel %vm3807, %v4008, %v4009
      %s4013 = scalar_lea.vmem %s197, 104
      %4014 = vst.msk [vmem:[%s4013] sm:$0xf] %vm3794, %v4007
      %4015 = vst.msk [vmem:[%s4013 + $0x4] sm:$0xf] %vm3794, %v4010
      %v4017 = vunpack.c.l.b16 %v3785
      %v4018 = vunpack.c.h.b16 %v3785
      %v4019 = vpack.c.b16 %v4017, %v4017
      %v4020 = vpack.c.b16 %v4018, %v4018
      %v4021 = vrot.slane %v4003, 6
      %v4022 = vrot.slane %v4021, 4
      %v4023 = vrot.slane %v4019, 6
      %v4024 = vsel %vm3827, %v4022, %v4023
      %v4025 = vrot.slane %v4023, 4
      %v4026 = vrot.slane %v4020, 6
      %v4027 = vsel %vm3827, %v4025, %v4026
      %s4030 = scalar_lea.vmem %s197, 112
      %4031 = vst.msk [vmem:[%s4030] sm:$0xf] %vm3794, %v4024
      %4032 = vst.msk [vmem:[%s4030 + $0x4] sm:$0xf] %vm3794, %v4027
      %v4034 = vunpack.c.l.b16 %v3786
      %v4035 = vunpack.c.h.b16 %v3786
      %v4036 = vpack.c.b16 %v4034, %v4034
      %v4037 = vpack.c.b16 %v4035, %v4035
      %v4038 = vrot.slane %v4020, 7
      %v4039 = vrot.slane %v4038, 4
      %v4040 = vrot.slane %v4036, 7
      %v4041 = vsel %vm3847, %v4039, %v4040
      %v4042 = vrot.slane %v4040, 4
      %v4043 = vrot.slane %v4037, 7
      %v4044 = vsel %vm3847, %v4042, %v4043
      %s4047 = scalar_lea.vmem %s197, 120
      %4048 = vst.msk [vmem:[%s4047] sm:$0xf] %vm3794, %v4041
      %4049 = vst.msk [vmem:[%s4047 + $0x4] sm:$0xf] %vm3794, %v4044
      %p4050 = scmp.lt.s32.totalorder %s15, 1
      %s4051 = scalar_select %p4050, %s15, 1
      %s4052 = smul.addr %s4051, 32
      %s4053 = smul.addr %s4052, 4
      %s4054 = scalar_lea.vmem %s4, %s4053
      // Predicated region
      $region37: #{group_forward_jit.7} parent=35 // pred_check
        %p4055 = pneg %p122
      $region38: #{group_forward_jit.7} parent=35 // pred_check_branch
        %4057 = sbr.rel (%p4055) target = $region40
      $region39: #{group_forward_jit.7} parent=35 // pred_region
        _
      $region40: #{group_forward_jit.7} parent=35 // pred_fallthru
        _
    $region36: #{group_forward_jit.7} parent=5 // pred_fallthru
      _
    %p4058 = scmp.le.s32.totalorder 2, %s10
    // Predicated region
    $region41: #{group_forward_jit.7} parent=5 // pred_check
      %p4059 = pneg %p4058
    $region42: #{group_forward_jit.7} parent=5 // pred_check_branch
      %4061 = sbr.rel (%p4059) target = $region44
    $region43: #{group_forward_jit.7} parent=5 // pred_region
      %s4062 = ssub.s32 %s10, 2
      // Predicated region
      $region45: #{group_forward_jit.7} parent=43 // pred_check
        %p4063 = pneg %p128
      $region46: #{group_forward_jit.7} parent=43 // pred_check_branch
        %4065 = sbr.rel (%p4063) target = $region48
      $region47: #{group_forward_jit.7} parent=43 // pred_region
        %p4066 = scmp.lt.s32.totalorder %s16, 1
        %s4067 = scalar_select %p4066, %s16, 1
        %s4068 = smul.addr %s4067, 32
        %s4069 = smul.addr %s4068, 4
        %s4070 = scalar_lea.vmem %s4, %s4069
      $region48: #{group_forward_jit.7} parent=43 // pred_fallthru
        _
    $region44: #{group_forward_jit.7} parent=5 // pred_fallthru
      _
  $region6: #{group_forward_jit.7} parent=0 // loop_footer
    %s14 = sadd.s32 1, %s10
  $region7: #{group_forward_jit.7} parent=0 // loop_footer_branch
    %9 = sbr.rel target = $region3
  $region8: #{group_forward_jit.7} parent=0 // loop_exit
    _

</llo_original>
